<compile_context>
chip_gen: v6e
topology: v6e:2x2x1
jax: 0.10.0
libtpu: 0.0.40
codegen_flags: <defaults>
</compile_context>

<pallas_src>
import functools
import math

import jax
import jax.numpy as jnp
from jax.experimental import pallas as pl
from jax.experimental.pallas import tpu as pltpu

# ---------------------------------------------------------------------------
# Model configuration (small, consistent with the module's constructor args).
# ---------------------------------------------------------------------------
D_MODEL = 32
NHEAD = 4
HEAD_DIM = D_MODEL // NHEAD
NUM_LAYERS = 2
DIM_FF = 64
VOCAB = 10
VOCAB_EMB_PAD = 16       # embedding-table rows padded for the one-hot matmul
VOCAB_PAD = 128          # lane-dense fc output width (sliced back to VOCAB)
MAX_LEN = 5000
LN_EPS = 1e-5


# ---------------------------------------------------------------------------
# Fused Pallas kernel: embedding + PE + 2 decoder layers + fc.
# ---------------------------------------------------------------------------
def fused_decoder_kernel(
    ids_ref,                     # (B*S, 1) int32
    mem_ref,                     # (B*M, D) f32
    emb_ref,                     # (VOCAB_EMB_PAD, D) f32
    pe_ref,                      # (B*S, D) f32  (pe row per batch, bcast over seq)
    W_sqkv, b_sqkv,              # (L, D, 3D), (L, 1, 3D)   self-attn [Wq|Wk|Wv]
    W_misc, b_misc,              # (L, D, 3D), (L, 1, 3D)   [Wo_self|Wq_cross|Wo_cross]
    W_ckv, b_ckv,                # (D, 2*L*D), (1, 2*L*D)   [Kc_l0|Vc_l0|Kc_l1|Vc_l1]
    W1, b1,                      # (L, D, FF), (L, 1, FF)
    W2, b2,                      # (L, FF, D), (L, 1, D)
    ln,                          # (L, 6, D)  rows: g1,b1,g2,b2,g3,b3
    fcW, fcb,                    # (D, VOCAB_PAD), (1, VOCAB_PAD)
    o_ref,                       # (B*S, VOCAB_PAD) f32
    *, B, S, M,
):
    D = D_MODEL
    scale = 1.0 / math.sqrt(HEAD_DIM)

    # Per-head lane masks (1, D), built once, reused by all attention blocks.
    lane = jax.lax.broadcasted_iota(jnp.int32, (1, D), 1)
    head_masks = [
        jnp.logical_and(lane >= h * HEAD_DIM, lane < (h + 1) * HEAD_DIM
                        ).astype(jnp.float32)
        for h in range(NHEAD)
    ]

    # --- embedding via one-hot matmul + positional encoding (batch-indexed pe) ---
    ids = ids_ref[...]                                              # (B*S, 1) int32
    vocab_iota = jax.lax.broadcasted_iota(
        jnp.int32, (B * S, VOCAB_EMB_PAD), 1)
    one_hot = (ids == vocab_iota).astype(jnp.float32)               # (B*S, Vp)
    x = (jnp.dot(one_hot, emb_ref[...], preferred_element_type=jnp.float32)
         + pe_ref[...])                                             # (B*S, D)

    mem_rows = mem_ref[...]                                         # (B*M, D)

    # --- cross-attention K/V for ALL layers: one lane-dense 128-col matmul ---
    kv_cross = (jnp.dot(mem_rows, W_ckv[...],
                        preferred_element_type=jnp.float32) + b_ckv[...])

    def layer_norm(v, g, beta):
        mu = jnp.mean(v, axis=-1, keepdims=True)
        ms = jnp.mean(v * v, axis=-1, keepdims=True)
        var = ms - mu * mu
        return (v - mu) * jax.lax.rsqrt(var + LN_EPS) * g + beta

    def attention_core(q, k, v, skv):
        # q: (B*S, D); k, v: (B*skv, D).  Heads via lane masks: masking q zeroes
        # lanes outside head h so the full-D contraction equals q_h @ k_h^T; the
        # head-h ctx lanes are kept with the same mask and accumulated (VPU),
        # giving ONE Wo matmul per attention block after the loop.
        q3 = q.reshape(B, S, D)
        k3 = k.reshape(B, skv, D)
        v3 = v.reshape(B, skv, D)
        ctx = jnp.zeros((B, S, D), jnp.float32)
        for h in range(NHEAD):
            mask = head_masks[h]
            scores = jnp.einsum('bqd,bkd->bqk', q3 * mask, k3,
                                preferred_element_type=jnp.float32) * scale
            scores = scores - jnp.max(scores, axis=-1, keepdims=True)
            p = jnp.exp(scores)
            p = p * pl.reciprocal(jnp.sum(p, axis=-1, keepdims=True), approx=True)
            ctx_h = jnp.einsum('bqk,bkd->bqd', p, v3,
                               preferred_element_type=jnp.float32)
            ctx = ctx + ctx_h * mask
        return ctx.reshape(B * S, D)

    # --- decoder layers (post-norm), statically unrolled over the layer axis ---
    for l in range(NUM_LAYERS):
        Wm = W_misc[l]                      # (D, 3D): [Wo_self | Wq_cross | Wo_cross]
        bm = b_misc[l]                      # (1, 3D)
        ln_l = ln[l]                        # (6, D)

        # ---- self-attention: fused QKV projection ----
        qkv = (jnp.dot(x, W_sqkv[l], preferred_element_type=jnp.float32)
               + b_sqkv[l])                 # (B*S, 3D)
        q = qkv[:, 0:D]
        k = qkv[:, D:2 * D]
        v = qkv[:, 2 * D:3 * D]
        ctx = attention_core(q, k, v, S)
        sa = (jnp.dot(ctx, Wm[:, 0:D], preferred_element_type=jnp.float32)
              + bm[:, 0:D])
        x = layer_norm(x + sa, ln_l[0:1, :], ln_l[1:2, :])

        # ---- cross-attention: K/V precomputed, only Q projected per layer ----
        q = (jnp.dot(x, Wm[:, D:2 * D], preferred_element_type=jnp.float32)
             + bm[:, D:2 * D])
        k = kv_cross[:, 2 * l * D:(2 * l + 1) * D]
        v = kv_cross[:, (2 * l + 1) * D:(2 * l + 2) * D]
        ctx = attention_core(q, k, v, M)
        ca = (jnp.dot(ctx, Wm[:, 2 * D:3 * D], preferred_element_type=jnp.float32)
              + bm[:, 2 * D:3 * D])
        x = layer_norm(x + ca, ln_l[2:3, :], ln_l[3:4, :])

        # ---- FFN (ReLU) ----
        hidden = jnp.maximum(
            jnp.dot(x, W1[l], preferred_element_type=jnp.float32) + b1[l], 0.0)
        ff = jnp.dot(hidden, W2[l], preferred_element_type=jnp.float32) + b2[l]
        x = layer_norm(x + ff, ln_l[4:5, :], ln_l[5:6, :])

    # --- final vocab projection (lane-dense 128-wide output, unmasked stores) ---
    o_ref[...] = (jnp.dot(x, fcW[...], preferred_element_type=jnp.float32)
                  + fcb[...]).astype(o_ref.dtype)


# ---------------------------------------------------------------------------
# Wrapper: one pallas_call for the whole forward pass.
# ---------------------------------------------------------------------------
@jax.jit
def transformer_decoder_forward(tgt_ids, memory, params):
    (emb_pad, pe, W_sqkv, b_sqkv, W_misc, b_misc, W_ckv, b_ckv,
     W1, b1, W2, b2, ln, fcW_pad, fcb_pad) = params
    B, S = tgt_ids.shape
    _, M, D = memory.shape

    ids_col = tgt_ids.reshape(B * S, 1).astype(jnp.int32)
    mem_rows = memory.reshape(B * M, D)
    # PositionalEncoding quirk: pe[:x.size(0)] with a batch_first x == pe rows
    # indexed by the batch dim, broadcast over the sequence.
    pe_rows = pe[:B, 0, :]                         # (B, D)
    pe_bcast = jnp.repeat(pe_rows, S, axis=0)      # (B*S, D)

    kernel = functools.partial(fused_decoder_kernel, B=B, S=S, M=M)
    args = (ids_col, mem_rows, emb_pad, pe_bcast,
            W_sqkv, b_sqkv, W_misc, b_misc, W_ckv, b_ckv,
            W1, b1, W2, b2, ln, fcW_pad, fcb_pad)

    logits_pad = pl.pallas_call(
        kernel,
        out_shape=jax.ShapeDtypeStruct((B * S, VOCAB_PAD), jnp.float32),
        in_specs=[pl.BlockSpec(memory_space=pltpu.MemorySpace.VMEM)] * len(args),
        out_specs=pl.BlockSpec(memory_space=pltpu.MemorySpace.VMEM),
    )(*args)

    return logits_pad.reshape(B, S, VOCAB_PAD)[:, :, :VOCAB]


# ---------------------------------------------------------------------------
# Parameters (deterministic synthetic, shapes follow the module __init__),
# packed into a small number of slabs for fewer / larger input DMAs.
# ---------------------------------------------------------------------------
def positional_encoding(max_len, d_model):
    position = jnp.arange(max_len, dtype=jnp.float32)[:, None]
    div_term = jnp.exp(jnp.arange(0, d_model, 2, dtype=jnp.float32)
                       * (-math.log(10000.0) / d_model))
    pe = jnp.zeros((max_len, d_model), jnp.float32)
    pe = pe.at[:, 0::2].set(jnp.sin(position * div_term))
    pe = pe.at[:, 1::2].set(jnp.cos(position * div_term))
    return pe[:, None, :]   # (max_len, 1, d_model) — same layout as the torch buffer


def init_params(key):
    def dense(k, fan_in, fan_out, scl=0.05):
        return jax.random.normal(k, (fan_in, fan_out), jnp.float32) * scl

    def bias(k, n):
        return jax.random.normal(k, (1, n), jnp.float32) * 0.01

    keys = jax.random.split(key, 3 + NUM_LAYERS)
    emb = jax.random.normal(keys[0], (VOCAB, D_MODEL), jnp.float32) * 0.1
    emb_pad = jnp.zeros((VOCAB_EMB_PAD, D_MODEL), jnp.float32).at[:VOCAB].set(emb)

    fc_W = dense(keys[1], D_MODEL, VOCAB)
    fc_b = bias(keys[2], VOCAB)
    fcW_pad = jnp.zeros((D_MODEL, VOCAB_PAD), jnp.float32).at[:, :VOCAB].set(fc_W)
    fcb_pad = jnp.zeros((1, VOCAB_PAD), jnp.float32).at[:, :VOCAB].set(fc_b)

    ones = jnp.ones((1, D_MODEL), jnp.float32)
    zeros = jnp.zeros((1, D_MODEL), jnp.float32)

    W_sqkv, b_sqkv, W_misc, b_misc = [], [], [], []
    W_ckv_cols, b_ckv_cols = [], []
    W1s, b1s, W2s, b2s, lns = [], [], [], [], []
    for l in range(NUM_LAYERS):
        ks = jax.random.split(keys[3 + l], 20)
        sWq, sbq = dense(ks[0], D_MODEL, D_MODEL), bias(ks[1], D_MODEL)
        sWk, sbk = dense(ks[2], D_MODEL, D_MODEL), bias(ks[3], D_MODEL)
        sWv, sbv = dense(ks[4], D_MODEL, D_MODEL), bias(ks[5], D_MODEL)
        sWo, sbo = dense(ks[6], D_MODEL, D_MODEL), bias(ks[7], D_MODEL)
        cWq, cbq = dense(ks[8], D_MODEL, D_MODEL), bias(ks[9], D_MODEL)
        cWk, cbk = dense(ks[10], D_MODEL, D_MODEL), bias(ks[11], D_MODEL)
        cWv, cbv = dense(ks[12], D_MODEL, D_MODEL), bias(ks[13], D_MODEL)
        cWo, cbo = dense(ks[14], D_MODEL, D_MODEL), bias(ks[15], D_MODEL)
        W1l, b1l = dense(ks[16], D_MODEL, DIM_FF), bias(ks[17], DIM_FF)
        W2l, b2l = dense(ks[18], DIM_FF, D_MODEL), bias(ks[19], D_MODEL)

        W_sqkv.append(jnp.concatenate([sWq, sWk, sWv], axis=1))     # (D, 3D)
        b_sqkv.append(jnp.concatenate([sbq, sbk, sbv], axis=1))     # (1, 3D)
        W_misc.append(jnp.concatenate([sWo, cWq, cWo], axis=1))     # (D, 3D)
        b_misc.append(jnp.concatenate([sbo, cbq, cbo], axis=1))     # (1, 3D)
        W_ckv_cols.append(jnp.concatenate([cWk, cWv], axis=1))      # (D, 2D)
        b_ckv_cols.append(jnp.concatenate([cbk, cbv], axis=1))      # (1, 2D)
        W1s.append(W1l); b1s.append(b1l); W2s.append(W2l); b2s.append(b2l)
        lns.append(jnp.concatenate([ones, zeros, ones, zeros, ones, zeros],
                                   axis=0))                         # (6, D)

    params = (
        emb_pad,
        positional_encoding(MAX_LEN, D_MODEL),
        jnp.stack(W_sqkv), jnp.stack(b_sqkv),
        jnp.stack(W_misc), jnp.stack(b_misc),
        jnp.concatenate(W_ckv_cols, axis=1),        # (D, 2*L*D) = (32, 128)
        jnp.concatenate(b_ckv_cols, axis=1),        # (1, 128)
        jnp.stack(W1s), jnp.stack(b1s),
        jnp.stack(W2s), jnp.stack(b2s),
        jnp.stack(lns),                             # (L, 6, D)
        fcW_pad, fcb_pad,
    )
    return params


if __name__ == "__main__":
    key = jax.random.PRNGKey(0)
    k_ids, k_mem, k_par = jax.random.split(key, 3)

    B, S, M = 2, 8, 16   # batch, tgt seq len, memory (encoder) seq len
    tgt = jax.random.randint(k_ids, (B, S), 0, VOCAB, dtype=jnp.int32)
    memory = jax.random.normal(k_mem, (B, M, D_MODEL), dtype=jnp.float32)

    params = init_params(k_par)
    out = transformer_decoder_forward(tgt, memory, params)
    out = jax.block_until_ready(out)

    assert out.shape == (B, S, VOCAB), out.shape
    assert bool(jnp.all(jnp.isfinite(out)))
    # TODO(synk): tgt_mask / key_padding_mask variants are not implemented
    # (the reference forward is exercised with all masks = None).
    print("KERNEL_OK")
</pallas_src>

<mosaic_0001>
module attributes {stable_mosaic.version = 11 : i64} {
  func.func @fused_decoder_kernel(%arg0: memref<16x1xi32, #tpu.memory_space<vmem>>, %arg1: memref<32x32xf32, #tpu.memory_space<vmem>>, %arg2: memref<16x32xf32, #tpu.memory_space<vmem>>, %arg3: memref<16x32xf32, #tpu.memory_space<vmem>>, %arg4: memref<2x32x96xf32, #tpu.memory_space<vmem>>, %arg5: memref<2x1x96xf32, #tpu.memory_space<vmem>>, %arg6: memref<2x32x96xf32, #tpu.memory_space<vmem>>, %arg7: memref<2x1x96xf32, #tpu.memory_space<vmem>>, %arg8: memref<32x128xf32, #tpu.memory_space<vmem>>, %arg9: memref<1x128xf32, #tpu.memory_space<vmem>>, %arg10: memref<2x32x64xf32, #tpu.memory_space<vmem>>, %arg11: memref<2x1x64xf32, #tpu.memory_space<vmem>>, %arg12: memref<2x64x32xf32, #tpu.memory_space<vmem>>, %arg13: memref<2x1x32xf32, #tpu.memory_space<vmem>>, %arg14: memref<2x6x32xf32, #tpu.memory_space<vmem>>, %arg15: memref<32x128xf32, #tpu.memory_space<vmem>>, %arg16: memref<1x128xf32, #tpu.memory_space<vmem>>, %arg17: memref<16x128xf32, #tpu.memory_space<vmem>>) attributes {dimension_semantics = [], scalar_prefetch = 0 : i64, scratch_operands = 0 : i64, tpu.core_type = #tpu.core_type<tc>} {
    %0 = tpu.iota {dimensions = array<i32: 1>} : vector<1x32xi32>
    %c0_i32 = arith.constant 0 : i32
    %1 = vector.broadcast %c0_i32 : i32 to vector<1x32xi32>
    %2 = arith.cmpi sge, %0, %1 : vector<1x32xi32>
    %c8_i32 = arith.constant 8 : i32
    %3 = vector.broadcast %c8_i32 : i32 to vector<1x32xi32>
    %4 = arith.cmpi slt, %0, %3 : vector<1x32xi32>
    %5 = arith.andi %2, %4 : vector<1x32xi1>
    %6 = arith.extui %5 : vector<1x32xi1> to vector<1x32xi32>
    %7 = arith.sitofp %6 : vector<1x32xi32> to vector<1x32xf32>
    %c8_i32_0 = arith.constant 8 : i32
    %8 = vector.broadcast %c8_i32_0 : i32 to vector<1x32xi32>
    %9 = arith.cmpi sge, %0, %8 : vector<1x32xi32>
    %c16_i32 = arith.constant 16 : i32
    %10 = vector.broadcast %c16_i32 : i32 to vector<1x32xi32>
    %11 = arith.cmpi slt, %0, %10 : vector<1x32xi32>
    %12 = arith.andi %9, %11 : vector<1x32xi1>
    %13 = arith.extui %12 : vector<1x32xi1> to vector<1x32xi32>
    %14 = arith.sitofp %13 : vector<1x32xi32> to vector<1x32xf32>
    %c16_i32_1 = arith.constant 16 : i32
    %15 = vector.broadcast %c16_i32_1 : i32 to vector<1x32xi32>
    %16 = arith.cmpi sge, %0, %15 : vector<1x32xi32>
    %c24_i32 = arith.constant 24 : i32
    %17 = vector.broadcast %c24_i32 : i32 to vector<1x32xi32>
    %18 = arith.cmpi slt, %0, %17 : vector<1x32xi32>
    %19 = arith.andi %16, %18 : vector<1x32xi1>
    %20 = arith.extui %19 : vector<1x32xi1> to vector<1x32xi32>
    %21 = arith.sitofp %20 : vector<1x32xi32> to vector<1x32xf32>
    %c24_i32_2 = arith.constant 24 : i32
    %22 = vector.broadcast %c24_i32_2 : i32 to vector<1x32xi32>
    %23 = arith.cmpi sge, %0, %22 : vector<1x32xi32>
    %c32_i32 = arith.constant 32 : i32
    %24 = vector.broadcast %c32_i32 : i32 to vector<1x32xi32>
    %25 = arith.cmpi slt, %0, %24 : vector<1x32xi32>
    %26 = arith.andi %23, %25 : vector<1x32xi1>
    %27 = arith.extui %26 : vector<1x32xi1> to vector<1x32xi32>
    %28 = arith.sitofp %27 : vector<1x32xi32> to vector<1x32xf32>
    %c0 = arith.constant 0 : index
    %c0_3 = arith.constant 0 : index
    %29 = vector.load %arg0[%c0, %c0_3] : memref<16x1xi32, #tpu.memory_space<vmem>>, vector<16x1xi32>
    %30 = tpu.iota {dimensions = array<i32: 1>} : vector<16x16xi32>
    %31 = vector.broadcast %29 : vector<16x1xi32> to vector<16x16xi32>
    %32 = arith.cmpi eq, %31, %30 : vector<16x16xi32>
    %33 = arith.extui %32 : vector<16x16xi1> to vector<16x16xi32>
    %34 = arith.sitofp %33 : vector<16x16xi32> to vector<16x16xf32>
    %c0_4 = arith.constant 0 : index
    %c0_5 = arith.constant 0 : index
    %35 = vector.load %arg2[%c0_4, %c0_5] : memref<16x32xf32, #tpu.memory_space<vmem>>, vector<16x32xf32>
    %cst = arith.constant dense<0.000000e+00> : vector<16x32xf32>
    %36 = tpu.matmul %34, %35, %cst {dimension_numbers = #tpu.dot_dimension_numbers<[1], [0], [0], [1], [0, 0, 1, 1], [], []>} : vector<16x16xf32>, vector<16x32xf32>, vector<16x32xf32> -> vector<16x32xf32>
    %c0_6 = arith.constant 0 : index
    %c0_7 = arith.constant 0 : index
    %37 = vector.load %arg3[%c0_6, %c0_7] : memref<16x32xf32, #tpu.memory_space<vmem>>, vector<16x32xf32>
    %38 = arith.addf %36, %37 : vector<16x32xf32>
    %c0_8 = arith.constant 0 : index
    %c0_9 = arith.constant 0 : index
    %39 = vector.load %arg1[%c0_8, %c0_9] : memref<32x32xf32, #tpu.memory_space<vmem>>, vector<32x32xf32>
    %c0_10 = arith.constant 0 : index
    %c0_11 = arith.constant 0 : index
    %40 = vector.load %arg8[%c0_10, %c0_11] : memref<32x128xf32, #tpu.memory_space<vmem>>, vector<32x128xf32>
    %cst_12 = arith.constant dense<0.000000e+00> : vector<32x128xf32>
    %41 = tpu.matmul %39, %40, %cst_12 {dimension_numbers = #tpu.dot_dimension_numbers<[1], [0], [0], [1], [0, 0, 1, 1], [], []>} : vector<32x32xf32>, vector<32x128xf32>, vector<32x128xf32> -> vector<32x128xf32>
    %c0_13 = arith.constant 0 : index
    %c0_14 = arith.constant 0 : index
    %42 = vector.load %arg9[%c0_13, %c0_14] : memref<1x128xf32, #tpu.memory_space<vmem>>, vector<1x128xf32>
    %43 = vector.broadcast %42 : vector<1x128xf32> to vector<32x128xf32>
    %44 = arith.addf %41, %43 : vector<32x128xf32>
    %c0_15 = arith.constant 0 : index
    %c0_16 = arith.constant 0 : index
    %c0_17 = arith.constant 0 : index
    %45 = vector.load %arg6[%c0_15, %c0_16, %c0_17] : memref<2x32x96xf32, #tpu.memory_space<vmem>>, vector<1x32x96xf32>
    %46 = vector.shape_cast %45 : vector<1x32x96xf32> to vector<32x96xf32>
    %c0_18 = arith.constant 0 : index
    %c0_19 = arith.constant 0 : index
    %c0_20 = arith.constant 0 : index
    %47 = vector.load %arg7[%c0_18, %c0_19, %c0_20] : memref<2x1x96xf32, #tpu.memory_space<vmem>>, vector<1x1x96xf32>
    %48 = vector.shape_cast %47 : vector<1x1x96xf32> to vector<1x96xf32>
    %c0_21 = arith.constant 0 : index
    %c0_22 = arith.constant 0 : index
    %c0_23 = arith.constant 0 : index
    %49 = vector.load %arg14[%c0_21, %c0_22, %c0_23] : memref<2x6x32xf32, #tpu.memory_space<vmem>>, vector<1x6x32xf32>
    %50 = vector.shape_cast %49 : vector<1x6x32xf32> to vector<6x32xf32>
    %c0_24 = arith.constant 0 : index
    %c0_25 = arith.constant 0 : index
    %c0_26 = arith.constant 0 : index
    %51 = vector.load %arg4[%c0_24, %c0_25, %c0_26] : memref<2x32x96xf32, #tpu.memory_space<vmem>>, vector<1x32x96xf32>
    %52 = vector.shape_cast %51 : vector<1x32x96xf32> to vector<32x96xf32>
    %cst_27 = arith.constant dense<0.000000e+00> : vector<16x96xf32>
    %53 = tpu.matmul %38, %52, %cst_27 {dimension_numbers = #tpu.dot_dimension_numbers<[1], [0], [0], [1], [0, 0, 1, 1], [], []>} : vector<16x32xf32>, vector<32x96xf32>, vector<16x96xf32> -> vector<16x96xf32>
    %c0_28 = arith.constant 0 : index
    %c0_29 = arith.constant 0 : index
    %c0_30 = arith.constant 0 : index
    %54 = vector.load %arg5[%c0_28, %c0_29, %c0_30] : memref<2x1x96xf32, #tpu.memory_space<vmem>>, vector<1x1x96xf32>
    %55 = vector.shape_cast %54 : vector<1x1x96xf32> to vector<1x96xf32>
    %56 = vector.broadcast %55 : vector<1x96xf32> to vector<16x96xf32>
    %57 = arith.addf %53, %56 : vector<16x96xf32>
    %58 = vector.extract_strided_slice %57 {offsets = [0, 0], sizes = [16, 32], strides = [1, 1]} : vector<16x96xf32> to vector<16x32xf32>
    %59 = vector.extract_strided_slice %57 {offsets = [0, 32], sizes = [16, 32], strides = [1, 1]} : vector<16x96xf32> to vector<16x32xf32>
    %60 = vector.extract_strided_slice %57 {offsets = [0, 64], sizes = [16, 32], strides = [1, 1]} : vector<16x96xf32> to vector<16x32xf32>
    %61 = vector.shape_cast %58 : vector<16x32xf32> to vector<2x8x32xf32>
    %62 = vector.shape_cast %59 : vector<16x32xf32> to vector<2x8x32xf32>
    %63 = vector.shape_cast %60 : vector<16x32xf32> to vector<2x8x32xf32>
    %cst_31 = arith.constant 0.000000e+00 : f32
    %64 = vector.broadcast %cst_31 : f32 to vector<2x8x32xf32>
    %65 = vector.shape_cast %7 : vector<1x32xf32> to vector<1x1x32xf32>
    %66 = vector.broadcast %65 : vector<1x1x32xf32> to vector<2x8x32xf32>
    %67 = arith.mulf %61, %66 : vector<2x8x32xf32>
    "tpu.trace_start"() <{level = 10 : i32, message = "bqd,bkd->bqk"}> : () -> ()
    %cst_32 = arith.constant dense<0.000000e+00> : vector<2x8x8xf32>
    %68 = tpu.matmul %67, %62, %cst_32 {dimension_numbers = #tpu.dot_dimension_numbers<[2], [2], [1], [1], [0, 0, 0, 1, 1, 1], [0], [0]>} : vector<2x8x32xf32>, vector<2x8x32xf32>, vector<2x8x8xf32> -> vector<2x8x8xf32>
    "tpu.trace_stop"() : () -> ()
    %cst_33 = arith.constant 0.353553385 : f32
    %69 = vector.broadcast %cst_33 : f32 to vector<2x8x8xf32>
    %70 = arith.mulf %68, %69 : vector<2x8x8xf32>
    %cst_34 = arith.constant dense<0xFF800000> : vector<2x8xf32>
    %71 = vector.multi_reduction <maximumf>, %70, %cst_34 [2] : vector<2x8x8xf32> to vector<2x8xf32>
    %72 = vector.shape_cast %71 : vector<2x8xf32> to vector<2x8x1xf32>
    %73 = vector.broadcast %72 : vector<2x8x1xf32> to vector<2x8x8xf32>
    %74 = arith.subf %70, %73 : vector<2x8x8xf32>
    %75 = math.exp %74 : vector<2x8x8xf32>
    %cst_35 = arith.constant dense<0.000000e+00> : vector<2x8xf32>
    %76 = vector.multi_reduction <add>, %75, %cst_35 [2] : vector<2x8x8xf32> to vector<2x8xf32>
    %77 = vector.shape_cast %76 : vector<2x8xf32> to vector<2x8x1xf32>
    %78 = tpu.reciprocal %77 {approx = true} : vector<2x8x1xf32> -> vector<2x8x1xf32>
    %79 = vector.broadcast %78 : vector<2x8x1xf32> to vector<2x8x8xf32>
    %80 = arith.mulf %75, %79 : vector<2x8x8xf32>
    "tpu.trace_start"() <{level = 10 : i32, message = "bqk,bkd->bqd"}> : () -> ()
    %cst_36 = arith.constant dense<0.000000e+00> : vector<2x8x32xf32>
    %81 = tpu.matmul %80, %63, %cst_36 {dimension_numbers = #tpu.dot_dimension_numbers<[2], [1], [1], [2], [0, 0, 0, 1, 1, 2], [0], [0]>} : vector<2x8x8xf32>, vector<2x8x32xf32>, vector<2x8x32xf32> -> vector<2x8x32xf32>
    "tpu.trace_stop"() : () -> ()
    %82 = vector.shape_cast %7 : vector<1x32xf32> to vector<1x1x32xf32>
    %83 = vector.broadcast %82 : vector<1x1x32xf32> to vector<2x8x32xf32>
    %84 = arith.mulf %81, %83 : vector<2x8x32xf32>
    %85 = arith.addf %64, %84 : vector<2x8x32xf32>
    %86 = vector.shape_cast %14 : vector<1x32xf32> to vector<1x1x32xf32>
    %87 = vector.broadcast %86 : vector<1x1x32xf32> to vector<2x8x32xf32>
    %88 = arith.mulf %61, %87 : vector<2x8x32xf32>
    "tpu.trace_start"() <{level = 10 : i32, message = "bqd,bkd->bqk"}> : () -> ()
    %cst_37 = arith.constant dense<0.000000e+00> : vector<2x8x8xf32>
    %89 = tpu.matmul %88, %62, %cst_37 {dimension_numbers = #tpu.dot_dimension_numbers<[2], [2], [1], [1], [0, 0, 0, 1, 1, 1], [0], [0]>} : vector<2x8x32xf32>, vector<2x8x32xf32>, vector<2x8x8xf32> -> vector<2x8x8xf32>
    "tpu.trace_stop"() : () -> ()
    %cst_38 = arith.constant 0.353553385 : f32
    %90 = vector.broadcast %cst_38 : f32 to vector<2x8x8xf32>
    %91 = arith.mulf %89, %90 : vector<2x8x8xf32>
    %cst_39 = arith.constant dense<0xFF800000> : vector<2x8xf32>
    %92 = vector.multi_reduction <maximumf>, %91, %cst_39 [2] : vector<2x8x8xf32> to vector<2x8xf32>
    %93 = vector.shape_cast %92 : vector<2x8xf32> to vector<2x8x1xf32>
    %94 = vector.broadcast %93 : vector<2x8x1xf32> to vector<2x8x8xf32>
    %95 = arith.subf %91, %94 : vector<2x8x8xf32>
    %96 = math.exp %95 : vector<2x8x8xf32>
    %cst_40 = arith.constant dense<0.000000e+00> : vector<2x8xf32>
    %97 = vector.multi_reduction <add>, %96, %cst_40 [2] : vector<2x8x8xf32> to vector<2x8xf32>
    %98 = vector.shape_cast %97 : vector<2x8xf32> to vector<2x8x1xf32>
    %99 = tpu.reciprocal %98 {approx = true} : vector<2x8x1xf32> -> vector<2x8x1xf32>
    %100 = vector.broadcast %99 : vector<2x8x1xf32> to vector<2x8x8xf32>
    %101 = arith.mulf %96, %100 : vector<2x8x8xf32>
    "tpu.trace_start"() <{level = 10 : i32, message = "bqk,bkd->bqd"}> : () -> ()
    %cst_41 = arith.constant dense<0.000000e+00> : vector<2x8x32xf32>
    %102 = tpu.matmul %101, %63, %cst_41 {dimension_numbers = #tpu.dot_dimension_numbers<[2], [1], [1], [2], [0, 0, 0, 1, 1, 2], [0], [0]>} : vector<2x8x8xf32>, vector<2x8x32xf32>, vector<2x8x32xf32> -> vector<2x8x32xf32>
    "tpu.trace_stop"() : () -> ()
    %103 = vector.shape_cast %14 : vector<1x32xf32> to vector<1x1x32xf32>
    %104 = vector.broadcast %103 : vector<1x1x32xf32> to vector<2x8x32xf32>
    %105 = arith.mulf %102, %104 : vector<2x8x32xf32>
    %106 = arith.addf %85, %105 : vector<2x8x32xf32>
    %107 = vector.shape_cast %21 : vector<1x32xf32> to vector<1x1x32xf32>
    %108 = vector.broadcast %107 : vector<1x1x32xf32> to vector<2x8x32xf32>
    %109 = arith.mulf %61, %108 : vector<2x8x32xf32>
    "tpu.trace_start"() <{level = 10 : i32, message = "bqd,bkd->bqk"}> : () -> ()
    %cst_42 = arith.constant dense<0.000000e+00> : vector<2x8x8xf32>
    %110 = tpu.matmul %109, %62, %cst_42 {dimension_numbers = #tpu.dot_dimension_numbers<[2], [2], [1], [1], [0, 0, 0, 1, 1, 1], [0], [0]>} : vector<2x8x32xf32>, vector<2x8x32xf32>, vector<2x8x8xf32> -> vector<2x8x8xf32>
    "tpu.trace_stop"() : () -> ()
    %cst_43 = arith.constant 0.353553385 : f32
    %111 = vector.broadcast %cst_43 : f32 to vector<2x8x8xf32>
    %112 = arith.mulf %110, %111 : vector<2x8x8xf32>
    %cst_44 = arith.constant dense<0xFF800000> : vector<2x8xf32>
    %113 = vector.multi_reduction <maximumf>, %112, %cst_44 [2] : vector<2x8x8xf32> to vector<2x8xf32>
    %114 = vector.shape_cast %113 : vector<2x8xf32> to vector<2x8x1xf32>
    %115 = vector.broadcast %114 : vector<2x8x1xf32> to vector<2x8x8xf32>
    %116 = arith.subf %112, %115 : vector<2x8x8xf32>
    %117 = math.exp %116 : vector<2x8x8xf32>
    %cst_45 = arith.constant dense<0.000000e+00> : vector<2x8xf32>
    %118 = vector.multi_reduction <add>, %117, %cst_45 [2] : vector<2x8x8xf32> to vector<2x8xf32>
    %119 = vector.shape_cast %118 : vector<2x8xf32> to vector<2x8x1xf32>
    %120 = tpu.reciprocal %119 {approx = true} : vector<2x8x1xf32> -> vector<2x8x1xf32>
    %121 = vector.broadcast %120 : vector<2x8x1xf32> to vector<2x8x8xf32>
    %122 = arith.mulf %117, %121 : vector<2x8x8xf32>
    "tpu.trace_start"() <{level = 10 : i32, message = "bqk,bkd->bqd"}> : () -> ()
    %cst_46 = arith.constant dense<0.000000e+00> : vector<2x8x32xf32>
    %123 = tpu.matmul %122, %63, %cst_46 {dimension_numbers = #tpu.dot_dimension_numbers<[2], [1], [1], [2], [0, 0, 0, 1, 1, 2], [0], [0]>} : vector<2x8x8xf32>, vector<2x8x32xf32>, vector<2x8x32xf32> -> vector<2x8x32xf32>
    "tpu.trace_stop"() : () -> ()
    %124 = vector.shape_cast %21 : vector<1x32xf32> to vector<1x1x32xf32>
    %125 = vector.broadcast %124 : vector<1x1x32xf32> to vector<2x8x32xf32>
    %126 = arith.mulf %123, %125 : vector<2x8x32xf32>
    %127 = arith.addf %106, %126 : vector<2x8x32xf32>
    %128 = vector.shape_cast %28 : vector<1x32xf32> to vector<1x1x32xf32>
    %129 = vector.broadcast %128 : vector<1x1x32xf32> to vector<2x8x32xf32>
    %130 = arith.mulf %61, %129 : vector<2x8x32xf32>
    "tpu.trace_start"() <{level = 10 : i32, message = "bqd,bkd->bqk"}> : () -> ()
    %cst_47 = arith.constant dense<0.000000e+00> : vector<2x8x8xf32>
    %131 = tpu.matmul %130, %62, %cst_47 {dimension_numbers = #tpu.dot_dimension_numbers<[2], [2], [1], [1], [0, 0, 0, 1, 1, 1], [0], [0]>} : vector<2x8x32xf32>, vector<2x8x32xf32>, vector<2x8x8xf32> -> vector<2x8x8xf32>
    "tpu.trace_stop"() : () -> ()
    %cst_48 = arith.constant 0.353553385 : f32
    %132 = vector.broadcast %cst_48 : f32 to vector<2x8x8xf32>
    %133 = arith.mulf %131, %132 : vector<2x8x8xf32>
    %cst_49 = arith.constant dense<0xFF800000> : vector<2x8xf32>
    %134 = vector.multi_reduction <maximumf>, %133, %cst_49 [2] : vector<2x8x8xf32> to vector<2x8xf32>
    %135 = vector.shape_cast %134 : vector<2x8xf32> to vector<2x8x1xf32>
    %136 = vector.broadcast %135 : vector<2x8x1xf32> to vector<2x8x8xf32>
    %137 = arith.subf %133, %136 : vector<2x8x8xf32>
    %138 = math.exp %137 : vector<2x8x8xf32>
    %cst_50 = arith.constant dense<0.000000e+00> : vector<2x8xf32>
    %139 = vector.multi_reduction <add>, %138, %cst_50 [2] : vector<2x8x8xf32> to vector<2x8xf32>
    %140 = vector.shape_cast %139 : vector<2x8xf32> to vector<2x8x1xf32>
    %141 = tpu.reciprocal %140 {approx = true} : vector<2x8x1xf32> -> vector<2x8x1xf32>
    %142 = vector.broadcast %141 : vector<2x8x1xf32> to vector<2x8x8xf32>
    %143 = arith.mulf %138, %142 : vector<2x8x8xf32>
    "tpu.trace_start"() <{level = 10 : i32, message = "bqk,bkd->bqd"}> : () -> ()
    %cst_51 = arith.constant dense<0.000000e+00> : vector<2x8x32xf32>
    %144 = tpu.matmul %143, %63, %cst_51 {dimension_numbers = #tpu.dot_dimension_numbers<[2], [1], [1], [2], [0, 0, 0, 1, 1, 2], [0], [0]>} : vector<2x8x8xf32>, vector<2x8x32xf32>, vector<2x8x32xf32> -> vector<2x8x32xf32>
    "tpu.trace_stop"() : () -> ()
    %145 = vector.shape_cast %28 : vector<1x32xf32> to vector<1x1x32xf32>
    %146 = vector.broadcast %145 : vector<1x1x32xf32> to vector<2x8x32xf32>
    %147 = arith.mulf %144, %146 : vector<2x8x32xf32>
    %148 = arith.addf %127, %147 : vector<2x8x32xf32>
    %149 = vector.shape_cast %148 : vector<2x8x32xf32> to vector<16x32xf32>
    %150 = vector.extract_strided_slice %46 {offsets = [0, 0], sizes = [32, 32], strides = [1, 1]} : vector<32x96xf32> to vector<32x32xf32>
    %cst_52 = arith.constant dense<0.000000e+00> : vector<16x32xf32>
    %151 = tpu.matmul %149, %150, %cst_52 {dimension_numbers = #tpu.dot_dimension_numbers<[1], [0], [0], [1], [0, 0, 1, 1], [], []>} : vector<16x32xf32>, vector<32x32xf32>, vector<16x32xf32> -> vector<16x32xf32>
    %152 = vector.extract_strided_slice %48 {offsets = [0, 0], sizes = [1, 32], strides = [1, 1]} : vector<1x96xf32> to vector<1x32xf32>
    %153 = vector.broadcast %152 : vector<1x32xf32> to vector<16x32xf32>
    %154 = arith.addf %151, %153 : vector<16x32xf32>
    %155 = arith.addf %38, %154 : vector<16x32xf32>
    %156 = vector.extract_strided_slice %50 {offsets = [0, 0], sizes = [1, 32], strides = [1, 1]} : vector<6x32xf32> to vector<1x32xf32>
    %157 = vector.extract_strided_slice %50 {offsets = [1, 0], sizes = [1, 32], strides = [1, 1]} : vector<6x32xf32> to vector<1x32xf32>
    %cst_53 = arith.constant dense<0.000000e+00> : vector<16xf32>
    %158 = vector.multi_reduction <add>, %155, %cst_53 [1] : vector<16x32xf32> to vector<16xf32>
    %159 = vector.shape_cast %158 : vector<16xf32> to vector<16x1xf32>
    %cst_54 = arith.constant 3.200000e+01 : f32
    %160 = vector.broadcast %cst_54 : f32 to vector<16x1xf32>
    %161 = arith.divf %159, %160 : vector<16x1xf32>
    %162 = arith.mulf %155, %155 : vector<16x32xf32>
    %cst_55 = arith.constant dense<0.000000e+00> : vector<16xf32>
    %163 = vector.multi_reduction <add>, %162, %cst_55 [1] : vector<16x32xf32> to vector<16xf32>
    %164 = vector.shape_cast %163 : vector<16xf32> to vector<16x1xf32>
    %cst_56 = arith.constant 3.200000e+01 : f32
    %165 = vector.broadcast %cst_56 : f32 to vector<16x1xf32>
    %166 = arith.divf %164, %165 : vector<16x1xf32>
    %167 = arith.mulf %161, %161 : vector<16x1xf32>
    %168 = arith.subf %166, %167 : vector<16x1xf32>
    %169 = vector.broadcast %161 : vector<16x1xf32> to vector<16x32xf32>
    %170 = arith.subf %155, %169 : vector<16x32xf32>
    %cst_57 = arith.constant 9.99999974E-6 : f32
    %171 = vector.broadcast %cst_57 : f32 to vector<16x1xf32>
    %172 = arith.addf %168, %171 : vector<16x1xf32>
    %173 = math.rsqrt %172 : vector<16x1xf32>
    %174 = vector.broadcast %173 : vector<16x1xf32> to vector<16x32xf32>
    %175 = arith.mulf %170, %174 : vector<16x32xf32>
    %176 = vector.broadcast %156 : vector<1x32xf32> to vector<16x32xf32>
    %177 = arith.mulf %175, %176 : vector<16x32xf32>
    %178 = vector.broadcast %157 : vector<1x32xf32> to vector<16x32xf32>
    %179 = arith.addf %177, %178 : vector<16x32xf32>
    %180 = vector.extract_strided_slice %46 {offsets = [0, 32], sizes = [32, 32], strides = [1, 1]} : vector<32x96xf32> to vector<32x32xf32>
    %cst_58 = arith.constant dense<0.000000e+00> : vector<16x32xf32>
    %181 = tpu.matmul %179, %180, %cst_58 {dimension_numbers = #tpu.dot_dimension_numbers<[1], [0], [0], [1], [0, 0, 1, 1], [], []>} : vector<16x32xf32>, vector<32x32xf32>, vector<16x32xf32> -> vector<16x32xf32>
    %182 = vector.extract_strided_slice %48 {offsets = [0, 32], sizes = [1, 32], strides = [1, 1]} : vector<1x96xf32> to vector<1x32xf32>
    %183 = vector.broadcast %182 : vector<1x32xf32> to vector<16x32xf32>
    %184 = arith.addf %181, %183 : vector<16x32xf32>
    %185 = vector.extract_strided_slice %44 {offsets = [0, 0], sizes = [32, 32], strides = [1, 1]} : vector<32x128xf32> to vector<32x32xf32>
    %186 = vector.extract_strided_slice %44 {offsets = [0, 32], sizes = [32, 32], strides = [1, 1]} : vector<32x128xf32> to vector<32x32xf32>
    %187 = vector.shape_cast %184 : vector<16x32xf32> to vector<2x8x32xf32>
    %188 = vector.shape_cast %185 : vector<32x32xf32> to vector<2x16x32xf32>
    %189 = vector.shape_cast %186 : vector<32x32xf32> to vector<2x16x32xf32>
    %cst_59 = arith.constant 0.000000e+00 : f32
    %190 = vector.broadcast %cst_59 : f32 to vector<2x8x32xf32>
    %191 = vector.shape_cast %7 : vector<1x32xf32> to vector<1x1x32xf32>
    %192 = vector.broadcast %191 : vector<1x1x32xf32> to vector<2x8x32xf32>
    %193 = arith.mulf %187, %192 : vector<2x8x32xf32>
    "tpu.trace_start"() <{level = 10 : i32, message = "bqd,bkd->bqk"}> : () -> ()
    %cst_60 = arith.constant dense<0.000000e+00> : vector<2x8x16xf32>
    %194 = tpu.matmul %193, %188, %cst_60 {dimension_numbers = #tpu.dot_dimension_numbers<[2], [2], [1], [1], [0, 0, 0, 1, 1, 1], [0], [0]>} : vector<2x8x32xf32>, vector<2x16x32xf32>, vector<2x8x16xf32> -> vector<2x8x16xf32>
    "tpu.trace_stop"() : () -> ()
    %cst_61 = arith.constant 0.353553385 : f32
    %195 = vector.broadcast %cst_61 : f32 to vector<2x8x16xf32>
    %196 = arith.mulf %194, %195 : vector<2x8x16xf32>
    %cst_62 = arith.constant dense<0xFF800000> : vector<2x8xf32>
    %197 = vector.multi_reduction <maximumf>, %196, %cst_62 [2] : vector<2x8x16xf32> to vector<2x8xf32>
    %198 = vector.shape_cast %197 : vector<2x8xf32> to vector<2x8x1xf32>
    %199 = vector.broadcast %198 : vector<2x8x1xf32> to vector<2x8x16xf32>
    %200 = arith.subf %196, %199 : vector<2x8x16xf32>
    %201 = math.exp %200 : vector<2x8x16xf32>
    %cst_63 = arith.constant dense<0.000000e+00> : vector<2x8xf32>
    %202 = vector.multi_reduction <add>, %201, %cst_63 [2] : vector<2x8x16xf32> to vector<2x8xf32>
    %203 = vector.shape_cast %202 : vector<2x8xf32> to vector<2x8x1xf32>
    %204 = tpu.reciprocal %203 {approx = true} : vector<2x8x1xf32> -> vector<2x8x1xf32>
    %205 = vector.broadcast %204 : vector<2x8x1xf32> to vector<2x8x16xf32>
    %206 = arith.mulf %201, %205 : vector<2x8x16xf32>
    "tpu.trace_start"() <{level = 10 : i32, message = "bqk,bkd->bqd"}> : () -> ()
    %cst_64 = arith.constant dense<0.000000e+00> : vector<2x8x32xf32>
    %207 = tpu.matmul %206, %189, %cst_64 {dimension_numbers = #tpu.dot_dimension_numbers<[2], [1], [1], [2], [0, 0, 0, 1, 1, 2], [0], [0]>} : vector<2x8x16xf32>, vector<2x16x32xf32>, vector<2x8x32xf32> -> vector<2x8x32xf32>
    "tpu.trace_stop"() : () -> ()
    %208 = vector.shape_cast %7 : vector<1x32xf32> to vector<1x1x32xf32>
    %209 = vector.broadcast %208 : vector<1x1x32xf32> to vector<2x8x32xf32>
    %210 = arith.mulf %207, %209 : vector<2x8x32xf32>
    %211 = arith.addf %190, %210 : vector<2x8x32xf32>
    %212 = vector.shape_cast %14 : vector<1x32xf32> to vector<1x1x32xf32>
    %213 = vector.broadcast %212 : vector<1x1x32xf32> to vector<2x8x32xf32>
    %214 = arith.mulf %187, %213 : vector<2x8x32xf32>
    "tpu.trace_start"() <{level = 10 : i32, message = "bqd,bkd->bqk"}> : () -> ()
    %cst_65 = arith.constant dense<0.000000e+00> : vector<2x8x16xf32>
    %215 = tpu.matmul %214, %188, %cst_65 {dimension_numbers = #tpu.dot_dimension_numbers<[2], [2], [1], [1], [0, 0, 0, 1, 1, 1], [0], [0]>} : vector<2x8x32xf32>, vector<2x16x32xf32>, vector<2x8x16xf32> -> vector<2x8x16xf32>
    "tpu.trace_stop"() : () -> ()
    %cst_66 = arith.constant 0.353553385 : f32
    %216 = vector.broadcast %cst_66 : f32 to vector<2x8x16xf32>
    %217 = arith.mulf %215, %216 : vector<2x8x16xf32>
    %cst_67 = arith.constant dense<0xFF800000> : vector<2x8xf32>
    %218 = vector.multi_reduction <maximumf>, %217, %cst_67 [2] : vector<2x8x16xf32> to vector<2x8xf32>
    %219 = vector.shape_cast %218 : vector<2x8xf32> to vector<2x8x1xf32>
    %220 = vector.broadcast %219 : vector<2x8x1xf32> to vector<2x8x16xf32>
    %221 = arith.subf %217, %220 : vector<2x8x16xf32>
    %222 = math.exp %221 : vector<2x8x16xf32>
    %cst_68 = arith.constant dense<0.000000e+00> : vector<2x8xf32>
    %223 = vector.multi_reduction <add>, %222, %cst_68 [2] : vector<2x8x16xf32> to vector<2x8xf32>
    %224 = vector.shape_cast %223 : vector<2x8xf32> to vector<2x8x1xf32>
    %225 = tpu.reciprocal %224 {approx = true} : vector<2x8x1xf32> -> vector<2x8x1xf32>
    %226 = vector.broadcast %225 : vector<2x8x1xf32> to vector<2x8x16xf32>
    %227 = arith.mulf %222, %226 : vector<2x8x16xf32>
    "tpu.trace_start"() <{level = 10 : i32, message = "bqk,bkd->bqd"}> : () -> ()
    %cst_69 = arith.constant dense<0.000000e+00> : vector<2x8x32xf32>
    %228 = tpu.matmul %227, %189, %cst_69 {dimension_numbers = #tpu.dot_dimension_numbers<[2], [1], [1], [2], [0, 0, 0, 1, 1, 2], [0], [0]>} : vector<2x8x16xf32>, vector<2x16x32xf32>, vector<2x8x32xf32> -> vector<2x8x32xf32>
    "tpu.trace_stop"() : () -> ()
    %229 = vector.shape_cast %14 : vector<1x32xf32> to vector<1x1x32xf32>
    %230 = vector.broadcast %229 : vector<1x1x32xf32> to vector<2x8x32xf32>
    %231 = arith.mulf %228, %230 : vector<2x8x32xf32>
    %232 = arith.addf %211, %231 : vector<2x8x32xf32>
    %233 = vector.shape_cast %21 : vector<1x32xf32> to vector<1x1x32xf32>
    %234 = vector.broadcast %233 : vector<1x1x32xf32> to vector<2x8x32xf32>
    %235 = arith.mulf %187, %234 : vector<2x8x32xf32>
    "tpu.trace_start"() <{level = 10 : i32, message = "bqd,bkd->bqk"}> : () -> ()
    %cst_70 = arith.constant dense<0.000000e+00> : vector<2x8x16xf32>
    %236 = tpu.matmul %235, %188, %cst_70 {dimension_numbers = #tpu.dot_dimension_numbers<[2], [2], [1], [1], [0, 0, 0, 1, 1, 1], [0], [0]>} : vector<2x8x32xf32>, vector<2x16x32xf32>, vector<2x8x16xf32> -> vector<2x8x16xf32>
    "tpu.trace_stop"() : () -> ()
    %cst_71 = arith.constant 0.353553385 : f32
    %237 = vector.broadcast %cst_71 : f32 to vector<2x8x16xf32>
    %238 = arith.mulf %236, %237 : vector<2x8x16xf32>
    %cst_72 = arith.constant dense<0xFF800000> : vector<2x8xf32>
    %239 = vector.multi_reduction <maximumf>, %238, %cst_72 [2] : vector<2x8x16xf32> to vector<2x8xf32>
    %240 = vector.shape_cast %239 : vector<2x8xf32> to vector<2x8x1xf32>
    %241 = vector.broadcast %240 : vector<2x8x1xf32> to vector<2x8x16xf32>
    %242 = arith.subf %238, %241 : vector<2x8x16xf32>
    %243 = math.exp %242 : vector<2x8x16xf32>
    %cst_73 = arith.constant dense<0.000000e+00> : vector<2x8xf32>
    %244 = vector.multi_reduction <add>, %243, %cst_73 [2] : vector<2x8x16xf32> to vector<2x8xf32>
    %245 = vector.shape_cast %244 : vector<2x8xf32> to vector<2x8x1xf32>
    %246 = tpu.reciprocal %245 {approx = true} : vector<2x8x1xf32> -> vector<2x8x1xf32>
    %247 = vector.broadcast %246 : vector<2x8x1xf32> to vector<2x8x16xf32>
    %248 = arith.mulf %243, %247 : vector<2x8x16xf32>
    "tpu.trace_start"() <{level = 10 : i32, message = "bqk,bkd->bqd"}> : () -> ()
    %cst_74 = arith.constant dense<0.000000e+00> : vector<2x8x32xf32>
    %249 = tpu.matmul %248, %189, %cst_74 {dimension_numbers = #tpu.dot_dimension_numbers<[2], [1], [1], [2], [0, 0, 0, 1, 1, 2], [0], [0]>} : vector<2x8x16xf32>, vector<2x16x32xf32>, vector<2x8x32xf32> -> vector<2x8x32xf32>
    "tpu.trace_stop"() : () -> ()
    %250 = vector.shape_cast %21 : vector<1x32xf32> to vector<1x1x32xf32>
    %251 = vector.broadcast %250 : vector<1x1x32xf32> to vector<2x8x32xf32>
    %252 = arith.mulf %249, %251 : vector<2x8x32xf32>
    %253 = arith.addf %232, %252 : vector<2x8x32xf32>
    %254 = vector.shape_cast %28 : vector<1x32xf32> to vector<1x1x32xf32>
    %255 = vector.broadcast %254 : vector<1x1x32xf32> to vector<2x8x32xf32>
    %256 = arith.mulf %187, %255 : vector<2x8x32xf32>
    "tpu.trace_start"() <{level = 10 : i32, message = "bqd,bkd->bqk"}> : () -> ()
    %cst_75 = arith.constant dense<0.000000e+00> : vector<2x8x16xf32>
    %257 = tpu.matmul %256, %188, %cst_75 {dimension_numbers = #tpu.dot_dimension_numbers<[2], [2], [1], [1], [0, 0, 0, 1, 1, 1], [0], [0]>} : vector<2x8x32xf32>, vector<2x16x32xf32>, vector<2x8x16xf32> -> vector<2x8x16xf32>
    "tpu.trace_stop"() : () -> ()
    %cst_76 = arith.constant 0.353553385 : f32
    %258 = vector.broadcast %cst_76 : f32 to vector<2x8x16xf32>
    %259 = arith.mulf %257, %258 : vector<2x8x16xf32>
    %cst_77 = arith.constant dense<0xFF800000> : vector<2x8xf32>
    %260 = vector.multi_reduction <maximumf>, %259, %cst_77 [2] : vector<2x8x16xf32> to vector<2x8xf32>
    %261 = vector.shape_cast %260 : vector<2x8xf32> to vector<2x8x1xf32>
    %262 = vector.broadcast %261 : vector<2x8x1xf32> to vector<2x8x16xf32>
    %263 = arith.subf %259, %262 : vector<2x8x16xf32>
    %264 = math.exp %263 : vector<2x8x16xf32>
    %cst_78 = arith.constant dense<0.000000e+00> : vector<2x8xf32>
    %265 = vector.multi_reduction <add>, %264, %cst_78 [2] : vector<2x8x16xf32> to vector<2x8xf32>
    %266 = vector.shape_cast %265 : vector<2x8xf32> to vector<2x8x1xf32>
    %267 = tpu.reciprocal %266 {approx = true} : vector<2x8x1xf32> -> vector<2x8x1xf32>
    %268 = vector.broadcast %267 : vector<2x8x1xf32> to vector<2x8x16xf32>
    %269 = arith.mulf %264, %268 : vector<2x8x16xf32>
    "tpu.trace_start"() <{level = 10 : i32, message = "bqk,bkd->bqd"}> : () -> ()
    %cst_79 = arith.constant dense<0.000000e+00> : vector<2x8x32xf32>
    %270 = tpu.matmul %269, %189, %cst_79 {dimension_numbers = #tpu.dot_dimension_numbers<[2], [1], [1], [2], [0, 0, 0, 1, 1, 2], [0], [0]>} : vector<2x8x16xf32>, vector<2x16x32xf32>, vector<2x8x32xf32> -> vector<2x8x32xf32>
    "tpu.trace_stop"() : () -> ()
    %271 = vector.shape_cast %28 : vector<1x32xf32> to vector<1x1x32xf32>
    %272 = vector.broadcast %271 : vector<1x1x32xf32> to vector<2x8x32xf32>
    %273 = arith.mulf %270, %272 : vector<2x8x32xf32>
    %274 = arith.addf %253, %273 : vector<2x8x32xf32>
    %275 = vector.shape_cast %274 : vector<2x8x32xf32> to vector<16x32xf32>
    %276 = vector.extract_strided_slice %46 {offsets = [0, 64], sizes = [32, 32], strides = [1, 1]} : vector<32x96xf32> to vector<32x32xf32>
    %cst_80 = arith.constant dense<0.000000e+00> : vector<16x32xf32>
    %277 = tpu.matmul %275, %276, %cst_80 {dimension_numbers = #tpu.dot_dimension_numbers<[1], [0], [0], [1], [0, 0, 1, 1], [], []>} : vector<16x32xf32>, vector<32x32xf32>, vector<16x32xf32> -> vector<16x32xf32>
    %278 = vector.extract_strided_slice %48 {offsets = [0, 64], sizes = [1, 32], strides = [1, 1]} : vector<1x96xf32> to vector<1x32xf32>
    %279 = vector.broadcast %278 : vector<1x32xf32> to vector<16x32xf32>
    %280 = arith.addf %277, %279 : vector<16x32xf32>
    %281 = arith.addf %179, %280 : vector<16x32xf32>
    %282 = vector.extract_strided_slice %50 {offsets = [2, 0], sizes = [1, 32], strides = [1, 1]} : vector<6x32xf32> to vector<1x32xf32>
    %283 = vector.extract_strided_slice %50 {offsets = [3, 0], sizes = [1, 32], strides = [1, 1]} : vector<6x32xf32> to vector<1x32xf32>
    %cst_81 = arith.constant dense<0.000000e+00> : vector<16xf32>
    %284 = vector.multi_reduction <add>, %281, %cst_81 [1] : vector<16x32xf32> to vector<16xf32>
    %285 = vector.shape_cast %284 : vector<16xf32> to vector<16x1xf32>
    %cst_82 = arith.constant 3.200000e+01 : f32
    %286 = vector.broadcast %cst_82 : f32 to vector<16x1xf32>
    %287 = arith.divf %285, %286 : vector<16x1xf32>
    %288 = arith.mulf %281, %281 : vector<16x32xf32>
    %cst_83 = arith.constant dense<0.000000e+00> : vector<16xf32>
    %289 = vector.multi_reduction <add>, %288, %cst_83 [1] : vector<16x32xf32> to vector<16xf32>
    %290 = vector.shape_cast %289 : vector<16xf32> to vector<16x1xf32>
    %cst_84 = arith.constant 3.200000e+01 : f32
    %291 = vector.broadcast %cst_84 : f32 to vector<16x1xf32>
    %292 = arith.divf %290, %291 : vector<16x1xf32>
    %293 = arith.mulf %287, %287 : vector<16x1xf32>
    %294 = arith.subf %292, %293 : vector<16x1xf32>
    %295 = vector.broadcast %287 : vector<16x1xf32> to vector<16x32xf32>
    %296 = arith.subf %281, %295 : vector<16x32xf32>
    %cst_85 = arith.constant 9.99999974E-6 : f32
    %297 = vector.broadcast %cst_85 : f32 to vector<16x1xf32>
    %298 = arith.addf %294, %297 : vector<16x1xf32>
    %299 = math.rsqrt %298 : vector<16x1xf32>
    %300 = vector.broadcast %299 : vector<16x1xf32> to vector<16x32xf32>
    %301 = arith.mulf %296, %300 : vector<16x32xf32>
    %302 = vector.broadcast %282 : vector<1x32xf32> to vector<16x32xf32>
    %303 = arith.mulf %301, %302 : vector<16x32xf32>
    %304 = vector.broadcast %283 : vector<1x32xf32> to vector<16x32xf32>
    %305 = arith.addf %303, %304 : vector<16x32xf32>
    %c0_86 = arith.constant 0 : index
    %c0_87 = arith.constant 0 : index
    %c0_88 = arith.constant 0 : index
    %306 = vector.load %arg10[%c0_86, %c0_87, %c0_88] : memref<2x32x64xf32, #tpu.memory_space<vmem>>, vector<1x32x64xf32>
    %307 = vector.shape_cast %306 : vector<1x32x64xf32> to vector<32x64xf32>
    %cst_89 = arith.constant dense<0.000000e+00> : vector<16x64xf32>
    %308 = tpu.matmul %305, %307, %cst_89 {dimension_numbers = #tpu.dot_dimension_numbers<[1], [0], [0], [1], [0, 0, 1, 1], [], []>} : vector<16x32xf32>, vector<32x64xf32>, vector<16x64xf32> -> vector<16x64xf32>
    %c0_90 = arith.constant 0 : index
    %c0_91 = arith.constant 0 : index
    %c0_92 = arith.constant 0 : index
    %309 = vector.load %arg11[%c0_90, %c0_91, %c0_92] : memref<2x1x64xf32, #tpu.memory_space<vmem>>, vector<1x1x64xf32>
    %310 = vector.shape_cast %309 : vector<1x1x64xf32> to vector<1x64xf32>
    %311 = vector.broadcast %310 : vector<1x64xf32> to vector<16x64xf32>
    %312 = arith.addf %308, %311 : vector<16x64xf32>
    %cst_93 = arith.constant 0.000000e+00 : f32
    %313 = vector.broadcast %cst_93 : f32 to vector<16x64xf32>
    %314 = arith.maximumf %312, %313 : vector<16x64xf32>
    %c0_94 = arith.constant 0 : index
    %c0_95 = arith.constant 0 : index
    %c0_96 = arith.constant 0 : index
    %315 = vector.load %arg12[%c0_94, %c0_95, %c0_96] : memref<2x64x32xf32, #tpu.memory_space<vmem>>, vector<1x64x32xf32>
    %316 = vector.shape_cast %315 : vector<1x64x32xf32> to vector<64x32xf32>
    %cst_97 = arith.constant dense<0.000000e+00> : vector<16x32xf32>
    %317 = tpu.matmul %314, %316, %cst_97 {dimension_numbers = #tpu.dot_dimension_numbers<[1], [0], [0], [1], [0, 0, 1, 1], [], []>} : vector<16x64xf32>, vector<64x32xf32>, vector<16x32xf32> -> vector<16x32xf32>
    %c0_98 = arith.constant 0 : index
    %c0_99 = arith.constant 0 : index
    %c0_100 = arith.constant 0 : index
    %318 = vector.load %arg13[%c0_98, %c0_99, %c0_100] : memref<2x1x32xf32, #tpu.memory_space<vmem>>, vector<1x1x32xf32>
    %319 = vector.shape_cast %318 : vector<1x1x32xf32> to vector<1x32xf32>
    %320 = vector.broadcast %319 : vector<1x32xf32> to vector<16x32xf32>
    %321 = arith.addf %317, %320 : vector<16x32xf32>
    %322 = arith.addf %305, %321 : vector<16x32xf32>
    %323 = vector.extract_strided_slice %50 {offsets = [4, 0], sizes = [1, 32], strides = [1, 1]} : vector<6x32xf32> to vector<1x32xf32>
    %324 = vector.extract_strided_slice %50 {offsets = [5, 0], sizes = [1, 32], strides = [1, 1]} : vector<6x32xf32> to vector<1x32xf32>
    %cst_101 = arith.constant dense<0.000000e+00> : vector<16xf32>
    %325 = vector.multi_reduction <add>, %322, %cst_101 [1] : vector<16x32xf32> to vector<16xf32>
    %326 = vector.shape_cast %325 : vector<16xf32> to vector<16x1xf32>
    %cst_102 = arith.constant 3.200000e+01 : f32
    %327 = vector.broadcast %cst_102 : f32 to vector<16x1xf32>
    %328 = arith.divf %326, %327 : vector<16x1xf32>
    %329 = arith.mulf %322, %322 : vector<16x32xf32>
    %cst_103 = arith.constant dense<0.000000e+00> : vector<16xf32>
    %330 = vector.multi_reduction <add>, %329, %cst_103 [1] : vector<16x32xf32> to vector<16xf32>
    %331 = vector.shape_cast %330 : vector<16xf32> to vector<16x1xf32>
    %cst_104 = arith.constant 3.200000e+01 : f32
    %332 = vector.broadcast %cst_104 : f32 to vector<16x1xf32>
    %333 = arith.divf %331, %332 : vector<16x1xf32>
    %334 = arith.mulf %328, %328 : vector<16x1xf32>
    %335 = arith.subf %333, %334 : vector<16x1xf32>
    %336 = vector.broadcast %328 : vector<16x1xf32> to vector<16x32xf32>
    %337 = arith.subf %322, %336 : vector<16x32xf32>
    %cst_105 = arith.constant 9.99999974E-6 : f32
    %338 = vector.broadcast %cst_105 : f32 to vector<16x1xf32>
    %339 = arith.addf %335, %338 : vector<16x1xf32>
    %340 = math.rsqrt %339 : vector<16x1xf32>
    %341 = vector.broadcast %340 : vector<16x1xf32> to vector<16x32xf32>
    %342 = arith.mulf %337, %341 : vector<16x32xf32>
    %343 = vector.broadcast %323 : vector<1x32xf32> to vector<16x32xf32>
    %344 = arith.mulf %342, %343 : vector<16x32xf32>
    %345 = vector.broadcast %324 : vector<1x32xf32> to vector<16x32xf32>
    %346 = arith.addf %344, %345 : vector<16x32xf32>
    %c1 = arith.constant 1 : index
    %c0_106 = arith.constant 0 : index
    %c0_107 = arith.constant 0 : index
    %347 = vector.load %arg6[%c1, %c0_106, %c0_107] : memref<2x32x96xf32, #tpu.memory_space<vmem>>, vector<1x32x96xf32>
    %348 = vector.shape_cast %347 : vector<1x32x96xf32> to vector<32x96xf32>
    %c1_108 = arith.constant 1 : index
    %c0_109 = arith.constant 0 : index
    %c0_110 = arith.constant 0 : index
    %349 = vector.load %arg7[%c1_108, %c0_109, %c0_110] : memref<2x1x96xf32, #tpu.memory_space<vmem>>, vector<1x1x96xf32>
    %350 = vector.shape_cast %349 : vector<1x1x96xf32> to vector<1x96xf32>
    %c1_111 = arith.constant 1 : index
    %c0_112 = arith.constant 0 : index
    %c0_113 = arith.constant 0 : index
    %351 = vector.load %arg14[%c1_111, %c0_112, %c0_113] : memref<2x6x32xf32, #tpu.memory_space<vmem>>, vector<1x6x32xf32>
    %352 = vector.shape_cast %351 : vector<1x6x32xf32> to vector<6x32xf32>
    %c1_114 = arith.constant 1 : index
    %c0_115 = arith.constant 0 : index
    %c0_116 = arith.constant 0 : index
    %353 = vector.load %arg4[%c1_114, %c0_115, %c0_116] : memref<2x32x96xf32, #tpu.memory_space<vmem>>, vector<1x32x96xf32>
    %354 = vector.shape_cast %353 : vector<1x32x96xf32> to vector<32x96xf32>
    %cst_117 = arith.constant dense<0.000000e+00> : vector<16x96xf32>
    %355 = tpu.matmul %346, %354, %cst_117 {dimension_numbers = #tpu.dot_dimension_numbers<[1], [0], [0], [1], [0, 0, 1, 1], [], []>} : vector<16x32xf32>, vector<32x96xf32>, vector<16x96xf32> -> vector<16x96xf32>
    %c1_118 = arith.constant 1 : index
    %c0_119 = arith.constant 0 : index
    %c0_120 = arith.constant 0 : index
    %356 = vector.load %arg5[%c1_118, %c0_119, %c0_120] : memref<2x1x96xf32, #tpu.memory_space<vmem>>, vector<1x1x96xf32>
    %357 = vector.shape_cast %356 : vector<1x1x96xf32> to vector<1x96xf32>
    %358 = vector.broadcast %357 : vector<1x96xf32> to vector<16x96xf32>
    %359 = arith.addf %355, %358 : vector<16x96xf32>
    %360 = vector.extract_strided_slice %359 {offsets = [0, 0], sizes = [16, 32], strides = [1, 1]} : vector<16x96xf32> to vector<16x32xf32>
    %361 = vector.extract_strided_slice %359 {offsets = [0, 32], sizes = [16, 32], strides = [1, 1]} : vector<16x96xf32> to vector<16x32xf32>
    %362 = vector.extract_strided_slice %359 {offsets = [0, 64], sizes = [16, 32], strides = [1, 1]} : vector<16x96xf32> to vector<16x32xf32>
    %363 = vector.shape_cast %360 : vector<16x32xf32> to vector<2x8x32xf32>
    %364 = vector.shape_cast %361 : vector<16x32xf32> to vector<2x8x32xf32>
    %365 = vector.shape_cast %362 : vector<16x32xf32> to vector<2x8x32xf32>
    %cst_121 = arith.constant 0.000000e+00 : f32
    %366 = vector.broadcast %cst_121 : f32 to vector<2x8x32xf32>
    %367 = vector.shape_cast %7 : vector<1x32xf32> to vector<1x1x32xf32>
    %368 = vector.broadcast %367 : vector<1x1x32xf32> to vector<2x8x32xf32>
    %369 = arith.mulf %363, %368 : vector<2x8x32xf32>
    "tpu.trace_start"() <{level = 10 : i32, message = "bqd,bkd->bqk"}> : () -> ()
    %cst_122 = arith.constant dense<0.000000e+00> : vector<2x8x8xf32>
    %370 = tpu.matmul %369, %364, %cst_122 {dimension_numbers = #tpu.dot_dimension_numbers<[2], [2], [1], [1], [0, 0, 0, 1, 1, 1], [0], [0]>} : vector<2x8x32xf32>, vector<2x8x32xf32>, vector<2x8x8xf32> -> vector<2x8x8xf32>
    "tpu.trace_stop"() : () -> ()
    %cst_123 = arith.constant 0.353553385 : f32
    %371 = vector.broadcast %cst_123 : f32 to vector<2x8x8xf32>
    %372 = arith.mulf %370, %371 : vector<2x8x8xf32>
    %cst_124 = arith.constant dense<0xFF800000> : vector<2x8xf32>
    %373 = vector.multi_reduction <maximumf>, %372, %cst_124 [2] : vector<2x8x8xf32> to vector<2x8xf32>
    %374 = vector.shape_cast %373 : vector<2x8xf32> to vector<2x8x1xf32>
    %375 = vector.broadcast %374 : vector<2x8x1xf32> to vector<2x8x8xf32>
    %376 = arith.subf %372, %375 : vector<2x8x8xf32>
    %377 = math.exp %376 : vector<2x8x8xf32>
    %cst_125 = arith.constant dense<0.000000e+00> : vector<2x8xf32>
    %378 = vector.multi_reduction <add>, %377, %cst_125 [2] : vector<2x8x8xf32> to vector<2x8xf32>
    %379 = vector.shape_cast %378 : vector<2x8xf32> to vector<2x8x1xf32>
    %380 = tpu.reciprocal %379 {approx = true} : vector<2x8x1xf32> -> vector<2x8x1xf32>
    %381 = vector.broadcast %380 : vector<2x8x1xf32> to vector<2x8x8xf32>
    %382 = arith.mulf %377, %381 : vector<2x8x8xf32>
    "tpu.trace_start"() <{level = 10 : i32, message = "bqk,bkd->bqd"}> : () -> ()
    %cst_126 = arith.constant dense<0.000000e+00> : vector<2x8x32xf32>
    %383 = tpu.matmul %382, %365, %cst_126 {dimension_numbers = #tpu.dot_dimension_numbers<[2], [1], [1], [2], [0, 0, 0, 1, 1, 2], [0], [0]>} : vector<2x8x8xf32>, vector<2x8x32xf32>, vector<2x8x32xf32> -> vector<2x8x32xf32>
    "tpu.trace_stop"() : () -> ()
    %384 = vector.shape_cast %7 : vector<1x32xf32> to vector<1x1x32xf32>
    %385 = vector.broadcast %384 : vector<1x1x32xf32> to vector<2x8x32xf32>
    %386 = arith.mulf %383, %385 : vector<2x8x32xf32>
    %387 = arith.addf %366, %386 : vector<2x8x32xf32>
    %388 = vector.shape_cast %14 : vector<1x32xf32> to vector<1x1x32xf32>
    %389 = vector.broadcast %388 : vector<1x1x32xf32> to vector<2x8x32xf32>
    %390 = arith.mulf %363, %389 : vector<2x8x32xf32>
    "tpu.trace_start"() <{level = 10 : i32, message = "bqd,bkd->bqk"}> : () -> ()
    %cst_127 = arith.constant dense<0.000000e+00> : vector<2x8x8xf32>
    %391 = tpu.matmul %390, %364, %cst_127 {dimension_numbers = #tpu.dot_dimension_numbers<[2], [2], [1], [1], [0, 0, 0, 1, 1, 1], [0], [0]>} : vector<2x8x32xf32>, vector<2x8x32xf32>, vector<2x8x8xf32> -> vector<2x8x8xf32>
    "tpu.trace_stop"() : () -> ()
    %cst_128 = arith.constant 0.353553385 : f32
    %392 = vector.broadcast %cst_128 : f32 to vector<2x8x8xf32>
    %393 = arith.mulf %391, %392 : vector<2x8x8xf32>
    %cst_129 = arith.constant dense<0xFF800000> : vector<2x8xf32>
    %394 = vector.multi_reduction <maximumf>, %393, %cst_129 [2] : vector<2x8x8xf32> to vector<2x8xf32>
    %395 = vector.shape_cast %394 : vector<2x8xf32> to vector<2x8x1xf32>
    %396 = vector.broadcast %395 : vector<2x8x1xf32> to vector<2x8x8xf32>
    %397 = arith.subf %393, %396 : vector<2x8x8xf32>
    %398 = math.exp %397 : vector<2x8x8xf32>
    %cst_130 = arith.constant dense<0.000000e+00> : vector<2x8xf32>
    %399 = vector.multi_reduction <add>, %398, %cst_130 [2] : vector<2x8x8xf32> to vector<2x8xf32>
    %400 = vector.shape_cast %399 : vector<2x8xf32> to vector<2x8x1xf32>
    %401 = tpu.reciprocal %400 {approx = true} : vector<2x8x1xf32> -> vector<2x8x1xf32>
    %402 = vector.broadcast %401 : vector<2x8x1xf32> to vector<2x8x8xf32>
    %403 = arith.mulf %398, %402 : vector<2x8x8xf32>
    "tpu.trace_start"() <{level = 10 : i32, message = "bqk,bkd->bqd"}> : () -> ()
    %cst_131 = arith.constant dense<0.000000e+00> : vector<2x8x32xf32>
    %404 = tpu.matmul %403, %365, %cst_131 {dimension_numbers = #tpu.dot_dimension_numbers<[2], [1], [1], [2], [0, 0, 0, 1, 1, 2], [0], [0]>} : vector<2x8x8xf32>, vector<2x8x32xf32>, vector<2x8x32xf32> -> vector<2x8x32xf32>
    "tpu.trace_stop"() : () -> ()
    %405 = vector.shape_cast %14 : vector<1x32xf32> to vector<1x1x32xf32>
    %406 = vector.broadcast %405 : vector<1x1x32xf32> to vector<2x8x32xf32>
    %407 = arith.mulf %404, %406 : vector<2x8x32xf32>
    %408 = arith.addf %387, %407 : vector<2x8x32xf32>
    %409 = vector.shape_cast %21 : vector<1x32xf32> to vector<1x1x32xf32>
    %410 = vector.broadcast %409 : vector<1x1x32xf32> to vector<2x8x32xf32>
    %411 = arith.mulf %363, %410 : vector<2x8x32xf32>
    "tpu.trace_start"() <{level = 10 : i32, message = "bqd,bkd->bqk"}> : () -> ()
    %cst_132 = arith.constant dense<0.000000e+00> : vector<2x8x8xf32>
    %412 = tpu.matmul %411, %364, %cst_132 {dimension_numbers = #tpu.dot_dimension_numbers<[2], [2], [1], [1], [0, 0, 0, 1, 1, 1], [0], [0]>} : vector<2x8x32xf32>, vector<2x8x32xf32>, vector<2x8x8xf32> -> vector<2x8x8xf32>
    "tpu.trace_stop"() : () -> ()
    %cst_133 = arith.constant 0.353553385 : f32
    %413 = vector.broadcast %cst_133 : f32 to vector<2x8x8xf32>
    %414 = arith.mulf %412, %413 : vector<2x8x8xf32>
    %cst_134 = arith.constant dense<0xFF800000> : vector<2x8xf32>
    %415 = vector.multi_reduction <maximumf>, %414, %cst_134 [2] : vector<2x8x8xf32> to vector<2x8xf32>
    %416 = vector.shape_cast %415 : vector<2x8xf32> to vector<2x8x1xf32>
    %417 = vector.broadcast %416 : vector<2x8x1xf32> to vector<2x8x8xf32>
    %418 = arith.subf %414, %417 : vector<2x8x8xf32>
    %419 = math.exp %418 : vector<2x8x8xf32>
    %cst_135 = arith.constant dense<0.000000e+00> : vector<2x8xf32>
    %420 = vector.multi_reduction <add>, %419, %cst_135 [2] : vector<2x8x8xf32> to vector<2x8xf32>
    %421 = vector.shape_cast %420 : vector<2x8xf32> to vector<2x8x1xf32>
    %422 = tpu.reciprocal %421 {approx = true} : vector<2x8x1xf32> -> vector<2x8x1xf32>
    %423 = vector.broadcast %422 : vector<2x8x1xf32> to vector<2x8x8xf32>
    %424 = arith.mulf %419, %423 : vector<2x8x8xf32>
    "tpu.trace_start"() <{level = 10 : i32, message = "bqk,bkd->bqd"}> : () -> ()
    %cst_136 = arith.constant dense<0.000000e+00> : vector<2x8x32xf32>
    %425 = tpu.matmul %424, %365, %cst_136 {dimension_numbers = #tpu.dot_dimension_numbers<[2], [1], [1], [2], [0, 0, 0, 1, 1, 2], [0], [0]>} : vector<2x8x8xf32>, vector<2x8x32xf32>, vector<2x8x32xf32> -> vector<2x8x32xf32>
    "tpu.trace_stop"() : () -> ()
    %426 = vector.shape_cast %21 : vector<1x32xf32> to vector<1x1x32xf32>
    %427 = vector.broadcast %426 : vector<1x1x32xf32> to vector<2x8x32xf32>
    %428 = arith.mulf %425, %427 : vector<2x8x32xf32>
    %429 = arith.addf %408, %428 : vector<2x8x32xf32>
    %430 = vector.shape_cast %28 : vector<1x32xf32> to vector<1x1x32xf32>
    %431 = vector.broadcast %430 : vector<1x1x32xf32> to vector<2x8x32xf32>
    %432 = arith.mulf %363, %431 : vector<2x8x32xf32>
    "tpu.trace_start"() <{level = 10 : i32, message = "bqd,bkd->bqk"}> : () -> ()
    %cst_137 = arith.constant dense<0.000000e+00> : vector<2x8x8xf32>
    %433 = tpu.matmul %432, %364, %cst_137 {dimension_numbers = #tpu.dot_dimension_numbers<[2], [2], [1], [1], [0, 0, 0, 1, 1, 1], [0], [0]>} : vector<2x8x32xf32>, vector<2x8x32xf32>, vector<2x8x8xf32> -> vector<2x8x8xf32>
    "tpu.trace_stop"() : () -> ()
    %cst_138 = arith.constant 0.353553385 : f32
    %434 = vector.broadcast %cst_138 : f32 to vector<2x8x8xf32>
    %435 = arith.mulf %433, %434 : vector<2x8x8xf32>
    %cst_139 = arith.constant dense<0xFF800000> : vector<2x8xf32>
    %436 = vector.multi_reduction <maximumf>, %435, %cst_139 [2] : vector<2x8x8xf32> to vector<2x8xf32>
    %437 = vector.shape_cast %436 : vector<2x8xf32> to vector<2x8x1xf32>
    %438 = vector.broadcast %437 : vector<2x8x1xf32> to vector<2x8x8xf32>
    %439 = arith.subf %435, %438 : vector<2x8x8xf32>
    %440 = math.exp %439 : vector<2x8x8xf32>
    %cst_140 = arith.constant dense<0.000000e+00> : vector<2x8xf32>
    %441 = vector.multi_reduction <add>, %440, %cst_140 [2] : vector<2x8x8xf32> to vector<2x8xf32>
    %442 = vector.shape_cast %441 : vector<2x8xf32> to vector<2x8x1xf32>
    %443 = tpu.reciprocal %442 {approx = true} : vector<2x8x1xf32> -> vector<2x8x1xf32>
    %444 = vector.broadcast %443 : vector<2x8x1xf32> to vector<2x8x8xf32>
    %445 = arith.mulf %440, %444 : vector<2x8x8xf32>
    "tpu.trace_start"() <{level = 10 : i32, message = "bqk,bkd->bqd"}> : () -> ()
    %cst_141 = arith.constant dense<0.000000e+00> : vector<2x8x32xf32>
    %446 = tpu.matmul %445, %365, %cst_141 {dimension_numbers = #tpu.dot_dimension_numbers<[2], [1], [1], [2], [0, 0, 0, 1, 1, 2], [0], [0]>} : vector<2x8x8xf32>, vector<2x8x32xf32>, vector<2x8x32xf32> -> vector<2x8x32xf32>
    "tpu.trace_stop"() : () -> ()
    %447 = vector.shape_cast %28 : vector<1x32xf32> to vector<1x1x32xf32>
    %448 = vector.broadcast %447 : vector<1x1x32xf32> to vector<2x8x32xf32>
    %449 = arith.mulf %446, %448 : vector<2x8x32xf32>
    %450 = arith.addf %429, %449 : vector<2x8x32xf32>
    %451 = vector.shape_cast %450 : vector<2x8x32xf32> to vector<16x32xf32>
    %452 = vector.extract_strided_slice %348 {offsets = [0, 0], sizes = [32, 32], strides = [1, 1]} : vector<32x96xf32> to vector<32x32xf32>
    %cst_142 = arith.constant dense<0.000000e+00> : vector<16x32xf32>
    %453 = tpu.matmul %451, %452, %cst_142 {dimension_numbers = #tpu.dot_dimension_numbers<[1], [0], [0], [1], [0, 0, 1, 1], [], []>} : vector<16x32xf32>, vector<32x32xf32>, vector<16x32xf32> -> vector<16x32xf32>
    %454 = vector.extract_strided_slice %350 {offsets = [0, 0], sizes = [1, 32], strides = [1, 1]} : vector<1x96xf32> to vector<1x32xf32>
    %455 = vector.broadcast %454 : vector<1x32xf32> to vector<16x32xf32>
    %456 = arith.addf %453, %455 : vector<16x32xf32>
    %457 = arith.addf %346, %456 : vector<16x32xf32>
    %458 = vector.extract_strided_slice %352 {offsets = [0, 0], sizes = [1, 32], strides = [1, 1]} : vector<6x32xf32> to vector<1x32xf32>
    %459 = vector.extract_strided_slice %352 {offsets = [1, 0], sizes = [1, 32], strides = [1, 1]} : vector<6x32xf32> to vector<1x32xf32>
    %cst_143 = arith.constant dense<0.000000e+00> : vector<16xf32>
    %460 = vector.multi_reduction <add>, %457, %cst_143 [1] : vector<16x32xf32> to vector<16xf32>
    %461 = vector.shape_cast %460 : vector<16xf32> to vector<16x1xf32>
    %cst_144 = arith.constant 3.200000e+01 : f32
    %462 = vector.broadcast %cst_144 : f32 to vector<16x1xf32>
    %463 = arith.divf %461, %462 : vector<16x1xf32>
    %464 = arith.mulf %457, %457 : vector<16x32xf32>
    %cst_145 = arith.constant dense<0.000000e+00> : vector<16xf32>
    %465 = vector.multi_reduction <add>, %464, %cst_145 [1] : vector<16x32xf32> to vector<16xf32>
    %466 = vector.shape_cast %465 : vector<16xf32> to vector<16x1xf32>
    %cst_146 = arith.constant 3.200000e+01 : f32
    %467 = vector.broadcast %cst_146 : f32 to vector<16x1xf32>
    %468 = arith.divf %466, %467 : vector<16x1xf32>
    %469 = arith.mulf %463, %463 : vector<16x1xf32>
    %470 = arith.subf %468, %469 : vector<16x1xf32>
    %471 = vector.broadcast %463 : vector<16x1xf32> to vector<16x32xf32>
    %472 = arith.subf %457, %471 : vector<16x32xf32>
    %cst_147 = arith.constant 9.99999974E-6 : f32
    %473 = vector.broadcast %cst_147 : f32 to vector<16x1xf32>
    %474 = arith.addf %470, %473 : vector<16x1xf32>
    %475 = math.rsqrt %474 : vector<16x1xf32>
    %476 = vector.broadcast %475 : vector<16x1xf32> to vector<16x32xf32>
    %477 = arith.mulf %472, %476 : vector<16x32xf32>
    %478 = vector.broadcast %458 : vector<1x32xf32> to vector<16x32xf32>
    %479 = arith.mulf %477, %478 : vector<16x32xf32>
    %480 = vector.broadcast %459 : vector<1x32xf32> to vector<16x32xf32>
    %481 = arith.addf %479, %480 : vector<16x32xf32>
    %482 = vector.extract_strided_slice %348 {offsets = [0, 32], sizes = [32, 32], strides = [1, 1]} : vector<32x96xf32> to vector<32x32xf32>
    %cst_148 = arith.constant dense<0.000000e+00> : vector<16x32xf32>
    %483 = tpu.matmul %481, %482, %cst_148 {dimension_numbers = #tpu.dot_dimension_numbers<[1], [0], [0], [1], [0, 0, 1, 1], [], []>} : vector<16x32xf32>, vector<32x32xf32>, vector<16x32xf32> -> vector<16x32xf32>
    %484 = vector.extract_strided_slice %350 {offsets = [0, 32], sizes = [1, 32], strides = [1, 1]} : vector<1x96xf32> to vector<1x32xf32>
    %485 = vector.broadcast %484 : vector<1x32xf32> to vector<16x32xf32>
    %486 = arith.addf %483, %485 : vector<16x32xf32>
    %487 = vector.extract_strided_slice %44 {offsets = [0, 64], sizes = [32, 32], strides = [1, 1]} : vector<32x128xf32> to vector<32x32xf32>
    %488 = vector.extract_strided_slice %44 {offsets = [0, 96], sizes = [32, 32], strides = [1, 1]} : vector<32x128xf32> to vector<32x32xf32>
    %489 = vector.shape_cast %486 : vector<16x32xf32> to vector<2x8x32xf32>
    %490 = vector.shape_cast %487 : vector<32x32xf32> to vector<2x16x32xf32>
    %491 = vector.shape_cast %488 : vector<32x32xf32> to vector<2x16x32xf32>
    %cst_149 = arith.constant 0.000000e+00 : f32
    %492 = vector.broadcast %cst_149 : f32 to vector<2x8x32xf32>
    %493 = vector.shape_cast %7 : vector<1x32xf32> to vector<1x1x32xf32>
    %494 = vector.broadcast %493 : vector<1x1x32xf32> to vector<2x8x32xf32>
    %495 = arith.mulf %489, %494 : vector<2x8x32xf32>
    "tpu.trace_start"() <{level = 10 : i32, message = "bqd,bkd->bqk"}> : () -> ()
    %cst_150 = arith.constant dense<0.000000e+00> : vector<2x8x16xf32>
    %496 = tpu.matmul %495, %490, %cst_150 {dimension_numbers = #tpu.dot_dimension_numbers<[2], [2], [1], [1], [0, 0, 0, 1, 1, 1], [0], [0]>} : vector<2x8x32xf32>, vector<2x16x32xf32>, vector<2x8x16xf32> -> vector<2x8x16xf32>
    "tpu.trace_stop"() : () -> ()
    %cst_151 = arith.constant 0.353553385 : f32
    %497 = vector.broadcast %cst_151 : f32 to vector<2x8x16xf32>
    %498 = arith.mulf %496, %497 : vector<2x8x16xf32>
    %cst_152 = arith.constant dense<0xFF800000> : vector<2x8xf32>
    %499 = vector.multi_reduction <maximumf>, %498, %cst_152 [2] : vector<2x8x16xf32> to vector<2x8xf32>
    %500 = vector.shape_cast %499 : vector<2x8xf32> to vector<2x8x1xf32>
    %501 = vector.broadcast %500 : vector<2x8x1xf32> to vector<2x8x16xf32>
    %502 = arith.subf %498, %501 : vector<2x8x16xf32>
    %503 = math.exp %502 : vector<2x8x16xf32>
    %cst_153 = arith.constant dense<0.000000e+00> : vector<2x8xf32>
    %504 = vector.multi_reduction <add>, %503, %cst_153 [2] : vector<2x8x16xf32> to vector<2x8xf32>
    %505 = vector.shape_cast %504 : vector<2x8xf32> to vector<2x8x1xf32>
    %506 = tpu.reciprocal %505 {approx = true} : vector<2x8x1xf32> -> vector<2x8x1xf32>
    %507 = vector.broadcast %506 : vector<2x8x1xf32> to vector<2x8x16xf32>
    %508 = arith.mulf %503, %507 : vector<2x8x16xf32>
    "tpu.trace_start"() <{level = 10 : i32, message = "bqk,bkd->bqd"}> : () -> ()
    %cst_154 = arith.constant dense<0.000000e+00> : vector<2x8x32xf32>
    %509 = tpu.matmul %508, %491, %cst_154 {dimension_numbers = #tpu.dot_dimension_numbers<[2], [1], [1], [2], [0, 0, 0, 1, 1, 2], [0], [0]>} : vector<2x8x16xf32>, vector<2x16x32xf32>, vector<2x8x32xf32> -> vector<2x8x32xf32>
    "tpu.trace_stop"() : () -> ()
    %510 = vector.shape_cast %7 : vector<1x32xf32> to vector<1x1x32xf32>
    %511 = vector.broadcast %510 : vector<1x1x32xf32> to vector<2x8x32xf32>
    %512 = arith.mulf %509, %511 : vector<2x8x32xf32>
    %513 = arith.addf %492, %512 : vector<2x8x32xf32>
    %514 = vector.shape_cast %14 : vector<1x32xf32> to vector<1x1x32xf32>
    %515 = vector.broadcast %514 : vector<1x1x32xf32> to vector<2x8x32xf32>
    %516 = arith.mulf %489, %515 : vector<2x8x32xf32>
    "tpu.trace_start"() <{level = 10 : i32, message = "bqd,bkd->bqk"}> : () -> ()
    %cst_155 = arith.constant dense<0.000000e+00> : vector<2x8x16xf32>
    %517 = tpu.matmul %516, %490, %cst_155 {dimension_numbers = #tpu.dot_dimension_numbers<[2], [2], [1], [1], [0, 0, 0, 1, 1, 1], [0], [0]>} : vector<2x8x32xf32>, vector<2x16x32xf32>, vector<2x8x16xf32> -> vector<2x8x16xf32>
    "tpu.trace_stop"() : () -> ()
    %cst_156 = arith.constant 0.353553385 : f32
    %518 = vector.broadcast %cst_156 : f32 to vector<2x8x16xf32>
    %519 = arith.mulf %517, %518 : vector<2x8x16xf32>
    %cst_157 = arith.constant dense<0xFF800000> : vector<2x8xf32>
    %520 = vector.multi_reduction <maximumf>, %519, %cst_157 [2] : vector<2x8x16xf32> to vector<2x8xf32>
    %521 = vector.shape_cast %520 : vector<2x8xf32> to vector<2x8x1xf32>
    %522 = vector.broadcast %521 : vector<2x8x1xf32> to vector<2x8x16xf32>
    %523 = arith.subf %519, %522 : vector<2x8x16xf32>
    %524 = math.exp %523 : vector<2x8x16xf32>
    %cst_158 = arith.constant dense<0.000000e+00> : vector<2x8xf32>
    %525 = vector.multi_reduction <add>, %524, %cst_158 [2] : vector<2x8x16xf32> to vector<2x8xf32>
    %526 = vector.shape_cast %525 : vector<2x8xf32> to vector<2x8x1xf32>
    %527 = tpu.reciprocal %526 {approx = true} : vector<2x8x1xf32> -> vector<2x8x1xf32>
    %528 = vector.broadcast %527 : vector<2x8x1xf32> to vector<2x8x16xf32>
    %529 = arith.mulf %524, %528 : vector<2x8x16xf32>
    "tpu.trace_start"() <{level = 10 : i32, message = "bqk,bkd->bqd"}> : () -> ()
    %cst_159 = arith.constant dense<0.000000e+00> : vector<2x8x32xf32>
    %530 = tpu.matmul %529, %491, %cst_159 {dimension_numbers = #tpu.dot_dimension_numbers<[2], [1], [1], [2], [0, 0, 0, 1, 1, 2], [0], [0]>} : vector<2x8x16xf32>, vector<2x16x32xf32>, vector<2x8x32xf32> -> vector<2x8x32xf32>
    "tpu.trace_stop"() : () -> ()
    %531 = vector.shape_cast %14 : vector<1x32xf32> to vector<1x1x32xf32>
    %532 = vector.broadcast %531 : vector<1x1x32xf32> to vector<2x8x32xf32>
    %533 = arith.mulf %530, %532 : vector<2x8x32xf32>
    %534 = arith.addf %513, %533 : vector<2x8x32xf32>
    %535 = vector.shape_cast %21 : vector<1x32xf32> to vector<1x1x32xf32>
    %536 = vector.broadcast %535 : vector<1x1x32xf32> to vector<2x8x32xf32>
    %537 = arith.mulf %489, %536 : vector<2x8x32xf32>
    "tpu.trace_start"() <{level = 10 : i32, message = "bqd,bkd->bqk"}> : () -> ()
    %cst_160 = arith.constant dense<0.000000e+00> : vector<2x8x16xf32>
    %538 = tpu.matmul %537, %490, %cst_160 {dimension_numbers = #tpu.dot_dimension_numbers<[2], [2], [1], [1], [0, 0, 0, 1, 1, 1], [0], [0]>} : vector<2x8x32xf32>, vector<2x16x32xf32>, vector<2x8x16xf32> -> vector<2x8x16xf32>
    "tpu.trace_stop"() : () -> ()
    %cst_161 = arith.constant 0.353553385 : f32
    %539 = vector.broadcast %cst_161 : f32 to vector<2x8x16xf32>
    %540 = arith.mulf %538, %539 : vector<2x8x16xf32>
    %cst_162 = arith.constant dense<0xFF800000> : vector<2x8xf32>
    %541 = vector.multi_reduction <maximumf>, %540, %cst_162 [2] : vector<2x8x16xf32> to vector<2x8xf32>
    %542 = vector.shape_cast %541 : vector<2x8xf32> to vector<2x8x1xf32>
    %543 = vector.broadcast %542 : vector<2x8x1xf32> to vector<2x8x16xf32>
    %544 = arith.subf %540, %543 : vector<2x8x16xf32>
    %545 = math.exp %544 : vector<2x8x16xf32>
    %cst_163 = arith.constant dense<0.000000e+00> : vector<2x8xf32>
    %546 = vector.multi_reduction <add>, %545, %cst_163 [2] : vector<2x8x16xf32> to vector<2x8xf32>
    %547 = vector.shape_cast %546 : vector<2x8xf32> to vector<2x8x1xf32>
    %548 = tpu.reciprocal %547 {approx = true} : vector<2x8x1xf32> -> vector<2x8x1xf32>
    %549 = vector.broadcast %548 : vector<2x8x1xf32> to vector<2x8x16xf32>
    %550 = arith.mulf %545, %549 : vector<2x8x16xf32>
    "tpu.trace_start"() <{level = 10 : i32, message = "bqk,bkd->bqd"}> : () -> ()
    %cst_164 = arith.constant dense<0.000000e+00> : vector<2x8x32xf32>
    %551 = tpu.matmul %550, %491, %cst_164 {dimension_numbers = #tpu.dot_dimension_numbers<[2], [1], [1], [2], [0, 0, 0, 1, 1, 2], [0], [0]>} : vector<2x8x16xf32>, vector<2x16x32xf32>, vector<2x8x32xf32> -> vector<2x8x32xf32>
    "tpu.trace_stop"() : () -> ()
    %552 = vector.shape_cast %21 : vector<1x32xf32> to vector<1x1x32xf32>
    %553 = vector.broadcast %552 : vector<1x1x32xf32> to vector<2x8x32xf32>
    %554 = arith.mulf %551, %553 : vector<2x8x32xf32>
    %555 = arith.addf %534, %554 : vector<2x8x32xf32>
    %556 = vector.shape_cast %28 : vector<1x32xf32> to vector<1x1x32xf32>
    %557 = vector.broadcast %556 : vector<1x1x32xf32> to vector<2x8x32xf32>
    %558 = arith.mulf %489, %557 : vector<2x8x32xf32>
    "tpu.trace_start"() <{level = 10 : i32, message = "bqd,bkd->bqk"}> : () -> ()
    %cst_165 = arith.constant dense<0.000000e+00> : vector<2x8x16xf32>
    %559 = tpu.matmul %558, %490, %cst_165 {dimension_numbers = #tpu.dot_dimension_numbers<[2], [2], [1], [1], [0, 0, 0, 1, 1, 1], [0], [0]>} : vector<2x8x32xf32>, vector<2x16x32xf32>, vector<2x8x16xf32> -> vector<2x8x16xf32>
    "tpu.trace_stop"() : () -> ()
    %cst_166 = arith.constant 0.353553385 : f32
    %560 = vector.broadcast %cst_166 : f32 to vector<2x8x16xf32>
    %561 = arith.mulf %559, %560 : vector<2x8x16xf32>
    %cst_167 = arith.constant dense<0xFF800000> : vector<2x8xf32>
    %562 = vector.multi_reduction <maximumf>, %561, %cst_167 [2] : vector<2x8x16xf32> to vector<2x8xf32>
    %563 = vector.shape_cast %562 : vector<2x8xf32> to vector<2x8x1xf32>
    %564 = vector.broadcast %563 : vector<2x8x1xf32> to vector<2x8x16xf32>
    %565 = arith.subf %561, %564 : vector<2x8x16xf32>
    %566 = math.exp %565 : vector<2x8x16xf32>
    %cst_168 = arith.constant dense<0.000000e+00> : vector<2x8xf32>
    %567 = vector.multi_reduction <add>, %566, %cst_168 [2] : vector<2x8x16xf32> to vector<2x8xf32>
    %568 = vector.shape_cast %567 : vector<2x8xf32> to vector<2x8x1xf32>
    %569 = tpu.reciprocal %568 {approx = true} : vector<2x8x1xf32> -> vector<2x8x1xf32>
    %570 = vector.broadcast %569 : vector<2x8x1xf32> to vector<2x8x16xf32>
    %571 = arith.mulf %566, %570 : vector<2x8x16xf32>
    "tpu.trace_start"() <{level = 10 : i32, message = "bqk,bkd->bqd"}> : () -> ()
    %cst_169 = arith.constant dense<0.000000e+00> : vector<2x8x32xf32>
    %572 = tpu.matmul %571, %491, %cst_169 {dimension_numbers = #tpu.dot_dimension_numbers<[2], [1], [1], [2], [0, 0, 0, 1, 1, 2], [0], [0]>} : vector<2x8x16xf32>, vector<2x16x32xf32>, vector<2x8x32xf32> -> vector<2x8x32xf32>
    "tpu.trace_stop"() : () -> ()
    %573 = vector.shape_cast %28 : vector<1x32xf32> to vector<1x1x32xf32>
    %574 = vector.broadcast %573 : vector<1x1x32xf32> to vector<2x8x32xf32>
    %575 = arith.mulf %572, %574 : vector<2x8x32xf32>
    %576 = arith.addf %555, %575 : vector<2x8x32xf32>
    %577 = vector.shape_cast %576 : vector<2x8x32xf32> to vector<16x32xf32>
    %578 = vector.extract_strided_slice %348 {offsets = [0, 64], sizes = [32, 32], strides = [1, 1]} : vector<32x96xf32> to vector<32x32xf32>
    %cst_170 = arith.constant dense<0.000000e+00> : vector<16x32xf32>
    %579 = tpu.matmul %577, %578, %cst_170 {dimension_numbers = #tpu.dot_dimension_numbers<[1], [0], [0], [1], [0, 0, 1, 1], [], []>} : vector<16x32xf32>, vector<32x32xf32>, vector<16x32xf32> -> vector<16x32xf32>
    %580 = vector.extract_strided_slice %350 {offsets = [0, 64], sizes = [1, 32], strides = [1, 1]} : vector<1x96xf32> to vector<1x32xf32>
    %581 = vector.broadcast %580 : vector<1x32xf32> to vector<16x32xf32>
    %582 = arith.addf %579, %581 : vector<16x32xf32>
    %583 = arith.addf %481, %582 : vector<16x32xf32>
    %584 = vector.extract_strided_slice %352 {offsets = [2, 0], sizes = [1, 32], strides = [1, 1]} : vector<6x32xf32> to vector<1x32xf32>
    %585 = vector.extract_strided_slice %352 {offsets = [3, 0], sizes = [1, 32], strides = [1, 1]} : vector<6x32xf32> to vector<1x32xf32>
    %cst_171 = arith.constant dense<0.000000e+00> : vector<16xf32>
    %586 = vector.multi_reduction <add>, %583, %cst_171 [1] : vector<16x32xf32> to vector<16xf32>
    %587 = vector.shape_cast %586 : vector<16xf32> to vector<16x1xf32>
    %cst_172 = arith.constant 3.200000e+01 : f32
    %588 = vector.broadcast %cst_172 : f32 to vector<16x1xf32>
    %589 = arith.divf %587, %588 : vector<16x1xf32>
    %590 = arith.mulf %583, %583 : vector<16x32xf32>
    %cst_173 = arith.constant dense<0.000000e+00> : vector<16xf32>
    %591 = vector.multi_reduction <add>, %590, %cst_173 [1] : vector<16x32xf32> to vector<16xf32>
    %592 = vector.shape_cast %591 : vector<16xf32> to vector<16x1xf32>
    %cst_174 = arith.constant 3.200000e+01 : f32
    %593 = vector.broadcast %cst_174 : f32 to vector<16x1xf32>
    %594 = arith.divf %592, %593 : vector<16x1xf32>
    %595 = arith.mulf %589, %589 : vector<16x1xf32>
    %596 = arith.subf %594, %595 : vector<16x1xf32>
    %597 = vector.broadcast %589 : vector<16x1xf32> to vector<16x32xf32>
    %598 = arith.subf %583, %597 : vector<16x32xf32>
    %cst_175 = arith.constant 9.99999974E-6 : f32
    %599 = vector.broadcast %cst_175 : f32 to vector<16x1xf32>
    %600 = arith.addf %596, %599 : vector<16x1xf32>
    %601 = math.rsqrt %600 : vector<16x1xf32>
    %602 = vector.broadcast %601 : vector<16x1xf32> to vector<16x32xf32>
    %603 = arith.mulf %598, %602 : vector<16x32xf32>
    %604 = vector.broadcast %584 : vector<1x32xf32> to vector<16x32xf32>
    %605 = arith.mulf %603, %604 : vector<16x32xf32>
    %606 = vector.broadcast %585 : vector<1x32xf32> to vector<16x32xf32>
    %607 = arith.addf %605, %606 : vector<16x32xf32>
    %c1_176 = arith.constant 1 : index
    %c0_177 = arith.constant 0 : index
    %c0_178 = arith.constant 0 : index
    %608 = vector.load %arg10[%c1_176, %c0_177, %c0_178] : memref<2x32x64xf32, #tpu.memory_space<vmem>>, vector<1x32x64xf32>
    %609 = vector.shape_cast %608 : vector<1x32x64xf32> to vector<32x64xf32>
    %cst_179 = arith.constant dense<0.000000e+00> : vector<16x64xf32>
    %610 = tpu.matmul %607, %609, %cst_179 {dimension_numbers = #tpu.dot_dimension_numbers<[1], [0], [0], [1], [0, 0, 1, 1], [], []>} : vector<16x32xf32>, vector<32x64xf32>, vector<16x64xf32> -> vector<16x64xf32>
    %c1_180 = arith.constant 1 : index
    %c0_181 = arith.constant 0 : index
    %c0_182 = arith.constant 0 : index
    %611 = vector.load %arg11[%c1_180, %c0_181, %c0_182] : memref<2x1x64xf32, #tpu.memory_space<vmem>>, vector<1x1x64xf32>
    %612 = vector.shape_cast %611 : vector<1x1x64xf32> to vector<1x64xf32>
    %613 = vector.broadcast %612 : vector<1x64xf32> to vector<16x64xf32>
    %614 = arith.addf %610, %613 : vector<16x64xf32>
    %cst_183 = arith.constant 0.000000e+00 : f32
    %615 = vector.broadcast %cst_183 : f32 to vector<16x64xf32>
    %616 = arith.maximumf %614, %615 : vector<16x64xf32>
    %c1_184 = arith.constant 1 : index
    %c0_185 = arith.constant 0 : index
    %c0_186 = arith.constant 0 : index
    %617 = vector.load %arg12[%c1_184, %c0_185, %c0_186] : memref<2x64x32xf32, #tpu.memory_space<vmem>>, vector<1x64x32xf32>
    %618 = vector.shape_cast %617 : vector<1x64x32xf32> to vector<64x32xf32>
    %cst_187 = arith.constant dense<0.000000e+00> : vector<16x32xf32>
    %619 = tpu.matmul %616, %618, %cst_187 {dimension_numbers = #tpu.dot_dimension_numbers<[1], [0], [0], [1], [0, 0, 1, 1], [], []>} : vector<16x64xf32>, vector<64x32xf32>, vector<16x32xf32> -> vector<16x32xf32>
    %c1_188 = arith.constant 1 : index
    %c0_189 = arith.constant 0 : index
    %c0_190 = arith.constant 0 : index
    %620 = vector.load %arg13[%c1_188, %c0_189, %c0_190] : memref<2x1x32xf32, #tpu.memory_space<vmem>>, vector<1x1x32xf32>
    %621 = vector.shape_cast %620 : vector<1x1x32xf32> to vector<1x32xf32>
    %622 = vector.broadcast %621 : vector<1x32xf32> to vector<16x32xf32>
    %623 = arith.addf %619, %622 : vector<16x32xf32>
    %624 = arith.addf %607, %623 : vector<16x32xf32>
    %625 = vector.extract_strided_slice %352 {offsets = [4, 0], sizes = [1, 32], strides = [1, 1]} : vector<6x32xf32> to vector<1x32xf32>
    %626 = vector.extract_strided_slice %352 {offsets = [5, 0], sizes = [1, 32], strides = [1, 1]} : vector<6x32xf32> to vector<1x32xf32>
    %cst_191 = arith.constant dense<0.000000e+00> : vector<16xf32>
    %627 = vector.multi_reduction <add>, %624, %cst_191 [1] : vector<16x32xf32> to vector<16xf32>
    %628 = vector.shape_cast %627 : vector<16xf32> to vector<16x1xf32>
    %cst_192 = arith.constant 3.200000e+01 : f32
    %629 = vector.broadcast %cst_192 : f32 to vector<16x1xf32>
    %630 = arith.divf %628, %629 : vector<16x1xf32>
    %631 = arith.mulf %624, %624 : vector<16x32xf32>
    %cst_193 = arith.constant dense<0.000000e+00> : vector<16xf32>
    %632 = vector.multi_reduction <add>, %631, %cst_193 [1] : vector<16x32xf32> to vector<16xf32>
    %633 = vector.shape_cast %632 : vector<16xf32> to vector<16x1xf32>
    %cst_194 = arith.constant 3.200000e+01 : f32
    %634 = vector.broadcast %cst_194 : f32 to vector<16x1xf32>
    %635 = arith.divf %633, %634 : vector<16x1xf32>
    %636 = arith.mulf %630, %630 : vector<16x1xf32>
    %637 = arith.subf %635, %636 : vector<16x1xf32>
    %638 = vector.broadcast %630 : vector<16x1xf32> to vector<16x32xf32>
    %639 = arith.subf %624, %638 : vector<16x32xf32>
    %cst_195 = arith.constant 9.99999974E-6 : f32
    %640 = vector.broadcast %cst_195 : f32 to vector<16x1xf32>
    %641 = arith.addf %637, %640 : vector<16x1xf32>
    %642 = math.rsqrt %641 : vector<16x1xf32>
    %643 = vector.broadcast %642 : vector<16x1xf32> to vector<16x32xf32>
    %644 = arith.mulf %639, %643 : vector<16x32xf32>
    %645 = vector.broadcast %625 : vector<1x32xf32> to vector<16x32xf32>
    %646 = arith.mulf %644, %645 : vector<16x32xf32>
    %647 = vector.broadcast %626 : vector<1x32xf32> to vector<16x32xf32>
    %648 = arith.addf %646, %647 : vector<16x32xf32>
    %c0_196 = arith.constant 0 : index
    %c0_197 = arith.constant 0 : index
    %649 = vector.load %arg15[%c0_196, %c0_197] : memref<32x128xf32, #tpu.memory_space<vmem>>, vector<32x128xf32>
    %cst_198 = arith.constant dense<0.000000e+00> : vector<16x128xf32>
    %650 = tpu.matmul %648, %649, %cst_198 {dimension_numbers = #tpu.dot_dimension_numbers<[1], [0], [0], [1], [0, 0, 1, 1], [], []>} : vector<16x32xf32>, vector<32x128xf32>, vector<16x128xf32> -> vector<16x128xf32>
    %c0_199 = arith.constant 0 : index
    %c0_200 = arith.constant 0 : index
    %651 = vector.load %arg16[%c0_199, %c0_200] : memref<1x128xf32, #tpu.memory_space<vmem>>, vector<1x128xf32>
    %652 = vector.broadcast %651 : vector<1x128xf32> to vector<16x128xf32>
    %653 = arith.addf %650, %652 : vector<16x128xf32>
    %c0_201 = arith.constant 0 : index
    %c0_202 = arith.constant 0 : index
    %654 = vector.load %arg17[%c0_201, %c0_202] : memref<16x128xf32, #tpu.memory_space<vmem>>, vector<16x128xf32>
    tpu.vector_store %arg17[%c0_201, %c0_202], %653 {strides = array<i32>} : memref<16x128xf32, #tpu.memory_space<vmem>>, vector<16x128xf32>,
    return
  }
}

</mosaic_0001>

<llo_original>
// kernel: transformer_decoder_forward.1
$region0: #{transformer_decoder_forward.1}
  #allocation0 [shape = 'u32[]', space=smem, size = 0x4, offset = 0x4, fixed_abs, tag = 'smem constant byte address 0x4 - core index']
  #allocation1 [shape = 'u32[144,128]{1,0:T(1,128)}', space=vmem, size = 0x12000, scoped, tag = 'internal scratch']
  %s0 = inlined_call_operand.vmem [shape: s32[16,1], index: 0, kind: input, shape index: {}]
  %s1 = inlined_call_operand.vmem [shape: f32[32,32], index: 1, kind: input, shape index: {}]
  %s2 = inlined_call_operand.hbm [shape: f32[16,32], index: 2, kind: input, shape index: {}]
  %s3 = inlined_call_operand.vmem [shape: f32[16,32], index: 3, kind: input, shape index: {}]
  %s4 = inlined_call_operand.vmem [shape: f32[2,32,96], index: 4, kind: input, shape index: {}]
  %s5 = inlined_call_operand.vmem [shape: f32[2,1,96], index: 5, kind: input, shape index: {}]
  %s6 = inlined_call_operand.vmem [shape: f32[2,32,96], index: 6, kind: input, shape index: {}]
  %s7 = inlined_call_operand.hbm [shape: f32[2,1,96], index: 7, kind: input, shape index: {}]
  %s8 = inlined_call_operand.vmem [shape: f32[32,128], index: 8, kind: input, shape index: {}]
  %s9 = inlined_call_operand.vmem [shape: f32[1,128], index: 9, kind: input, shape index: {}]
  %s10 = inlined_call_operand.vmem [shape: f32[2,32,64], index: 10, kind: input, shape index: {}]
  %s11 = inlined_call_operand.vmem [shape: f32[2,1,64], index: 11, kind: input, shape index: {}]
  %s12 = inlined_call_operand.vmem [shape: f32[2,64,32], index: 12, kind: input, shape index: {}]
  %s13 = inlined_call_operand.vmem [shape: f32[2,1,32], index: 13, kind: input, shape index: {}]
  %s14 = inlined_call_operand.vmem [shape: f32[2,6,32], index: 14, kind: input, shape index: {}]
  %s15 = inlined_call_operand.hbm [shape: f32[32,128], index: 15, kind: input, shape index: {}]
  %s16 = inlined_call_operand.vmem [shape: f32[1,128], index: 16, kind: input, shape index: {}]
  %s17 = inlined_call_operand.hbm [shape: f32[16,128], index: 17, kind: output, shape index: {}]
  %s18 = sld [smem:[#allocation0]]
  $region90: #{transformer_decoder_forward.1} parent=0
    _
  %s20 = ssub.s32 1, %s18
  %s21 = scalar_select 0, %s20, %s18
  $region1: #{transformer_decoder_forward.1} parent=0
    #allocation2 [shape = 'u8[8192]{0}', space=vmem, size = 0x2000, scoped, tag = 'input window, operand 2, single buffered']
    #allocation3 [shape = 's32[1]{0}', space=sflag, size = 0x4, scoped, tag = 'scoped memory for transformer_decoder_forward.1']
    #allocation4 [shape = 's32[1]{0}', space=sflag, size = 0x4, scoped, tag = 'scoped memory for transformer_decoder_forward.1']
    #allocation5 [shape = 'u8[1024]{0}', space=vmem, size = 0x400, scoped, tag = 'input window, operand 7, single buffered']
    #allocation6 [shape = 's32[1]{0}', space=sflag, size = 0x4, scoped, tag = 'scoped memory for transformer_decoder_forward.1']
    #allocation7 [shape = 'u8[16384]{0}', space=vmem, size = 0x4000, scoped, tag = 'input window, operand 15, single buffered']
    #allocation8 [shape = 'u8[8192]{0}', space=vmem, size = 0x2000, scoped, tag = 'output window, operand 0, single buffered']
    %22 = vsyncpa [#allocation3], 0
    %23 = vsyncpa [#allocation6], 0
    %24 = vsyncpa [#allocation4], 0
    // Predicated region
    $region2: #{transformer_decoder_forward.1} parent=1 // pred_check
      _
    $region3: #{transformer_decoder_forward.1} parent=1 // pred_check_branch
      %26 = sbr.rel (0) target = $region5
    $region4: #{transformer_decoder_forward.1} parent=1 // pred_region
      _
    $region5: #{transformer_decoder_forward.1} parent=1 // pred_fallthru
      _
    // Predicated region
    $region6: #{transformer_decoder_forward.1} parent=1 // pred_check
      _
    $region7: #{transformer_decoder_forward.1} parent=1 // pred_check_branch
      %28 = sbr.rel (0) target = $region9
    $region8: #{transformer_decoder_forward.1} parent=1 // pred_region
      _
    $region9: #{transformer_decoder_forward.1} parent=1 // pred_fallthru
      _
    // Predicated region
    $region10: #{transformer_decoder_forward.1} parent=1 // pred_check
      _
    $region11: #{transformer_decoder_forward.1} parent=1 // pred_check_branch
      %30 = sbr.rel (0) target = $region13
    $region12: #{transformer_decoder_forward.1} parent=1 // pred_region
      %s32 = ssub.s32 256, 256
      %33 = vsyncadd [#allocation3], %s32
      %s34 = sshll.u32 [#allocation2], 4
      %s35 = int_to_ptr.vmem [resolvable:$true] %s34
      %40 = dma.hbm_to_vmem [thread:$0]  %s2, 256, %s35, [#allocation3], 128, 128, 8
    $region13: #{transformer_decoder_forward.1} parent=1 // pred_fallthru
      _
    // Predicated region
    $region14: #{transformer_decoder_forward.1} parent=1 // pred_check
      _
    $region15: #{transformer_decoder_forward.1} parent=1 // pred_check_branch
      %42 = sbr.rel (0) target = $region17
    $region16: #{transformer_decoder_forward.1} parent=1 // pred_region
      _
    $region17: #{transformer_decoder_forward.1} parent=1 // pred_fallthru
      _
    // Predicated region
    $region18: #{transformer_decoder_forward.1} parent=1 // pred_check
      _
    $region19: #{transformer_decoder_forward.1} parent=1 // pred_check_branch
      %44 = sbr.rel (0) target = $region21
    $region20: #{transformer_decoder_forward.1} parent=1 // pred_region
      _
    $region21: #{transformer_decoder_forward.1} parent=1 // pred_fallthru
      _
    // Predicated region
    $region22: #{transformer_decoder_forward.1} parent=1 // pred_check
      _
    $region23: #{transformer_decoder_forward.1} parent=1 // pred_check_branch
      %46 = sbr.rel (0) target = $region25
    $region24: #{transformer_decoder_forward.1} parent=1 // pred_region
      _
    $region25: #{transformer_decoder_forward.1} parent=1 // pred_fallthru
      _
    // Predicated region
    $region26: #{transformer_decoder_forward.1} parent=1 // pred_check
      _
    $region27: #{transformer_decoder_forward.1} parent=1 // pred_check_branch
      %48 = sbr.rel (0) target = $region29
    $region28: #{transformer_decoder_forward.1} parent=1 // pred_region
      _
    $region29: #{transformer_decoder_forward.1} parent=1 // pred_fallthru
      _
    // Predicated region
    $region30: #{transformer_decoder_forward.1} parent=1 // pred_check
      _
    $region31: #{transformer_decoder_forward.1} parent=1 // pred_check_branch
      %50 = sbr.rel (0) target = $region33
    $region32: #{transformer_decoder_forward.1} parent=1 // pred_region
      %s52 = ssub.s32 32, 32
      %53 = vsyncadd [#allocation6], %s52
      %s54 = sshll.u32 [#allocation5], 4
      %s55 = int_to_ptr.vmem [resolvable:$true] %s54
      %60 = dma.hbm_to_vmem [thread:$0]  %s7, 32, %s55, [#allocation6], 16, 16, 1
    $region33: #{transformer_decoder_forward.1} parent=1 // pred_fallthru
      _
    // Predicated region
    $region34: #{transformer_decoder_forward.1} parent=1 // pred_check
      _
    $region35: #{transformer_decoder_forward.1} parent=1 // pred_check_branch
      %62 = sbr.rel (0) target = $region37
    $region36: #{transformer_decoder_forward.1} parent=1 // pred_region
      _
    $region37: #{transformer_decoder_forward.1} parent=1 // pred_fallthru
      _
    // Predicated region
    $region38: #{transformer_decoder_forward.1} parent=1 // pred_check
      _
    $region39: #{transformer_decoder_forward.1} parent=1 // pred_check_branch
      %64 = sbr.rel (0) target = $region41
    $region40: #{transformer_decoder_forward.1} parent=1 // pred_region
      _
    $region41: #{transformer_decoder_forward.1} parent=1 // pred_fallthru
      _
    // Predicated region
    $region42: #{transformer_decoder_forward.1} parent=1 // pred_check
      _
    $region43: #{transformer_decoder_forward.1} parent=1 // pred_check_branch
      %66 = sbr.rel (0) target = $region45
    $region44: #{transformer_decoder_forward.1} parent=1 // pred_region
      _
    $region45: #{transformer_decoder_forward.1} parent=1 // pred_fallthru
      _
    // Predicated region
    $region46: #{transformer_decoder_forward.1} parent=1 // pred_check
      _
    $region47: #{transformer_decoder_forward.1} parent=1 // pred_check_branch
      %68 = sbr.rel (0) target = $region49
    $region48: #{transformer_decoder_forward.1} parent=1 // pred_region
      _
    $region49: #{transformer_decoder_forward.1} parent=1 // pred_fallthru
      _
    // Predicated region
    $region50: #{transformer_decoder_forward.1} parent=1 // pred_check
      _
    $region51: #{transformer_decoder_forward.1} parent=1 // pred_check_branch
      %70 = sbr.rel (0) target = $region53
    $region52: #{transformer_decoder_forward.1} parent=1 // pred_region
      _
    $region53: #{transformer_decoder_forward.1} parent=1 // pred_fallthru
      _
    // Predicated region
    $region54: #{transformer_decoder_forward.1} parent=1 // pred_check
      _
    $region55: #{transformer_decoder_forward.1} parent=1 // pred_check_branch
      %72 = sbr.rel (0) target = $region57
    $region56: #{transformer_decoder_forward.1} parent=1 // pred_region
      _
    $region57: #{transformer_decoder_forward.1} parent=1 // pred_fallthru
      _
    // Predicated region
    $region58: #{transformer_decoder_forward.1} parent=1 // pred_check
      _
    $region59: #{transformer_decoder_forward.1} parent=1 // pred_check_branch
      %74 = sbr.rel (0) target = $region61
    $region60: #{transformer_decoder_forward.1} parent=1 // pred_region
      _
    $region61: #{transformer_decoder_forward.1} parent=1 // pred_fallthru
      _
    // Predicated region
    $region62: #{transformer_decoder_forward.1} parent=1 // pred_check
      _
    $region63: #{transformer_decoder_forward.1} parent=1 // pred_check_branch
      %76 = sbr.rel (0) target = $region65
    $region64: #{transformer_decoder_forward.1} parent=1 // pred_region
      %s78 = ssub.s32 512, 512
      %79 = vsyncadd [#allocation6], %s78
      %s80 = sshll.u32 [#allocation7], 4
      %s81 = int_to_ptr.vmem [resolvable:$true] %s80
      %86 = dma.hbm_to_vmem [thread:$0]  %s15, 512, %s81, [#allocation6], 128, 128, 8
    $region65: #{transformer_decoder_forward.1} parent=1 // pred_fallthru
      _
    // Predicated region
    $region66: #{transformer_decoder_forward.1} parent=1 // pred_check
      _
    $region67: #{transformer_decoder_forward.1} parent=1 // pred_check_branch
      %88 = sbr.rel (0) target = $region69
    $region68: #{transformer_decoder_forward.1} parent=1 // pred_region
      _
    $region69: #{transformer_decoder_forward.1} parent=1 // pred_fallthru
      _
    // Predicated region
    $region70: #{transformer_decoder_forward.1} parent=1 // pred_check
      _
    $region71: #{transformer_decoder_forward.1} parent=1 // pred_check_branch
      %90 = sbr.rel (0) target = $region73
    $region72: #{transformer_decoder_forward.1} parent=1 // pred_region
      %91 = dma.done [#allocation3], 256
    $region73: #{transformer_decoder_forward.1} parent=1 // pred_fallthru
      _
    // Predicated region
    $region74: #{transformer_decoder_forward.1} parent=1 // pred_check
      _
    $region75: #{transformer_decoder_forward.1} parent=1 // pred_check_branch
      %93 = sbr.rel (0) target = $region77
    $region76: #{transformer_decoder_forward.1} parent=1 // pred_region
      %94 = dma.done [#allocation6], 32
    $region77: #{transformer_decoder_forward.1} parent=1 // pred_fallthru
      _
    // Predicated region
    $region78: #{transformer_decoder_forward.1} parent=1 // pred_check
      _
    $region79: #{transformer_decoder_forward.1} parent=1 // pred_check_branch
      %96 = sbr.rel (0) target = $region81
    $region80: #{transformer_decoder_forward.1} parent=1 // pred_region
      %97 = dma.done [#allocation6], 512
    $region81: #{transformer_decoder_forward.1} parent=1 // pred_fallthru
      _
    %v98 = vlaneseq
    %v99 = vand.u32 %v98, 127
    %vm100 = vcmp.ge.s32.totalorder %v99, 0
    %vm101 = vcmp.lt.s32.totalorder %v99, 8
    %vm102 = vmand %vm100, %vm101
    %v103 = vsel %vm102, 1, 0
    %v104 = vcvt.s32.f32 %v103
    %vm105 = vcmp.ge.s32.totalorder %v99, 8
    %vm106 = vcmp.lt.s32.totalorder %v99, 16
    %vm107 = vmand %vm105, %vm106
    %v108 = vsel %vm107, 1, 0
    %v109 = vcvt.s32.f32 %v108
    %vm110 = vcmp.ge.s32.totalorder %v99, 16
    %vm111 = vcmp.lt.s32.totalorder %v99, 24
    %vm112 = vmand %vm110, %vm111
    %v113 = vsel %vm112, 1, 0
    %v114 = vcvt.s32.f32 %v113
    %vm115 = vcmp.ge.s32.totalorder %v99, 24
    %vm116 = vcmp.lt.s32.totalorder %v99, 32
    %vm117 = vmand %vm115, %vm116
    %v118 = vsel %vm117, 1, 0
    %v119 = vcvt.s32.f32 %v118
    %v120 = vld [vmem:[%s0] sm:$0xff]
    %v121 = vld [vmem:[%s0 + $0x8] sm:$0xff]
    %122 = vset.pattern.permute.xlu0 0
    %123 = vperm.xlu0 %122, %v120
    %v124 = vpop.permute.xlu0 %123
    %125 = vset.pattern.permute.xlu0 0
    %126 = vperm.xlu0 %125, %v121
    %v127 = vpop.permute.xlu0 %126
    %vm128 = vcmp.eq.s32.totalorder %v124, %v99
    %vm129 = vcmp.eq.s32.totalorder %v127, %v99
    %v130 = vsel %vm128, 1, 0
    %v131 = vsel %vm129, 1, 0
    %v132 = vcvt.s32.f32 %v130
    %v133 = vcvt.s32.f32 %v131
    %v134 = vld [vmem:[#allocation2] sm:$0xff]
    %v135 = vld [vmem:[#allocation2 + $0x8] sm:$0xff]
    %v136 = vld [vmem:[%s3] sm:$0xff]
    %v137 = vld [vmem:[%s3 + $0x8] sm:$0xff]
    %vm138 = vcmask 130048
    %v140 = vsel %vm138, %v132, 0
    %v143 = vsel %vm138, %v133, 0
    %145 = vmatprep.subr.mxu0 0.0
    %146 = vmatpush1.msra.mxu0 0.0
    %147 = vmatprep.subr.mxu0 0.0
    %148 = vmatpush1.msra.mxu0 0.0
    %149 = vmatprep.subr.mxu0 0.0
    %150 = vmatpush1.msra.mxu0 0.0
    %151 = vmatprep.subr.mxu0 0.0
    %152 = vmatpush1.msra.mxu0 0.0
    %153 = vmatprep.subr.mxu0 0.0
    %154 = vmatpush1.msra.mxu0 0.0
    %155 = vmatprep.subr.mxu0 0.0
    %156 = vmatpush1.msra.mxu0 0.0
    %157 = vmatprep.subr.mxu0 0.0
    %158 = vmatpush1.msra.mxu0 0.0
    %159 = vmatprep.subr.mxu0 0.0
    %160 = vmatpush1.msra.mxu0 0.0
    %161 = vmatprep.subr.mxu0 0.0
    %162 = vmatpush1.msra.mxu0 0.0
    %163 = vmatprep.subr.mxu0 0.0
    %164 = vmatpush1.msra.mxu0 0.0
    %165 = vmatprep.subr.mxu0 0.0
    %166 = vmatpush1.msra.mxu0 0.0
    %167 = vmatprep.subr.mxu0 0.0
    %168 = vmatpush1.msra.mxu0 0.0
    %169 = vmatprep.subr.mxu0 0.0
    %170 = vmatpush1.msra.mxu0 0.0
    %171 = vmatprep.subr.mxu0 0.0
    %172 = vmatpush1.msra.mxu0 0.0
    %173 = vmatprep.subr.mxu0 0.0
    %174 = vmatpush1.msra.mxu0 %v135
    %175 = vmatprep.subr.mxu0 0.0
    %176 = vmatpush1.msra.mxu0 %v134
    %177 = vmatprep.subr.mxu0 0.0
    %178 = vmatpush2.msra.mxu0 0.0
    %179 = vmatprep.subr.mxu0 0.0
    %180 = vmatpush2.msra.mxu0 0.0
    %181 = vmatprep.subr.mxu0 0.0
    %182 = vmatpush2.msra.mxu0 0.0
    %183 = vmatprep.subr.mxu0 0.0
    %184 = vmatpush2.msra.mxu0 0.0
    %185 = vmatprep.subr.mxu0 0.0
    %186 = vmatpush2.msra.mxu0 0.0
    %187 = vmatprep.subr.mxu0 0.0
    %188 = vmatpush2.msra.mxu0 0.0
    %189 = vmatprep.subr.mxu0 0.0
    %190 = vmatpush2.msra.mxu0 0.0
    %191 = vmatprep.subr.mxu0 0.0
    %192 = vmatpush2.msra.mxu0 0.0
    %193 = vmatprep.subr.mxu0 0.0
    %194 = vmatpush2.msra.mxu0 0.0
    %195 = vmatprep.subr.mxu0 0.0
    %196 = vmatpush2.msra.mxu0 0.0
    %197 = vmatprep.subr.mxu0 0.0
    %198 = vmatpush2.msra.mxu0 0.0
    %199 = vmatprep.subr.mxu0 0.0
    %200 = vmatpush2.msra.mxu0 0.0
    %201 = vmatprep.subr.mxu0 0.0
    %202 = vmatpush2.msra.mxu0 0.0
    %203 = vmatprep.subr.mxu0 0.0
    %204 = vmatpush2.msra.mxu0 0.0
    %205 = vmatprep.subr.mxu0 0.0
    %206 = vmatpush2.msra.mxu0 0.0
    %207 = vmatprep.subr.mxu0 0.0
    %208 = vmatpush2.msra.mxu0 0.0
    %209 = vmatprep.mubr.f32.mxu0 0.0
    %210 = vmatmul.mubr.f32.gmra.mxu0 %v140
    %v211 = vpop.f32.mrf.mxu0
    %v212 = vadd.f32 %v136, %v211
    %v213 = vpop.f32.mrf.mxu0
    %214 = vmatprep.mubr.f32.mxu0 0.0
    %215 = vmatmul.mubr.f32.gmra.mxu0 %v143
    %v216 = vpop.f32.mrf.mxu0
    %v217 = vadd.f32 %v137, %v216
    %v218 = vpop.f32.mrf.mxu0
    %219 = vdwg.mxu0
    %v220 = vld [vmem:[%s1] sm:$0xff]
    %v221 = vld [vmem:[%s1 + $0x8] sm:$0xff]
    %v222 = vld [vmem:[%s1 + $0x10] sm:$0xff]
    %v223 = vld [vmem:[%s1 + $0x18] sm:$0xff]
    %v224 = vld [vmem:[%s8] sm:$0xff]
    %v225 = vld [vmem:[%s8 + $0x8] sm:$0xff]
    %v226 = vld [vmem:[%s8 + $0x10] sm:$0xff]
    %v227 = vld [vmem:[%s8 + $0x18] sm:$0xff]
    %v228 = vld [vmem:[%s9] sm:$0x1]
    %v230 = vlaneseq
    %v231 = vshrl.u32 %v230, 7
    %v232 = vsub.s32 0, %v231
    %v233 = vrot.slane %v228, %v232
    %vm235 = vcmask 261120
    %v237 = vsel %vm235, %v220, 0
    %v240 = vsel %vm235, %v221, 0
    %v243 = vsel %vm235, %v222, 0
    %v246 = vsel %vm235, %v223, 0
    %248 = vmatprep.subr.mxu0 0.0
    %249 = vmatpush1.msra.mxu0 0.0
    %250 = vmatprep.subr.mxu0 0.0
    %251 = vmatpush1.msra.mxu0 0.0
    %252 = vmatprep.subr.mxu0 0.0
    %253 = vmatpush1.msra.mxu0 0.0
    %254 = vmatprep.subr.mxu0 0.0
    %255 = vmatpush1.msra.mxu0 0.0
    %256 = vmatprep.subr.mxu0 0.0
    %257 = vmatpush1.msra.mxu0 0.0
    %258 = vmatprep.subr.mxu0 0.0
    %259 = vmatpush1.msra.mxu0 0.0
    %260 = vmatprep.subr.mxu0 0.0
    %261 = vmatpush1.msra.mxu0 0.0
    %262 = vmatprep.subr.mxu0 0.0
    %263 = vmatpush1.msra.mxu0 0.0
    %264 = vmatprep.subr.mxu0 0.0
    %265 = vmatpush1.msra.mxu0 0.0
    %266 = vmatprep.subr.mxu0 0.0
    %267 = vmatpush1.msra.mxu0 0.0
    %268 = vmatprep.subr.mxu0 0.0
    %269 = vmatpush1.msra.mxu0 0.0
    %270 = vmatprep.subr.mxu0 0.0
    %271 = vmatpush1.msra.mxu0 0.0
    %272 = vmatprep.subr.mxu0 0.0
    %273 = vmatpush1.msra.mxu0 %v227
    %274 = vmatprep.subr.mxu0 0.0
    %275 = vmatpush1.msra.mxu0 %v226
    %276 = vmatprep.subr.mxu0 0.0
    %277 = vmatpush1.msra.mxu0 %v225
    %278 = vmatprep.subr.mxu0 0.0
    %279 = vmatpush1.msra.mxu0 %v224
    %280 = vmatprep.subr.mxu0 0.0
    %281 = vmatpush2.msra.mxu0 0.0
    %282 = vmatprep.subr.mxu0 0.0
    %283 = vmatpush2.msra.mxu0 0.0
    %284 = vmatprep.subr.mxu0 0.0
    %285 = vmatpush2.msra.mxu0 0.0
    %286 = vmatprep.subr.mxu0 0.0
    %287 = vmatpush2.msra.mxu0 0.0
    %288 = vmatprep.subr.mxu0 0.0
    %289 = vmatpush2.msra.mxu0 0.0
    %290 = vmatprep.subr.mxu0 0.0
    %291 = vmatpush2.msra.mxu0 0.0
    %292 = vmatprep.subr.mxu0 0.0
    %293 = vmatpush2.msra.mxu0 0.0
    %294 = vmatprep.subr.mxu0 0.0
    %295 = vmatpush2.msra.mxu0 0.0
    %296 = vmatprep.subr.mxu0 0.0
    %297 = vmatpush2.msra.mxu0 0.0
    %298 = vmatprep.subr.mxu0 0.0
    %299 = vmatpush2.msra.mxu0 0.0
    %300 = vmatprep.subr.mxu0 0.0
    %301 = vmatpush2.msra.mxu0 0.0
    %302 = vmatprep.subr.mxu0 0.0
    %303 = vmatpush2.msra.mxu0 0.0
    %304 = vmatprep.subr.mxu0 0.0
    %305 = vmatpush2.msra.mxu0 0.0
    %306 = vmatprep.subr.mxu0 0.0
    %307 = vmatpush2.msra.mxu0 0.0
    %308 = vmatprep.subr.mxu0 0.0
    %309 = vmatpush2.msra.mxu0 0.0
    %310 = vmatprep.subr.mxu0 0.0
    %311 = vmatpush2.msra.mxu0 0.0
    %312 = vmatprep.mubr.f32.mxu0 0.0
    %313 = vmatmul.mubr.f32.gmra.mxu0 %v237
    %v314 = vpop.f32.mrf.mxu0
    %v315 = vadd.f32 %v233, %v314
    %v316 = vpop.f32.mrf.mxu0
    %317 = vmatprep.mubr.f32.mxu0 0.0
    %318 = vmatmul.mubr.f32.gmra.mxu0 %v240
    %v319 = vpop.f32.mrf.mxu0
    %v320 = vadd.f32 %v233, %v319
    %v321 = vpop.f32.mrf.mxu0
    %322 = vmatprep.mubr.f32.mxu0 0.0
    %323 = vmatmul.mubr.f32.gmra.mxu0 %v243
    %v324 = vpop.f32.mrf.mxu0
    %v325 = vadd.f32 %v233, %v324
    %v326 = vpop.f32.mrf.mxu0
    %327 = vmatprep.mubr.f32.mxu0 0.0
    %328 = vmatmul.mubr.f32.gmra.mxu0 %v246
    %v329 = vpop.f32.mrf.mxu0
    %v330 = vadd.f32 %v233, %v329
    %v331 = vpop.f32.mrf.mxu0
    %332 = vdwg.mxu0
    %v333 = vld [vmem:[%s6] sm:$0xff]
    %v334 = vld [vmem:[%s6 + $0x8] sm:$0xff]
    %v335 = vld [vmem:[%s6 + $0x10] sm:$0xff]
    %v336 = vld [vmem:[%s6 + $0x18] sm:$0xff]
    %v337 = vld [vmem:[#allocation5] sm:$0x1]
    %v338 = vld [vmem:[%s14] sm:$0x3f]
    %v339 = vld [vmem:[%s4] sm:$0xff]
    %v340 = vld [vmem:[%s4 + $0x8] sm:$0xff]
    %v341 = vld [vmem:[%s4 + $0x10] sm:$0xff]
    %v342 = vld [vmem:[%s4 + $0x18] sm:$0xff]
    %v343 = vld [vmem:[%s5] sm:$0x1]
    %v345 = vlaneseq
    %v346 = vshrl.u32 %v345, 7
    %v347 = vsub.s32 0, %v346
    %v348 = vrot.slane %v343, %v347
    %v351 = vsel %vm235, %v212, 0
    %v354 = vsel %vm235, %v217, 0
    %356 = vmatprep.subr.mxu0 0.0
    %357 = vmatpush1.msra.mxu0 0.0
    %358 = vmatprep.subr.mxu0 0.0
    %359 = vmatpush1.msra.mxu0 0.0
    %360 = vmatprep.subr.mxu0 0.0
    %361 = vmatpush1.msra.mxu0 0.0
    %362 = vmatprep.subr.mxu0 0.0
    %363 = vmatpush1.msra.mxu0 0.0
    %364 = vmatprep.subr.mxu0 0.0
    %365 = vmatpush1.msra.mxu0 0.0
    %366 = vmatprep.subr.mxu0 0.0
    %367 = vmatpush1.msra.mxu0 0.0
    %368 = vmatprep.subr.mxu0 0.0
    %369 = vmatpush1.msra.mxu0 0.0
    %370 = vmatprep.subr.mxu0 0.0
    %371 = vmatpush1.msra.mxu0 0.0
    %372 = vmatprep.subr.mxu0 0.0
    %373 = vmatpush1.msra.mxu0 0.0
    %374 = vmatprep.subr.mxu0 0.0
    %375 = vmatpush1.msra.mxu0 0.0
    %376 = vmatprep.subr.mxu0 0.0
    %377 = vmatpush1.msra.mxu0 0.0
    %378 = vmatprep.subr.mxu0 0.0
    %379 = vmatpush1.msra.mxu0 0.0
    %380 = vmatprep.subr.mxu0 0.0
    %381 = vmatpush1.msra.mxu0 %v342
    %382 = vmatprep.subr.mxu0 0.0
    %383 = vmatpush1.msra.mxu0 %v341
    %384 = vmatprep.subr.mxu0 0.0
    %385 = vmatpush1.msra.mxu0 %v340
    %386 = vmatprep.subr.mxu0 0.0
    %387 = vmatpush1.msra.mxu0 %v339
    %388 = vmatprep.subr.mxu0 0.0
    %389 = vmatpush2.msra.mxu0 0.0
    %390 = vmatprep.subr.mxu0 0.0
    %391 = vmatpush2.msra.mxu0 0.0
    %392 = vmatprep.subr.mxu0 0.0
    %393 = vmatpush2.msra.mxu0 0.0
    %394 = vmatprep.subr.mxu0 0.0
    %395 = vmatpush2.msra.mxu0 0.0
    %396 = vmatprep.subr.mxu0 0.0
    %397 = vmatpush2.msra.mxu0 0.0
    %398 = vmatprep.subr.mxu0 0.0
    %399 = vmatpush2.msra.mxu0 0.0
    %400 = vmatprep.subr.mxu0 0.0
    %401 = vmatpush2.msra.mxu0 0.0
    %402 = vmatprep.subr.mxu0 0.0
    %403 = vmatpush2.msra.mxu0 0.0
    %404 = vmatprep.subr.mxu0 0.0
    %405 = vmatpush2.msra.mxu0 0.0
    %406 = vmatprep.subr.mxu0 0.0
    %407 = vmatpush2.msra.mxu0 0.0
    %408 = vmatprep.subr.mxu0 0.0
    %409 = vmatpush2.msra.mxu0 0.0
    %410 = vmatprep.subr.mxu0 0.0
    %411 = vmatpush2.msra.mxu0 0.0
    %412 = vmatprep.subr.mxu0 0.0
    %413 = vmatpush2.msra.mxu0 0.0
    %414 = vmatprep.subr.mxu0 0.0
    %415 = vmatpush2.msra.mxu0 0.0
    %416 = vmatprep.subr.mxu0 0.0
    %417 = vmatpush2.msra.mxu0 0.0
    %418 = vmatprep.subr.mxu0 0.0
    %419 = vmatpush2.msra.mxu0 0.0
    %420 = vmatprep.mubr.f32.mxu0 0.0
    %421 = vmatmul.mubr.f32.gmra.mxu0 %v351
    %v422 = vpop.f32.mrf.mxu0
    %v423 = vadd.f32 %v348, %v422
    %v424 = vpop.f32.mrf.mxu0
    %425 = vmatprep.mubr.f32.mxu0 0.0
    %426 = vmatmul.mubr.f32.gmra.mxu0 %v354
    %v427 = vpop.f32.mrf.mxu0
    %v428 = vadd.f32 %v348, %v427
    %v429 = vpop.f32.mrf.mxu0
    %430 = vdwg.mxu0
    %v431 = vmul.f32 %v423, %v104
    %v432 = vmul.f32 %v428, %v104
    %434 = vrot.lane.b32.xlu0 %v423, 96
    %v435 = vpop.permute.xlu0 %434
    %v437 = vsel %vm235, %v431, 0
    %v439 = vsel %vm235, %v435, 0
    %441 = vmatprep.subr.mxu0 0.0
    %442 = vmatpush1.xpose.msra.mxu0 0.0
    %443 = vmatprep.subr.mxu0 0.0
    %444 = vmatpush1.xpose.msra.mxu0 0.0
    %445 = vmatprep.subr.mxu0 0.0
    %446 = vmatpush1.xpose.msra.mxu0 0.0
    %447 = vmatprep.subr.mxu0 0.0
    %448 = vmatpush1.xpose.msra.mxu0 0.0
    %449 = vmatprep.subr.mxu0 0.0
    %450 = vmatpush1.xpose.msra.mxu0 0.0
    %451 = vmatprep.subr.mxu0 0.0
    %452 = vmatpush1.xpose.msra.mxu0 0.0
    %453 = vmatprep.subr.mxu0 0.0
    %454 = vmatpush1.xpose.msra.mxu0 0.0
    %455 = vmatprep.subr.mxu0 0.0
    %456 = vmatpush1.xpose.msra.mxu0 0.0
    %457 = vmatprep.subr.mxu0 0.0
    %458 = vmatpush1.xpose.msra.mxu0 0.0
    %459 = vmatprep.subr.mxu0 0.0
    %460 = vmatpush1.xpose.msra.mxu0 0.0
    %461 = vmatprep.subr.mxu0 0.0
    %462 = vmatpush1.xpose.msra.mxu0 0.0
    %463 = vmatprep.subr.mxu0 0.0
    %464 = vmatpush1.xpose.msra.mxu0 0.0
    %465 = vmatprep.subr.mxu0 0.0
    %466 = vmatpush1.xpose.msra.mxu0 0.0
    %467 = vmatprep.subr.mxu0 0.0
    %468 = vmatpush1.xpose.msra.mxu0 0.0
    %469 = vmatprep.subr.mxu0 0.0
    %470 = vmatpush1.xpose.msra.mxu0 0.0
    %471 = vmatprep.subr.mxu0 0.0
    %472 = vmatpush1.xpose.msra.mxu0 %v439
    %473 = vmatprep.subr.mxu0 0.0
    %474 = vmatpush2.xpose.msra.mxu0 0.0
    %475 = vmatprep.subr.mxu0 0.0
    %476 = vmatpush2.xpose.msra.mxu0 0.0
    %477 = vmatprep.subr.mxu0 0.0
    %478 = vmatpush2.xpose.msra.mxu0 0.0
    %479 = vmatprep.subr.mxu0 0.0
    %480 = vmatpush2.xpose.msra.mxu0 0.0
    %481 = vmatprep.subr.mxu0 0.0
    %482 = vmatpush2.xpose.msra.mxu0 0.0
    %483 = vmatprep.subr.mxu0 0.0
    %484 = vmatpush2.xpose.msra.mxu0 0.0
    %485 = vmatprep.subr.mxu0 0.0
    %486 = vmatpush2.xpose.msra.mxu0 0.0
    %487 = vmatprep.subr.mxu0 0.0
    %488 = vmatpush2.xpose.msra.mxu0 0.0
    %489 = vmatprep.subr.mxu0 0.0
    %490 = vmatpush2.xpose.msra.mxu0 0.0
    %491 = vmatprep.subr.mxu0 0.0
    %492 = vmatpush2.xpose.msra.mxu0 0.0
    %493 = vmatprep.subr.mxu0 0.0
    %494 = vmatpush2.xpose.msra.mxu0 0.0
    %495 = vmatprep.subr.mxu0 0.0
    %496 = vmatpush2.xpose.msra.mxu0 0.0
    %497 = vmatprep.subr.mxu0 0.0
    %498 = vmatpush2.xpose.msra.mxu0 0.0
    %499 = vmatprep.subr.mxu0 0.0
    %500 = vmatpush2.xpose.msra.mxu0 0.0
    %501 = vmatprep.subr.mxu0 0.0
    %502 = vmatpush2.xpose.msra.mxu0 0.0
    %503 = vmatprep.subr.mxu0 0.0
    %504 = vmatpush2.xpose.msra.mxu0 0.0
    %505 = vmatprep.mubr.f32.mxu0 0.0
    %506 = vmatmul.mubr.f32.gmra.mxu0 %v437
    %v507 = vpop.f32.mrf.mxu0
    %v508 = vadd.f32 0.0, %v507
    %v509 = vpop.f32.mrf.mxu0
    %510 = vdwg.mxu0
    %512 = vrot.lane.b32.xlu0 %v428, 96
    %v513 = vpop.permute.xlu0 %512
    %v515 = vsel %vm235, %v432, 0
    %v517 = vsel %vm235, %v513, 0
    %519 = vmatprep.subr.mxu0 0.0
    %520 = vmatpush1.xpose.msra.mxu0 0.0
    %521 = vmatprep.subr.mxu0 0.0
    %522 = vmatpush1.xpose.msra.mxu0 0.0
    %523 = vmatprep.subr.mxu0 0.0
    %524 = vmatpush1.xpose.msra.mxu0 0.0
    %525 = vmatprep.subr.mxu0 0.0
    %526 = vmatpush1.xpose.msra.mxu0 0.0
    %527 = vmatprep.subr.mxu0 0.0
    %528 = vmatpush1.xpose.msra.mxu0 0.0
    %529 = vmatprep.subr.mxu0 0.0
    %530 = vmatpush1.xpose.msra.mxu0 0.0
    %531 = vmatprep.subr.mxu0 0.0
    %532 = vmatpush1.xpose.msra.mxu0 0.0
    %533 = vmatprep.subr.mxu0 0.0
    %534 = vmatpush1.xpose.msra.mxu0 0.0
    %535 = vmatprep.subr.mxu0 0.0
    %536 = vmatpush1.xpose.msra.mxu0 0.0
    %537 = vmatprep.subr.mxu0 0.0
    %538 = vmatpush1.xpose.msra.mxu0 0.0
    %539 = vmatprep.subr.mxu0 0.0
    %540 = vmatpush1.xpose.msra.mxu0 0.0
    %541 = vmatprep.subr.mxu0 0.0
    %542 = vmatpush1.xpose.msra.mxu0 0.0
    %543 = vmatprep.subr.mxu0 0.0
    %544 = vmatpush1.xpose.msra.mxu0 0.0
    %545 = vmatprep.subr.mxu0 0.0
    %546 = vmatpush1.xpose.msra.mxu0 0.0
    %547 = vmatprep.subr.mxu0 0.0
    %548 = vmatpush1.xpose.msra.mxu0 0.0
    %549 = vmatprep.subr.mxu0 0.0
    %550 = vmatpush1.xpose.msra.mxu0 %v517
    %551 = vmatprep.subr.mxu0 0.0
    %552 = vmatpush2.xpose.msra.mxu0 0.0
    %553 = vmatprep.subr.mxu0 0.0
    %554 = vmatpush2.xpose.msra.mxu0 0.0
    %555 = vmatprep.subr.mxu0 0.0
    %556 = vmatpush2.xpose.msra.mxu0 0.0
    %557 = vmatprep.subr.mxu0 0.0
    %558 = vmatpush2.xpose.msra.mxu0 0.0
    %559 = vmatprep.subr.mxu0 0.0
    %560 = vmatpush2.xpose.msra.mxu0 0.0
    %561 = vmatprep.subr.mxu0 0.0
    %562 = vmatpush2.xpose.msra.mxu0 0.0
    %563 = vmatprep.subr.mxu0 0.0
    %564 = vmatpush2.xpose.msra.mxu0 0.0
    %565 = vmatprep.subr.mxu0 0.0
    %566 = vmatpush2.xpose.msra.mxu0 0.0
    %567 = vmatprep.subr.mxu0 0.0
    %568 = vmatpush2.xpose.msra.mxu0 0.0
    %569 = vmatprep.subr.mxu0 0.0
    %570 = vmatpush2.xpose.msra.mxu0 0.0
    %571 = vmatprep.subr.mxu0 0.0
    %572 = vmatpush2.xpose.msra.mxu0 0.0
    %573 = vmatprep.subr.mxu0 0.0
    %574 = vmatpush2.xpose.msra.mxu0 0.0
    %575 = vmatprep.subr.mxu0 0.0
    %576 = vmatpush2.xpose.msra.mxu0 0.0
    %577 = vmatprep.subr.mxu0 0.0
    %578 = vmatpush2.xpose.msra.mxu0 0.0
    %579 = vmatprep.subr.mxu0 0.0
    %580 = vmatpush2.xpose.msra.mxu0 0.0
    %581 = vmatprep.subr.mxu0 0.0
    %582 = vmatpush2.xpose.msra.mxu0 0.0
    %583 = vmatprep.mubr.f32.mxu0 0.0
    %584 = vmatmul.mubr.f32.gmra.mxu0 %v515
    %v585 = vpop.f32.mrf.mxu0
    %v586 = vadd.f32 0.0, %v585
    %v587 = vpop.f32.mrf.mxu0
    %588 = vdwg.mxu0
    %v589 = vmul.f32 %v508, 0.35355338
    %v590 = vmul.f32 %v586, 0.35355338
    %vm591 = vcmask 64512
    %v592 = vsel %vm591, %v589, -inf
    %593 = vmax.xlane.f32.xlu0 %v592
    %v594 = vpop.xlane.xlu0 %593
    %v595 = vsel %vm591, %v590, -inf
    %596 = vmax.xlane.f32.xlu0 %v595
    %v597 = vpop.xlane.xlu0 %596
    %v598 = vsub.f32 %v589, %v594
    %v599 = vsub.f32 %v590, %v597
    %v600 = vmul.f32 %v598, 1.442695
    %v601 = vpow.pop %v600
    %v602 = vmul.f32 %v599, 1.442695
    %v603 = vpow.pop %v602
    %v604 = vsel %vm591, %v601, 0.0
    %605 = vadd.xlane.f32.xlu0 %v604
    %v606 = vpop.xlane.xlu0 %605
    %v607 = vsel %vm591, %v603, 0.0
    %608 = vadd.xlane.f32.xlu0 %v607
    %v609 = vpop.xlane.xlu0 %608
    %v610 = vrcp.pop %v606
    %v611 = vrcp.pop %v609
    %v612 = vmul.f32 %v601, %v610
    %v613 = vmul.f32 %v603, %v611
    %614 = vrot.lane.b32.xlu0 %v423, 64
    %v615 = vpop.permute.xlu0 %614
    %v618 = vsel %vm591, %v612, 0
    %620 = vmatprep.subr.mxu0 0.0
    %621 = vmatpush1.msra.mxu0 0.0
    %622 = vmatprep.subr.mxu0 0.0
    %623 = vmatpush1.msra.mxu0 0.0
    %624 = vmatprep.subr.mxu0 0.0
    %625 = vmatpush1.msra.mxu0 0.0
    %626 = vmatprep.subr.mxu0 0.0
    %627 = vmatpush1.msra.mxu0 0.0
    %628 = vmatprep.subr.mxu0 0.0
    %629 = vmatpush1.msra.mxu0 0.0
    %630 = vmatprep.subr.mxu0 0.0
    %631 = vmatpush1.msra.mxu0 0.0
    %632 = vmatprep.subr.mxu0 0.0
    %633 = vmatpush1.msra.mxu0 0.0
    %634 = vmatprep.subr.mxu0 0.0
    %635 = vmatpush1.msra.mxu0 0.0
    %636 = vmatprep.subr.mxu0 0.0
    %637 = vmatpush1.msra.mxu0 0.0
    %638 = vmatprep.subr.mxu0 0.0
    %639 = vmatpush1.msra.mxu0 0.0
    %640 = vmatprep.subr.mxu0 0.0
    %641 = vmatpush1.msra.mxu0 0.0
    %642 = vmatprep.subr.mxu0 0.0
    %643 = vmatpush1.msra.mxu0 0.0
    %644 = vmatprep.subr.mxu0 0.0
    %645 = vmatpush1.msra.mxu0 0.0
    %646 = vmatprep.subr.mxu0 0.0
    %647 = vmatpush1.msra.mxu0 0.0
    %648 = vmatprep.subr.mxu0 0.0
    %649 = vmatpush1.msra.mxu0 0.0
    %650 = vmatprep.subr.mxu0 0.0
    %651 = vmatpush1.msra.mxu0 %v615
    %652 = vmatprep.subr.mxu0 0.0
    %653 = vmatpush2.msra.mxu0 0.0
    %654 = vmatprep.subr.mxu0 0.0
    %655 = vmatpush2.msra.mxu0 0.0
    %656 = vmatprep.subr.mxu0 0.0
    %657 = vmatpush2.msra.mxu0 0.0
    %658 = vmatprep.subr.mxu0 0.0
    %659 = vmatpush2.msra.mxu0 0.0
    %660 = vmatprep.subr.mxu0 0.0
    %661 = vmatpush2.msra.mxu0 0.0
    %662 = vmatprep.subr.mxu0 0.0
    %663 = vmatpush2.msra.mxu0 0.0
    %664 = vmatprep.subr.mxu0 0.0
    %665 = vmatpush2.msra.mxu0 0.0
    %666 = vmatprep.subr.mxu0 0.0
    %667 = vmatpush2.msra.mxu0 0.0
    %668 = vmatprep.subr.mxu0 0.0
    %669 = vmatpush2.msra.mxu0 0.0
    %670 = vmatprep.subr.mxu0 0.0
    %671 = vmatpush2.msra.mxu0 0.0
    %672 = vmatprep.subr.mxu0 0.0
    %673 = vmatpush2.msra.mxu0 0.0
    %674 = vmatprep.subr.mxu0 0.0
    %675 = vmatpush2.msra.mxu0 0.0
    %676 = vmatprep.subr.mxu0 0.0
    %677 = vmatpush2.msra.mxu0 0.0
    %678 = vmatprep.subr.mxu0 0.0
    %679 = vmatpush2.msra.mxu0 0.0
    %680 = vmatprep.subr.mxu0 0.0
    %681 = vmatpush2.msra.mxu0 0.0
    %682 = vmatprep.subr.mxu0 0.0
    %683 = vmatpush2.msra.mxu0 0.0
    %684 = vmatprep.mubr.f32.mxu0 0.0
    %685 = vmatmul.mubr.f32.gmra.mxu0 %v618
    %v686 = vpop.f32.mrf.mxu0
    %v687 = vadd.f32 0.0, %v686
    %v688 = vpop.f32.mrf.mxu0
    %689 = vdwg.mxu0
    %690 = vrot.lane.b32.xlu0 %v428, 64
    %v691 = vpop.permute.xlu0 %690
    %v694 = vsel %vm591, %v613, 0
    %696 = vmatprep.subr.mxu0 0.0
    %697 = vmatpush1.msra.mxu0 0.0
    %698 = vmatprep.subr.mxu0 0.0
    %699 = vmatpush1.msra.mxu0 0.0
    %700 = vmatprep.subr.mxu0 0.0
    %701 = vmatpush1.msra.mxu0 0.0
    %702 = vmatprep.subr.mxu0 0.0
    %703 = vmatpush1.msra.mxu0 0.0
    %704 = vmatprep.subr.mxu0 0.0
    %705 = vmatpush1.msra.mxu0 0.0
    %706 = vmatprep.subr.mxu0 0.0
    %707 = vmatpush1.msra.mxu0 0.0
    %708 = vmatprep.subr.mxu0 0.0
    %709 = vmatpush1.msra.mxu0 0.0
    %710 = vmatprep.subr.mxu0 0.0
    %711 = vmatpush1.msra.mxu0 0.0
    %712 = vmatprep.subr.mxu0 0.0
    %713 = vmatpush1.msra.mxu0 0.0
    %714 = vmatprep.subr.mxu0 0.0
    %715 = vmatpush1.msra.mxu0 0.0
    %716 = vmatprep.subr.mxu0 0.0
    %717 = vmatpush1.msra.mxu0 0.0
    %718 = vmatprep.subr.mxu0 0.0
    %719 = vmatpush1.msra.mxu0 0.0
    %720 = vmatprep.subr.mxu0 0.0
    %721 = vmatpush1.msra.mxu0 0.0
    %722 = vmatprep.subr.mxu0 0.0
    %723 = vmatpush1.msra.mxu0 0.0
    %724 = vmatprep.subr.mxu0 0.0
    %725 = vmatpush1.msra.mxu0 0.0
    %726 = vmatprep.subr.mxu0 0.0
    %727 = vmatpush1.msra.mxu0 %v691
    %728 = vmatprep.subr.mxu0 0.0
    %729 = vmatpush2.msra.mxu0 0.0
    %730 = vmatprep.subr.mxu0 0.0
    %731 = vmatpush2.msra.mxu0 0.0
    %732 = vmatprep.subr.mxu0 0.0
    %733 = vmatpush2.msra.mxu0 0.0
    %734 = vmatprep.subr.mxu0 0.0
    %735 = vmatpush2.msra.mxu0 0.0
    %736 = vmatprep.subr.mxu0 0.0
    %737 = vmatpush2.msra.mxu0 0.0
    %738 = vmatprep.subr.mxu0 0.0
    %739 = vmatpush2.msra.mxu0 0.0
    %740 = vmatprep.subr.mxu0 0.0
    %741 = vmatpush2.msra.mxu0 0.0
    %742 = vmatprep.subr.mxu0 0.0
    %743 = vmatpush2.msra.mxu0 0.0
    %744 = vmatprep.subr.mxu0 0.0
    %745 = vmatpush2.msra.mxu0 0.0
    %746 = vmatprep.subr.mxu0 0.0
    %747 = vmatpush2.msra.mxu0 0.0
    %748 = vmatprep.subr.mxu0 0.0
    %749 = vmatpush2.msra.mxu0 0.0
    %750 = vmatprep.subr.mxu0 0.0
    %751 = vmatpush2.msra.mxu0 0.0
    %752 = vmatprep.subr.mxu0 0.0
    %753 = vmatpush2.msra.mxu0 0.0
    %754 = vmatprep.subr.mxu0 0.0
    %755 = vmatpush2.msra.mxu0 0.0
    %756 = vmatprep.subr.mxu0 0.0
    %757 = vmatpush2.msra.mxu0 0.0
    %758 = vmatprep.subr.mxu0 0.0
    %759 = vmatpush2.msra.mxu0 0.0
    %760 = vmatprep.mubr.f32.mxu0 0.0
    %761 = vmatmul.mubr.f32.gmra.mxu0 %v694
    %v762 = vpop.f32.mrf.mxu0
    %v763 = vadd.f32 0.0, %v762
    %v764 = vpop.f32.mrf.mxu0
    %765 = vdwg.mxu0
    %v766 = vmul.f32 %v687, %v104
    %v767 = vmul.f32 %v763, %v104
    %v768 = vadd.f32 %v766, 0.0
    %v769 = vadd.f32 %v767, 0.0
    %v770 = vmul.f32 %v423, %v109
    %v771 = vmul.f32 %v428, %v109
    %v773 = vsel %vm235, %v770, 0
    %775 = vmatprep.subr.mxu0 0.0
    %776 = vmatpush1.xpose.msra.mxu0 0.0
    %777 = vmatprep.subr.mxu0 0.0
    %778 = vmatpush1.xpose.msra.mxu0 0.0
    %779 = vmatprep.subr.mxu0 0.0
    %780 = vmatpush1.xpose.msra.mxu0 0.0
    %781 = vmatprep.subr.mxu0 0.0
    %782 = vmatpush1.xpose.msra.mxu0 0.0
    %783 = vmatprep.subr.mxu0 0.0
    %784 = vmatpush1.xpose.msra.mxu0 0.0
    %785 = vmatprep.subr.mxu0 0.0
    %786 = vmatpush1.xpose.msra.mxu0 0.0
    %787 = vmatprep.subr.mxu0 0.0
    %788 = vmatpush1.xpose.msra.mxu0 0.0
    %789 = vmatprep.subr.mxu0 0.0
    %790 = vmatpush1.xpose.msra.mxu0 0.0
    %791 = vmatprep.subr.mxu0 0.0
    %792 = vmatpush1.xpose.msra.mxu0 0.0
    %793 = vmatprep.subr.mxu0 0.0
    %794 = vmatpush1.xpose.msra.mxu0 0.0
    %795 = vmatprep.subr.mxu0 0.0
    %796 = vmatpush1.xpose.msra.mxu0 0.0
    %797 = vmatprep.subr.mxu0 0.0
    %798 = vmatpush1.xpose.msra.mxu0 0.0
    %799 = vmatprep.subr.mxu0 0.0
    %800 = vmatpush1.xpose.msra.mxu0 0.0
    %801 = vmatprep.subr.mxu0 0.0
    %802 = vmatpush1.xpose.msra.mxu0 0.0
    %803 = vmatprep.subr.mxu0 0.0
    %804 = vmatpush1.xpose.msra.mxu0 0.0
    %805 = vmatprep.subr.mxu0 0.0
    %806 = vmatpush1.xpose.msra.mxu0 %v439
    %807 = vmatprep.subr.mxu0 0.0
    %808 = vmatpush2.xpose.msra.mxu0 0.0
    %809 = vmatprep.subr.mxu0 0.0
    %810 = vmatpush2.xpose.msra.mxu0 0.0
    %811 = vmatprep.subr.mxu0 0.0
    %812 = vmatpush2.xpose.msra.mxu0 0.0
    %813 = vmatprep.subr.mxu0 0.0
    %814 = vmatpush2.xpose.msra.mxu0 0.0
    %815 = vmatprep.subr.mxu0 0.0
    %816 = vmatpush2.xpose.msra.mxu0 0.0
    %817 = vmatprep.subr.mxu0 0.0
    %818 = vmatpush2.xpose.msra.mxu0 0.0
    %819 = vmatprep.subr.mxu0 0.0
    %820 = vmatpush2.xpose.msra.mxu0 0.0
    %821 = vmatprep.subr.mxu0 0.0
    %822 = vmatpush2.xpose.msra.mxu0 0.0
    %823 = vmatprep.subr.mxu0 0.0
    %824 = vmatpush2.xpose.msra.mxu0 0.0
    %825 = vmatprep.subr.mxu0 0.0
    %826 = vmatpush2.xpose.msra.mxu0 0.0
    %827 = vmatprep.subr.mxu0 0.0
    %828 = vmatpush2.xpose.msra.mxu0 0.0
    %829 = vmatprep.subr.mxu0 0.0
    %830 = vmatpush2.xpose.msra.mxu0 0.0
    %831 = vmatprep.subr.mxu0 0.0
    %832 = vmatpush2.xpose.msra.mxu0 0.0
    %833 = vmatprep.subr.mxu0 0.0
    %834 = vmatpush2.xpose.msra.mxu0 0.0
    %835 = vmatprep.subr.mxu0 0.0
    %836 = vmatpush2.xpose.msra.mxu0 0.0
    %837 = vmatprep.subr.mxu0 0.0
    %838 = vmatpush2.xpose.msra.mxu0 0.0
    %839 = vmatprep.mubr.f32.mxu0 0.0
    %840 = vmatmul.mubr.f32.gmra.mxu0 %v773
    %v841 = vpop.f32.mrf.mxu0
    %v842 = vadd.f32 0.0, %v841
    %v843 = vpop.f32.mrf.mxu0
    %844 = vdwg.mxu0
    %v846 = vsel %vm235, %v771, 0
    %848 = vmatprep.subr.mxu0 0.0
    %849 = vmatpush1.xpose.msra.mxu0 0.0
    %850 = vmatprep.subr.mxu0 0.0
    %851 = vmatpush1.xpose.msra.mxu0 0.0
    %852 = vmatprep.subr.mxu0 0.0
    %853 = vmatpush1.xpose.msra.mxu0 0.0
    %854 = vmatprep.subr.mxu0 0.0
    %855 = vmatpush1.xpose.msra.mxu0 0.0
    %856 = vmatprep.subr.mxu0 0.0
    %857 = vmatpush1.xpose.msra.mxu0 0.0
    %858 = vmatprep.subr.mxu0 0.0
    %859 = vmatpush1.xpose.msra.mxu0 0.0
    %860 = vmatprep.subr.mxu0 0.0
    %861 = vmatpush1.xpose.msra.mxu0 0.0
    %862 = vmatprep.subr.mxu0 0.0
    %863 = vmatpush1.xpose.msra.mxu0 0.0
    %864 = vmatprep.subr.mxu0 0.0
    %865 = vmatpush1.xpose.msra.mxu0 0.0
    %866 = vmatprep.subr.mxu0 0.0
    %867 = vmatpush1.xpose.msra.mxu0 0.0
    %868 = vmatprep.subr.mxu0 0.0
    %869 = vmatpush1.xpose.msra.mxu0 0.0
    %870 = vmatprep.subr.mxu0 0.0
    %871 = vmatpush1.xpose.msra.mxu0 0.0
    %872 = vmatprep.subr.mxu0 0.0
    %873 = vmatpush1.xpose.msra.mxu0 0.0
    %874 = vmatprep.subr.mxu0 0.0
    %875 = vmatpush1.xpose.msra.mxu0 0.0
    %876 = vmatprep.subr.mxu0 0.0
    %877 = vmatpush1.xpose.msra.mxu0 0.0
    %878 = vmatprep.subr.mxu0 0.0
    %879 = vmatpush1.xpose.msra.mxu0 %v517
    %880 = vmatprep.subr.mxu0 0.0
    %881 = vmatpush2.xpose.msra.mxu0 0.0
    %882 = vmatprep.subr.mxu0 0.0
    %883 = vmatpush2.xpose.msra.mxu0 0.0
    %884 = vmatprep.subr.mxu0 0.0
    %885 = vmatpush2.xpose.msra.mxu0 0.0
    %886 = vmatprep.subr.mxu0 0.0
    %887 = vmatpush2.xpose.msra.mxu0 0.0
    %888 = vmatprep.subr.mxu0 0.0
    %889 = vmatpush2.xpose.msra.mxu0 0.0
    %890 = vmatprep.subr.mxu0 0.0
    %891 = vmatpush2.xpose.msra.mxu0 0.0
    %892 = vmatprep.subr.mxu0 0.0
    %893 = vmatpush2.xpose.msra.mxu0 0.0
    %894 = vmatprep.subr.mxu0 0.0
    %895 = vmatpush2.xpose.msra.mxu0 0.0
    %896 = vmatprep.subr.mxu0 0.0
    %897 = vmatpush2.xpose.msra.mxu0 0.0
    %898 = vmatprep.subr.mxu0 0.0
    %899 = vmatpush2.xpose.msra.mxu0 0.0
    %900 = vmatprep.subr.mxu0 0.0
    %901 = vmatpush2.xpose.msra.mxu0 0.0
    %902 = vmatprep.subr.mxu0 0.0
    %903 = vmatpush2.xpose.msra.mxu0 0.0
    %904 = vmatprep.subr.mxu0 0.0
    %905 = vmatpush2.xpose.msra.mxu0 0.0
    %906 = vmatprep.subr.mxu0 0.0
    %907 = vmatpush2.xpose.msra.mxu0 0.0
    %908 = vmatprep.subr.mxu0 0.0
    %909 = vmatpush2.xpose.msra.mxu0 0.0
    %910 = vmatprep.subr.mxu0 0.0
    %911 = vmatpush2.xpose.msra.mxu0 0.0
    %912 = vmatprep.mubr.f32.mxu0 0.0
    %913 = vmatmul.mubr.f32.gmra.mxu0 %v846
    %v914 = vpop.f32.mrf.mxu0
    %v915 = vadd.f32 0.0, %v914
    %v916 = vpop.f32.mrf.mxu0
    %917 = vdwg.mxu0
    %v918 = vmul.f32 %v842, 0.35355338
    %v919 = vmul.f32 %v915, 0.35355338
    %v920 = vsel %vm591, %v918, -inf
    %921 = vmax.xlane.f32.xlu0 %v920
    %v922 = vpop.xlane.xlu0 %921
    %v923 = vsel %vm591, %v919, -inf
    %924 = vmax.xlane.f32.xlu0 %v923
    %v925 = vpop.xlane.xlu0 %924
    %v926 = vsub.f32 %v918, %v922
    %v927 = vsub.f32 %v919, %v925
    %v928 = vmul.f32 %v926, 1.442695
    %v929 = vpow.pop %v928
    %v930 = vmul.f32 %v927, 1.442695
    %v931 = vpow.pop %v930
    %v932 = vsel %vm591, %v929, 0.0
    %933 = vadd.xlane.f32.xlu0 %v932
    %v934 = vpop.xlane.xlu0 %933
    %v935 = vsel %vm591, %v931, 0.0
    %936 = vadd.xlane.f32.xlu0 %v935
    %v937 = vpop.xlane.xlu0 %936
    %v938 = vrcp.pop %v934
    %v939 = vrcp.pop %v937
    %v940 = vmul.f32 %v929, %v938
    %v941 = vmul.f32 %v931, %v939
    %v943 = vsel %vm591, %v940, 0
    %945 = vmatprep.subr.mxu0 0.0
    %946 = vmatpush1.msra.mxu0 0.0
    %947 = vmatprep.subr.mxu0 0.0
    %948 = vmatpush1.msra.mxu0 0.0
    %949 = vmatprep.subr.mxu0 0.0
    %950 = vmatpush1.msra.mxu0 0.0
    %951 = vmatprep.subr.mxu0 0.0
    %952 = vmatpush1.msra.mxu0 0.0
    %953 = vmatprep.subr.mxu0 0.0
    %954 = vmatpush1.msra.mxu0 0.0
    %955 = vmatprep.subr.mxu0 0.0
    %956 = vmatpush1.msra.mxu0 0.0
    %957 = vmatprep.subr.mxu0 0.0
    %958 = vmatpush1.msra.mxu0 0.0
    %959 = vmatprep.subr.mxu0 0.0
    %960 = vmatpush1.msra.mxu0 0.0
    %961 = vmatprep.subr.mxu0 0.0
    %962 = vmatpush1.msra.mxu0 0.0
    %963 = vmatprep.subr.mxu0 0.0
    %964 = vmatpush1.msra.mxu0 0.0
    %965 = vmatprep.subr.mxu0 0.0
    %966 = vmatpush1.msra.mxu0 0.0
    %967 = vmatprep.subr.mxu0 0.0
    %968 = vmatpush1.msra.mxu0 0.0
    %969 = vmatprep.subr.mxu0 0.0
    %970 = vmatpush1.msra.mxu0 0.0
    %971 = vmatprep.subr.mxu0 0.0
    %972 = vmatpush1.msra.mxu0 0.0
    %973 = vmatprep.subr.mxu0 0.0
    %974 = vmatpush1.msra.mxu0 0.0
    %975 = vmatprep.subr.mxu0 0.0
    %976 = vmatpush1.msra.mxu0 %v615
    %977 = vmatprep.subr.mxu0 0.0
    %978 = vmatpush2.msra.mxu0 0.0
    %979 = vmatprep.subr.mxu0 0.0
    %980 = vmatpush2.msra.mxu0 0.0
    %981 = vmatprep.subr.mxu0 0.0
    %982 = vmatpush2.msra.mxu0 0.0
    %983 = vmatprep.subr.mxu0 0.0
    %984 = vmatpush2.msra.mxu0 0.0
    %985 = vmatprep.subr.mxu0 0.0
    %986 = vmatpush2.msra.mxu0 0.0
    %987 = vmatprep.subr.mxu0 0.0
    %988 = vmatpush2.msra.mxu0 0.0
    %989 = vmatprep.subr.mxu0 0.0
    %990 = vmatpush2.msra.mxu0 0.0
    %991 = vmatprep.subr.mxu0 0.0
    %992 = vmatpush2.msra.mxu0 0.0
    %993 = vmatprep.subr.mxu0 0.0
    %994 = vmatpush2.msra.mxu0 0.0
    %995 = vmatprep.subr.mxu0 0.0
    %996 = vmatpush2.msra.mxu0 0.0
    %997 = vmatprep.subr.mxu0 0.0
    %998 = vmatpush2.msra.mxu0 0.0
    %999 = vmatprep.subr.mxu0 0.0
    %1000 = vmatpush2.msra.mxu0 0.0
    %1001 = vmatprep.subr.mxu0 0.0
    %1002 = vmatpush2.msra.mxu0 0.0
    %1003 = vmatprep.subr.mxu0 0.0
    %1004 = vmatpush2.msra.mxu0 0.0
    %1005 = vmatprep.subr.mxu0 0.0
    %1006 = vmatpush2.msra.mxu0 0.0
    %1007 = vmatprep.subr.mxu0 0.0
    %1008 = vmatpush2.msra.mxu0 0.0
    %1009 = vmatprep.mubr.f32.mxu0 0.0
    %1010 = vmatmul.mubr.f32.gmra.mxu0 %v943
    %v1011 = vpop.f32.mrf.mxu0
    %v1012 = vadd.f32 0.0, %v1011
    %v1013 = vpop.f32.mrf.mxu0
    %1014 = vdwg.mxu0
    %v1016 = vsel %vm591, %v941, 0
    %1018 = vmatprep.subr.mxu0 0.0
    %1019 = vmatpush1.msra.mxu0 0.0
    %1020 = vmatprep.subr.mxu0 0.0
    %1021 = vmatpush1.msra.mxu0 0.0
    %1022 = vmatprep.subr.mxu0 0.0
    %1023 = vmatpush1.msra.mxu0 0.0
    %1024 = vmatprep.subr.mxu0 0.0
    %1025 = vmatpush1.msra.mxu0 0.0
    %1026 = vmatprep.subr.mxu0 0.0
    %1027 = vmatpush1.msra.mxu0 0.0
    %1028 = vmatprep.subr.mxu0 0.0
    %1029 = vmatpush1.msra.mxu0 0.0
    %1030 = vmatprep.subr.mxu0 0.0
    %1031 = vmatpush1.msra.mxu0 0.0
    %1032 = vmatprep.subr.mxu0 0.0
    %1033 = vmatpush1.msra.mxu0 0.0
    %1034 = vmatprep.subr.mxu0 0.0
    %1035 = vmatpush1.msra.mxu0 0.0
    %1036 = vmatprep.subr.mxu0 0.0
    %1037 = vmatpush1.msra.mxu0 0.0
    %1038 = vmatprep.subr.mxu0 0.0
    %1039 = vmatpush1.msra.mxu0 0.0
    %1040 = vmatprep.subr.mxu0 0.0
    %1041 = vmatpush1.msra.mxu0 0.0
    %1042 = vmatprep.subr.mxu0 0.0
    %1043 = vmatpush1.msra.mxu0 0.0
    %1044 = vmatprep.subr.mxu0 0.0
    %1045 = vmatpush1.msra.mxu0 0.0
    %1046 = vmatprep.subr.mxu0 0.0
    %1047 = vmatpush1.msra.mxu0 0.0
    %1048 = vmatprep.subr.mxu0 0.0
    %1049 = vmatpush1.msra.mxu0 %v691
    %1050 = vmatprep.subr.mxu0 0.0
    %1051 = vmatpush2.msra.mxu0 0.0
    %1052 = vmatprep.subr.mxu0 0.0
    %1053 = vmatpush2.msra.mxu0 0.0
    %1054 = vmatprep.subr.mxu0 0.0
    %1055 = vmatpush2.msra.mxu0 0.0
    %1056 = vmatprep.subr.mxu0 0.0
    %1057 = vmatpush2.msra.mxu0 0.0
    %1058 = vmatprep.subr.mxu0 0.0
    %1059 = vmatpush2.msra.mxu0 0.0
    %1060 = vmatprep.subr.mxu0 0.0
    %1061 = vmatpush2.msra.mxu0 0.0
    %1062 = vmatprep.subr.mxu0 0.0
    %1063 = vmatpush2.msra.mxu0 0.0
    %1064 = vmatprep.subr.mxu0 0.0
    %1065 = vmatpush2.msra.mxu0 0.0
    %1066 = vmatprep.subr.mxu0 0.0
    %1067 = vmatpush2.msra.mxu0 0.0
    %1068 = vmatprep.subr.mxu0 0.0
    %1069 = vmatpush2.msra.mxu0 0.0
    %1070 = vmatprep.subr.mxu0 0.0
    %1071 = vmatpush2.msra.mxu0 0.0
    %1072 = vmatprep.subr.mxu0 0.0
    %1073 = vmatpush2.msra.mxu0 0.0
    %1074 = vmatprep.subr.mxu0 0.0
    %1075 = vmatpush2.msra.mxu0 0.0
    %1076 = vmatprep.subr.mxu0 0.0
    %1077 = vmatpush2.msra.mxu0 0.0
    %1078 = vmatprep.subr.mxu0 0.0
    %1079 = vmatpush2.msra.mxu0 0.0
    %1080 = vmatprep.subr.mxu0 0.0
    %1081 = vmatpush2.msra.mxu0 0.0
    %1082 = vmatprep.mubr.f32.mxu0 0.0
    %1083 = vmatmul.mubr.f32.gmra.mxu0 %v1016
    %v1084 = vpop.f32.mrf.mxu0
    %v1085 = vadd.f32 0.0, %v1084
    %v1086 = vpop.f32.mrf.mxu0
    %1087 = vdwg.mxu0
    %v1088 = vmul.f32 %v1012, %v109
    %v1089 = vmul.f32 %v1085, %v109
    %v1090 = vadd.f32 %v768, %v1088
    %v1091 = vadd.f32 %v769, %v1089
    %v1092 = vmul.f32 %v423, %v114
    %v1093 = vmul.f32 %v428, %v114
    %v1095 = vsel %vm235, %v1092, 0
    %1097 = vmatprep.subr.mxu0 0.0
    %1098 = vmatpush1.xpose.msra.mxu0 0.0
    %1099 = vmatprep.subr.mxu0 0.0
    %1100 = vmatpush1.xpose.msra.mxu0 0.0
    %1101 = vmatprep.subr.mxu0 0.0
    %1102 = vmatpush1.xpose.msra.mxu0 0.0
    %1103 = vmatprep.subr.mxu0 0.0
    %1104 = vmatpush1.xpose.msra.mxu0 0.0
    %1105 = vmatprep.subr.mxu0 0.0
    %1106 = vmatpush1.xpose.msra.mxu0 0.0
    %1107 = vmatprep.subr.mxu0 0.0
    %1108 = vmatpush1.xpose.msra.mxu0 0.0
    %1109 = vmatprep.subr.mxu0 0.0
    %1110 = vmatpush1.xpose.msra.mxu0 0.0
    %1111 = vmatprep.subr.mxu0 0.0
    %1112 = vmatpush1.xpose.msra.mxu0 0.0
    %1113 = vmatprep.subr.mxu0 0.0
    %1114 = vmatpush1.xpose.msra.mxu0 0.0
    %1115 = vmatprep.subr.mxu0 0.0
    %1116 = vmatpush1.xpose.msra.mxu0 0.0
    %1117 = vmatprep.subr.mxu0 0.0
    %1118 = vmatpush1.xpose.msra.mxu0 0.0
    %1119 = vmatprep.subr.mxu0 0.0
    %1120 = vmatpush1.xpose.msra.mxu0 0.0
    %1121 = vmatprep.subr.mxu0 0.0
    %1122 = vmatpush1.xpose.msra.mxu0 0.0
    %1123 = vmatprep.subr.mxu0 0.0
    %1124 = vmatpush1.xpose.msra.mxu0 0.0
    %1125 = vmatprep.subr.mxu0 0.0
    %1126 = vmatpush1.xpose.msra.mxu0 0.0
    %1127 = vmatprep.subr.mxu0 0.0
    %1128 = vmatpush1.xpose.msra.mxu0 %v439
    %1129 = vmatprep.subr.mxu0 0.0
    %1130 = vmatpush2.xpose.msra.mxu0 0.0
    %1131 = vmatprep.subr.mxu0 0.0
    %1132 = vmatpush2.xpose.msra.mxu0 0.0
    %1133 = vmatprep.subr.mxu0 0.0
    %1134 = vmatpush2.xpose.msra.mxu0 0.0
    %1135 = vmatprep.subr.mxu0 0.0
    %1136 = vmatpush2.xpose.msra.mxu0 0.0
    %1137 = vmatprep.subr.mxu0 0.0
    %1138 = vmatpush2.xpose.msra.mxu0 0.0
    %1139 = vmatprep.subr.mxu0 0.0
    %1140 = vmatpush2.xpose.msra.mxu0 0.0
    %1141 = vmatprep.subr.mxu0 0.0
    %1142 = vmatpush2.xpose.msra.mxu0 0.0
    %1143 = vmatprep.subr.mxu0 0.0
    %1144 = vmatpush2.xpose.msra.mxu0 0.0
    %1145 = vmatprep.subr.mxu0 0.0
    %1146 = vmatpush2.xpose.msra.mxu0 0.0
    %1147 = vmatprep.subr.mxu0 0.0
    %1148 = vmatpush2.xpose.msra.mxu0 0.0
    %1149 = vmatprep.subr.mxu0 0.0
    %1150 = vmatpush2.xpose.msra.mxu0 0.0
    %1151 = vmatprep.subr.mxu0 0.0
    %1152 = vmatpush2.xpose.msra.mxu0 0.0
    %1153 = vmatprep.subr.mxu0 0.0
    %1154 = vmatpush2.xpose.msra.mxu0 0.0
    %1155 = vmatprep.subr.mxu0 0.0
    %1156 = vmatpush2.xpose.msra.mxu0 0.0
    %1157 = vmatprep.subr.mxu0 0.0
    %1158 = vmatpush2.xpose.msra.mxu0 0.0
    %1159 = vmatprep.subr.mxu0 0.0
    %1160 = vmatpush2.xpose.msra.mxu0 0.0
    %1161 = vmatprep.mubr.f32.mxu0 0.0
    %1162 = vmatmul.mubr.f32.gmra.mxu0 %v1095
    %v1163 = vpop.f32.mrf.mxu0
    %v1164 = vadd.f32 0.0, %v1163
    %v1165 = vpop.f32.mrf.mxu0
    %1166 = vdwg.mxu0
    %v1168 = vsel %vm235, %v1093, 0
    %1170 = vmatprep.subr.mxu0 0.0
    %1171 = vmatpush1.xpose.msra.mxu0 0.0
    %1172 = vmatprep.subr.mxu0 0.0
    %1173 = vmatpush1.xpose.msra.mxu0 0.0
    %1174 = vmatprep.subr.mxu0 0.0
    %1175 = vmatpush1.xpose.msra.mxu0 0.0
    %1176 = vmatprep.subr.mxu0 0.0
    %1177 = vmatpush1.xpose.msra.mxu0 0.0
    %1178 = vmatprep.subr.mxu0 0.0
    %1179 = vmatpush1.xpose.msra.mxu0 0.0
    %1180 = vmatprep.subr.mxu0 0.0
    %1181 = vmatpush1.xpose.msra.mxu0 0.0
    %1182 = vmatprep.subr.mxu0 0.0
    %1183 = vmatpush1.xpose.msra.mxu0 0.0
    %1184 = vmatprep.subr.mxu0 0.0
    %1185 = vmatpush1.xpose.msra.mxu0 0.0
    %1186 = vmatprep.subr.mxu0 0.0
    %1187 = vmatpush1.xpose.msra.mxu0 0.0
    %1188 = vmatprep.subr.mxu0 0.0
    %1189 = vmatpush1.xpose.msra.mxu0 0.0
    %1190 = vmatprep.subr.mxu0 0.0
    %1191 = vmatpush1.xpose.msra.mxu0 0.0
    %1192 = vmatprep.subr.mxu0 0.0
    %1193 = vmatpush1.xpose.msra.mxu0 0.0
    %1194 = vmatprep.subr.mxu0 0.0
    %1195 = vmatpush1.xpose.msra.mxu0 0.0
    %1196 = vmatprep.subr.mxu0 0.0
    %1197 = vmatpush1.xpose.msra.mxu0 0.0
    %1198 = vmatprep.subr.mxu0 0.0
    %1199 = vmatpush1.xpose.msra.mxu0 0.0
    %1200 = vmatprep.subr.mxu0 0.0
    %1201 = vmatpush1.xpose.msra.mxu0 %v517
    %1202 = vmatprep.subr.mxu0 0.0
    %1203 = vmatpush2.xpose.msra.mxu0 0.0
    %1204 = vmatprep.subr.mxu0 0.0
    %1205 = vmatpush2.xpose.msra.mxu0 0.0
    %1206 = vmatprep.subr.mxu0 0.0
    %1207 = vmatpush2.xpose.msra.mxu0 0.0
    %1208 = vmatprep.subr.mxu0 0.0
    %1209 = vmatpush2.xpose.msra.mxu0 0.0
    %1210 = vmatprep.subr.mxu0 0.0
    %1211 = vmatpush2.xpose.msra.mxu0 0.0
    %1212 = vmatprep.subr.mxu0 0.0
    %1213 = vmatpush2.xpose.msra.mxu0 0.0
    %1214 = vmatprep.subr.mxu0 0.0
    %1215 = vmatpush2.xpose.msra.mxu0 0.0
    %1216 = vmatprep.subr.mxu0 0.0
    %1217 = vmatpush2.xpose.msra.mxu0 0.0
    %1218 = vmatprep.subr.mxu0 0.0
    %1219 = vmatpush2.xpose.msra.mxu0 0.0
    %1220 = vmatprep.subr.mxu0 0.0
    %1221 = vmatpush2.xpose.msra.mxu0 0.0
    %1222 = vmatprep.subr.mxu0 0.0
    %1223 = vmatpush2.xpose.msra.mxu0 0.0
    %1224 = vmatprep.subr.mxu0 0.0
    %1225 = vmatpush2.xpose.msra.mxu0 0.0
    %1226 = vmatprep.subr.mxu0 0.0
    %1227 = vmatpush2.xpose.msra.mxu0 0.0
    %1228 = vmatprep.subr.mxu0 0.0
    %1229 = vmatpush2.xpose.msra.mxu0 0.0
    %1230 = vmatprep.subr.mxu0 0.0
    %1231 = vmatpush2.xpose.msra.mxu0 0.0
    %1232 = vmatprep.subr.mxu0 0.0
    %1233 = vmatpush2.xpose.msra.mxu0 0.0
    %1234 = vmatprep.mubr.f32.mxu0 0.0
    %1235 = vmatmul.mubr.f32.gmra.mxu0 %v1168
    %v1236 = vpop.f32.mrf.mxu0
    %v1237 = vadd.f32 0.0, %v1236
    %v1238 = vpop.f32.mrf.mxu0
    %1239 = vdwg.mxu0
    %v1240 = vmul.f32 %v1164, 0.35355338
    %v1241 = vmul.f32 %v1237, 0.35355338
    %v1242 = vsel %vm591, %v1240, -inf
    %1243 = vmax.xlane.f32.xlu0 %v1242
    %v1244 = vpop.xlane.xlu0 %1243
    %v1245 = vsel %vm591, %v1241, -inf
    %1246 = vmax.xlane.f32.xlu0 %v1245
    %v1247 = vpop.xlane.xlu0 %1246
    %v1248 = vsub.f32 %v1240, %v1244
    %v1249 = vsub.f32 %v1241, %v1247
    %v1250 = vmul.f32 %v1248, 1.442695
    %v1251 = vpow.pop %v1250
    %v1252 = vmul.f32 %v1249, 1.442695
    %v1253 = vpow.pop %v1252
    %v1254 = vsel %vm591, %v1251, 0.0
    %1255 = vadd.xlane.f32.xlu0 %v1254
    %v1256 = vpop.xlane.xlu0 %1255
    %v1257 = vsel %vm591, %v1253, 0.0
    %1258 = vadd.xlane.f32.xlu0 %v1257
    %v1259 = vpop.xlane.xlu0 %1258
    %v1260 = vrcp.pop %v1256
    %v1261 = vrcp.pop %v1259
    %v1262 = vmul.f32 %v1251, %v1260
    %v1263 = vmul.f32 %v1253, %v1261
    %v1265 = vsel %vm591, %v1262, 0
    %1267 = vmatprep.subr.mxu0 0.0
    %1268 = vmatpush1.msra.mxu0 0.0
    %1269 = vmatprep.subr.mxu0 0.0
    %1270 = vmatpush1.msra.mxu0 0.0
    %1271 = vmatprep.subr.mxu0 0.0
    %1272 = vmatpush1.msra.mxu0 0.0
    %1273 = vmatprep.subr.mxu0 0.0
    %1274 = vmatpush1.msra.mxu0 0.0
    %1275 = vmatprep.subr.mxu0 0.0
    %1276 = vmatpush1.msra.mxu0 0.0
    %1277 = vmatprep.subr.mxu0 0.0
    %1278 = vmatpush1.msra.mxu0 0.0
    %1279 = vmatprep.subr.mxu0 0.0
    %1280 = vmatpush1.msra.mxu0 0.0
    %1281 = vmatprep.subr.mxu0 0.0
    %1282 = vmatpush1.msra.mxu0 0.0
    %1283 = vmatprep.subr.mxu0 0.0
    %1284 = vmatpush1.msra.mxu0 0.0
    %1285 = vmatprep.subr.mxu0 0.0
    %1286 = vmatpush1.msra.mxu0 0.0
    %1287 = vmatprep.subr.mxu0 0.0
    %1288 = vmatpush1.msra.mxu0 0.0
    %1289 = vmatprep.subr.mxu0 0.0
    %1290 = vmatpush1.msra.mxu0 0.0
    %1291 = vmatprep.subr.mxu0 0.0
    %1292 = vmatpush1.msra.mxu0 0.0
    %1293 = vmatprep.subr.mxu0 0.0
    %1294 = vmatpush1.msra.mxu0 0.0
    %1295 = vmatprep.subr.mxu0 0.0
    %1296 = vmatpush1.msra.mxu0 0.0
    %1297 = vmatprep.subr.mxu0 0.0
    %1298 = vmatpush1.msra.mxu0 %v615
    %1299 = vmatprep.subr.mxu0 0.0
    %1300 = vmatpush2.msra.mxu0 0.0
    %1301 = vmatprep.subr.mxu0 0.0
    %1302 = vmatpush2.msra.mxu0 0.0
    %1303 = vmatprep.subr.mxu0 0.0
    %1304 = vmatpush2.msra.mxu0 0.0
    %1305 = vmatprep.subr.mxu0 0.0
    %1306 = vmatpush2.msra.mxu0 0.0
    %1307 = vmatprep.subr.mxu0 0.0
    %1308 = vmatpush2.msra.mxu0 0.0
    %1309 = vmatprep.subr.mxu0 0.0
    %1310 = vmatpush2.msra.mxu0 0.0
    %1311 = vmatprep.subr.mxu0 0.0
    %1312 = vmatpush2.msra.mxu0 0.0
    %1313 = vmatprep.subr.mxu0 0.0
    %1314 = vmatpush2.msra.mxu0 0.0
    %1315 = vmatprep.subr.mxu0 0.0
    %1316 = vmatpush2.msra.mxu0 0.0
    %1317 = vmatprep.subr.mxu0 0.0
    %1318 = vmatpush2.msra.mxu0 0.0
    %1319 = vmatprep.subr.mxu0 0.0
    %1320 = vmatpush2.msra.mxu0 0.0
    %1321 = vmatprep.subr.mxu0 0.0
    %1322 = vmatpush2.msra.mxu0 0.0
    %1323 = vmatprep.subr.mxu0 0.0
    %1324 = vmatpush2.msra.mxu0 0.0
    %1325 = vmatprep.subr.mxu0 0.0
    %1326 = vmatpush2.msra.mxu0 0.0
    %1327 = vmatprep.subr.mxu0 0.0
    %1328 = vmatpush2.msra.mxu0 0.0
    %1329 = vmatprep.subr.mxu0 0.0
    %1330 = vmatpush2.msra.mxu0 0.0
    %1331 = vmatprep.mubr.f32.mxu0 0.0
    %1332 = vmatmul.mubr.f32.gmra.mxu0 %v1265
    %v1333 = vpop.f32.mrf.mxu0
    %v1334 = vadd.f32 0.0, %v1333
    %v1335 = vpop.f32.mrf.mxu0
    %1336 = vdwg.mxu0
    %v1338 = vsel %vm591, %v1263, 0
    %1340 = vmatprep.subr.mxu0 0.0
    %1341 = vmatpush1.msra.mxu0 0.0
    %1342 = vmatprep.subr.mxu0 0.0
    %1343 = vmatpush1.msra.mxu0 0.0
    %1344 = vmatprep.subr.mxu0 0.0
    %1345 = vmatpush1.msra.mxu0 0.0
    %1346 = vmatprep.subr.mxu0 0.0
    %1347 = vmatpush1.msra.mxu0 0.0
    %1348 = vmatprep.subr.mxu0 0.0
    %1349 = vmatpush1.msra.mxu0 0.0
    %1350 = vmatprep.subr.mxu0 0.0
    %1351 = vmatpush1.msra.mxu0 0.0
    %1352 = vmatprep.subr.mxu0 0.0
    %1353 = vmatpush1.msra.mxu0 0.0
    %1354 = vmatprep.subr.mxu0 0.0
    %1355 = vmatpush1.msra.mxu0 0.0
    %1356 = vmatprep.subr.mxu0 0.0
    %1357 = vmatpush1.msra.mxu0 0.0
    %1358 = vmatprep.subr.mxu0 0.0
    %1359 = vmatpush1.msra.mxu0 0.0
    %1360 = vmatprep.subr.mxu0 0.0
    %1361 = vmatpush1.msra.mxu0 0.0
    %1362 = vmatprep.subr.mxu0 0.0
    %1363 = vmatpush1.msra.mxu0 0.0
    %1364 = vmatprep.subr.mxu0 0.0
    %1365 = vmatpush1.msra.mxu0 0.0
    %1366 = vmatprep.subr.mxu0 0.0
    %1367 = vmatpush1.msra.mxu0 0.0
    %1368 = vmatprep.subr.mxu0 0.0
    %1369 = vmatpush1.msra.mxu0 0.0
    %1370 = vmatprep.subr.mxu0 0.0
    %1371 = vmatpush1.msra.mxu0 %v691
    %1372 = vmatprep.subr.mxu0 0.0
    %1373 = vmatpush2.msra.mxu0 0.0
    %1374 = vmatprep.subr.mxu0 0.0
    %1375 = vmatpush2.msra.mxu0 0.0
    %1376 = vmatprep.subr.mxu0 0.0
    %1377 = vmatpush2.msra.mxu0 0.0
    %1378 = vmatprep.subr.mxu0 0.0
    %1379 = vmatpush2.msra.mxu0 0.0
    %1380 = vmatprep.subr.mxu0 0.0
    %1381 = vmatpush2.msra.mxu0 0.0
    %1382 = vmatprep.subr.mxu0 0.0
    %1383 = vmatpush2.msra.mxu0 0.0
    %1384 = vmatprep.subr.mxu0 0.0
    %1385 = vmatpush2.msra.mxu0 0.0
    %1386 = vmatprep.subr.mxu0 0.0
    %1387 = vmatpush2.msra.mxu0 0.0
    %1388 = vmatprep.subr.mxu0 0.0
    %1389 = vmatpush2.msra.mxu0 0.0
    %1390 = vmatprep.subr.mxu0 0.0
    %1391 = vmatpush2.msra.mxu0 0.0
    %1392 = vmatprep.subr.mxu0 0.0
    %1393 = vmatpush2.msra.mxu0 0.0
    %1394 = vmatprep.subr.mxu0 0.0
    %1395 = vmatpush2.msra.mxu0 0.0
    %1396 = vmatprep.subr.mxu0 0.0
    %1397 = vmatpush2.msra.mxu0 0.0
    %1398 = vmatprep.subr.mxu0 0.0
    %1399 = vmatpush2.msra.mxu0 0.0
    %1400 = vmatprep.subr.mxu0 0.0
    %1401 = vmatpush2.msra.mxu0 0.0
    %1402 = vmatprep.subr.mxu0 0.0
    %1403 = vmatpush2.msra.mxu0 0.0
    %1404 = vmatprep.mubr.f32.mxu0 0.0
    %1405 = vmatmul.mubr.f32.gmra.mxu0 %v1338
    %v1406 = vpop.f32.mrf.mxu0
    %v1407 = vadd.f32 0.0, %v1406
    %v1408 = vpop.f32.mrf.mxu0
    %1409 = vdwg.mxu0
    %v1410 = vmul.f32 %v1334, %v114
    %v1411 = vmul.f32 %v1407, %v114
    %v1412 = vadd.f32 %v1090, %v1410
    %v1413 = vadd.f32 %v1091, %v1411
    %v1414 = vmul.f32 %v423, %v119
    %v1415 = vmul.f32 %v428, %v119
    %v1417 = vsel %vm235, %v1414, 0
    %1419 = vmatprep.subr.mxu0 0.0
    %1420 = vmatpush1.xpose.msra.mxu0 0.0
    %1421 = vmatprep.subr.mxu0 0.0
    %1422 = vmatpush1.xpose.msra.mxu0 0.0
    %1423 = vmatprep.subr.mxu0 0.0
    %1424 = vmatpush1.xpose.msra.mxu0 0.0
    %1425 = vmatprep.subr.mxu0 0.0
    %1426 = vmatpush1.xpose.msra.mxu0 0.0
    %1427 = vmatprep.subr.mxu0 0.0
    %1428 = vmatpush1.xpose.msra.mxu0 0.0
    %1429 = vmatprep.subr.mxu0 0.0
    %1430 = vmatpush1.xpose.msra.mxu0 0.0
    %1431 = vmatprep.subr.mxu0 0.0
    %1432 = vmatpush1.xpose.msra.mxu0 0.0
    %1433 = vmatprep.subr.mxu0 0.0
    %1434 = vmatpush1.xpose.msra.mxu0 0.0
    %1435 = vmatprep.subr.mxu0 0.0
    %1436 = vmatpush1.xpose.msra.mxu0 0.0
    %1437 = vmatprep.subr.mxu0 0.0
    %1438 = vmatpush1.xpose.msra.mxu0 0.0
    %1439 = vmatprep.subr.mxu0 0.0
    %1440 = vmatpush1.xpose.msra.mxu0 0.0
    %1441 = vmatprep.subr.mxu0 0.0
    %1442 = vmatpush1.xpose.msra.mxu0 0.0
    %1443 = vmatprep.subr.mxu0 0.0
    %1444 = vmatpush1.xpose.msra.mxu0 0.0
    %1445 = vmatprep.subr.mxu0 0.0
    %1446 = vmatpush1.xpose.msra.mxu0 0.0
    %1447 = vmatprep.subr.mxu0 0.0
    %1448 = vmatpush1.xpose.msra.mxu0 0.0
    %1449 = vmatprep.subr.mxu0 0.0
    %1450 = vmatpush1.xpose.msra.mxu0 %v439
    %1451 = vmatprep.subr.mxu0 0.0
    %1452 = vmatpush2.xpose.msra.mxu0 0.0
    %1453 = vmatprep.subr.mxu0 0.0
    %1454 = vmatpush2.xpose.msra.mxu0 0.0
    %1455 = vmatprep.subr.mxu0 0.0
    %1456 = vmatpush2.xpose.msra.mxu0 0.0
    %1457 = vmatprep.subr.mxu0 0.0
    %1458 = vmatpush2.xpose.msra.mxu0 0.0
    %1459 = vmatprep.subr.mxu0 0.0
    %1460 = vmatpush2.xpose.msra.mxu0 0.0
    %1461 = vmatprep.subr.mxu0 0.0
    %1462 = vmatpush2.xpose.msra.mxu0 0.0
    %1463 = vmatprep.subr.mxu0 0.0
    %1464 = vmatpush2.xpose.msra.mxu0 0.0
    %1465 = vmatprep.subr.mxu0 0.0
    %1466 = vmatpush2.xpose.msra.mxu0 0.0
    %1467 = vmatprep.subr.mxu0 0.0
    %1468 = vmatpush2.xpose.msra.mxu0 0.0
    %1469 = vmatprep.subr.mxu0 0.0
    %1470 = vmatpush2.xpose.msra.mxu0 0.0
    %1471 = vmatprep.subr.mxu0 0.0
    %1472 = vmatpush2.xpose.msra.mxu0 0.0
    %1473 = vmatprep.subr.mxu0 0.0
    %1474 = vmatpush2.xpose.msra.mxu0 0.0
    %1475 = vmatprep.subr.mxu0 0.0
    %1476 = vmatpush2.xpose.msra.mxu0 0.0
    %1477 = vmatprep.subr.mxu0 0.0
    %1478 = vmatpush2.xpose.msra.mxu0 0.0
    %1479 = vmatprep.subr.mxu0 0.0
    %1480 = vmatpush2.xpose.msra.mxu0 0.0
    %1481 = vmatprep.subr.mxu0 0.0
    %1482 = vmatpush2.xpose.msra.mxu0 0.0
    %1483 = vmatprep.mubr.f32.mxu0 0.0
    %1484 = vmatmul.mubr.f32.gmra.mxu0 %v1417
    %v1485 = vpop.f32.mrf.mxu0
    %v1486 = vadd.f32 0.0, %v1485
    %v1487 = vpop.f32.mrf.mxu0
    %1488 = vdwg.mxu0
    %v1490 = vsel %vm235, %v1415, 0
    %1492 = vmatprep.subr.mxu0 0.0
    %1493 = vmatpush1.xpose.msra.mxu0 0.0
    %1494 = vmatprep.subr.mxu0 0.0
    %1495 = vmatpush1.xpose.msra.mxu0 0.0
    %1496 = vmatprep.subr.mxu0 0.0
    %1497 = vmatpush1.xpose.msra.mxu0 0.0
    %1498 = vmatprep.subr.mxu0 0.0
    %1499 = vmatpush1.xpose.msra.mxu0 0.0
    %1500 = vmatprep.subr.mxu0 0.0
    %1501 = vmatpush1.xpose.msra.mxu0 0.0
    %1502 = vmatprep.subr.mxu0 0.0
    %1503 = vmatpush1.xpose.msra.mxu0 0.0
    %1504 = vmatprep.subr.mxu0 0.0
    %1505 = vmatpush1.xpose.msra.mxu0 0.0
    %1506 = vmatprep.subr.mxu0 0.0
    %1507 = vmatpush1.xpose.msra.mxu0 0.0
    %1508 = vmatprep.subr.mxu0 0.0
    %1509 = vmatpush1.xpose.msra.mxu0 0.0
    %1510 = vmatprep.subr.mxu0 0.0
    %1511 = vmatpush1.xpose.msra.mxu0 0.0
    %1512 = vmatprep.subr.mxu0 0.0
    %1513 = vmatpush1.xpose.msra.mxu0 0.0
    %1514 = vmatprep.subr.mxu0 0.0
    %1515 = vmatpush1.xpose.msra.mxu0 0.0
    %1516 = vmatprep.subr.mxu0 0.0
    %1517 = vmatpush1.xpose.msra.mxu0 0.0
    %1518 = vmatprep.subr.mxu0 0.0
    %1519 = vmatpush1.xpose.msra.mxu0 0.0
    %1520 = vmatprep.subr.mxu0 0.0
    %1521 = vmatpush1.xpose.msra.mxu0 0.0
    %1522 = vmatprep.subr.mxu0 0.0
    %1523 = vmatpush1.xpose.msra.mxu0 %v517
    %1524 = vmatprep.subr.mxu0 0.0
    %1525 = vmatpush2.xpose.msra.mxu0 0.0
    %1526 = vmatprep.subr.mxu0 0.0
    %1527 = vmatpush2.xpose.msra.mxu0 0.0
    %1528 = vmatprep.subr.mxu0 0.0
    %1529 = vmatpush2.xpose.msra.mxu0 0.0
    %1530 = vmatprep.subr.mxu0 0.0
    %1531 = vmatpush2.xpose.msra.mxu0 0.0
    %1532 = vmatprep.subr.mxu0 0.0
    %1533 = vmatpush2.xpose.msra.mxu0 0.0
    %1534 = vmatprep.subr.mxu0 0.0
    %1535 = vmatpush2.xpose.msra.mxu0 0.0
    %1536 = vmatprep.subr.mxu0 0.0
    %1537 = vmatpush2.xpose.msra.mxu0 0.0
    %1538 = vmatprep.subr.mxu0 0.0
    %1539 = vmatpush2.xpose.msra.mxu0 0.0
    %1540 = vmatprep.subr.mxu0 0.0
    %1541 = vmatpush2.xpose.msra.mxu0 0.0
    %1542 = vmatprep.subr.mxu0 0.0
    %1543 = vmatpush2.xpose.msra.mxu0 0.0
    %1544 = vmatprep.subr.mxu0 0.0
    %1545 = vmatpush2.xpose.msra.mxu0 0.0
    %1546 = vmatprep.subr.mxu0 0.0
    %1547 = vmatpush2.xpose.msra.mxu0 0.0
    %1548 = vmatprep.subr.mxu0 0.0
    %1549 = vmatpush2.xpose.msra.mxu0 0.0
    %1550 = vmatprep.subr.mxu0 0.0
    %1551 = vmatpush2.xpose.msra.mxu0 0.0
    %1552 = vmatprep.subr.mxu0 0.0
    %1553 = vmatpush2.xpose.msra.mxu0 0.0
    %1554 = vmatprep.subr.mxu0 0.0
    %1555 = vmatpush2.xpose.msra.mxu0 0.0
    %1556 = vmatprep.mubr.f32.mxu0 0.0
    %1557 = vmatmul.mubr.f32.gmra.mxu0 %v1490
    %v1558 = vpop.f32.mrf.mxu0
    %v1559 = vadd.f32 0.0, %v1558
    %v1560 = vpop.f32.mrf.mxu0
    %1561 = vdwg.mxu0
    %v1562 = vmul.f32 %v1486, 0.35355338
    %v1563 = vmul.f32 %v1559, 0.35355338
    %v1564 = vsel %vm591, %v1562, -inf
    %1565 = vmax.xlane.f32.xlu0 %v1564
    %v1566 = vpop.xlane.xlu0 %1565
    %v1567 = vsel %vm591, %v1563, -inf
    %1568 = vmax.xlane.f32.xlu0 %v1567
    %v1569 = vpop.xlane.xlu0 %1568
    %v1570 = vsub.f32 %v1562, %v1566
    %v1571 = vsub.f32 %v1563, %v1569
    %v1572 = vmul.f32 %v1570, 1.442695
    %v1573 = vpow.pop %v1572
    %v1574 = vmul.f32 %v1571, 1.442695
    %v1575 = vpow.pop %v1574
    %v1576 = vsel %vm591, %v1573, 0.0
    %1577 = vadd.xlane.f32.xlu0 %v1576
    %v1578 = vpop.xlane.xlu0 %1577
    %v1579 = vsel %vm591, %v1575, 0.0
    %1580 = vadd.xlane.f32.xlu0 %v1579
    %v1581 = vpop.xlane.xlu0 %1580
    %v1582 = vrcp.pop %v1578
    %v1583 = vrcp.pop %v1581
    %v1584 = vmul.f32 %v1573, %v1582
    %v1585 = vmul.f32 %v1575, %v1583
    %v1587 = vsel %vm591, %v1584, 0
    %1589 = vmatprep.subr.mxu0 0.0
    %1590 = vmatpush1.msra.mxu0 0.0
    %1591 = vmatprep.subr.mxu0 0.0
    %1592 = vmatpush1.msra.mxu0 0.0
    %1593 = vmatprep.subr.mxu0 0.0
    %1594 = vmatpush1.msra.mxu0 0.0
    %1595 = vmatprep.subr.mxu0 0.0
    %1596 = vmatpush1.msra.mxu0 0.0
    %1597 = vmatprep.subr.mxu0 0.0
    %1598 = vmatpush1.msra.mxu0 0.0
    %1599 = vmatprep.subr.mxu0 0.0
    %1600 = vmatpush1.msra.mxu0 0.0
    %1601 = vmatprep.subr.mxu0 0.0
    %1602 = vmatpush1.msra.mxu0 0.0
    %1603 = vmatprep.subr.mxu0 0.0
    %1604 = vmatpush1.msra.mxu0 0.0
    %1605 = vmatprep.subr.mxu0 0.0
    %1606 = vmatpush1.msra.mxu0 0.0
    %1607 = vmatprep.subr.mxu0 0.0
    %1608 = vmatpush1.msra.mxu0 0.0
    %1609 = vmatprep.subr.mxu0 0.0
    %1610 = vmatpush1.msra.mxu0 0.0
    %1611 = vmatprep.subr.mxu0 0.0
    %1612 = vmatpush1.msra.mxu0 0.0
    %1613 = vmatprep.subr.mxu0 0.0
    %1614 = vmatpush1.msra.mxu0 0.0
    %1615 = vmatprep.subr.mxu0 0.0
    %1616 = vmatpush1.msra.mxu0 0.0
    %1617 = vmatprep.subr.mxu0 0.0
    %1618 = vmatpush1.msra.mxu0 0.0
    %1619 = vmatprep.subr.mxu0 0.0
    %1620 = vmatpush1.msra.mxu0 %v615
    %1621 = vmatprep.subr.mxu0 0.0
    %1622 = vmatpush2.msra.mxu0 0.0
    %1623 = vmatprep.subr.mxu0 0.0
    %1624 = vmatpush2.msra.mxu0 0.0
    %1625 = vmatprep.subr.mxu0 0.0
    %1626 = vmatpush2.msra.mxu0 0.0
    %1627 = vmatprep.subr.mxu0 0.0
    %1628 = vmatpush2.msra.mxu0 0.0
    %1629 = vmatprep.subr.mxu0 0.0
    %1630 = vmatpush2.msra.mxu0 0.0
    %1631 = vmatprep.subr.mxu0 0.0
    %1632 = vmatpush2.msra.mxu0 0.0
    %1633 = vmatprep.subr.mxu0 0.0
    %1634 = vmatpush2.msra.mxu0 0.0
    %1635 = vmatprep.subr.mxu0 0.0
    %1636 = vmatpush2.msra.mxu0 0.0
    %1637 = vmatprep.subr.mxu0 0.0
    %1638 = vmatpush2.msra.mxu0 0.0
    %1639 = vmatprep.subr.mxu0 0.0
    %1640 = vmatpush2.msra.mxu0 0.0
    %1641 = vmatprep.subr.mxu0 0.0
    %1642 = vmatpush2.msra.mxu0 0.0
    %1643 = vmatprep.subr.mxu0 0.0
    %1644 = vmatpush2.msra.mxu0 0.0
    %1645 = vmatprep.subr.mxu0 0.0
    %1646 = vmatpush2.msra.mxu0 0.0
    %1647 = vmatprep.subr.mxu0 0.0
    %1648 = vmatpush2.msra.mxu0 0.0
    %1649 = vmatprep.subr.mxu0 0.0
    %1650 = vmatpush2.msra.mxu0 0.0
    %1651 = vmatprep.subr.mxu0 0.0
    %1652 = vmatpush2.msra.mxu0 0.0
    %1653 = vmatprep.mubr.f32.mxu0 0.0
    %1654 = vmatmul.mubr.f32.gmra.mxu0 %v1587
    %v1655 = vpop.f32.mrf.mxu0
    %v1656 = vadd.f32 0.0, %v1655
    %v1657 = vpop.f32.mrf.mxu0
    %1658 = vdwg.mxu0
    %v1660 = vsel %vm591, %v1585, 0
    %1662 = vmatprep.subr.mxu0 0.0
    %1663 = vmatpush1.msra.mxu0 0.0
    %1664 = vmatprep.subr.mxu0 0.0
    %1665 = vmatpush1.msra.mxu0 0.0
    %1666 = vmatprep.subr.mxu0 0.0
    %1667 = vmatpush1.msra.mxu0 0.0
    %1668 = vmatprep.subr.mxu0 0.0
    %1669 = vmatpush1.msra.mxu0 0.0
    %1670 = vmatprep.subr.mxu0 0.0
    %1671 = vmatpush1.msra.mxu0 0.0
    %1672 = vmatprep.subr.mxu0 0.0
    %1673 = vmatpush1.msra.mxu0 0.0
    %1674 = vmatprep.subr.mxu0 0.0
    %1675 = vmatpush1.msra.mxu0 0.0
    %1676 = vmatprep.subr.mxu0 0.0
    %1677 = vmatpush1.msra.mxu0 0.0
    %1678 = vmatprep.subr.mxu0 0.0
    %1679 = vmatpush1.msra.mxu0 0.0
    %1680 = vmatprep.subr.mxu0 0.0
    %1681 = vmatpush1.msra.mxu0 0.0
    %1682 = vmatprep.subr.mxu0 0.0
    %1683 = vmatpush1.msra.mxu0 0.0
    %1684 = vmatprep.subr.mxu0 0.0
    %1685 = vmatpush1.msra.mxu0 0.0
    %1686 = vmatprep.subr.mxu0 0.0
    %1687 = vmatpush1.msra.mxu0 0.0
    %1688 = vmatprep.subr.mxu0 0.0
    %1689 = vmatpush1.msra.mxu0 0.0
    %1690 = vmatprep.subr.mxu0 0.0
    %1691 = vmatpush1.msra.mxu0 0.0
    %1692 = vmatprep.subr.mxu0 0.0
    %1693 = vmatpush1.msra.mxu0 %v691
    %1694 = vmatprep.subr.mxu0 0.0
    %1695 = vmatpush2.msra.mxu0 0.0
    %1696 = vmatprep.subr.mxu0 0.0
    %1697 = vmatpush2.msra.mxu0 0.0
    %1698 = vmatprep.subr.mxu0 0.0
    %1699 = vmatpush2.msra.mxu0 0.0
    %1700 = vmatprep.subr.mxu0 0.0
    %1701 = vmatpush2.msra.mxu0 0.0
    %1702 = vmatprep.subr.mxu0 0.0
    %1703 = vmatpush2.msra.mxu0 0.0
    %1704 = vmatprep.subr.mxu0 0.0
    %1705 = vmatpush2.msra.mxu0 0.0
    %1706 = vmatprep.subr.mxu0 0.0
    %1707 = vmatpush2.msra.mxu0 0.0
    %1708 = vmatprep.subr.mxu0 0.0
    %1709 = vmatpush2.msra.mxu0 0.0
    %1710 = vmatprep.subr.mxu0 0.0
    %1711 = vmatpush2.msra.mxu0 0.0
    %1712 = vmatprep.subr.mxu0 0.0
    %1713 = vmatpush2.msra.mxu0 0.0
    %1714 = vmatprep.subr.mxu0 0.0
    %1715 = vmatpush2.msra.mxu0 0.0
    %1716 = vmatprep.subr.mxu0 0.0
    %1717 = vmatpush2.msra.mxu0 0.0
    %1718 = vmatprep.subr.mxu0 0.0
    %1719 = vmatpush2.msra.mxu0 0.0
    %1720 = vmatprep.subr.mxu0 0.0
    %1721 = vmatpush2.msra.mxu0 0.0
    %1722 = vmatprep.subr.mxu0 0.0
    %1723 = vmatpush2.msra.mxu0 0.0
    %1724 = vmatprep.subr.mxu0 0.0
    %1725 = vmatpush2.msra.mxu0 0.0
    %1726 = vmatprep.mubr.f32.mxu0 0.0
    %1727 = vmatmul.mubr.f32.gmra.mxu0 %v1660
    %v1728 = vpop.f32.mrf.mxu0
    %v1729 = vadd.f32 0.0, %v1728
    %v1730 = vpop.f32.mrf.mxu0
    %1731 = vdwg.mxu0
    %v1732 = vmul.f32 %v1656, %v119
    %v1733 = vmul.f32 %v1729, %v119
    %v1734 = vadd.f32 %v1412, %v1732
    %v1735 = vadd.f32 %v1413, %v1733
    %v1737 = vlaneseq
    %v1738 = vshrl.u32 %v1737, 7
    %v1739 = vsub.s32 0, %v1738
    %v1740 = vrot.slane %v337, %v1739
    %v1743 = vsel %vm235, %v1734, 0
    %v1746 = vsel %vm235, %v1735, 0
    %1748 = vmatprep.subr.mxu0 0.0
    %1749 = vmatpush1.msra.mxu0 0.0
    %1750 = vmatprep.subr.mxu0 0.0
    %1751 = vmatpush1.msra.mxu0 0.0
    %1752 = vmatprep.subr.mxu0 0.0
    %1753 = vmatpush1.msra.mxu0 0.0
    %1754 = vmatprep.subr.mxu0 0.0
    %1755 = vmatpush1.msra.mxu0 0.0
    %1756 = vmatprep.subr.mxu0 0.0
    %1757 = vmatpush1.msra.mxu0 0.0
    %1758 = vmatprep.subr.mxu0 0.0
    %1759 = vmatpush1.msra.mxu0 0.0
    %1760 = vmatprep.subr.mxu0 0.0
    %1761 = vmatpush1.msra.mxu0 0.0
    %1762 = vmatprep.subr.mxu0 0.0
    %1763 = vmatpush1.msra.mxu0 0.0
    %1764 = vmatprep.subr.mxu0 0.0
    %1765 = vmatpush1.msra.mxu0 0.0
    %1766 = vmatprep.subr.mxu0 0.0
    %1767 = vmatpush1.msra.mxu0 0.0
    %1768 = vmatprep.subr.mxu0 0.0
    %1769 = vmatpush1.msra.mxu0 0.0
    %1770 = vmatprep.subr.mxu0 0.0
    %1771 = vmatpush1.msra.mxu0 0.0
    %1772 = vmatprep.subr.mxu0 0.0
    %1773 = vmatpush1.msra.mxu0 %v336
    %1774 = vmatprep.subr.mxu0 0.0
    %1775 = vmatpush1.msra.mxu0 %v335
    %1776 = vmatprep.subr.mxu0 0.0
    %1777 = vmatpush1.msra.mxu0 %v334
    %1778 = vmatprep.subr.mxu0 0.0
    %1779 = vmatpush1.msra.mxu0 %v333
    %1780 = vmatprep.subr.mxu0 0.0
    %1781 = vmatpush2.msra.mxu0 0.0
    %1782 = vmatprep.subr.mxu0 0.0
    %1783 = vmatpush2.msra.mxu0 0.0
    %1784 = vmatprep.subr.mxu0 0.0
    %1785 = vmatpush2.msra.mxu0 0.0
    %1786 = vmatprep.subr.mxu0 0.0
    %1787 = vmatpush2.msra.mxu0 0.0
    %1788 = vmatprep.subr.mxu0 0.0
    %1789 = vmatpush2.msra.mxu0 0.0
    %1790 = vmatprep.subr.mxu0 0.0
    %1791 = vmatpush2.msra.mxu0 0.0
    %1792 = vmatprep.subr.mxu0 0.0
    %1793 = vmatpush2.msra.mxu0 0.0
    %1794 = vmatprep.subr.mxu0 0.0
    %1795 = vmatpush2.msra.mxu0 0.0
    %1796 = vmatprep.subr.mxu0 0.0
    %1797 = vmatpush2.msra.mxu0 0.0
    %1798 = vmatprep.subr.mxu0 0.0
    %1799 = vmatpush2.msra.mxu0 0.0
    %1800 = vmatprep.subr.mxu0 0.0
    %1801 = vmatpush2.msra.mxu0 0.0
    %1802 = vmatprep.subr.mxu0 0.0
    %1803 = vmatpush2.msra.mxu0 0.0
    %1804 = vmatprep.subr.mxu0 0.0
    %1805 = vmatpush2.msra.mxu0 0.0
    %1806 = vmatprep.subr.mxu0 0.0
    %1807 = vmatpush2.msra.mxu0 0.0
    %1808 = vmatprep.subr.mxu0 0.0
    %1809 = vmatpush2.msra.mxu0 0.0
    %1810 = vmatprep.subr.mxu0 0.0
    %1811 = vmatpush2.msra.mxu0 0.0
    %1812 = vmatprep.mubr.f32.mxu0 0.0
    %1813 = vmatmul.mubr.f32.gmra.mxu0 %v1743
    %v1814 = vpop.f32.mrf.mxu0
    %v1815 = vadd.f32 %v1740, %v1814
    %v1816 = vpop.f32.mrf.mxu0
    %1817 = vmatprep.mubr.f32.mxu0 0.0
    %1818 = vmatmul.mubr.f32.gmra.mxu0 %v1746
    %v1819 = vpop.f32.mrf.mxu0
    %v1820 = vadd.f32 %v1740, %v1819
    %v1821 = vpop.f32.mrf.mxu0
    %1822 = vdwg.mxu0
    %v1823 = vadd.f32 %v212, %v1815
    %v1824 = vadd.f32 %v217, %v1820
    %v1825 = vsel %vm235, %v1823, 0.0
    %1826 = vadd.xlane.f32.xlu0 %v1825
    %v1827 = vpop.xlane.xlu0 %1826
    %v1828 = vsel %vm235, %v1824, 0.0
    %1829 = vadd.xlane.f32.xlu0 %v1828
    %v1830 = vpop.xlane.xlu0 %1829
    %v1831 = vrcp.pop 32.0
    %v1832 = vmul.f32 %v1827, %v1831
    %v1833 = vmul.f32 %v1830, %v1831
    %v1834 = vmul.f32 %v1823, %v1823
    %v1835 = vmul.f32 %v1824, %v1824
    %v1836 = vsel %vm235, %v1834, 0.0
    %1837 = vadd.xlane.f32.xlu0 %v1836
    %v1838 = vpop.xlane.xlu0 %1837
    %v1839 = vsel %vm235, %v1835, 0.0
    %1840 = vadd.xlane.f32.xlu0 %v1839
    %v1841 = vpop.xlane.xlu0 %1840
    %v1842 = vmul.f32 %v1838, %v1831
    %v1843 = vmul.f32 %v1841, %v1831
    %v1844 = vmul.f32 %v1832, %v1832
    %v1845 = vmul.f32 %v1833, %v1833
    %v1846 = vsub.f32 %v1842, %v1844
    %v1847 = vsub.f32 %v1843, %v1845
    %v1848 = vsub.f32 %v1823, %v1832
    %v1849 = vsub.f32 %v1824, %v1833
    %v1850 = vadd.f32 %v1846, 1e-05
    %v1851 = vadd.f32 %v1847, 1e-05
    %v1852 = vrsqrt.pop %v1850
    %v1853 = vrsqrt.pop %v1851
    %v1854 = vmul.f32 %v1848, %v1852
    %v1855 = vmul.f32 %v1849, %v1853
    %v1856 = vlaneseq
    %v1857 = vshrl.u32 %v1856, 7
    %v1858 = vsub.s32 0, %v1857
    %v1859 = vrot.slane %v338, %v1858
    %v1860 = vmul.f32 %v1854, %v1859
    %v1861 = vmul.f32 %v1855, %v1859
    %v1862 = vlaneseq
    %v1863 = vshrl.u32 %v1862, 7
    %v1864 = vsub.s32 1, %v1863
    %v1865 = vrot.slane %v338, %v1864
    %v1866 = vadd.f32 %v1860, %v1865
    %v1867 = vadd.f32 %v1861, %v1865
    %1872 = vrot.lane.b32.xlu0 %v333, 96
    %v1873 = vpop.permute.xlu0 %1872
    %1874 = vrot.lane.b32.xlu0 %v334, 96
    %v1875 = vpop.permute.xlu0 %1874
    %1876 = vrot.lane.b32.xlu0 %v335, 96
    %v1877 = vpop.permute.xlu0 %1876
    %1878 = vrot.lane.b32.xlu0 %v336, 96
    %v1879 = vpop.permute.xlu0 %1878
    %1884 = vrot.lane.b32.xlu0 %v1740, 96
    %v1885 = vpop.permute.xlu0 %1884
    %v1888 = vsel %vm235, %v1866, 0
    %v1891 = vsel %vm235, %v1867, 0
    %1893 = vmatprep.subr.mxu0 0.0
    %1894 = vmatpush1.msra.mxu0 0.0
    %1895 = vmatprep.subr.mxu0 0.0
    %1896 = vmatpush1.msra.mxu0 0.0
    %1897 = vmatprep.subr.mxu0 0.0
    %1898 = vmatpush1.msra.mxu0 0.0
    %1899 = vmatprep.subr.mxu0 0.0
    %1900 = vmatpush1.msra.mxu0 0.0
    %1901 = vmatprep.subr.mxu0 0.0
    %1902 = vmatpush1.msra.mxu0 0.0
    %1903 = vmatprep.subr.mxu0 0.0
    %1904 = vmatpush1.msra.mxu0 0.0
    %1905 = vmatprep.subr.mxu0 0.0
    %1906 = vmatpush1.msra.mxu0 0.0
    %1907 = vmatprep.subr.mxu0 0.0
    %1908 = vmatpush1.msra.mxu0 0.0
    %1909 = vmatprep.subr.mxu0 0.0
    %1910 = vmatpush1.msra.mxu0 0.0
    %1911 = vmatprep.subr.mxu0 0.0
    %1912 = vmatpush1.msra.mxu0 0.0
    %1913 = vmatprep.subr.mxu0 0.0
    %1914 = vmatpush1.msra.mxu0 0.0
    %1915 = vmatprep.subr.mxu0 0.0
    %1916 = vmatpush1.msra.mxu0 0.0
    %1917 = vmatprep.subr.mxu0 0.0
    %1918 = vmatpush1.msra.mxu0 %v1879
    %1919 = vmatprep.subr.mxu0 0.0
    %1920 = vmatpush1.msra.mxu0 %v1877
    %1921 = vmatprep.subr.mxu0 0.0
    %1922 = vmatpush1.msra.mxu0 %v1875
    %1923 = vmatprep.subr.mxu0 0.0
    %1924 = vmatpush1.msra.mxu0 %v1873
    %1925 = vmatprep.subr.mxu0 0.0
    %1926 = vmatpush2.msra.mxu0 0.0
    %1927 = vmatprep.subr.mxu0 0.0
    %1928 = vmatpush2.msra.mxu0 0.0
    %1929 = vmatprep.subr.mxu0 0.0
    %1930 = vmatpush2.msra.mxu0 0.0
    %1931 = vmatprep.subr.mxu0 0.0
    %1932 = vmatpush2.msra.mxu0 0.0
    %1933 = vmatprep.subr.mxu0 0.0
    %1934 = vmatpush2.msra.mxu0 0.0
    %1935 = vmatprep.subr.mxu0 0.0
    %1936 = vmatpush2.msra.mxu0 0.0
    %1937 = vmatprep.subr.mxu0 0.0
    %1938 = vmatpush2.msra.mxu0 0.0
    %1939 = vmatprep.subr.mxu0 0.0
    %1940 = vmatpush2.msra.mxu0 0.0
    %1941 = vmatprep.subr.mxu0 0.0
    %1942 = vmatpush2.msra.mxu0 0.0
    %1943 = vmatprep.subr.mxu0 0.0
    %1944 = vmatpush2.msra.mxu0 0.0
    %1945 = vmatprep.subr.mxu0 0.0
    %1946 = vmatpush2.msra.mxu0 0.0
    %1947 = vmatprep.subr.mxu0 0.0
    %1948 = vmatpush2.msra.mxu0 0.0
    %1949 = vmatprep.subr.mxu0 0.0
    %1950 = vmatpush2.msra.mxu0 0.0
    %1951 = vmatprep.subr.mxu0 0.0
    %1952 = vmatpush2.msra.mxu0 0.0
    %1953 = vmatprep.subr.mxu0 0.0
    %1954 = vmatpush2.msra.mxu0 0.0
    %1955 = vmatprep.subr.mxu0 0.0
    %1956 = vmatpush2.msra.mxu0 0.0
    %1957 = vmatprep.mubr.f32.mxu0 0.0
    %1958 = vmatmul.mubr.f32.gmra.mxu0 %v1888
    %v1959 = vpop.f32.mrf.mxu0
    %v1960 = vadd.f32 %v1885, %v1959
    %v1961 = vpop.f32.mrf.mxu0
    %1962 = vmatprep.mubr.f32.mxu0 0.0
    %1963 = vmatmul.mubr.f32.gmra.mxu0 %v1891
    %v1964 = vpop.f32.mrf.mxu0
    %v1965 = vadd.f32 %v1885, %v1964
    %v1966 = vpop.f32.mrf.mxu0
    %1967 = vdwg.mxu0
    %v1968 = vmul.f32 %v1960, %v104
    %v1969 = vmul.f32 %v1965, %v104
    %v1971 = vsel %vm235, %v1968, 0
    %v1974 = vsel %vm235, %v315, 0
    %v1977 = vsel %vm235, %v320, 0
    %1979 = vmatprep.subr.mxu0 0.0
    %1980 = vmatpush1.xpose.msra.mxu0 0.0
    %1981 = vmatprep.subr.mxu0 0.0
    %1982 = vmatpush1.xpose.msra.mxu0 0.0
    %1983 = vmatprep.subr.mxu0 0.0
    %1984 = vmatpush1.xpose.msra.mxu0 0.0
    %1985 = vmatprep.subr.mxu0 0.0
    %1986 = vmatpush1.xpose.msra.mxu0 0.0
    %1987 = vmatprep.subr.mxu0 0.0
    %1988 = vmatpush1.xpose.msra.mxu0 0.0
    %1989 = vmatprep.subr.mxu0 0.0
    %1990 = vmatpush1.xpose.msra.mxu0 0.0
    %1991 = vmatprep.subr.mxu0 0.0
    %1992 = vmatpush1.xpose.msra.mxu0 0.0
    %1993 = vmatprep.subr.mxu0 0.0
    %1994 = vmatpush1.xpose.msra.mxu0 0.0
    %1995 = vmatprep.subr.mxu0 0.0
    %1996 = vmatpush1.xpose.msra.mxu0 0.0
    %1997 = vmatprep.subr.mxu0 0.0
    %1998 = vmatpush1.xpose.msra.mxu0 0.0
    %1999 = vmatprep.subr.mxu0 0.0
    %2000 = vmatpush1.xpose.msra.mxu0 0.0
    %2001 = vmatprep.subr.mxu0 0.0
    %2002 = vmatpush1.xpose.msra.mxu0 0.0
    %2003 = vmatprep.subr.mxu0 0.0
    %2004 = vmatpush1.xpose.msra.mxu0 0.0
    %2005 = vmatprep.subr.mxu0 0.0
    %2006 = vmatpush1.xpose.msra.mxu0 0.0
    %2007 = vmatprep.subr.mxu0 0.0
    %2008 = vmatpush1.xpose.msra.mxu0 %v1977
    %2009 = vmatprep.subr.mxu0 0.0
    %2010 = vmatpush1.xpose.msra.mxu0 %v1974
    %2011 = vmatprep.subr.mxu0 0.0
    %2012 = vmatpush2.xpose.msra.mxu0 0.0
    %2013 = vmatprep.subr.mxu0 0.0
    %2014 = vmatpush2.xpose.msra.mxu0 0.0
    %2015 = vmatprep.subr.mxu0 0.0
    %2016 = vmatpush2.xpose.msra.mxu0 0.0
    %2017 = vmatprep.subr.mxu0 0.0
    %2018 = vmatpush2.xpose.msra.mxu0 0.0
    %2019 = vmatprep.subr.mxu0 0.0
    %2020 = vmatpush2.xpose.msra.mxu0 0.0
    %2021 = vmatprep.subr.mxu0 0.0
    %2022 = vmatpush2.xpose.msra.mxu0 0.0
    %2023 = vmatprep.subr.mxu0 0.0
    %2024 = vmatpush2.xpose.msra.mxu0 0.0
    %2025 = vmatprep.subr.mxu0 0.0
    %2026 = vmatpush2.xpose.msra.mxu0 0.0
    %2027 = vmatprep.subr.mxu0 0.0
    %2028 = vmatpush2.xpose.msra.mxu0 0.0
    %2029 = vmatprep.subr.mxu0 0.0
    %2030 = vmatpush2.xpose.msra.mxu0 0.0
    %2031 = vmatprep.subr.mxu0 0.0
    %2032 = vmatpush2.xpose.msra.mxu0 0.0
    %2033 = vmatprep.subr.mxu0 0.0
    %2034 = vmatpush2.xpose.msra.mxu0 0.0
    %2035 = vmatprep.subr.mxu0 0.0
    %2036 = vmatpush2.xpose.msra.mxu0 0.0
    %2037 = vmatprep.subr.mxu0 0.0
    %2038 = vmatpush2.xpose.msra.mxu0 0.0
    %2039 = vmatprep.subr.mxu0 0.0
    %2040 = vmatpush2.xpose.msra.mxu0 0.0
    %2041 = vmatprep.subr.mxu0 0.0
    %2042 = vmatpush2.xpose.msra.mxu0 0.0
    %2043 = vmatprep.mubr.f32.mxu0 0.0
    %2044 = vmatmul.mubr.f32.gmra.mxu0 %v1971
    %v2045 = vpop.f32.mrf.mxu0
    %v2046 = vadd.f32 0.0, %v2045
    %v2047 = vpop.f32.mrf.mxu0
    %2048 = vdwg.mxu0
    %v2050 = vsel %vm235, %v1969, 0
    %v2053 = vsel %vm235, %v325, 0
    %v2056 = vsel %vm235, %v330, 0
    %2058 = vmatprep.subr.mxu0 0.0
    %2059 = vmatpush1.xpose.msra.mxu0 0.0
    %2060 = vmatprep.subr.mxu0 0.0
    %2061 = vmatpush1.xpose.msra.mxu0 0.0
    %2062 = vmatprep.subr.mxu0 0.0
    %2063 = vmatpush1.xpose.msra.mxu0 0.0
    %2064 = vmatprep.subr.mxu0 0.0
    %2065 = vmatpush1.xpose.msra.mxu0 0.0
    %2066 = vmatprep.subr.mxu0 0.0
    %2067 = vmatpush1.xpose.msra.mxu0 0.0
    %2068 = vmatprep.subr.mxu0 0.0
    %2069 = vmatpush1.xpose.msra.mxu0 0.0
    %2070 = vmatprep.subr.mxu0 0.0
    %2071 = vmatpush1.xpose.msra.mxu0 0.0
    %2072 = vmatprep.subr.mxu0 0.0
    %2073 = vmatpush1.xpose.msra.mxu0 0.0
    %2074 = vmatprep.subr.mxu0 0.0
    %2075 = vmatpush1.xpose.msra.mxu0 0.0
    %2076 = vmatprep.subr.mxu0 0.0
    %2077 = vmatpush1.xpose.msra.mxu0 0.0
    %2078 = vmatprep.subr.mxu0 0.0
    %2079 = vmatpush1.xpose.msra.mxu0 0.0
    %2080 = vmatprep.subr.mxu0 0.0
    %2081 = vmatpush1.xpose.msra.mxu0 0.0
    %2082 = vmatprep.subr.mxu0 0.0
    %2083 = vmatpush1.xpose.msra.mxu0 0.0
    %2084 = vmatprep.subr.mxu0 0.0
    %2085 = vmatpush1.xpose.msra.mxu0 0.0
    %2086 = vmatprep.subr.mxu0 0.0
    %2087 = vmatpush1.xpose.msra.mxu0 %v2056
    %2088 = vmatprep.subr.mxu0 0.0
    %2089 = vmatpush1.xpose.msra.mxu0 %v2053
    %2090 = vmatprep.subr.mxu0 0.0
    %2091 = vmatpush2.xpose.msra.mxu0 0.0
    %2092 = vmatprep.subr.mxu0 0.0
    %2093 = vmatpush2.xpose.msra.mxu0 0.0
    %2094 = vmatprep.subr.mxu0 0.0
    %2095 = vmatpush2.xpose.msra.mxu0 0.0
    %2096 = vmatprep.subr.mxu0 0.0
    %2097 = vmatpush2.xpose.msra.mxu0 0.0
    %2098 = vmatprep.subr.mxu0 0.0
    %2099 = vmatpush2.xpose.msra.mxu0 0.0
    %2100 = vmatprep.subr.mxu0 0.0
    %2101 = vmatpush2.xpose.msra.mxu0 0.0
    %2102 = vmatprep.subr.mxu0 0.0
    %2103 = vmatpush2.xpose.msra.mxu0 0.0
    %2104 = vmatprep.subr.mxu0 0.0
    %2105 = vmatpush2.xpose.msra.mxu0 0.0
    %2106 = vmatprep.subr.mxu0 0.0
    %2107 = vmatpush2.xpose.msra.mxu0 0.0
    %2108 = vmatprep.subr.mxu0 0.0
    %2109 = vmatpush2.xpose.msra.mxu0 0.0
    %2110 = vmatprep.subr.mxu0 0.0
    %2111 = vmatpush2.xpose.msra.mxu0 0.0
    %2112 = vmatprep.subr.mxu0 0.0
    %2113 = vmatpush2.xpose.msra.mxu0 0.0
    %2114 = vmatprep.subr.mxu0 0.0
    %2115 = vmatpush2.xpose.msra.mxu0 0.0
    %2116 = vmatprep.subr.mxu0 0.0
    %2117 = vmatpush2.xpose.msra.mxu0 0.0
    %2118 = vmatprep.subr.mxu0 0.0
    %2119 = vmatpush2.xpose.msra.mxu0 0.0
    %2120 = vmatprep.subr.mxu0 0.0
    %2121 = vmatpush2.xpose.msra.mxu0 0.0
    %2122 = vmatprep.mubr.f32.mxu0 0.0
    %2123 = vmatmul.mubr.f32.gmra.mxu0 %v2050
    %v2124 = vpop.f32.mrf.mxu0
    %v2125 = vadd.f32 0.0, %v2124
    %v2126 = vpop.f32.mrf.mxu0
    %2127 = vdwg.mxu0
    %v2128 = vmul.f32 %v2046, 0.35355338
    %v2129 = vmul.f32 %v2125, 0.35355338
    %v2130 = vsel %vm138, %v2128, -inf
    %2131 = vmax.xlane.f32.xlu0 %v2130
    %v2132 = vpop.xlane.xlu0 %2131
    %v2133 = vsel %vm138, %v2129, -inf
    %2134 = vmax.xlane.f32.xlu0 %v2133
    %v2135 = vpop.xlane.xlu0 %2134
    %v2136 = vsub.f32 %v2128, %v2132
    %v2137 = vsub.f32 %v2129, %v2135
    %v2138 = vmul.f32 %v2136, 1.442695
    %v2139 = vpow.pop %v2138
    %v2140 = vmul.f32 %v2137, 1.442695
    %v2141 = vpow.pop %v2140
    %v2142 = vsel %vm138, %v2139, 0.0
    %2143 = vadd.xlane.f32.xlu0 %v2142
    %v2144 = vpop.xlane.xlu0 %2143
    %v2145 = vsel %vm138, %v2141, 0.0
    %2146 = vadd.xlane.f32.xlu0 %v2145
    %v2147 = vpop.xlane.xlu0 %2146
    %v2148 = vrcp.pop %v2144
    %v2149 = vrcp.pop %v2147
    %v2150 = vmul.f32 %v2139, %v2148
    %v2151 = vmul.f32 %v2141, %v2149
    %2152 = vrot.lane.b32.xlu0 %v315, 96
    %v2153 = vpop.permute.xlu0 %2152
    %2154 = vrot.lane.b32.xlu0 %v320, 96
    %v2155 = vpop.permute.xlu0 %2154
    %v2159 = vsel %vm138, %v2150, 0
    %2161 = vmatprep.subr.mxu0 0.0
    %2162 = vmatpush1.msra.mxu0 0.0
    %2163 = vmatprep.subr.mxu0 0.0
    %2164 = vmatpush1.msra.mxu0 0.0
    %2165 = vmatprep.subr.mxu0 0.0
    %2166 = vmatpush1.msra.mxu0 0.0
    %2167 = vmatprep.subr.mxu0 0.0
    %2168 = vmatpush1.msra.mxu0 0.0
    %2169 = vmatprep.subr.mxu0 0.0
    %2170 = vmatpush1.msra.mxu0 0.0
    %2171 = vmatprep.subr.mxu0 0.0
    %2172 = vmatpush1.msra.mxu0 0.0
    %2173 = vmatprep.subr.mxu0 0.0
    %2174 = vmatpush1.msra.mxu0 0.0
    %2175 = vmatprep.subr.mxu0 0.0
    %2176 = vmatpush1.msra.mxu0 0.0
    %2177 = vmatprep.subr.mxu0 0.0
    %2178 = vmatpush1.msra.mxu0 0.0
    %2179 = vmatprep.subr.mxu0 0.0
    %2180 = vmatpush1.msra.mxu0 0.0
    %2181 = vmatprep.subr.mxu0 0.0
    %2182 = vmatpush1.msra.mxu0 0.0
    %2183 = vmatprep.subr.mxu0 0.0
    %2184 = vmatpush1.msra.mxu0 0.0
    %2185 = vmatprep.subr.mxu0 0.0
    %2186 = vmatpush1.msra.mxu0 0.0
    %2187 = vmatprep.subr.mxu0 0.0
    %2188 = vmatpush1.msra.mxu0 0.0
    %2189 = vmatprep.subr.mxu0 0.0
    %2190 = vmatpush1.msra.mxu0 %v2155
    %2191 = vmatprep.subr.mxu0 0.0
    %2192 = vmatpush1.msra.mxu0 %v2153
    %2193 = vmatprep.subr.mxu0 0.0
    %2194 = vmatpush2.msra.mxu0 0.0
    %2195 = vmatprep.subr.mxu0 0.0
    %2196 = vmatpush2.msra.mxu0 0.0
    %2197 = vmatprep.subr.mxu0 0.0
    %2198 = vmatpush2.msra.mxu0 0.0
    %2199 = vmatprep.subr.mxu0 0.0
    %2200 = vmatpush2.msra.mxu0 0.0
    %2201 = vmatprep.subr.mxu0 0.0
    %2202 = vmatpush2.msra.mxu0 0.0
    %2203 = vmatprep.subr.mxu0 0.0
    %2204 = vmatpush2.msra.mxu0 0.0
    %2205 = vmatprep.subr.mxu0 0.0
    %2206 = vmatpush2.msra.mxu0 0.0
    %2207 = vmatprep.subr.mxu0 0.0
    %2208 = vmatpush2.msra.mxu0 0.0
    %2209 = vmatprep.subr.mxu0 0.0
    %2210 = vmatpush2.msra.mxu0 0.0
    %2211 = vmatprep.subr.mxu0 0.0
    %2212 = vmatpush2.msra.mxu0 0.0
    %2213 = vmatprep.subr.mxu0 0.0
    %2214 = vmatpush2.msra.mxu0 0.0
    %2215 = vmatprep.subr.mxu0 0.0
    %2216 = vmatpush2.msra.mxu0 0.0
    %2217 = vmatprep.subr.mxu0 0.0
    %2218 = vmatpush2.msra.mxu0 0.0
    %2219 = vmatprep.subr.mxu0 0.0
    %2220 = vmatpush2.msra.mxu0 0.0
    %2221 = vmatprep.subr.mxu0 0.0
    %2222 = vmatpush2.msra.mxu0 0.0
    %2223 = vmatprep.subr.mxu0 0.0
    %2224 = vmatpush2.msra.mxu0 0.0
    %2225 = vmatprep.mubr.f32.mxu0 0.0
    %2226 = vmatmul.mubr.f32.gmra.mxu0 %v2159
    %v2227 = vpop.f32.mrf.mxu0
    %v2228 = vadd.f32 0.0, %v2227
    %v2229 = vpop.f32.mrf.mxu0
    %2230 = vdwg.mxu0
    %2231 = vrot.lane.b32.xlu0 %v325, 96
    %v2232 = vpop.permute.xlu0 %2231
    %2233 = vrot.lane.b32.xlu0 %v330, 96
    %v2234 = vpop.permute.xlu0 %2233
    %v2238 = vsel %vm138, %v2151, 0
    %2240 = vmatprep.subr.mxu0 0.0
    %2241 = vmatpush1.msra.mxu0 0.0
    %2242 = vmatprep.subr.mxu0 0.0
    %2243 = vmatpush1.msra.mxu0 0.0
    %2244 = vmatprep.subr.mxu0 0.0
    %2245 = vmatpush1.msra.mxu0 0.0
    %2246 = vmatprep.subr.mxu0 0.0
    %2247 = vmatpush1.msra.mxu0 0.0
    %2248 = vmatprep.subr.mxu0 0.0
    %2249 = vmatpush1.msra.mxu0 0.0
    %2250 = vmatprep.subr.mxu0 0.0
    %2251 = vmatpush1.msra.mxu0 0.0
    %2252 = vmatprep.subr.mxu0 0.0
    %2253 = vmatpush1.msra.mxu0 0.0
    %2254 = vmatprep.subr.mxu0 0.0
    %2255 = vmatpush1.msra.mxu0 0.0
    %2256 = vmatprep.subr.mxu0 0.0
    %2257 = vmatpush1.msra.mxu0 0.0
    %2258 = vmatprep.subr.mxu0 0.0
    %2259 = vmatpush1.msra.mxu0 0.0
    %2260 = vmatprep.subr.mxu0 0.0
    %2261 = vmatpush1.msra.mxu0 0.0
    %2262 = vmatprep.subr.mxu0 0.0
    %2263 = vmatpush1.msra.mxu0 0.0
    %2264 = vmatprep.subr.mxu0 0.0
    %2265 = vmatpush1.msra.mxu0 0.0
    %2266 = vmatprep.subr.mxu0 0.0
    %2267 = vmatpush1.msra.mxu0 0.0
    %2268 = vmatprep.subr.mxu0 0.0
    %2269 = vmatpush1.msra.mxu0 %v2234
    %2270 = vmatprep.subr.mxu0 0.0
    %2271 = vmatpush1.msra.mxu0 %v2232
    %2272 = vmatprep.subr.mxu0 0.0
    %2273 = vmatpush2.msra.mxu0 0.0
    %2274 = vmatprep.subr.mxu0 0.0
    %2275 = vmatpush2.msra.mxu0 0.0
    %2276 = vmatprep.subr.mxu0 0.0
    %2277 = vmatpush2.msra.mxu0 0.0
    %2278 = vmatprep.subr.mxu0 0.0
    %2279 = vmatpush2.msra.mxu0 0.0
    %2280 = vmatprep.subr.mxu0 0.0
    %2281 = vmatpush2.msra.mxu0 0.0
    %2282 = vmatprep.subr.mxu0 0.0
    %2283 = vmatpush2.msra.mxu0 0.0
    %2284 = vmatprep.subr.mxu0 0.0
    %2285 = vmatpush2.msra.mxu0 0.0
    %2286 = vmatprep.subr.mxu0 0.0
    %2287 = vmatpush2.msra.mxu0 0.0
    %2288 = vmatprep.subr.mxu0 0.0
    %2289 = vmatpush2.msra.mxu0 0.0
    %2290 = vmatprep.subr.mxu0 0.0
    %2291 = vmatpush2.msra.mxu0 0.0
    %2292 = vmatprep.subr.mxu0 0.0
    %2293 = vmatpush2.msra.mxu0 0.0
    %2294 = vmatprep.subr.mxu0 0.0
    %2295 = vmatpush2.msra.mxu0 0.0
    %2296 = vmatprep.subr.mxu0 0.0
    %2297 = vmatpush2.msra.mxu0 0.0
    %2298 = vmatprep.subr.mxu0 0.0
    %2299 = vmatpush2.msra.mxu0 0.0
    %2300 = vmatprep.subr.mxu0 0.0
    %2301 = vmatpush2.msra.mxu0 0.0
    %2302 = vmatprep.subr.mxu0 0.0
    %2303 = vmatpush2.msra.mxu0 0.0
    %2304 = vmatprep.mubr.f32.mxu0 0.0
    %2305 = vmatmul.mubr.f32.gmra.mxu0 %v2238
    %v2306 = vpop.f32.mrf.mxu0
    %v2307 = vadd.f32 0.0, %v2306
    %v2308 = vpop.f32.mrf.mxu0
    %2309 = vdwg.mxu0
    %v2310 = vmul.f32 %v2228, %v104
    %v2311 = vmul.f32 %v2307, %v104
    %v2312 = vadd.f32 %v2310, 0.0
    %v2313 = vadd.f32 %v2311, 0.0
    %v2314 = vmul.f32 %v1960, %v109
    %v2315 = vmul.f32 %v1965, %v109
    %v2317 = vsel %vm235, %v2314, 0
    %2319 = vmatprep.subr.mxu0 0.0
    %2320 = vmatpush1.xpose.msra.mxu0 0.0
    %2321 = vmatprep.subr.mxu0 0.0
    %2322 = vmatpush1.xpose.msra.mxu0 0.0
    %2323 = vmatprep.subr.mxu0 0.0
    %2324 = vmatpush1.xpose.msra.mxu0 0.0
    %2325 = vmatprep.subr.mxu0 0.0
    %2326 = vmatpush1.xpose.msra.mxu0 0.0
    %2327 = vmatprep.subr.mxu0 0.0
    %2328 = vmatpush1.xpose.msra.mxu0 0.0
    %2329 = vmatprep.subr.mxu0 0.0
    %2330 = vmatpush1.xpose.msra.mxu0 0.0
    %2331 = vmatprep.subr.mxu0 0.0
    %2332 = vmatpush1.xpose.msra.mxu0 0.0
    %2333 = vmatprep.subr.mxu0 0.0
    %2334 = vmatpush1.xpose.msra.mxu0 0.0
    %2335 = vmatprep.subr.mxu0 0.0
    %2336 = vmatpush1.xpose.msra.mxu0 0.0
    %2337 = vmatprep.subr.mxu0 0.0
    %2338 = vmatpush1.xpose.msra.mxu0 0.0
    %2339 = vmatprep.subr.mxu0 0.0
    %2340 = vmatpush1.xpose.msra.mxu0 0.0
    %2341 = vmatprep.subr.mxu0 0.0
    %2342 = vmatpush1.xpose.msra.mxu0 0.0
    %2343 = vmatprep.subr.mxu0 0.0
    %2344 = vmatpush1.xpose.msra.mxu0 0.0
    %2345 = vmatprep.subr.mxu0 0.0
    %2346 = vmatpush1.xpose.msra.mxu0 0.0
    %2347 = vmatprep.subr.mxu0 0.0
    %2348 = vmatpush1.xpose.msra.mxu0 %v1977
    %2349 = vmatprep.subr.mxu0 0.0
    %2350 = vmatpush1.xpose.msra.mxu0 %v1974
    %2351 = vmatprep.subr.mxu0 0.0
    %2352 = vmatpush2.xpose.msra.mxu0 0.0
    %2353 = vmatprep.subr.mxu0 0.0
    %2354 = vmatpush2.xpose.msra.mxu0 0.0
    %2355 = vmatprep.subr.mxu0 0.0
    %2356 = vmatpush2.xpose.msra.mxu0 0.0
    %2357 = vmatprep.subr.mxu0 0.0
    %2358 = vmatpush2.xpose.msra.mxu0 0.0
    %2359 = vmatprep.subr.mxu0 0.0
    %2360 = vmatpush2.xpose.msra.mxu0 0.0
    %2361 = vmatprep.subr.mxu0 0.0
    %2362 = vmatpush2.xpose.msra.mxu0 0.0
    %2363 = vmatprep.subr.mxu0 0.0
    %2364 = vmatpush2.xpose.msra.mxu0 0.0
    %2365 = vmatprep.subr.mxu0 0.0
    %2366 = vmatpush2.xpose.msra.mxu0 0.0
    %2367 = vmatprep.subr.mxu0 0.0
    %2368 = vmatpush2.xpose.msra.mxu0 0.0
    %2369 = vmatprep.subr.mxu0 0.0
    %2370 = vmatpush2.xpose.msra.mxu0 0.0
    %2371 = vmatprep.subr.mxu0 0.0
    %2372 = vmatpush2.xpose.msra.mxu0 0.0
    %2373 = vmatprep.subr.mxu0 0.0
    %2374 = vmatpush2.xpose.msra.mxu0 0.0
    %2375 = vmatprep.subr.mxu0 0.0
    %2376 = vmatpush2.xpose.msra.mxu0 0.0
    %2377 = vmatprep.subr.mxu0 0.0
    %2378 = vmatpush2.xpose.msra.mxu0 0.0
    %2379 = vmatprep.subr.mxu0 0.0
    %2380 = vmatpush2.xpose.msra.mxu0 0.0
    %2381 = vmatprep.subr.mxu0 0.0
    %2382 = vmatpush2.xpose.msra.mxu0 0.0
    %2383 = vmatprep.mubr.f32.mxu0 0.0
    %2384 = vmatmul.mubr.f32.gmra.mxu0 %v2317
    %v2385 = vpop.f32.mrf.mxu0
    %v2386 = vadd.f32 0.0, %v2385
    %v2387 = vpop.f32.mrf.mxu0
    %2388 = vdwg.mxu0
    %v2390 = vsel %vm235, %v2315, 0
    %2392 = vmatprep.subr.mxu0 0.0
    %2393 = vmatpush1.xpose.msra.mxu0 0.0
    %2394 = vmatprep.subr.mxu0 0.0
    %2395 = vmatpush1.xpose.msra.mxu0 0.0
    %2396 = vmatprep.subr.mxu0 0.0
    %2397 = vmatpush1.xpose.msra.mxu0 0.0
    %2398 = vmatprep.subr.mxu0 0.0
    %2399 = vmatpush1.xpose.msra.mxu0 0.0
    %2400 = vmatprep.subr.mxu0 0.0
    %2401 = vmatpush1.xpose.msra.mxu0 0.0
    %2402 = vmatprep.subr.mxu0 0.0
    %2403 = vmatpush1.xpose.msra.mxu0 0.0
    %2404 = vmatprep.subr.mxu0 0.0
    %2405 = vmatpush1.xpose.msra.mxu0 0.0
    %2406 = vmatprep.subr.mxu0 0.0
    %2407 = vmatpush1.xpose.msra.mxu0 0.0
    %2408 = vmatprep.subr.mxu0 0.0
    %2409 = vmatpush1.xpose.msra.mxu0 0.0
    %2410 = vmatprep.subr.mxu0 0.0
    %2411 = vmatpush1.xpose.msra.mxu0 0.0
    %2412 = vmatprep.subr.mxu0 0.0
    %2413 = vmatpush1.xpose.msra.mxu0 0.0
    %2414 = vmatprep.subr.mxu0 0.0
    %2415 = vmatpush1.xpose.msra.mxu0 0.0
    %2416 = vmatprep.subr.mxu0 0.0
    %2417 = vmatpush1.xpose.msra.mxu0 0.0
    %2418 = vmatprep.subr.mxu0 0.0
    %2419 = vmatpush1.xpose.msra.mxu0 0.0
    %2420 = vmatprep.subr.mxu0 0.0
    %2421 = vmatpush1.xpose.msra.mxu0 %v2056
    %2422 = vmatprep.subr.mxu0 0.0
    %2423 = vmatpush1.xpose.msra.mxu0 %v2053
    %2424 = vmatprep.subr.mxu0 0.0
    %2425 = vmatpush2.xpose.msra.mxu0 0.0
    %2426 = vmatprep.subr.mxu0 0.0
    %2427 = vmatpush2.xpose.msra.mxu0 0.0
    %2428 = vmatprep.subr.mxu0 0.0
    %2429 = vmatpush2.xpose.msra.mxu0 0.0
    %2430 = vmatprep.subr.mxu0 0.0
    %2431 = vmatpush2.xpose.msra.mxu0 0.0
    %2432 = vmatprep.subr.mxu0 0.0
    %2433 = vmatpush2.xpose.msra.mxu0 0.0
    %2434 = vmatprep.subr.mxu0 0.0
    %2435 = vmatpush2.xpose.msra.mxu0 0.0
    %2436 = vmatprep.subr.mxu0 0.0
    %2437 = vmatpush2.xpose.msra.mxu0 0.0
    %2438 = vmatprep.subr.mxu0 0.0
    %2439 = vmatpush2.xpose.msra.mxu0 0.0
    %2440 = vmatprep.subr.mxu0 0.0
    %2441 = vmatpush2.xpose.msra.mxu0 0.0
    %2442 = vmatprep.subr.mxu0 0.0
    %2443 = vmatpush2.xpose.msra.mxu0 0.0
    %2444 = vmatprep.subr.mxu0 0.0
    %2445 = vmatpush2.xpose.msra.mxu0 0.0
    %2446 = vmatprep.subr.mxu0 0.0
    %2447 = vmatpush2.xpose.msra.mxu0 0.0
    %2448 = vmatprep.subr.mxu0 0.0
    %2449 = vmatpush2.xpose.msra.mxu0 0.0
    %2450 = vmatprep.subr.mxu0 0.0
    %2451 = vmatpush2.xpose.msra.mxu0 0.0
    %2452 = vmatprep.subr.mxu0 0.0
    %2453 = vmatpush2.xpose.msra.mxu0 0.0
    %2454 = vmatprep.subr.mxu0 0.0
    %2455 = vmatpush2.xpose.msra.mxu0 0.0
    %2456 = vmatprep.mubr.f32.mxu0 0.0
    %2457 = vmatmul.mubr.f32.gmra.mxu0 %v2390
    %v2458 = vpop.f32.mrf.mxu0
    %v2459 = vadd.f32 0.0, %v2458
    %v2460 = vpop.f32.mrf.mxu0
    %2461 = vdwg.mxu0
    %v2462 = vmul.f32 %v2386, 0.35355338
    %v2463 = vmul.f32 %v2459, 0.35355338
    %v2464 = vsel %vm138, %v2462, -inf
    %2465 = vmax.xlane.f32.xlu0 %v2464
    %v2466 = vpop.xlane.xlu0 %2465
    %v2467 = vsel %vm138, %v2463, -inf
    %2468 = vmax.xlane.f32.xlu0 %v2467
    %v2469 = vpop.xlane.xlu0 %2468
    %v2470 = vsub.f32 %v2462, %v2466
    %v2471 = vsub.f32 %v2463, %v2469
    %v2472 = vmul.f32 %v2470, 1.442695
    %v2473 = vpow.pop %v2472
    %v2474 = vmul.f32 %v2471, 1.442695
    %v2475 = vpow.pop %v2474
    %v2476 = vsel %vm138, %v2473, 0.0
    %2477 = vadd.xlane.f32.xlu0 %v2476
    %v2478 = vpop.xlane.xlu0 %2477
    %v2479 = vsel %vm138, %v2475, 0.0
    %2480 = vadd.xlane.f32.xlu0 %v2479
    %v2481 = vpop.xlane.xlu0 %2480
    %v2482 = vrcp.pop %v2478
    %v2483 = vrcp.pop %v2481
    %v2484 = vmul.f32 %v2473, %v2482
    %v2485 = vmul.f32 %v2475, %v2483
    %v2487 = vsel %vm138, %v2484, 0
    %2489 = vmatprep.subr.mxu0 0.0
    %2490 = vmatpush1.msra.mxu0 0.0
    %2491 = vmatprep.subr.mxu0 0.0
    %2492 = vmatpush1.msra.mxu0 0.0
    %2493 = vmatprep.subr.mxu0 0.0
    %2494 = vmatpush1.msra.mxu0 0.0
    %2495 = vmatprep.subr.mxu0 0.0
    %2496 = vmatpush1.msra.mxu0 0.0
    %2497 = vmatprep.subr.mxu0 0.0
    %2498 = vmatpush1.msra.mxu0 0.0
    %2499 = vmatprep.subr.mxu0 0.0
    %2500 = vmatpush1.msra.mxu0 0.0
    %2501 = vmatprep.subr.mxu0 0.0
    %2502 = vmatpush1.msra.mxu0 0.0
    %2503 = vmatprep.subr.mxu0 0.0
    %2504 = vmatpush1.msra.mxu0 0.0
    %2505 = vmatprep.subr.mxu0 0.0
    %2506 = vmatpush1.msra.mxu0 0.0
    %2507 = vmatprep.subr.mxu0 0.0
    %2508 = vmatpush1.msra.mxu0 0.0
    %2509 = vmatprep.subr.mxu0 0.0
    %2510 = vmatpush1.msra.mxu0 0.0
    %2511 = vmatprep.subr.mxu0 0.0
    %2512 = vmatpush1.msra.mxu0 0.0
    %2513 = vmatprep.subr.mxu0 0.0
    %2514 = vmatpush1.msra.mxu0 0.0
    %2515 = vmatprep.subr.mxu0 0.0
    %2516 = vmatpush1.msra.mxu0 0.0
    %2517 = vmatprep.subr.mxu0 0.0
    %2518 = vmatpush1.msra.mxu0 %v2155
    %2519 = vmatprep.subr.mxu0 0.0
    %2520 = vmatpush1.msra.mxu0 %v2153
    %2521 = vmatprep.subr.mxu0 0.0
    %2522 = vmatpush2.msra.mxu0 0.0
    %2523 = vmatprep.subr.mxu0 0.0
    %2524 = vmatpush2.msra.mxu0 0.0
    %2525 = vmatprep.subr.mxu0 0.0
    %2526 = vmatpush2.msra.mxu0 0.0
    %2527 = vmatprep.subr.mxu0 0.0
    %2528 = vmatpush2.msra.mxu0 0.0
    %2529 = vmatprep.subr.mxu0 0.0
    %2530 = vmatpush2.msra.mxu0 0.0
    %2531 = vmatprep.subr.mxu0 0.0
    %2532 = vmatpush2.msra.mxu0 0.0
    %2533 = vmatprep.subr.mxu0 0.0
    %2534 = vmatpush2.msra.mxu0 0.0
    %2535 = vmatprep.subr.mxu0 0.0
    %2536 = vmatpush2.msra.mxu0 0.0
    %2537 = vmatprep.subr.mxu0 0.0
    %2538 = vmatpush2.msra.mxu0 0.0
    %2539 = vmatprep.subr.mxu0 0.0
    %2540 = vmatpush2.msra.mxu0 0.0
    %2541 = vmatprep.subr.mxu0 0.0
    %2542 = vmatpush2.msra.mxu0 0.0
    %2543 = vmatprep.subr.mxu0 0.0
    %2544 = vmatpush2.msra.mxu0 0.0
    %2545 = vmatprep.subr.mxu0 0.0
    %2546 = vmatpush2.msra.mxu0 0.0
    %2547 = vmatprep.subr.mxu0 0.0
    %2548 = vmatpush2.msra.mxu0 0.0
    %2549 = vmatprep.subr.mxu0 0.0
    %2550 = vmatpush2.msra.mxu0 0.0
    %2551 = vmatprep.subr.mxu0 0.0
    %2552 = vmatpush2.msra.mxu0 0.0
    %2553 = vmatprep.mubr.f32.mxu0 0.0
    %2554 = vmatmul.mubr.f32.gmra.mxu0 %v2487
    %v2555 = vpop.f32.mrf.mxu0
    %v2556 = vadd.f32 0.0, %v2555
    %v2557 = vpop.f32.mrf.mxu0
    %2558 = vdwg.mxu0
    %v2560 = vsel %vm138, %v2485, 0
    %2562 = vmatprep.subr.mxu0 0.0
    %2563 = vmatpush1.msra.mxu0 0.0
    %2564 = vmatprep.subr.mxu0 0.0
    %2565 = vmatpush1.msra.mxu0 0.0
    %2566 = vmatprep.subr.mxu0 0.0
    %2567 = vmatpush1.msra.mxu0 0.0
    %2568 = vmatprep.subr.mxu0 0.0
    %2569 = vmatpush1.msra.mxu0 0.0
    %2570 = vmatprep.subr.mxu0 0.0
    %2571 = vmatpush1.msra.mxu0 0.0
    %2572 = vmatprep.subr.mxu0 0.0
    %2573 = vmatpush1.msra.mxu0 0.0
    %2574 = vmatprep.subr.mxu0 0.0
    %2575 = vmatpush1.msra.mxu0 0.0
    %2576 = vmatprep.subr.mxu0 0.0
    %2577 = vmatpush1.msra.mxu0 0.0
    %2578 = vmatprep.subr.mxu0 0.0
    %2579 = vmatpush1.msra.mxu0 0.0
    %2580 = vmatprep.subr.mxu0 0.0
    %2581 = vmatpush1.msra.mxu0 0.0
    %2582 = vmatprep.subr.mxu0 0.0
    %2583 = vmatpush1.msra.mxu0 0.0
    %2584 = vmatprep.subr.mxu0 0.0
    %2585 = vmatpush1.msra.mxu0 0.0
    %2586 = vmatprep.subr.mxu0 0.0
    %2587 = vmatpush1.msra.mxu0 0.0
    %2588 = vmatprep.subr.mxu0 0.0
    %2589 = vmatpush1.msra.mxu0 0.0
    %2590 = vmatprep.subr.mxu0 0.0
    %2591 = vmatpush1.msra.mxu0 %v2234
    %2592 = vmatprep.subr.mxu0 0.0
    %2593 = vmatpush1.msra.mxu0 %v2232
    %2594 = vmatprep.subr.mxu0 0.0
    %2595 = vmatpush2.msra.mxu0 0.0
    %2596 = vmatprep.subr.mxu0 0.0
    %2597 = vmatpush2.msra.mxu0 0.0
    %2598 = vmatprep.subr.mxu0 0.0
    %2599 = vmatpush2.msra.mxu0 0.0
    %2600 = vmatprep.subr.mxu0 0.0
    %2601 = vmatpush2.msra.mxu0 0.0
    %2602 = vmatprep.subr.mxu0 0.0
    %2603 = vmatpush2.msra.mxu0 0.0
    %2604 = vmatprep.subr.mxu0 0.0
    %2605 = vmatpush2.msra.mxu0 0.0
    %2606 = vmatprep.subr.mxu0 0.0
    %2607 = vmatpush2.msra.mxu0 0.0
    %2608 = vmatprep.subr.mxu0 0.0
    %2609 = vmatpush2.msra.mxu0 0.0
    %2610 = vmatprep.subr.mxu0 0.0
    %2611 = vmatpush2.msra.mxu0 0.0
    %2612 = vmatprep.subr.mxu0 0.0
    %2613 = vmatpush2.msra.mxu0 0.0
    %2614 = vmatprep.subr.mxu0 0.0
    %2615 = vmatpush2.msra.mxu0 0.0
    %2616 = vmatprep.subr.mxu0 0.0
    %2617 = vmatpush2.msra.mxu0 0.0
    %2618 = vmatprep.subr.mxu0 0.0
    %2619 = vmatpush2.msra.mxu0 0.0
    %2620 = vmatprep.subr.mxu0 0.0
    %2621 = vmatpush2.msra.mxu0 0.0
    %2622 = vmatprep.subr.mxu0 0.0
    %2623 = vmatpush2.msra.mxu0 0.0
    %2624 = vmatprep.subr.mxu0 0.0
    %2625 = vmatpush2.msra.mxu0 0.0
    %2626 = vmatprep.mubr.f32.mxu0 0.0
    %2627 = vmatmul.mubr.f32.gmra.mxu0 %v2560
    %v2628 = vpop.f32.mrf.mxu0
    %v2629 = vadd.f32 0.0, %v2628
    %v2630 = vpop.f32.mrf.mxu0
    %2631 = vdwg.mxu0
    %v2632 = vmul.f32 %v2556, %v109
    %v2633 = vmul.f32 %v2629, %v109
    %v2634 = vadd.f32 %v2312, %v2632
    %v2635 = vadd.f32 %v2313, %v2633
    %v2636 = vmul.f32 %v1960, %v114
    %v2637 = vmul.f32 %v1965, %v114
    %v2639 = vsel %vm235, %v2636, 0
    %2641 = vmatprep.subr.mxu0 0.0
    %2642 = vmatpush1.xpose.msra.mxu0 0.0
    %2643 = vmatprep.subr.mxu0 0.0
    %2644 = vmatpush1.xpose.msra.mxu0 0.0
    %2645 = vmatprep.subr.mxu0 0.0
    %2646 = vmatpush1.xpose.msra.mxu0 0.0
    %2647 = vmatprep.subr.mxu0 0.0
    %2648 = vmatpush1.xpose.msra.mxu0 0.0
    %2649 = vmatprep.subr.mxu0 0.0
    %2650 = vmatpush1.xpose.msra.mxu0 0.0
    %2651 = vmatprep.subr.mxu0 0.0
    %2652 = vmatpush1.xpose.msra.mxu0 0.0
    %2653 = vmatprep.subr.mxu0 0.0
    %2654 = vmatpush1.xpose.msra.mxu0 0.0
    %2655 = vmatprep.subr.mxu0 0.0
    %2656 = vmatpush1.xpose.msra.mxu0 0.0
    %2657 = vmatprep.subr.mxu0 0.0
    %2658 = vmatpush1.xpose.msra.mxu0 0.0
    %2659 = vmatprep.subr.mxu0 0.0
    %2660 = vmatpush1.xpose.msra.mxu0 0.0
    %2661 = vmatprep.subr.mxu0 0.0
    %2662 = vmatpush1.xpose.msra.mxu0 0.0
    %2663 = vmatprep.subr.mxu0 0.0
    %2664 = vmatpush1.xpose.msra.mxu0 0.0
    %2665 = vmatprep.subr.mxu0 0.0
    %2666 = vmatpush1.xpose.msra.mxu0 0.0
    %2667 = vmatprep.subr.mxu0 0.0
    %2668 = vmatpush1.xpose.msra.mxu0 0.0
    %2669 = vmatprep.subr.mxu0 0.0
    %2670 = vmatpush1.xpose.msra.mxu0 %v1977
    %2671 = vmatprep.subr.mxu0 0.0
    %2672 = vmatpush1.xpose.msra.mxu0 %v1974
    %2673 = vmatprep.subr.mxu0 0.0
    %2674 = vmatpush2.xpose.msra.mxu0 0.0
    %2675 = vmatprep.subr.mxu0 0.0
    %2676 = vmatpush2.xpose.msra.mxu0 0.0
    %2677 = vmatprep.subr.mxu0 0.0
    %2678 = vmatpush2.xpose.msra.mxu0 0.0
    %2679 = vmatprep.subr.mxu0 0.0
    %2680 = vmatpush2.xpose.msra.mxu0 0.0
    %2681 = vmatprep.subr.mxu0 0.0
    %2682 = vmatpush2.xpose.msra.mxu0 0.0
    %2683 = vmatprep.subr.mxu0 0.0
    %2684 = vmatpush2.xpose.msra.mxu0 0.0
    %2685 = vmatprep.subr.mxu0 0.0
    %2686 = vmatpush2.xpose.msra.mxu0 0.0
    %2687 = vmatprep.subr.mxu0 0.0
    %2688 = vmatpush2.xpose.msra.mxu0 0.0
    %2689 = vmatprep.subr.mxu0 0.0
    %2690 = vmatpush2.xpose.msra.mxu0 0.0
    %2691 = vmatprep.subr.mxu0 0.0
    %2692 = vmatpush2.xpose.msra.mxu0 0.0
    %2693 = vmatprep.subr.mxu0 0.0
    %2694 = vmatpush2.xpose.msra.mxu0 0.0
    %2695 = vmatprep.subr.mxu0 0.0
    %2696 = vmatpush2.xpose.msra.mxu0 0.0
    %2697 = vmatprep.subr.mxu0 0.0
    %2698 = vmatpush2.xpose.msra.mxu0 0.0
    %2699 = vmatprep.subr.mxu0 0.0
    %2700 = vmatpush2.xpose.msra.mxu0 0.0
    %2701 = vmatprep.subr.mxu0 0.0
    %2702 = vmatpush2.xpose.msra.mxu0 0.0
    %2703 = vmatprep.subr.mxu0 0.0
    %2704 = vmatpush2.xpose.msra.mxu0 0.0
    %2705 = vmatprep.mubr.f32.mxu0 0.0
    %2706 = vmatmul.mubr.f32.gmra.mxu0 %v2639
    %v2707 = vpop.f32.mrf.mxu0
    %v2708 = vadd.f32 0.0, %v2707
    %v2709 = vpop.f32.mrf.mxu0
    %2710 = vdwg.mxu0
    %v2712 = vsel %vm235, %v2637, 0
    %2714 = vmatprep.subr.mxu0 0.0
    %2715 = vmatpush1.xpose.msra.mxu0 0.0
    %2716 = vmatprep.subr.mxu0 0.0
    %2717 = vmatpush1.xpose.msra.mxu0 0.0
    %2718 = vmatprep.subr.mxu0 0.0
    %2719 = vmatpush1.xpose.msra.mxu0 0.0
    %2720 = vmatprep.subr.mxu0 0.0
    %2721 = vmatpush1.xpose.msra.mxu0 0.0
    %2722 = vmatprep.subr.mxu0 0.0
    %2723 = vmatpush1.xpose.msra.mxu0 0.0
    %2724 = vmatprep.subr.mxu0 0.0
    %2725 = vmatpush1.xpose.msra.mxu0 0.0
    %2726 = vmatprep.subr.mxu0 0.0
    %2727 = vmatpush1.xpose.msra.mxu0 0.0
    %2728 = vmatprep.subr.mxu0 0.0
    %2729 = vmatpush1.xpose.msra.mxu0 0.0
    %2730 = vmatprep.subr.mxu0 0.0
    %2731 = vmatpush1.xpose.msra.mxu0 0.0
    %2732 = vmatprep.subr.mxu0 0.0
    %2733 = vmatpush1.xpose.msra.mxu0 0.0
    %2734 = vmatprep.subr.mxu0 0.0
    %2735 = vmatpush1.xpose.msra.mxu0 0.0
    %2736 = vmatprep.subr.mxu0 0.0
    %2737 = vmatpush1.xpose.msra.mxu0 0.0
    %2738 = vmatprep.subr.mxu0 0.0
    %2739 = vmatpush1.xpose.msra.mxu0 0.0
    %2740 = vmatprep.subr.mxu0 0.0
    %2741 = vmatpush1.xpose.msra.mxu0 0.0
    %2742 = vmatprep.subr.mxu0 0.0
    %2743 = vmatpush1.xpose.msra.mxu0 %v2056
    %2744 = vmatprep.subr.mxu0 0.0
    %2745 = vmatpush1.xpose.msra.mxu0 %v2053
    %2746 = vmatprep.subr.mxu0 0.0
    %2747 = vmatpush2.xpose.msra.mxu0 0.0
    %2748 = vmatprep.subr.mxu0 0.0
    %2749 = vmatpush2.xpose.msra.mxu0 0.0
    %2750 = vmatprep.subr.mxu0 0.0
    %2751 = vmatpush2.xpose.msra.mxu0 0.0
    %2752 = vmatprep.subr.mxu0 0.0
    %2753 = vmatpush2.xpose.msra.mxu0 0.0
    %2754 = vmatprep.subr.mxu0 0.0
    %2755 = vmatpush2.xpose.msra.mxu0 0.0
    %2756 = vmatprep.subr.mxu0 0.0
    %2757 = vmatpush2.xpose.msra.mxu0 0.0
    %2758 = vmatprep.subr.mxu0 0.0
    %2759 = vmatpush2.xpose.msra.mxu0 0.0
    %2760 = vmatprep.subr.mxu0 0.0
    %2761 = vmatpush2.xpose.msra.mxu0 0.0
    %2762 = vmatprep.subr.mxu0 0.0
    %2763 = vmatpush2.xpose.msra.mxu0 0.0
    %2764 = vmatprep.subr.mxu0 0.0
    %2765 = vmatpush2.xpose.msra.mxu0 0.0
    %2766 = vmatprep.subr.mxu0 0.0
    %2767 = vmatpush2.xpose.msra.mxu0 0.0
    %2768 = vmatprep.subr.mxu0 0.0
    %2769 = vmatpush2.xpose.msra.mxu0 0.0
    %2770 = vmatprep.subr.mxu0 0.0
    %2771 = vmatpush2.xpose.msra.mxu0 0.0
    %2772 = vmatprep.subr.mxu0 0.0
    %2773 = vmatpush2.xpose.msra.mxu0 0.0
    %2774 = vmatprep.subr.mxu0 0.0
    %2775 = vmatpush2.xpose.msra.mxu0 0.0
    %2776 = vmatprep.subr.mxu0 0.0
    %2777 = vmatpush2.xpose.msra.mxu0 0.0
    %2778 = vmatprep.mubr.f32.mxu0 0.0
    %2779 = vmatmul.mubr.f32.gmra.mxu0 %v2712
    %v2780 = vpop.f32.mrf.mxu0
    %v2781 = vadd.f32 0.0, %v2780
    %v2782 = vpop.f32.mrf.mxu0
    %2783 = vdwg.mxu0
    %v2784 = vmul.f32 %v2708, 0.35355338
    %v2785 = vmul.f32 %v2781, 0.35355338
    %v2786 = vsel %vm138, %v2784, -inf
    %2787 = vmax.xlane.f32.xlu0 %v2786
    %v2788 = vpop.xlane.xlu0 %2787
    %v2789 = vsel %vm138, %v2785, -inf
    %2790 = vmax.xlane.f32.xlu0 %v2789
    %v2791 = vpop.xlane.xlu0 %2790
    %v2792 = vsub.f32 %v2784, %v2788
    %v2793 = vsub.f32 %v2785, %v2791
    %v2794 = vmul.f32 %v2792, 1.442695
    %v2795 = vpow.pop %v2794
    %v2796 = vmul.f32 %v2793, 1.442695
    %v2797 = vpow.pop %v2796
    %v2798 = vsel %vm138, %v2795, 0.0
    %2799 = vadd.xlane.f32.xlu0 %v2798
    %v2800 = vpop.xlane.xlu0 %2799
    %v2801 = vsel %vm138, %v2797, 0.0
    %2802 = vadd.xlane.f32.xlu0 %v2801
    %v2803 = vpop.xlane.xlu0 %2802
    %v2804 = vrcp.pop %v2800
    %v2805 = vrcp.pop %v2803
    %v2806 = vmul.f32 %v2795, %v2804
    %v2807 = vmul.f32 %v2797, %v2805
    %v2809 = vsel %vm138, %v2806, 0
    %2811 = vmatprep.subr.mxu0 0.0
    %2812 = vmatpush1.msra.mxu0 0.0
    %2813 = vmatprep.subr.mxu0 0.0
    %2814 = vmatpush1.msra.mxu0 0.0
    %2815 = vmatprep.subr.mxu0 0.0
    %2816 = vmatpush1.msra.mxu0 0.0
    %2817 = vmatprep.subr.mxu0 0.0
    %2818 = vmatpush1.msra.mxu0 0.0
    %2819 = vmatprep.subr.mxu0 0.0
    %2820 = vmatpush1.msra.mxu0 0.0
    %2821 = vmatprep.subr.mxu0 0.0
    %2822 = vmatpush1.msra.mxu0 0.0
    %2823 = vmatprep.subr.mxu0 0.0
    %2824 = vmatpush1.msra.mxu0 0.0
    %2825 = vmatprep.subr.mxu0 0.0
    %2826 = vmatpush1.msra.mxu0 0.0
    %2827 = vmatprep.subr.mxu0 0.0
    %2828 = vmatpush1.msra.mxu0 0.0
    %2829 = vmatprep.subr.mxu0 0.0
    %2830 = vmatpush1.msra.mxu0 0.0
    %2831 = vmatprep.subr.mxu0 0.0
    %2832 = vmatpush1.msra.mxu0 0.0
    %2833 = vmatprep.subr.mxu0 0.0
    %2834 = vmatpush1.msra.mxu0 0.0
    %2835 = vmatprep.subr.mxu0 0.0
    %2836 = vmatpush1.msra.mxu0 0.0
    %2837 = vmatprep.subr.mxu0 0.0
    %2838 = vmatpush1.msra.mxu0 0.0
    %2839 = vmatprep.subr.mxu0 0.0
    %2840 = vmatpush1.msra.mxu0 %v2155
    %2841 = vmatprep.subr.mxu0 0.0
    %2842 = vmatpush1.msra.mxu0 %v2153
    %2843 = vmatprep.subr.mxu0 0.0
    %2844 = vmatpush2.msra.mxu0 0.0
    %2845 = vmatprep.subr.mxu0 0.0
    %2846 = vmatpush2.msra.mxu0 0.0
    %2847 = vmatprep.subr.mxu0 0.0
    %2848 = vmatpush2.msra.mxu0 0.0
    %2849 = vmatprep.subr.mxu0 0.0
    %2850 = vmatpush2.msra.mxu0 0.0
    %2851 = vmatprep.subr.mxu0 0.0
    %2852 = vmatpush2.msra.mxu0 0.0
    %2853 = vmatprep.subr.mxu0 0.0
    %2854 = vmatpush2.msra.mxu0 0.0
    %2855 = vmatprep.subr.mxu0 0.0
    %2856 = vmatpush2.msra.mxu0 0.0
    %2857 = vmatprep.subr.mxu0 0.0
    %2858 = vmatpush2.msra.mxu0 0.0
    %2859 = vmatprep.subr.mxu0 0.0
    %2860 = vmatpush2.msra.mxu0 0.0
    %2861 = vmatprep.subr.mxu0 0.0
    %2862 = vmatpush2.msra.mxu0 0.0
    %2863 = vmatprep.subr.mxu0 0.0
    %2864 = vmatpush2.msra.mxu0 0.0
    %2865 = vmatprep.subr.mxu0 0.0
    %2866 = vmatpush2.msra.mxu0 0.0
    %2867 = vmatprep.subr.mxu0 0.0
    %2868 = vmatpush2.msra.mxu0 0.0
    %2869 = vmatprep.subr.mxu0 0.0
    %2870 = vmatpush2.msra.mxu0 0.0
    %2871 = vmatprep.subr.mxu0 0.0
    %2872 = vmatpush2.msra.mxu0 0.0
    %2873 = vmatprep.subr.mxu0 0.0
    %2874 = vmatpush2.msra.mxu0 0.0
    %2875 = vmatprep.mubr.f32.mxu0 0.0
    %2876 = vmatmul.mubr.f32.gmra.mxu0 %v2809
    %v2877 = vpop.f32.mrf.mxu0
    %v2878 = vadd.f32 0.0, %v2877
    %v2879 = vpop.f32.mrf.mxu0
    %2880 = vdwg.mxu0
    %v2882 = vsel %vm138, %v2807, 0
    %2884 = vmatprep.subr.mxu0 0.0
    %2885 = vmatpush1.msra.mxu0 0.0
    %2886 = vmatprep.subr.mxu0 0.0
    %2887 = vmatpush1.msra.mxu0 0.0
    %2888 = vmatprep.subr.mxu0 0.0
    %2889 = vmatpush1.msra.mxu0 0.0
    %2890 = vmatprep.subr.mxu0 0.0
    %2891 = vmatpush1.msra.mxu0 0.0
    %2892 = vmatprep.subr.mxu0 0.0
    %2893 = vmatpush1.msra.mxu0 0.0
    %2894 = vmatprep.subr.mxu0 0.0
    %2895 = vmatpush1.msra.mxu0 0.0
    %2896 = vmatprep.subr.mxu0 0.0
    %2897 = vmatpush1.msra.mxu0 0.0
    %2898 = vmatprep.subr.mxu0 0.0
    %2899 = vmatpush1.msra.mxu0 0.0
    %2900 = vmatprep.subr.mxu0 0.0
    %2901 = vmatpush1.msra.mxu0 0.0
    %2902 = vmatprep.subr.mxu0 0.0
    %2903 = vmatpush1.msra.mxu0 0.0
    %2904 = vmatprep.subr.mxu0 0.0
    %2905 = vmatpush1.msra.mxu0 0.0
    %2906 = vmatprep.subr.mxu0 0.0
    %2907 = vmatpush1.msra.mxu0 0.0
    %2908 = vmatprep.subr.mxu0 0.0
    %2909 = vmatpush1.msra.mxu0 0.0
    %2910 = vmatprep.subr.mxu0 0.0
    %2911 = vmatpush1.msra.mxu0 0.0
    %2912 = vmatprep.subr.mxu0 0.0
    %2913 = vmatpush1.msra.mxu0 %v2234
    %2914 = vmatprep.subr.mxu0 0.0
    %2915 = vmatpush1.msra.mxu0 %v2232
    %2916 = vmatprep.subr.mxu0 0.0
    %2917 = vmatpush2.msra.mxu0 0.0
    %2918 = vmatprep.subr.mxu0 0.0
    %2919 = vmatpush2.msra.mxu0 0.0
    %2920 = vmatprep.subr.mxu0 0.0
    %2921 = vmatpush2.msra.mxu0 0.0
    %2922 = vmatprep.subr.mxu0 0.0
    %2923 = vmatpush2.msra.mxu0 0.0
    %2924 = vmatprep.subr.mxu0 0.0
    %2925 = vmatpush2.msra.mxu0 0.0
    %2926 = vmatprep.subr.mxu0 0.0
    %2927 = vmatpush2.msra.mxu0 0.0
    %2928 = vmatprep.subr.mxu0 0.0
    %2929 = vmatpush2.msra.mxu0 0.0
    %2930 = vmatprep.subr.mxu0 0.0
    %2931 = vmatpush2.msra.mxu0 0.0
    %2932 = vmatprep.subr.mxu0 0.0
    %2933 = vmatpush2.msra.mxu0 0.0
    %2934 = vmatprep.subr.mxu0 0.0
    %2935 = vmatpush2.msra.mxu0 0.0
    %2936 = vmatprep.subr.mxu0 0.0
    %2937 = vmatpush2.msra.mxu0 0.0
    %2938 = vmatprep.subr.mxu0 0.0
    %2939 = vmatpush2.msra.mxu0 0.0
    %2940 = vmatprep.subr.mxu0 0.0
    %2941 = vmatpush2.msra.mxu0 0.0
    %2942 = vmatprep.subr.mxu0 0.0
    %2943 = vmatpush2.msra.mxu0 0.0
    %2944 = vmatprep.subr.mxu0 0.0
    %2945 = vmatpush2.msra.mxu0 0.0
    %2946 = vmatprep.subr.mxu0 0.0
    %2947 = vmatpush2.msra.mxu0 0.0
    %2948 = vmatprep.mubr.f32.mxu0 0.0
    %2949 = vmatmul.mubr.f32.gmra.mxu0 %v2882
    %v2950 = vpop.f32.mrf.mxu0
    %v2951 = vadd.f32 0.0, %v2950
    %v2952 = vpop.f32.mrf.mxu0
    %2953 = vdwg.mxu0
    %v2954 = vmul.f32 %v2878, %v114
    %v2955 = vmul.f32 %v2951, %v114
    %v2956 = vadd.f32 %v2634, %v2954
    %v2957 = vadd.f32 %v2635, %v2955
    %v2958 = vmul.f32 %v1960, %v119
    %v2959 = vmul.f32 %v1965, %v119
    %v2961 = vsel %vm235, %v2958, 0
    %2963 = vmatprep.subr.mxu0 0.0
    %2964 = vmatpush1.xpose.msra.mxu0 0.0
    %2965 = vmatprep.subr.mxu0 0.0
    %2966 = vmatpush1.xpose.msra.mxu0 0.0
    %2967 = vmatprep.subr.mxu0 0.0
    %2968 = vmatpush1.xpose.msra.mxu0 0.0
    %2969 = vmatprep.subr.mxu0 0.0
    %2970 = vmatpush1.xpose.msra.mxu0 0.0
    %2971 = vmatprep.subr.mxu0 0.0
    %2972 = vmatpush1.xpose.msra.mxu0 0.0
    %2973 = vmatprep.subr.mxu0 0.0
    %2974 = vmatpush1.xpose.msra.mxu0 0.0
    %2975 = vmatprep.subr.mxu0 0.0
    %2976 = vmatpush1.xpose.msra.mxu0 0.0
    %2977 = vmatprep.subr.mxu0 0.0
    %2978 = vmatpush1.xpose.msra.mxu0 0.0
    %2979 = vmatprep.subr.mxu0 0.0
    %2980 = vmatpush1.xpose.msra.mxu0 0.0
    %2981 = vmatprep.subr.mxu0 0.0
    %2982 = vmatpush1.xpose.msra.mxu0 0.0
    %2983 = vmatprep.subr.mxu0 0.0
    %2984 = vmatpush1.xpose.msra.mxu0 0.0
    %2985 = vmatprep.subr.mxu0 0.0
    %2986 = vmatpush1.xpose.msra.mxu0 0.0
    %2987 = vmatprep.subr.mxu0 0.0
    %2988 = vmatpush1.xpose.msra.mxu0 0.0
    %2989 = vmatprep.subr.mxu0 0.0
    %2990 = vmatpush1.xpose.msra.mxu0 0.0
    %2991 = vmatprep.subr.mxu0 0.0
    %2992 = vmatpush1.xpose.msra.mxu0 %v1977
    %2993 = vmatprep.subr.mxu0 0.0
    %2994 = vmatpush1.xpose.msra.mxu0 %v1974
    %2995 = vmatprep.subr.mxu0 0.0
    %2996 = vmatpush2.xpose.msra.mxu0 0.0
    %2997 = vmatprep.subr.mxu0 0.0
    %2998 = vmatpush2.xpose.msra.mxu0 0.0
    %2999 = vmatprep.subr.mxu0 0.0
    %3000 = vmatpush2.xpose.msra.mxu0 0.0
    %3001 = vmatprep.subr.mxu0 0.0
    %3002 = vmatpush2.xpose.msra.mxu0 0.0
    %3003 = vmatprep.subr.mxu0 0.0
    %3004 = vmatpush2.xpose.msra.mxu0 0.0
    %3005 = vmatprep.subr.mxu0 0.0
    %3006 = vmatpush2.xpose.msra.mxu0 0.0
    %3007 = vmatprep.subr.mxu0 0.0
    %3008 = vmatpush2.xpose.msra.mxu0 0.0
    %3009 = vmatprep.subr.mxu0 0.0
    %3010 = vmatpush2.xpose.msra.mxu0 0.0
    %3011 = vmatprep.subr.mxu0 0.0
    %3012 = vmatpush2.xpose.msra.mxu0 0.0
    %3013 = vmatprep.subr.mxu0 0.0
    %3014 = vmatpush2.xpose.msra.mxu0 0.0
    %3015 = vmatprep.subr.mxu0 0.0
    %3016 = vmatpush2.xpose.msra.mxu0 0.0
    %3017 = vmatprep.subr.mxu0 0.0
    %3018 = vmatpush2.xpose.msra.mxu0 0.0
    %3019 = vmatprep.subr.mxu0 0.0
    %3020 = vmatpush2.xpose.msra.mxu0 0.0
    %3021 = vmatprep.subr.mxu0 0.0
    %3022 = vmatpush2.xpose.msra.mxu0 0.0
    %3023 = vmatprep.subr.mxu0 0.0
    %3024 = vmatpush2.xpose.msra.mxu0 0.0
    %3025 = vmatprep.subr.mxu0 0.0
    %3026 = vmatpush2.xpose.msra.mxu0 0.0
    %3027 = vmatprep.mubr.f32.mxu0 0.0
    %3028 = vmatmul.mubr.f32.gmra.mxu0 %v2961
    %v3029 = vpop.f32.mrf.mxu0
    %v3030 = vadd.f32 0.0, %v3029
    %v3031 = vpop.f32.mrf.mxu0
    %3032 = vdwg.mxu0
    %v3034 = vsel %vm235, %v2959, 0
    %3036 = vmatprep.subr.mxu0 0.0
    %3037 = vmatpush1.xpose.msra.mxu0 0.0
    %3038 = vmatprep.subr.mxu0 0.0
    %3039 = vmatpush1.xpose.msra.mxu0 0.0
    %3040 = vmatprep.subr.mxu0 0.0
    %3041 = vmatpush1.xpose.msra.mxu0 0.0
    %3042 = vmatprep.subr.mxu0 0.0
    %3043 = vmatpush1.xpose.msra.mxu0 0.0
    %3044 = vmatprep.subr.mxu0 0.0
    %3045 = vmatpush1.xpose.msra.mxu0 0.0
    %3046 = vmatprep.subr.mxu0 0.0
    %3047 = vmatpush1.xpose.msra.mxu0 0.0
    %3048 = vmatprep.subr.mxu0 0.0
    %3049 = vmatpush1.xpose.msra.mxu0 0.0
    %3050 = vmatprep.subr.mxu0 0.0
    %3051 = vmatpush1.xpose.msra.mxu0 0.0
    %3052 = vmatprep.subr.mxu0 0.0
    %3053 = vmatpush1.xpose.msra.mxu0 0.0
    %3054 = vmatprep.subr.mxu0 0.0
    %3055 = vmatpush1.xpose.msra.mxu0 0.0
    %3056 = vmatprep.subr.mxu0 0.0
    %3057 = vmatpush1.xpose.msra.mxu0 0.0
    %3058 = vmatprep.subr.mxu0 0.0
    %3059 = vmatpush1.xpose.msra.mxu0 0.0
    %3060 = vmatprep.subr.mxu0 0.0
    %3061 = vmatpush1.xpose.msra.mxu0 0.0
    %3062 = vmatprep.subr.mxu0 0.0
    %3063 = vmatpush1.xpose.msra.mxu0 0.0
    %3064 = vmatprep.subr.mxu0 0.0
    %3065 = vmatpush1.xpose.msra.mxu0 %v2056
    %3066 = vmatprep.subr.mxu0 0.0
    %3067 = vmatpush1.xpose.msra.mxu0 %v2053
    %3068 = vmatprep.subr.mxu0 0.0
    %3069 = vmatpush2.xpose.msra.mxu0 0.0
    %3070 = vmatprep.subr.mxu0 0.0
    %3071 = vmatpush2.xpose.msra.mxu0 0.0
    %3072 = vmatprep.subr.mxu0 0.0
    %3073 = vmatpush2.xpose.msra.mxu0 0.0
    %3074 = vmatprep.subr.mxu0 0.0
    %3075 = vmatpush2.xpose.msra.mxu0 0.0
    %3076 = vmatprep.subr.mxu0 0.0
    %3077 = vmatpush2.xpose.msra.mxu0 0.0
    %3078 = vmatprep.subr.mxu0 0.0
    %3079 = vmatpush2.xpose.msra.mxu0 0.0
    %3080 = vmatprep.subr.mxu0 0.0
    %3081 = vmatpush2.xpose.msra.mxu0 0.0
    %3082 = vmatprep.subr.mxu0 0.0
    %3083 = vmatpush2.xpose.msra.mxu0 0.0
    %3084 = vmatprep.subr.mxu0 0.0
    %3085 = vmatpush2.xpose.msra.mxu0 0.0
    %3086 = vmatprep.subr.mxu0 0.0
    %3087 = vmatpush2.xpose.msra.mxu0 0.0
    %3088 = vmatprep.subr.mxu0 0.0
    %3089 = vmatpush2.xpose.msra.mxu0 0.0
    %3090 = vmatprep.subr.mxu0 0.0
    %3091 = vmatpush2.xpose.msra.mxu0 0.0
    %3092 = vmatprep.subr.mxu0 0.0
    %3093 = vmatpush2.xpose.msra.mxu0 0.0
    %3094 = vmatprep.subr.mxu0 0.0
    %3095 = vmatpush2.xpose.msra.mxu0 0.0
    %3096 = vmatprep.subr.mxu0 0.0
    %3097 = vmatpush2.xpose.msra.mxu0 0.0
    %3098 = vmatprep.subr.mxu0 0.0
    %3099 = vmatpush2.xpose.msra.mxu0 0.0
    %3100 = vmatprep.mubr.f32.mxu0 0.0
    %3101 = vmatmul.mubr.f32.gmra.mxu0 %v3034
    %v3102 = vpop.f32.mrf.mxu0
    %v3103 = vadd.f32 0.0, %v3102
    %v3104 = vpop.f32.mrf.mxu0
    %3105 = vdwg.mxu0
    %v3106 = vmul.f32 %v3030, 0.35355338
    %v3107 = vmul.f32 %v3103, 0.35355338
    %v3108 = vsel %vm138, %v3106, -inf
    %3109 = vmax.xlane.f32.xlu0 %v3108
    %v3110 = vpop.xlane.xlu0 %3109
    %v3111 = vsel %vm138, %v3107, -inf
    %3112 = vmax.xlane.f32.xlu0 %v3111
    %v3113 = vpop.xlane.xlu0 %3112
    %v3114 = vsub.f32 %v3106, %v3110
    %v3115 = vsub.f32 %v3107, %v3113
    %v3116 = vmul.f32 %v3114, 1.442695
    %v3117 = vpow.pop %v3116
    %v3118 = vmul.f32 %v3115, 1.442695
    %v3119 = vpow.pop %v3118
    %v3120 = vsel %vm138, %v3117, 0.0
    %3121 = vadd.xlane.f32.xlu0 %v3120
    %v3122 = vpop.xlane.xlu0 %3121
    %v3123 = vsel %vm138, %v3119, 0.0
    %3124 = vadd.xlane.f32.xlu0 %v3123
    %v3125 = vpop.xlane.xlu0 %3124
    %v3126 = vrcp.pop %v3122
    %v3127 = vrcp.pop %v3125
    %v3128 = vmul.f32 %v3117, %v3126
    %v3129 = vmul.f32 %v3119, %v3127
    %v3131 = vsel %vm138, %v3128, 0
    %3133 = vmatprep.subr.mxu0 0.0
    %3134 = vmatpush1.msra.mxu0 0.0
    %3135 = vmatprep.subr.mxu0 0.0
    %3136 = vmatpush1.msra.mxu0 0.0
    %3137 = vmatprep.subr.mxu0 0.0
    %3138 = vmatpush1.msra.mxu0 0.0
    %3139 = vmatprep.subr.mxu0 0.0
    %3140 = vmatpush1.msra.mxu0 0.0
    %3141 = vmatprep.subr.mxu0 0.0
    %3142 = vmatpush1.msra.mxu0 0.0
    %3143 = vmatprep.subr.mxu0 0.0
    %3144 = vmatpush1.msra.mxu0 0.0
    %3145 = vmatprep.subr.mxu0 0.0
    %3146 = vmatpush1.msra.mxu0 0.0
    %3147 = vmatprep.subr.mxu0 0.0
    %3148 = vmatpush1.msra.mxu0 0.0
    %3149 = vmatprep.subr.mxu0 0.0
    %3150 = vmatpush1.msra.mxu0 0.0
    %3151 = vmatprep.subr.mxu0 0.0
    %3152 = vmatpush1.msra.mxu0 0.0
    %3153 = vmatprep.subr.mxu0 0.0
    %3154 = vmatpush1.msra.mxu0 0.0
    %3155 = vmatprep.subr.mxu0 0.0
    %3156 = vmatpush1.msra.mxu0 0.0
    %3157 = vmatprep.subr.mxu0 0.0
    %3158 = vmatpush1.msra.mxu0 0.0
    %3159 = vmatprep.subr.mxu0 0.0
    %3160 = vmatpush1.msra.mxu0 0.0
    %3161 = vmatprep.subr.mxu0 0.0
    %3162 = vmatpush1.msra.mxu0 %v2155
    %3163 = vmatprep.subr.mxu0 0.0
    %3164 = vmatpush1.msra.mxu0 %v2153
    %3165 = vmatprep.subr.mxu0 0.0
    %3166 = vmatpush2.msra.mxu0 0.0
    %3167 = vmatprep.subr.mxu0 0.0
    %3168 = vmatpush2.msra.mxu0 0.0
    %3169 = vmatprep.subr.mxu0 0.0
    %3170 = vmatpush2.msra.mxu0 0.0
    %3171 = vmatprep.subr.mxu0 0.0
    %3172 = vmatpush2.msra.mxu0 0.0
    %3173 = vmatprep.subr.mxu0 0.0
    %3174 = vmatpush2.msra.mxu0 0.0
    %3175 = vmatprep.subr.mxu0 0.0
    %3176 = vmatpush2.msra.mxu0 0.0
    %3177 = vmatprep.subr.mxu0 0.0
    %3178 = vmatpush2.msra.mxu0 0.0
    %3179 = vmatprep.subr.mxu0 0.0
    %3180 = vmatpush2.msra.mxu0 0.0
    %3181 = vmatprep.subr.mxu0 0.0
    %3182 = vmatpush2.msra.mxu0 0.0
    %3183 = vmatprep.subr.mxu0 0.0
    %3184 = vmatpush2.msra.mxu0 0.0
    %3185 = vmatprep.subr.mxu0 0.0
    %3186 = vmatpush2.msra.mxu0 0.0
    %3187 = vmatprep.subr.mxu0 0.0
    %3188 = vmatpush2.msra.mxu0 0.0
    %3189 = vmatprep.subr.mxu0 0.0
    %3190 = vmatpush2.msra.mxu0 0.0
    %3191 = vmatprep.subr.mxu0 0.0
    %3192 = vmatpush2.msra.mxu0 0.0
    %3193 = vmatprep.subr.mxu0 0.0
    %3194 = vmatpush2.msra.mxu0 0.0
    %3195 = vmatprep.subr.mxu0 0.0
    %3196 = vmatpush2.msra.mxu0 0.0
    %3197 = vmatprep.mubr.f32.mxu0 0.0
    %3198 = vmatmul.mubr.f32.gmra.mxu0 %v3131
    %v3199 = vpop.f32.mrf.mxu0
    %v3200 = vadd.f32 0.0, %v3199
    %v3201 = vpop.f32.mrf.mxu0
    %3202 = vdwg.mxu0
    %v3204 = vsel %vm138, %v3129, 0
    %3206 = vmatprep.subr.mxu0 0.0
    %3207 = vmatpush1.msra.mxu0 0.0
    %3208 = vmatprep.subr.mxu0 0.0
    %3209 = vmatpush1.msra.mxu0 0.0
    %3210 = vmatprep.subr.mxu0 0.0
    %3211 = vmatpush1.msra.mxu0 0.0
    %3212 = vmatprep.subr.mxu0 0.0
    %3213 = vmatpush1.msra.mxu0 0.0
    %3214 = vmatprep.subr.mxu0 0.0
    %3215 = vmatpush1.msra.mxu0 0.0
    %3216 = vmatprep.subr.mxu0 0.0
    %3217 = vmatpush1.msra.mxu0 0.0
    %3218 = vmatprep.subr.mxu0 0.0
    %3219 = vmatpush1.msra.mxu0 0.0
    %3220 = vmatprep.subr.mxu0 0.0
    %3221 = vmatpush1.msra.mxu0 0.0
    %3222 = vmatprep.subr.mxu0 0.0
    %3223 = vmatpush1.msra.mxu0 0.0
    %3224 = vmatprep.subr.mxu0 0.0
    %3225 = vmatpush1.msra.mxu0 0.0
    %3226 = vmatprep.subr.mxu0 0.0
    %3227 = vmatpush1.msra.mxu0 0.0
    %3228 = vmatprep.subr.mxu0 0.0
    %3229 = vmatpush1.msra.mxu0 0.0
    %3230 = vmatprep.subr.mxu0 0.0
    %3231 = vmatpush1.msra.mxu0 0.0
    %3232 = vmatprep.subr.mxu0 0.0
    %3233 = vmatpush1.msra.mxu0 0.0
    %3234 = vmatprep.subr.mxu0 0.0
    %3235 = vmatpush1.msra.mxu0 %v2234
    %3236 = vmatprep.subr.mxu0 0.0
    %3237 = vmatpush1.msra.mxu0 %v2232
    %3238 = vmatprep.subr.mxu0 0.0
    %3239 = vmatpush2.msra.mxu0 0.0
    %3240 = vmatprep.subr.mxu0 0.0
    %3241 = vmatpush2.msra.mxu0 0.0
    %3242 = vmatprep.subr.mxu0 0.0
    %3243 = vmatpush2.msra.mxu0 0.0
    %3244 = vmatprep.subr.mxu0 0.0
    %3245 = vmatpush2.msra.mxu0 0.0
    %3246 = vmatprep.subr.mxu0 0.0
    %3247 = vmatpush2.msra.mxu0 0.0
    %3248 = vmatprep.subr.mxu0 0.0
    %3249 = vmatpush2.msra.mxu0 0.0
    %3250 = vmatprep.subr.mxu0 0.0
    %3251 = vmatpush2.msra.mxu0 0.0
    %3252 = vmatprep.subr.mxu0 0.0
    %3253 = vmatpush2.msra.mxu0 0.0
    %3254 = vmatprep.subr.mxu0 0.0
    %3255 = vmatpush2.msra.mxu0 0.0
    %3256 = vmatprep.subr.mxu0 0.0
    %3257 = vmatpush2.msra.mxu0 0.0
    %3258 = vmatprep.subr.mxu0 0.0
    %3259 = vmatpush2.msra.mxu0 0.0
    %3260 = vmatprep.subr.mxu0 0.0
    %3261 = vmatpush2.msra.mxu0 0.0
    %3262 = vmatprep.subr.mxu0 0.0
    %3263 = vmatpush2.msra.mxu0 0.0
    %3264 = vmatprep.subr.mxu0 0.0
    %3265 = vmatpush2.msra.mxu0 0.0
    %3266 = vmatprep.subr.mxu0 0.0
    %3267 = vmatpush2.msra.mxu0 0.0
    %3268 = vmatprep.subr.mxu0 0.0
    %3269 = vmatpush2.msra.mxu0 0.0
    %3270 = vmatprep.mubr.f32.mxu0 0.0
    %3271 = vmatmul.mubr.f32.gmra.mxu0 %v3204
    %v3272 = vpop.f32.mrf.mxu0
    %v3273 = vadd.f32 0.0, %v3272
    %v3274 = vpop.f32.mrf.mxu0
    %3275 = vdwg.mxu0
    %v3276 = vmul.f32 %v3200, %v119
    %v3277 = vmul.f32 %v3273, %v119
    %v3278 = vadd.f32 %v2956, %v3276
    %v3279 = vadd.f32 %v2957, %v3277
    %3280 = vrot.lane.b32.xlu0 %v333, 64
    %v3281 = vpop.permute.xlu0 %3280
    %3282 = vrot.lane.b32.xlu0 %v334, 64
    %v3283 = vpop.permute.xlu0 %3282
    %3284 = vrot.lane.b32.xlu0 %v335, 64
    %v3285 = vpop.permute.xlu0 %3284
    %3286 = vrot.lane.b32.xlu0 %v336, 64
    %v3287 = vpop.permute.xlu0 %3286
    %3292 = vrot.lane.b32.xlu0 %v1740, 64
    %v3293 = vpop.permute.xlu0 %3292
    %v3296 = vsel %vm235, %v3278, 0
    %v3299 = vsel %vm235, %v3279, 0
    %3301 = vmatprep.subr.mxu0 0.0
    %3302 = vmatpush1.msra.mxu0 0.0
    %3303 = vmatprep.subr.mxu0 0.0
    %3304 = vmatpush1.msra.mxu0 0.0
    %3305 = vmatprep.subr.mxu0 0.0
    %3306 = vmatpush1.msra.mxu0 0.0
    %3307 = vmatprep.subr.mxu0 0.0
    %3308 = vmatpush1.msra.mxu0 0.0
    %3309 = vmatprep.subr.mxu0 0.0
    %3310 = vmatpush1.msra.mxu0 0.0
    %3311 = vmatprep.subr.mxu0 0.0
    %3312 = vmatpush1.msra.mxu0 0.0
    %3313 = vmatprep.subr.mxu0 0.0
    %3314 = vmatpush1.msra.mxu0 0.0
    %3315 = vmatprep.subr.mxu0 0.0
    %3316 = vmatpush1.msra.mxu0 0.0
    %3317 = vmatprep.subr.mxu0 0.0
    %3318 = vmatpush1.msra.mxu0 0.0
    %3319 = vmatprep.subr.mxu0 0.0
    %3320 = vmatpush1.msra.mxu0 0.0
    %3321 = vmatprep.subr.mxu0 0.0
    %3322 = vmatpush1.msra.mxu0 0.0
    %3323 = vmatprep.subr.mxu0 0.0
    %3324 = vmatpush1.msra.mxu0 0.0
    %3325 = vmatprep.subr.mxu0 0.0
    %3326 = vmatpush1.msra.mxu0 %v3287
    %3327 = vmatprep.subr.mxu0 0.0
    %3328 = vmatpush1.msra.mxu0 %v3285
    %3329 = vmatprep.subr.mxu0 0.0
    %3330 = vmatpush1.msra.mxu0 %v3283
    %3331 = vmatprep.subr.mxu0 0.0
    %3332 = vmatpush1.msra.mxu0 %v3281
    %3333 = vmatprep.subr.mxu0 0.0
    %3334 = vmatpush2.msra.mxu0 0.0
    %3335 = vmatprep.subr.mxu0 0.0
    %3336 = vmatpush2.msra.mxu0 0.0
    %3337 = vmatprep.subr.mxu0 0.0
    %3338 = vmatpush2.msra.mxu0 0.0
    %3339 = vmatprep.subr.mxu0 0.0
    %3340 = vmatpush2.msra.mxu0 0.0
    %3341 = vmatprep.subr.mxu0 0.0
    %3342 = vmatpush2.msra.mxu0 0.0
    %3343 = vmatprep.subr.mxu0 0.0
    %3344 = vmatpush2.msra.mxu0 0.0
    %3345 = vmatprep.subr.mxu0 0.0
    %3346 = vmatpush2.msra.mxu0 0.0
    %3347 = vmatprep.subr.mxu0 0.0
    %3348 = vmatpush2.msra.mxu0 0.0
    %3349 = vmatprep.subr.mxu0 0.0
    %3350 = vmatpush2.msra.mxu0 0.0
    %3351 = vmatprep.subr.mxu0 0.0
    %3352 = vmatpush2.msra.mxu0 0.0
    %3353 = vmatprep.subr.mxu0 0.0
    %3354 = vmatpush2.msra.mxu0 0.0
    %3355 = vmatprep.subr.mxu0 0.0
    %3356 = vmatpush2.msra.mxu0 0.0
    %3357 = vmatprep.subr.mxu0 0.0
    %3358 = vmatpush2.msra.mxu0 0.0
    %3359 = vmatprep.subr.mxu0 0.0
    %3360 = vmatpush2.msra.mxu0 0.0
    %3361 = vmatprep.subr.mxu0 0.0
    %3362 = vmatpush2.msra.mxu0 0.0
    %3363 = vmatprep.subr.mxu0 0.0
    %3364 = vmatpush2.msra.mxu0 0.0
    %3365 = vmatprep.mubr.f32.mxu0 0.0
    %3366 = vmatmul.mubr.f32.gmra.mxu0 %v3296
    %v3367 = vpop.f32.mrf.mxu0
    %v3368 = vadd.f32 %v3293, %v3367
    %v3369 = vpop.f32.mrf.mxu0
    %3370 = vmatprep.mubr.f32.mxu0 0.0
    %3371 = vmatmul.mubr.f32.gmra.mxu0 %v3299
    %v3372 = vpop.f32.mrf.mxu0
    %v3373 = vadd.f32 %v3293, %v3372
    %v3374 = vpop.f32.mrf.mxu0
    %3375 = vdwg.mxu0
    %v3376 = vadd.f32 %v1866, %v3368
    %v3377 = vadd.f32 %v1867, %v3373
    %v3378 = vsel %vm235, %v3376, 0.0
    %3379 = vadd.xlane.f32.xlu0 %v3378
    %v3380 = vpop.xlane.xlu0 %3379
    %v3381 = vsel %vm235, %v3377, 0.0
    %3382 = vadd.xlane.f32.xlu0 %v3381
    %v3383 = vpop.xlane.xlu0 %3382
    %v3384 = vmul.f32 %v3380, %v1831
    %v3385 = vmul.f32 %v3383, %v1831
    %v3386 = vmul.f32 %v3376, %v3376
    %v3387 = vmul.f32 %v3377, %v3377
    %v3388 = vsel %vm235, %v3386, 0.0
    %3389 = vadd.xlane.f32.xlu0 %v3388
    %v3390 = vpop.xlane.xlu0 %3389
    %v3391 = vsel %vm235, %v3387, 0.0
    %3392 = vadd.xlane.f32.xlu0 %v3391
    %v3393 = vpop.xlane.xlu0 %3392
    %v3394 = vmul.f32 %v3390, %v1831
    %v3395 = vmul.f32 %v3393, %v1831
    %v3396 = vmul.f32 %v3384, %v3384
    %v3397 = vmul.f32 %v3385, %v3385
    %v3398 = vsub.f32 %v3394, %v3396
    %v3399 = vsub.f32 %v3395, %v3397
    %v3400 = vsub.f32 %v3376, %v3384
    %v3401 = vsub.f32 %v3377, %v3385
    %v3402 = vadd.f32 %v3398, 1e-05
    %v3403 = vadd.f32 %v3399, 1e-05
    %v3404 = vrsqrt.pop %v3402
    %v3405 = vrsqrt.pop %v3403
    %v3406 = vmul.f32 %v3400, %v3404
    %v3407 = vmul.f32 %v3401, %v3405
    %v3408 = vlaneseq
    %v3409 = vshrl.u32 %v3408, 7
    %v3410 = vsub.s32 2, %v3409
    %v3411 = vrot.slane %v338, %v3410
    %v3412 = vmul.f32 %v3406, %v3411
    %v3413 = vmul.f32 %v3407, %v3411
    %v3414 = vlaneseq
    %v3415 = vshrl.u32 %v3414, 7
    %v3416 = vsub.s32 3, %v3415
    %v3417 = vrot.slane %v338, %v3416
    %v3418 = vadd.f32 %v3412, %v3417
    %v3419 = vadd.f32 %v3413, %v3417
    %v3420 = vld [vmem:[%s10] sm:$0xff]
    %v3421 = vld [vmem:[%s10 + $0x8] sm:$0xff]
    %v3422 = vld [vmem:[%s10 + $0x10] sm:$0xff]
    %v3423 = vld [vmem:[%s10 + $0x18] sm:$0xff]
    %v3424 = vld [vmem:[%s11] sm:$0x1]
    %v3426 = vlaneseq
    %v3427 = vshrl.u32 %v3426, 7
    %v3428 = vsub.s32 0, %v3427
    %v3429 = vrot.slane %v3424, %v3428
    %v3432 = vsel %vm235, %v3418, 0
    %v3435 = vsel %vm235, %v3419, 0
    %3437 = vmatprep.subr.mxu0 0.0
    %3438 = vmatpush1.msra.mxu0 0.0
    %3439 = vmatprep.subr.mxu0 0.0
    %3440 = vmatpush1.msra.mxu0 0.0
    %3441 = vmatprep.subr.mxu0 0.0
    %3442 = vmatpush1.msra.mxu0 0.0
    %3443 = vmatprep.subr.mxu0 0.0
    %3444 = vmatpush1.msra.mxu0 0.0
    %3445 = vmatprep.subr.mxu0 0.0
    %3446 = vmatpush1.msra.mxu0 0.0
    %3447 = vmatprep.subr.mxu0 0.0
    %3448 = vmatpush1.msra.mxu0 0.0
    %3449 = vmatprep.subr.mxu0 0.0
    %3450 = vmatpush1.msra.mxu0 0.0
    %3451 = vmatprep.subr.mxu0 0.0
    %3452 = vmatpush1.msra.mxu0 0.0
    %3453 = vmatprep.subr.mxu0 0.0
    %3454 = vmatpush1.msra.mxu0 0.0
    %3455 = vmatprep.subr.mxu0 0.0
    %3456 = vmatpush1.msra.mxu0 0.0
    %3457 = vmatprep.subr.mxu0 0.0
    %3458 = vmatpush1.msra.mxu0 0.0
    %3459 = vmatprep.subr.mxu0 0.0
    %3460 = vmatpush1.msra.mxu0 0.0
    %3461 = vmatprep.subr.mxu0 0.0
    %3462 = vmatpush1.msra.mxu0 %v3423
    %3463 = vmatprep.subr.mxu0 0.0
    %3464 = vmatpush1.msra.mxu0 %v3422
    %3465 = vmatprep.subr.mxu0 0.0
    %3466 = vmatpush1.msra.mxu0 %v3421
    %3467 = vmatprep.subr.mxu0 0.0
    %3468 = vmatpush1.msra.mxu0 %v3420
    %3469 = vmatprep.subr.mxu0 0.0
    %3470 = vmatpush2.msra.mxu0 0.0
    %3471 = vmatprep.subr.mxu0 0.0
    %3472 = vmatpush2.msra.mxu0 0.0
    %3473 = vmatprep.subr.mxu0 0.0
    %3474 = vmatpush2.msra.mxu0 0.0
    %3475 = vmatprep.subr.mxu0 0.0
    %3476 = vmatpush2.msra.mxu0 0.0
    %3477 = vmatprep.subr.mxu0 0.0
    %3478 = vmatpush2.msra.mxu0 0.0
    %3479 = vmatprep.subr.mxu0 0.0
    %3480 = vmatpush2.msra.mxu0 0.0
    %3481 = vmatprep.subr.mxu0 0.0
    %3482 = vmatpush2.msra.mxu0 0.0
    %3483 = vmatprep.subr.mxu0 0.0
    %3484 = vmatpush2.msra.mxu0 0.0
    %3485 = vmatprep.subr.mxu0 0.0
    %3486 = vmatpush2.msra.mxu0 0.0
    %3487 = vmatprep.subr.mxu0 0.0
    %3488 = vmatpush2.msra.mxu0 0.0
    %3489 = vmatprep.subr.mxu0 0.0
    %3490 = vmatpush2.msra.mxu0 0.0
    %3491 = vmatprep.subr.mxu0 0.0
    %3492 = vmatpush2.msra.mxu0 0.0
    %3493 = vmatprep.subr.mxu0 0.0
    %3494 = vmatpush2.msra.mxu0 0.0
    %3495 = vmatprep.subr.mxu0 0.0
    %3496 = vmatpush2.msra.mxu0 0.0
    %3497 = vmatprep.subr.mxu0 0.0
    %3498 = vmatpush2.msra.mxu0 0.0
    %3499 = vmatprep.subr.mxu0 0.0
    %3500 = vmatpush2.msra.mxu0 0.0
    %3501 = vmatprep.mubr.f32.mxu0 0.0
    %3502 = vmatmul.mubr.f32.gmra.mxu0 %v3432
    %v3503 = vpop.f32.mrf.mxu0
    %v3504 = vadd.f32 %v3429, %v3503
    %v3505 = vpop.f32.mrf.mxu0
    %3506 = vmatprep.mubr.f32.mxu0 0.0
    %3507 = vmatmul.mubr.f32.gmra.mxu0 %v3435
    %v3508 = vpop.f32.mrf.mxu0
    %v3509 = vadd.f32 %v3429, %v3508
    %v3510 = vpop.f32.mrf.mxu0
    %3511 = vdwg.mxu0
    %v3512 = vmax.f32 %v3504, 0.0
    %v3513 = vmax.f32 %v3509, 0.0
    %v3514 = vld [vmem:[%s12] sm:$0xff]
    %v3515 = vld [vmem:[%s12 + $0x8] sm:$0xff]
    %v3516 = vld [vmem:[%s12 + $0x10] sm:$0xff]
    %v3517 = vld [vmem:[%s12 + $0x18] sm:$0xff]
    %v3518 = vld [vmem:[%s12 + $0x20] sm:$0xff]
    %v3519 = vld [vmem:[%s12 + $0x28] sm:$0xff]
    %v3520 = vld [vmem:[%s12 + $0x30] sm:$0xff]
    %v3521 = vld [vmem:[%s12 + $0x38] sm:$0xff]
    %v3522 = vld [vmem:[%s13] sm:$0x1]
    %v3524 = vlaneseq
    %v3525 = vshrl.u32 %v3524, 7
    %v3526 = vsub.s32 0, %v3525
    %v3527 = vrot.slane %v3522, %v3526
    %vm3529 = vcmask 523264
    %v3531 = vsel %vm3529, %v3512, 0
    %v3534 = vsel %vm3529, %v3513, 0
    %3536 = vmatprep.subr.mxu0 0.0
    %3537 = vmatpush1.msra.mxu0 0.0
    %3538 = vmatprep.subr.mxu0 0.0
    %3539 = vmatpush1.msra.mxu0 0.0
    %3540 = vmatprep.subr.mxu0 0.0
    %3541 = vmatpush1.msra.mxu0 0.0
    %3542 = vmatprep.subr.mxu0 0.0
    %3543 = vmatpush1.msra.mxu0 0.0
    %3544 = vmatprep.subr.mxu0 0.0
    %3545 = vmatpush1.msra.mxu0 0.0
    %3546 = vmatprep.subr.mxu0 0.0
    %3547 = vmatpush1.msra.mxu0 0.0
    %3548 = vmatprep.subr.mxu0 0.0
    %3549 = vmatpush1.msra.mxu0 0.0
    %3550 = vmatprep.subr.mxu0 0.0
    %3551 = vmatpush1.msra.mxu0 0.0
    %3552 = vmatprep.subr.mxu0 0.0
    %3553 = vmatpush1.msra.mxu0 %v3521
    %3554 = vmatprep.subr.mxu0 0.0
    %3555 = vmatpush1.msra.mxu0 %v3520
    %3556 = vmatprep.subr.mxu0 0.0
    %3557 = vmatpush1.msra.mxu0 %v3519
    %3558 = vmatprep.subr.mxu0 0.0
    %3559 = vmatpush1.msra.mxu0 %v3518
    %3560 = vmatprep.subr.mxu0 0.0
    %3561 = vmatpush1.msra.mxu0 %v3517
    %3562 = vmatprep.subr.mxu0 0.0
    %3563 = vmatpush1.msra.mxu0 %v3516
    %3564 = vmatprep.subr.mxu0 0.0
    %3565 = vmatpush1.msra.mxu0 %v3515
    %3566 = vmatprep.subr.mxu0 0.0
    %3567 = vmatpush1.msra.mxu0 %v3514
    %3568 = vmatprep.subr.mxu0 0.0
    %3569 = vmatpush2.msra.mxu0 0.0
    %3570 = vmatprep.subr.mxu0 0.0
    %3571 = vmatpush2.msra.mxu0 0.0
    %3572 = vmatprep.subr.mxu0 0.0
    %3573 = vmatpush2.msra.mxu0 0.0
    %3574 = vmatprep.subr.mxu0 0.0
    %3575 = vmatpush2.msra.mxu0 0.0
    %3576 = vmatprep.subr.mxu0 0.0
    %3577 = vmatpush2.msra.mxu0 0.0
    %3578 = vmatprep.subr.mxu0 0.0
    %3579 = vmatpush2.msra.mxu0 0.0
    %3580 = vmatprep.subr.mxu0 0.0
    %3581 = vmatpush2.msra.mxu0 0.0
    %3582 = vmatprep.subr.mxu0 0.0
    %3583 = vmatpush2.msra.mxu0 0.0
    %3584 = vmatprep.subr.mxu0 0.0
    %3585 = vmatpush2.msra.mxu0 0.0
    %3586 = vmatprep.subr.mxu0 0.0
    %3587 = vmatpush2.msra.mxu0 0.0
    %3588 = vmatprep.subr.mxu0 0.0
    %3589 = vmatpush2.msra.mxu0 0.0
    %3590 = vmatprep.subr.mxu0 0.0
    %3591 = vmatpush2.msra.mxu0 0.0
    %3592 = vmatprep.subr.mxu0 0.0
    %3593 = vmatpush2.msra.mxu0 0.0
    %3594 = vmatprep.subr.mxu0 0.0
    %3595 = vmatpush2.msra.mxu0 0.0
    %3596 = vmatprep.subr.mxu0 0.0
    %3597 = vmatpush2.msra.mxu0 0.0
    %3598 = vmatprep.subr.mxu0 0.0
    %3599 = vmatpush2.msra.mxu0 0.0
    %3600 = vmatprep.mubr.f32.mxu0 0.0
    %3601 = vmatmul.mubr.f32.gmra.mxu0 %v3531
    %v3602 = vpop.f32.mrf.mxu0
    %v3603 = vadd.f32 %v3527, %v3602
    %v3604 = vpop.f32.mrf.mxu0
    %3605 = vmatprep.mubr.f32.mxu0 0.0
    %3606 = vmatmul.mubr.f32.gmra.mxu0 %v3534
    %v3607 = vpop.f32.mrf.mxu0
    %v3608 = vadd.f32 %v3527, %v3607
    %v3609 = vpop.f32.mrf.mxu0
    %3610 = vdwg.mxu0
    %v3611 = vadd.f32 %v3418, %v3603
    %v3612 = vadd.f32 %v3419, %v3608
    %v3613 = vsel %vm235, %v3611, 0.0
    %3614 = vadd.xlane.f32.xlu0 %v3613
    %v3615 = vpop.xlane.xlu0 %3614
    %v3616 = vsel %vm235, %v3612, 0.0
    %3617 = vadd.xlane.f32.xlu0 %v3616
    %v3618 = vpop.xlane.xlu0 %3617
    %v3619 = vmul.f32 %v3615, %v1831
    %v3620 = vmul.f32 %v3618, %v1831
    %v3621 = vmul.f32 %v3611, %v3611
    %v3622 = vmul.f32 %v3612, %v3612
    %v3623 = vsel %vm235, %v3621, 0.0
    %3624 = vadd.xlane.f32.xlu0 %v3623
    %v3625 = vpop.xlane.xlu0 %3624
    %v3626 = vsel %vm235, %v3622, 0.0
    %3627 = vadd.xlane.f32.xlu0 %v3626
    %v3628 = vpop.xlane.xlu0 %3627
    %v3629 = vmul.f32 %v3625, %v1831
    %v3630 = vmul.f32 %v3628, %v1831
    %v3631 = vmul.f32 %v3619, %v3619
    %v3632 = vmul.f32 %v3620, %v3620
    %v3633 = vsub.f32 %v3629, %v3631
    %v3634 = vsub.f32 %v3630, %v3632
    %v3635 = vsub.f32 %v3611, %v3619
    %v3636 = vsub.f32 %v3612, %v3620
    %v3637 = vadd.f32 %v3633, 1e-05
    %v3638 = vadd.f32 %v3634, 1e-05
    %v3639 = vrsqrt.pop %v3637
    %v3640 = vrsqrt.pop %v3638
    %v3641 = vmul.f32 %v3635, %v3639
    %v3642 = vmul.f32 %v3636, %v3640
    %v3643 = vlaneseq
    %v3644 = vshrl.u32 %v3643, 7
    %v3645 = vsub.s32 4, %v3644
    %v3646 = vrot.slane %v338, %v3645
    %v3647 = vmul.f32 %v3641, %v3646
    %v3648 = vmul.f32 %v3642, %v3646
    %v3649 = vlaneseq
    %v3650 = vshrl.u32 %v3649, 7
    %v3651 = vsub.s32 5, %v3650
    %v3652 = vrot.slane %v338, %v3651
    %v3653 = vadd.f32 %v3647, %v3652
    %v3654 = vadd.f32 %v3648, %v3652
    %s3655 = scalar_lea.vmem %s6, 32
    %v3656 = vld [vmem:[%s3655] sm:$0xff]
    %v3657 = vld [vmem:[%s3655 + $0x8] sm:$0xff]
    %v3658 = vld [vmem:[%s3655 + $0x10] sm:$0xff]
    %v3659 = vld [vmem:[%s3655 + $0x18] sm:$0xff]
    %s3660 = scalar_lea.vmem [#allocation5], 1
    %v3661 = vld [vmem:[%s3660] sm:$0x1]
    %s3662 = scalar_lea.vmem %s14, 8
    %v3663 = vld [vmem:[%s3662] sm:$0x3f]
    %s3664 = scalar_lea.vmem %s4, 32
    %v3665 = vld [vmem:[%s3664] sm:$0xff]
    %v3666 = vld [vmem:[%s3664 + $0x8] sm:$0xff]
    %v3667 = vld [vmem:[%s3664 + $0x10] sm:$0xff]
    %v3668 = vld [vmem:[%s3664 + $0x18] sm:$0xff]
    %s3669 = scalar_lea.vmem %s5, 1
    %v3670 = vld [vmem:[%s3669] sm:$0x1]
    %v3672 = vlaneseq
    %v3673 = vshrl.u32 %v3672, 7
    %v3674 = vsub.s32 0, %v3673
    %v3675 = vrot.slane %v3670, %v3674
    %v3678 = vsel %vm235, %v3653, 0
    %v3681 = vsel %vm235, %v3654, 0
    %3683 = vmatprep.subr.mxu0 0.0
    %3684 = vmatpush1.msra.mxu0 0.0
    %3685 = vmatprep.subr.mxu0 0.0
    %3686 = vmatpush1.msra.mxu0 0.0
    %3687 = vmatprep.subr.mxu0 0.0
    %3688 = vmatpush1.msra.mxu0 0.0
    %3689 = vmatprep.subr.mxu0 0.0
    %3690 = vmatpush1.msra.mxu0 0.0
    %3691 = vmatprep.subr.mxu0 0.0
    %3692 = vmatpush1.msra.mxu0 0.0
    %3693 = vmatprep.subr.mxu0 0.0
    %3694 = vmatpush1.msra.mxu0 0.0
    %3695 = vmatprep.subr.mxu0 0.0
    %3696 = vmatpush1.msra.mxu0 0.0
    %3697 = vmatprep.subr.mxu0 0.0
    %3698 = vmatpush1.msra.mxu0 0.0
    %3699 = vmatprep.subr.mxu0 0.0
    %3700 = vmatpush1.msra.mxu0 0.0
    %3701 = vmatprep.subr.mxu0 0.0
    %3702 = vmatpush1.msra.mxu0 0.0
    %3703 = vmatprep.subr.mxu0 0.0
    %3704 = vmatpush1.msra.mxu0 0.0
    %3705 = vmatprep.subr.mxu0 0.0
    %3706 = vmatpush1.msra.mxu0 0.0
    %3707 = vmatprep.subr.mxu0 0.0
    %3708 = vmatpush1.msra.mxu0 %v3668
    %3709 = vmatprep.subr.mxu0 0.0
    %3710 = vmatpush1.msra.mxu0 %v3667
    %3711 = vmatprep.subr.mxu0 0.0
    %3712 = vmatpush1.msra.mxu0 %v3666
    %3713 = vmatprep.subr.mxu0 0.0
    %3714 = vmatpush1.msra.mxu0 %v3665
    %3715 = vmatprep.subr.mxu0 0.0
    %3716 = vmatpush2.msra.mxu0 0.0
    %3717 = vmatprep.subr.mxu0 0.0
    %3718 = vmatpush2.msra.mxu0 0.0
    %3719 = vmatprep.subr.mxu0 0.0
    %3720 = vmatpush2.msra.mxu0 0.0
    %3721 = vmatprep.subr.mxu0 0.0
    %3722 = vmatpush2.msra.mxu0 0.0
    %3723 = vmatprep.subr.mxu0 0.0
    %3724 = vmatpush2.msra.mxu0 0.0
    %3725 = vmatprep.subr.mxu0 0.0
    %3726 = vmatpush2.msra.mxu0 0.0
    %3727 = vmatprep.subr.mxu0 0.0
    %3728 = vmatpush2.msra.mxu0 0.0
    %3729 = vmatprep.subr.mxu0 0.0
    %3730 = vmatpush2.msra.mxu0 0.0
    %3731 = vmatprep.subr.mxu0 0.0
    %3732 = vmatpush2.msra.mxu0 0.0
    %3733 = vmatprep.subr.mxu0 0.0
    %3734 = vmatpush2.msra.mxu0 0.0
    %3735 = vmatprep.subr.mxu0 0.0
    %3736 = vmatpush2.msra.mxu0 0.0
    %3737 = vmatprep.subr.mxu0 0.0
    %3738 = vmatpush2.msra.mxu0 0.0
    %3739 = vmatprep.subr.mxu0 0.0
    %3740 = vmatpush2.msra.mxu0 0.0
    %3741 = vmatprep.subr.mxu0 0.0
    %3742 = vmatpush2.msra.mxu0 0.0
    %3743 = vmatprep.subr.mxu0 0.0
    %3744 = vmatpush2.msra.mxu0 0.0
    %3745 = vmatprep.subr.mxu0 0.0
    %3746 = vmatpush2.msra.mxu0 0.0
    %3747 = vmatprep.mubr.f32.mxu0 0.0
    %3748 = vmatmul.mubr.f32.gmra.mxu0 %v3678
    %v3749 = vpop.f32.mrf.mxu0
    %v3750 = vadd.f32 %v3675, %v3749
    %v3751 = vpop.f32.mrf.mxu0
    %3752 = vmatprep.mubr.f32.mxu0 0.0
    %3753 = vmatmul.mubr.f32.gmra.mxu0 %v3681
    %v3754 = vpop.f32.mrf.mxu0
    %v3755 = vadd.f32 %v3675, %v3754
    %v3756 = vpop.f32.mrf.mxu0
    %3757 = vdwg.mxu0
    %v3758 = vmul.f32 %v3750, %v104
    %v3759 = vmul.f32 %v3755, %v104
    %3761 = vrot.lane.b32.xlu0 %v3750, 96
    %v3762 = vpop.permute.xlu0 %3761
    %v3764 = vsel %vm235, %v3758, 0
    %v3766 = vsel %vm235, %v3762, 0
    %3768 = vmatprep.subr.mxu0 0.0
    %3769 = vmatpush1.xpose.msra.mxu0 0.0
    %3770 = vmatprep.subr.mxu0 0.0
    %3771 = vmatpush1.xpose.msra.mxu0 0.0
    %3772 = vmatprep.subr.mxu0 0.0
    %3773 = vmatpush1.xpose.msra.mxu0 0.0
    %3774 = vmatprep.subr.mxu0 0.0
    %3775 = vmatpush1.xpose.msra.mxu0 0.0
    %3776 = vmatprep.subr.mxu0 0.0
    %3777 = vmatpush1.xpose.msra.mxu0 0.0
    %3778 = vmatprep.subr.mxu0 0.0
    %3779 = vmatpush1.xpose.msra.mxu0 0.0
    %3780 = vmatprep.subr.mxu0 0.0
    %3781 = vmatpush1.xpose.msra.mxu0 0.0
    %3782 = vmatprep.subr.mxu0 0.0
    %3783 = vmatpush1.xpose.msra.mxu0 0.0
    %3784 = vmatprep.subr.mxu0 0.0
    %3785 = vmatpush1.xpose.msra.mxu0 0.0
    %3786 = vmatprep.subr.mxu0 0.0
    %3787 = vmatpush1.xpose.msra.mxu0 0.0
    %3788 = vmatprep.subr.mxu0 0.0
    %3789 = vmatpush1.xpose.msra.mxu0 0.0
    %3790 = vmatprep.subr.mxu0 0.0
    %3791 = vmatpush1.xpose.msra.mxu0 0.0
    %3792 = vmatprep.subr.mxu0 0.0
    %3793 = vmatpush1.xpose.msra.mxu0 0.0
    %3794 = vmatprep.subr.mxu0 0.0
    %3795 = vmatpush1.xpose.msra.mxu0 0.0
    %3796 = vmatprep.subr.mxu0 0.0
    %3797 = vmatpush1.xpose.msra.mxu0 0.0
    %3798 = vmatprep.subr.mxu0 0.0
    %3799 = vmatpush1.xpose.msra.mxu0 %v3766
    %3800 = vmatprep.subr.mxu0 0.0
    %3801 = vmatpush2.xpose.msra.mxu0 0.0
    %3802 = vmatprep.subr.mxu0 0.0
    %3803 = vmatpush2.xpose.msra.mxu0 0.0
    %3804 = vmatprep.subr.mxu0 0.0
    %3805 = vmatpush2.xpose.msra.mxu0 0.0
    %3806 = vmatprep.subr.mxu0 0.0
    %3807 = vmatpush2.xpose.msra.mxu0 0.0
    %3808 = vmatprep.subr.mxu0 0.0
    %3809 = vmatpush2.xpose.msra.mxu0 0.0
    %3810 = vmatprep.subr.mxu0 0.0
    %3811 = vmatpush2.xpose.msra.mxu0 0.0
    %3812 = vmatprep.subr.mxu0 0.0
    %3813 = vmatpush2.xpose.msra.mxu0 0.0
    %3814 = vmatprep.subr.mxu0 0.0
    %3815 = vmatpush2.xpose.msra.mxu0 0.0
    %3816 = vmatprep.subr.mxu0 0.0
    %3817 = vmatpush2.xpose.msra.mxu0 0.0
    %3818 = vmatprep.subr.mxu0 0.0
    %3819 = vmatpush2.xpose.msra.mxu0 0.0
    %3820 = vmatprep.subr.mxu0 0.0
    %3821 = vmatpush2.xpose.msra.mxu0 0.0
    %3822 = vmatprep.subr.mxu0 0.0
    %3823 = vmatpush2.xpose.msra.mxu0 0.0
    %3824 = vmatprep.subr.mxu0 0.0
    %3825 = vmatpush2.xpose.msra.mxu0 0.0
    %3826 = vmatprep.subr.mxu0 0.0
    %3827 = vmatpush2.xpose.msra.mxu0 0.0
    %3828 = vmatprep.subr.mxu0 0.0
    %3829 = vmatpush2.xpose.msra.mxu0 0.0
    %3830 = vmatprep.subr.mxu0 0.0
    %3831 = vmatpush2.xpose.msra.mxu0 0.0
    %3832 = vmatprep.mubr.f32.mxu0 0.0
    %3833 = vmatmul.mubr.f32.gmra.mxu0 %v3764
    %v3834 = vpop.f32.mrf.mxu0
    %v3835 = vadd.f32 0.0, %v3834
    %v3836 = vpop.f32.mrf.mxu0
    %3837 = vdwg.mxu0
    %3839 = vrot.lane.b32.xlu0 %v3755, 96
    %v3840 = vpop.permute.xlu0 %3839
    %v3842 = vsel %vm235, %v3759, 0
    %v3844 = vsel %vm235, %v3840, 0
    %3846 = vmatprep.subr.mxu0 0.0
    %3847 = vmatpush1.xpose.msra.mxu0 0.0
    %3848 = vmatprep.subr.mxu0 0.0
    %3849 = vmatpush1.xpose.msra.mxu0 0.0
    %3850 = vmatprep.subr.mxu0 0.0
    %3851 = vmatpush1.xpose.msra.mxu0 0.0
    %3852 = vmatprep.subr.mxu0 0.0
    %3853 = vmatpush1.xpose.msra.mxu0 0.0
    %3854 = vmatprep.subr.mxu0 0.0
    %3855 = vmatpush1.xpose.msra.mxu0 0.0
    %3856 = vmatprep.subr.mxu0 0.0
    %3857 = vmatpush1.xpose.msra.mxu0 0.0
    %3858 = vmatprep.subr.mxu0 0.0
    %3859 = vmatpush1.xpose.msra.mxu0 0.0
    %3860 = vmatprep.subr.mxu0 0.0
    %3861 = vmatpush1.xpose.msra.mxu0 0.0
    %3862 = vmatprep.subr.mxu0 0.0
    %3863 = vmatpush1.xpose.msra.mxu0 0.0
    %3864 = vmatprep.subr.mxu0 0.0
    %3865 = vmatpush1.xpose.msra.mxu0 0.0
    %3866 = vmatprep.subr.mxu0 0.0
    %3867 = vmatpush1.xpose.msra.mxu0 0.0
    %3868 = vmatprep.subr.mxu0 0.0
    %3869 = vmatpush1.xpose.msra.mxu0 0.0
    %3870 = vmatprep.subr.mxu0 0.0
    %3871 = vmatpush1.xpose.msra.mxu0 0.0
    %3872 = vmatprep.subr.mxu0 0.0
    %3873 = vmatpush1.xpose.msra.mxu0 0.0
    %3874 = vmatprep.subr.mxu0 0.0
    %3875 = vmatpush1.xpose.msra.mxu0 0.0
    %3876 = vmatprep.subr.mxu0 0.0
    %3877 = vmatpush1.xpose.msra.mxu0 %v3844
    %3878 = vmatprep.subr.mxu0 0.0
    %3879 = vmatpush2.xpose.msra.mxu0 0.0
    %3880 = vmatprep.subr.mxu0 0.0
    %3881 = vmatpush2.xpose.msra.mxu0 0.0
    %3882 = vmatprep.subr.mxu0 0.0
    %3883 = vmatpush2.xpose.msra.mxu0 0.0
    %3884 = vmatprep.subr.mxu0 0.0
    %3885 = vmatpush2.xpose.msra.mxu0 0.0
    %3886 = vmatprep.subr.mxu0 0.0
    %3887 = vmatpush2.xpose.msra.mxu0 0.0
    %3888 = vmatprep.subr.mxu0 0.0
    %3889 = vmatpush2.xpose.msra.mxu0 0.0
    %3890 = vmatprep.subr.mxu0 0.0
    %3891 = vmatpush2.xpose.msra.mxu0 0.0
    %3892 = vmatprep.subr.mxu0 0.0
    %3893 = vmatpush2.xpose.msra.mxu0 0.0
    %3894 = vmatprep.subr.mxu0 0.0
    %3895 = vmatpush2.xpose.msra.mxu0 0.0
    %3896 = vmatprep.subr.mxu0 0.0
    %3897 = vmatpush2.xpose.msra.mxu0 0.0
    %3898 = vmatprep.subr.mxu0 0.0
    %3899 = vmatpush2.xpose.msra.mxu0 0.0
    %3900 = vmatprep.subr.mxu0 0.0
    %3901 = vmatpush2.xpose.msra.mxu0 0.0
    %3902 = vmatprep.subr.mxu0 0.0
    %3903 = vmatpush2.xpose.msra.mxu0 0.0
    %3904 = vmatprep.subr.mxu0 0.0
    %3905 = vmatpush2.xpose.msra.mxu0 0.0
    %3906 = vmatprep.subr.mxu0 0.0
    %3907 = vmatpush2.xpose.msra.mxu0 0.0
    %3908 = vmatprep.subr.mxu0 0.0
    %3909 = vmatpush2.xpose.msra.mxu0 0.0
    %3910 = vmatprep.mubr.f32.mxu0 0.0
    %3911 = vmatmul.mubr.f32.gmra.mxu0 %v3842
    %v3912 = vpop.f32.mrf.mxu0
    %v3913 = vadd.f32 0.0, %v3912
    %v3914 = vpop.f32.mrf.mxu0
    %3915 = vdwg.mxu0
    %v3916 = vmul.f32 %v3835, 0.35355338
    %v3917 = vmul.f32 %v3913, 0.35355338
    %v3918 = vsel %vm591, %v3916, -inf
    %3919 = vmax.xlane.f32.xlu0 %v3918
    %v3920 = vpop.xlane.xlu0 %3919
    %v3921 = vsel %vm591, %v3917, -inf
    %3922 = vmax.xlane.f32.xlu0 %v3921
    %v3923 = vpop.xlane.xlu0 %3922
    %v3924 = vsub.f32 %v3916, %v3920
    %v3925 = vsub.f32 %v3917, %v3923
    %v3926 = vmul.f32 %v3924, 1.442695
    %v3927 = vpow.pop %v3926
    %v3928 = vmul.f32 %v3925, 1.442695
    %v3929 = vpow.pop %v3928
    %v3930 = vsel %vm591, %v3927, 0.0
    %3931 = vadd.xlane.f32.xlu0 %v3930
    %v3932 = vpop.xlane.xlu0 %3931
    %v3933 = vsel %vm591, %v3929, 0.0
    %3934 = vadd.xlane.f32.xlu0 %v3933
    %v3935 = vpop.xlane.xlu0 %3934
    %v3936 = vrcp.pop %v3932
    %v3937 = vrcp.pop %v3935
    %v3938 = vmul.f32 %v3927, %v3936
    %v3939 = vmul.f32 %v3929, %v3937
    %3940 = vrot.lane.b32.xlu0 %v3750, 64
    %v3941 = vpop.permute.xlu0 %3940
    %v3944 = vsel %vm591, %v3938, 0
    %3946 = vmatprep.subr.mxu0 0.0
    %3947 = vmatpush1.msra.mxu0 0.0
    %3948 = vmatprep.subr.mxu0 0.0
    %3949 = vmatpush1.msra.mxu0 0.0
    %3950 = vmatprep.subr.mxu0 0.0
    %3951 = vmatpush1.msra.mxu0 0.0
    %3952 = vmatprep.subr.mxu0 0.0
    %3953 = vmatpush1.msra.mxu0 0.0
    %3954 = vmatprep.subr.mxu0 0.0
    %3955 = vmatpush1.msra.mxu0 0.0
    %3956 = vmatprep.subr.mxu0 0.0
    %3957 = vmatpush1.msra.mxu0 0.0
    %3958 = vmatprep.subr.mxu0 0.0
    %3959 = vmatpush1.msra.mxu0 0.0
    %3960 = vmatprep.subr.mxu0 0.0
    %3961 = vmatpush1.msra.mxu0 0.0
    %3962 = vmatprep.subr.mxu0 0.0
    %3963 = vmatpush1.msra.mxu0 0.0
    %3964 = vmatprep.subr.mxu0 0.0
    %3965 = vmatpush1.msra.mxu0 0.0
    %3966 = vmatprep.subr.mxu0 0.0
    %3967 = vmatpush1.msra.mxu0 0.0
    %3968 = vmatprep.subr.mxu0 0.0
    %3969 = vmatpush1.msra.mxu0 0.0
    %3970 = vmatprep.subr.mxu0 0.0
    %3971 = vmatpush1.msra.mxu0 0.0
    %3972 = vmatprep.subr.mxu0 0.0
    %3973 = vmatpush1.msra.mxu0 0.0
    %3974 = vmatprep.subr.mxu0 0.0
    %3975 = vmatpush1.msra.mxu0 0.0
    %3976 = vmatprep.subr.mxu0 0.0
    %3977 = vmatpush1.msra.mxu0 %v3941
    %3978 = vmatprep.subr.mxu0 0.0
    %3979 = vmatpush2.msra.mxu0 0.0
    %3980 = vmatprep.subr.mxu0 0.0
    %3981 = vmatpush2.msra.mxu0 0.0
    %3982 = vmatprep.subr.mxu0 0.0
    %3983 = vmatpush2.msra.mxu0 0.0
    %3984 = vmatprep.subr.mxu0 0.0
    %3985 = vmatpush2.msra.mxu0 0.0
    %3986 = vmatprep.subr.mxu0 0.0
    %3987 = vmatpush2.msra.mxu0 0.0
    %3988 = vmatprep.subr.mxu0 0.0
    %3989 = vmatpush2.msra.mxu0 0.0
    %3990 = vmatprep.subr.mxu0 0.0
    %3991 = vmatpush2.msra.mxu0 0.0
    %3992 = vmatprep.subr.mxu0 0.0
    %3993 = vmatpush2.msra.mxu0 0.0
    %3994 = vmatprep.subr.mxu0 0.0
    %3995 = vmatpush2.msra.mxu0 0.0
    %3996 = vmatprep.subr.mxu0 0.0
    %3997 = vmatpush2.msra.mxu0 0.0
    %3998 = vmatprep.subr.mxu0 0.0
    %3999 = vmatpush2.msra.mxu0 0.0
    %4000 = vmatprep.subr.mxu0 0.0
    %4001 = vmatpush2.msra.mxu0 0.0
    %4002 = vmatprep.subr.mxu0 0.0
    %4003 = vmatpush2.msra.mxu0 0.0
    %4004 = vmatprep.subr.mxu0 0.0
    %4005 = vmatpush2.msra.mxu0 0.0
    %4006 = vmatprep.subr.mxu0 0.0
    %4007 = vmatpush2.msra.mxu0 0.0
    %4008 = vmatprep.subr.mxu0 0.0
    %4009 = vmatpush2.msra.mxu0 0.0
    %4010 = vmatprep.mubr.f32.mxu0 0.0
    %4011 = vmatmul.mubr.f32.gmra.mxu0 %v3944
    %v4012 = vpop.f32.mrf.mxu0
    %v4013 = vadd.f32 0.0, %v4012
    %v4014 = vpop.f32.mrf.mxu0
    %4015 = vdwg.mxu0
    %4016 = vrot.lane.b32.xlu0 %v3755, 64
    %v4017 = vpop.permute.xlu0 %4016
    %v4020 = vsel %vm591, %v3939, 0
    %4022 = vmatprep.subr.mxu0 0.0
    %4023 = vmatpush1.msra.mxu0 0.0
    %4024 = vmatprep.subr.mxu0 0.0
    %4025 = vmatpush1.msra.mxu0 0.0
    %4026 = vmatprep.subr.mxu0 0.0
    %4027 = vmatpush1.msra.mxu0 0.0
    %4028 = vmatprep.subr.mxu0 0.0
    %4029 = vmatpush1.msra.mxu0 0.0
    %4030 = vmatprep.subr.mxu0 0.0
    %4031 = vmatpush1.msra.mxu0 0.0
    %4032 = vmatprep.subr.mxu0 0.0
    %4033 = vmatpush1.msra.mxu0 0.0
    %4034 = vmatprep.subr.mxu0 0.0
    %4035 = vmatpush1.msra.mxu0 0.0
    %4036 = vmatprep.subr.mxu0 0.0
    %4037 = vmatpush1.msra.mxu0 0.0
    %4038 = vmatprep.subr.mxu0 0.0
    %4039 = vmatpush1.msra.mxu0 0.0
    %4040 = vmatprep.subr.mxu0 0.0
    %4041 = vmatpush1.msra.mxu0 0.0
    %4042 = vmatprep.subr.mxu0 0.0
    %4043 = vmatpush1.msra.mxu0 0.0
    %4044 = vmatprep.subr.mxu0 0.0
    %4045 = vmatpush1.msra.mxu0 0.0
    %4046 = vmatprep.subr.mxu0 0.0
    %4047 = vmatpush1.msra.mxu0 0.0
    %4048 = vmatprep.subr.mxu0 0.0
    %4049 = vmatpush1.msra.mxu0 0.0
    %4050 = vmatprep.subr.mxu0 0.0
    %4051 = vmatpush1.msra.mxu0 0.0
    %4052 = vmatprep.subr.mxu0 0.0
    %4053 = vmatpush1.msra.mxu0 %v4017
    %4054 = vmatprep.subr.mxu0 0.0
    %4055 = vmatpush2.msra.mxu0 0.0
    %4056 = vmatprep.subr.mxu0 0.0
    %4057 = vmatpush2.msra.mxu0 0.0
    %4058 = vmatprep.subr.mxu0 0.0
    %4059 = vmatpush2.msra.mxu0 0.0
    %4060 = vmatprep.subr.mxu0 0.0
    %4061 = vmatpush2.msra.mxu0 0.0
    %4062 = vmatprep.subr.mxu0 0.0
    %4063 = vmatpush2.msra.mxu0 0.0
    %4064 = vmatprep.subr.mxu0 0.0
    %4065 = vmatpush2.msra.mxu0 0.0
    %4066 = vmatprep.subr.mxu0 0.0
    %4067 = vmatpush2.msra.mxu0 0.0
    %4068 = vmatprep.subr.mxu0 0.0
    %4069 = vmatpush2.msra.mxu0 0.0
    %4070 = vmatprep.subr.mxu0 0.0
    %4071 = vmatpush2.msra.mxu0 0.0
    %4072 = vmatprep.subr.mxu0 0.0
    %4073 = vmatpush2.msra.mxu0 0.0
    %4074 = vmatprep.subr.mxu0 0.0
    %4075 = vmatpush2.msra.mxu0 0.0
    %4076 = vmatprep.subr.mxu0 0.0
    %4077 = vmatpush2.msra.mxu0 0.0
    %4078 = vmatprep.subr.mxu0 0.0
    %4079 = vmatpush2.msra.mxu0 0.0
    %4080 = vmatprep.subr.mxu0 0.0
    %4081 = vmatpush2.msra.mxu0 0.0
    %4082 = vmatprep.subr.mxu0 0.0
    %4083 = vmatpush2.msra.mxu0 0.0
    %4084 = vmatprep.subr.mxu0 0.0
    %4085 = vmatpush2.msra.mxu0 0.0
    %4086 = vmatprep.mubr.f32.mxu0 0.0
    %4087 = vmatmul.mubr.f32.gmra.mxu0 %v4020
    %v4088 = vpop.f32.mrf.mxu0
    %v4089 = vadd.f32 0.0, %v4088
    %v4090 = vpop.f32.mrf.mxu0
    %4091 = vdwg.mxu0
    %v4092 = vmul.f32 %v4013, %v104
    %v4093 = vmul.f32 %v4089, %v104
    %v4094 = vadd.f32 %v4092, 0.0
    %v4095 = vadd.f32 %v4093, 0.0
    %v4096 = vmul.f32 %v3750, %v109
    %v4097 = vmul.f32 %v3755, %v109
    %v4099 = vsel %vm235, %v4096, 0
    %4101 = vmatprep.subr.mxu0 0.0
    %4102 = vmatpush1.xpose.msra.mxu0 0.0
    %4103 = vmatprep.subr.mxu0 0.0
    %4104 = vmatpush1.xpose.msra.mxu0 0.0
    %4105 = vmatprep.subr.mxu0 0.0
    %4106 = vmatpush1.xpose.msra.mxu0 0.0
    %4107 = vmatprep.subr.mxu0 0.0
    %4108 = vmatpush1.xpose.msra.mxu0 0.0
    %4109 = vmatprep.subr.mxu0 0.0
    %4110 = vmatpush1.xpose.msra.mxu0 0.0
    %4111 = vmatprep.subr.mxu0 0.0
    %4112 = vmatpush1.xpose.msra.mxu0 0.0
    %4113 = vmatprep.subr.mxu0 0.0
    %4114 = vmatpush1.xpose.msra.mxu0 0.0
    %4115 = vmatprep.subr.mxu0 0.0
    %4116 = vmatpush1.xpose.msra.mxu0 0.0
    %4117 = vmatprep.subr.mxu0 0.0
    %4118 = vmatpush1.xpose.msra.mxu0 0.0
    %4119 = vmatprep.subr.mxu0 0.0
    %4120 = vmatpush1.xpose.msra.mxu0 0.0
    %4121 = vmatprep.subr.mxu0 0.0
    %4122 = vmatpush1.xpose.msra.mxu0 0.0
    %4123 = vmatprep.subr.mxu0 0.0
    %4124 = vmatpush1.xpose.msra.mxu0 0.0
    %4125 = vmatprep.subr.mxu0 0.0
    %4126 = vmatpush1.xpose.msra.mxu0 0.0
    %4127 = vmatprep.subr.mxu0 0.0
    %4128 = vmatpush1.xpose.msra.mxu0 0.0
    %4129 = vmatprep.subr.mxu0 0.0
    %4130 = vmatpush1.xpose.msra.mxu0 0.0
    %4131 = vmatprep.subr.mxu0 0.0
    %4132 = vmatpush1.xpose.msra.mxu0 %v3766
    %4133 = vmatprep.subr.mxu0 0.0
    %4134 = vmatpush2.xpose.msra.mxu0 0.0
    %4135 = vmatprep.subr.mxu0 0.0
    %4136 = vmatpush2.xpose.msra.mxu0 0.0
    %4137 = vmatprep.subr.mxu0 0.0
    %4138 = vmatpush2.xpose.msra.mxu0 0.0
    %4139 = vmatprep.subr.mxu0 0.0
    %4140 = vmatpush2.xpose.msra.mxu0 0.0
    %4141 = vmatprep.subr.mxu0 0.0
    %4142 = vmatpush2.xpose.msra.mxu0 0.0
    %4143 = vmatprep.subr.mxu0 0.0
    %4144 = vmatpush2.xpose.msra.mxu0 0.0
    %4145 = vmatprep.subr.mxu0 0.0
    %4146 = vmatpush2.xpose.msra.mxu0 0.0
    %4147 = vmatprep.subr.mxu0 0.0
    %4148 = vmatpush2.xpose.msra.mxu0 0.0
    %4149 = vmatprep.subr.mxu0 0.0
    %4150 = vmatpush2.xpose.msra.mxu0 0.0
    %4151 = vmatprep.subr.mxu0 0.0
    %4152 = vmatpush2.xpose.msra.mxu0 0.0
    %4153 = vmatprep.subr.mxu0 0.0
    %4154 = vmatpush2.xpose.msra.mxu0 0.0
    %4155 = vmatprep.subr.mxu0 0.0
    %4156 = vmatpush2.xpose.msra.mxu0 0.0
    %4157 = vmatprep.subr.mxu0 0.0
    %4158 = vmatpush2.xpose.msra.mxu0 0.0
    %4159 = vmatprep.subr.mxu0 0.0
    %4160 = vmatpush2.xpose.msra.mxu0 0.0
    %4161 = vmatprep.subr.mxu0 0.0
    %4162 = vmatpush2.xpose.msra.mxu0 0.0
    %4163 = vmatprep.subr.mxu0 0.0
    %4164 = vmatpush2.xpose.msra.mxu0 0.0
    %4165 = vmatprep.mubr.f32.mxu0 0.0
    %4166 = vmatmul.mubr.f32.gmra.mxu0 %v4099
    %v4167 = vpop.f32.mrf.mxu0
    %v4168 = vadd.f32 0.0, %v4167
    %v4169 = vpop.f32.mrf.mxu0
    %4170 = vdwg.mxu0
    %v4172 = vsel %vm235, %v4097, 0
    %4174 = vmatprep.subr.mxu0 0.0
    %4175 = vmatpush1.xpose.msra.mxu0 0.0
    %4176 = vmatprep.subr.mxu0 0.0
    %4177 = vmatpush1.xpose.msra.mxu0 0.0
    %4178 = vmatprep.subr.mxu0 0.0
    %4179 = vmatpush1.xpose.msra.mxu0 0.0
    %4180 = vmatprep.subr.mxu0 0.0
    %4181 = vmatpush1.xpose.msra.mxu0 0.0
    %4182 = vmatprep.subr.mxu0 0.0
    %4183 = vmatpush1.xpose.msra.mxu0 0.0
    %4184 = vmatprep.subr.mxu0 0.0
    %4185 = vmatpush1.xpose.msra.mxu0 0.0
    %4186 = vmatprep.subr.mxu0 0.0
    %4187 = vmatpush1.xpose.msra.mxu0 0.0
    %4188 = vmatprep.subr.mxu0 0.0
    %4189 = vmatpush1.xpose.msra.mxu0 0.0
    %4190 = vmatprep.subr.mxu0 0.0
    %4191 = vmatpush1.xpose.msra.mxu0 0.0
    %4192 = vmatprep.subr.mxu0 0.0
    %4193 = vmatpush1.xpose.msra.mxu0 0.0
    %4194 = vmatprep.subr.mxu0 0.0
    %4195 = vmatpush1.xpose.msra.mxu0 0.0
    %4196 = vmatprep.subr.mxu0 0.0
    %4197 = vmatpush1.xpose.msra.mxu0 0.0
    %4198 = vmatprep.subr.mxu0 0.0
    %4199 = vmatpush1.xpose.msra.mxu0 0.0
    %4200 = vmatprep.subr.mxu0 0.0
    %4201 = vmatpush1.xpose.msra.mxu0 0.0
    %4202 = vmatprep.subr.mxu0 0.0
    %4203 = vmatpush1.xpose.msra.mxu0 0.0
    %4204 = vmatprep.subr.mxu0 0.0
    %4205 = vmatpush1.xpose.msra.mxu0 %v3844
    %4206 = vmatprep.subr.mxu0 0.0
    %4207 = vmatpush2.xpose.msra.mxu0 0.0
    %4208 = vmatprep.subr.mxu0 0.0
    %4209 = vmatpush2.xpose.msra.mxu0 0.0
    %4210 = vmatprep.subr.mxu0 0.0
    %4211 = vmatpush2.xpose.msra.mxu0 0.0
    %4212 = vmatprep.subr.mxu0 0.0
    %4213 = vmatpush2.xpose.msra.mxu0 0.0
    %4214 = vmatprep.subr.mxu0 0.0
    %4215 = vmatpush2.xpose.msra.mxu0 0.0
    %4216 = vmatprep.subr.mxu0 0.0
    %4217 = vmatpush2.xpose.msra.mxu0 0.0
    %4218 = vmatprep.subr.mxu0 0.0
    %4219 = vmatpush2.xpose.msra.mxu0 0.0
    %4220 = vmatprep.subr.mxu0 0.0
    %4221 = vmatpush2.xpose.msra.mxu0 0.0
    %4222 = vmatprep.subr.mxu0 0.0
    %4223 = vmatpush2.xpose.msra.mxu0 0.0
    %4224 = vmatprep.subr.mxu0 0.0
    %4225 = vmatpush2.xpose.msra.mxu0 0.0
    %4226 = vmatprep.subr.mxu0 0.0
    %4227 = vmatpush2.xpose.msra.mxu0 0.0
    %4228 = vmatprep.subr.mxu0 0.0
    %4229 = vmatpush2.xpose.msra.mxu0 0.0
    %4230 = vmatprep.subr.mxu0 0.0
    %4231 = vmatpush2.xpose.msra.mxu0 0.0
    %4232 = vmatprep.subr.mxu0 0.0
    %4233 = vmatpush2.xpose.msra.mxu0 0.0
    %4234 = vmatprep.subr.mxu0 0.0
    %4235 = vmatpush2.xpose.msra.mxu0 0.0
    %4236 = vmatprep.subr.mxu0 0.0
    %4237 = vmatpush2.xpose.msra.mxu0 0.0
    %4238 = vmatprep.mubr.f32.mxu0 0.0
    %4239 = vmatmul.mubr.f32.gmra.mxu0 %v4172
    %v4240 = vpop.f32.mrf.mxu0
    %v4241 = vadd.f32 0.0, %v4240
    %v4242 = vpop.f32.mrf.mxu0
    %4243 = vdwg.mxu0
    %v4244 = vmul.f32 %v4168, 0.35355338
    %v4245 = vmul.f32 %v4241, 0.35355338
    %v4246 = vsel %vm591, %v4244, -inf
    %4247 = vmax.xlane.f32.xlu0 %v4246
    %v4248 = vpop.xlane.xlu0 %4247
    %v4249 = vsel %vm591, %v4245, -inf
    %4250 = vmax.xlane.f32.xlu0 %v4249
    %v4251 = vpop.xlane.xlu0 %4250
    %v4252 = vsub.f32 %v4244, %v4248
    %v4253 = vsub.f32 %v4245, %v4251
    %v4254 = vmul.f32 %v4252, 1.442695
    %v4255 = vpow.pop %v4254
    %v4256 = vmul.f32 %v4253, 1.442695
    %v4257 = vpow.pop %v4256
    %v4258 = vsel %vm591, %v4255, 0.0
    %4259 = vadd.xlane.f32.xlu0 %v4258
    %v4260 = vpop.xlane.xlu0 %4259
    %v4261 = vsel %vm591, %v4257, 0.0
    %4262 = vadd.xlane.f32.xlu0 %v4261
    %v4263 = vpop.xlane.xlu0 %4262
    %v4264 = vrcp.pop %v4260
    %v4265 = vrcp.pop %v4263
    %v4266 = vmul.f32 %v4255, %v4264
    %v4267 = vmul.f32 %v4257, %v4265
    %v4269 = vsel %vm591, %v4266, 0
    %4271 = vmatprep.subr.mxu0 0.0
    %4272 = vmatpush1.msra.mxu0 0.0
    %4273 = vmatprep.subr.mxu0 0.0
    %4274 = vmatpush1.msra.mxu0 0.0
    %4275 = vmatprep.subr.mxu0 0.0
    %4276 = vmatpush1.msra.mxu0 0.0
    %4277 = vmatprep.subr.mxu0 0.0
    %4278 = vmatpush1.msra.mxu0 0.0
    %4279 = vmatprep.subr.mxu0 0.0
    %4280 = vmatpush1.msra.mxu0 0.0
    %4281 = vmatprep.subr.mxu0 0.0
    %4282 = vmatpush1.msra.mxu0 0.0
    %4283 = vmatprep.subr.mxu0 0.0
    %4284 = vmatpush1.msra.mxu0 0.0
    %4285 = vmatprep.subr.mxu0 0.0
    %4286 = vmatpush1.msra.mxu0 0.0
    %4287 = vmatprep.subr.mxu0 0.0
    %4288 = vmatpush1.msra.mxu0 0.0
    %4289 = vmatprep.subr.mxu0 0.0
    %4290 = vmatpush1.msra.mxu0 0.0
    %4291 = vmatprep.subr.mxu0 0.0
    %4292 = vmatpush1.msra.mxu0 0.0
    %4293 = vmatprep.subr.mxu0 0.0
    %4294 = vmatpush1.msra.mxu0 0.0
    %4295 = vmatprep.subr.mxu0 0.0
    %4296 = vmatpush1.msra.mxu0 0.0
    %4297 = vmatprep.subr.mxu0 0.0
    %4298 = vmatpush1.msra.mxu0 0.0
    %4299 = vmatprep.subr.mxu0 0.0
    %4300 = vmatpush1.msra.mxu0 0.0
    %4301 = vmatprep.subr.mxu0 0.0
    %4302 = vmatpush1.msra.mxu0 %v3941
    %4303 = vmatprep.subr.mxu0 0.0
    %4304 = vmatpush2.msra.mxu0 0.0
    %4305 = vmatprep.subr.mxu0 0.0
    %4306 = vmatpush2.msra.mxu0 0.0
    %4307 = vmatprep.subr.mxu0 0.0
    %4308 = vmatpush2.msra.mxu0 0.0
    %4309 = vmatprep.subr.mxu0 0.0
    %4310 = vmatpush2.msra.mxu0 0.0
    %4311 = vmatprep.subr.mxu0 0.0
    %4312 = vmatpush2.msra.mxu0 0.0
    %4313 = vmatprep.subr.mxu0 0.0
    %4314 = vmatpush2.msra.mxu0 0.0
    %4315 = vmatprep.subr.mxu0 0.0
    %4316 = vmatpush2.msra.mxu0 0.0
    %4317 = vmatprep.subr.mxu0 0.0
    %4318 = vmatpush2.msra.mxu0 0.0
    %4319 = vmatprep.subr.mxu0 0.0
    %4320 = vmatpush2.msra.mxu0 0.0
    %4321 = vmatprep.subr.mxu0 0.0
    %4322 = vmatpush2.msra.mxu0 0.0
    %4323 = vmatprep.subr.mxu0 0.0
    %4324 = vmatpush2.msra.mxu0 0.0
    %4325 = vmatprep.subr.mxu0 0.0
    %4326 = vmatpush2.msra.mxu0 0.0
    %4327 = vmatprep.subr.mxu0 0.0
    %4328 = vmatpush2.msra.mxu0 0.0
    %4329 = vmatprep.subr.mxu0 0.0
    %4330 = vmatpush2.msra.mxu0 0.0
    %4331 = vmatprep.subr.mxu0 0.0
    %4332 = vmatpush2.msra.mxu0 0.0
    %4333 = vmatprep.subr.mxu0 0.0
    %4334 = vmatpush2.msra.mxu0 0.0
    %4335 = vmatprep.mubr.f32.mxu0 0.0
    %4336 = vmatmul.mubr.f32.gmra.mxu0 %v4269
    %v4337 = vpop.f32.mrf.mxu0
    %v4338 = vadd.f32 0.0, %v4337
    %v4339 = vpop.f32.mrf.mxu0
    %4340 = vdwg.mxu0
    %v4342 = vsel %vm591, %v4267, 0
    %4344 = vmatprep.subr.mxu0 0.0
    %4345 = vmatpush1.msra.mxu0 0.0
    %4346 = vmatprep.subr.mxu0 0.0
    %4347 = vmatpush1.msra.mxu0 0.0
    %4348 = vmatprep.subr.mxu0 0.0
    %4349 = vmatpush1.msra.mxu0 0.0
    %4350 = vmatprep.subr.mxu0 0.0
    %4351 = vmatpush1.msra.mxu0 0.0
    %4352 = vmatprep.subr.mxu0 0.0
    %4353 = vmatpush1.msra.mxu0 0.0
    %4354 = vmatprep.subr.mxu0 0.0
    %4355 = vmatpush1.msra.mxu0 0.0
    %4356 = vmatprep.subr.mxu0 0.0
    %4357 = vmatpush1.msra.mxu0 0.0
    %4358 = vmatprep.subr.mxu0 0.0
    %4359 = vmatpush1.msra.mxu0 0.0
    %4360 = vmatprep.subr.mxu0 0.0
    %4361 = vmatpush1.msra.mxu0 0.0
    %4362 = vmatprep.subr.mxu0 0.0
    %4363 = vmatpush1.msra.mxu0 0.0
    %4364 = vmatprep.subr.mxu0 0.0
    %4365 = vmatpush1.msra.mxu0 0.0
    %4366 = vmatprep.subr.mxu0 0.0
    %4367 = vmatpush1.msra.mxu0 0.0
    %4368 = vmatprep.subr.mxu0 0.0
    %4369 = vmatpush1.msra.mxu0 0.0
    %4370 = vmatprep.subr.mxu0 0.0
    %4371 = vmatpush1.msra.mxu0 0.0
    %4372 = vmatprep.subr.mxu0 0.0
    %4373 = vmatpush1.msra.mxu0 0.0
    %4374 = vmatprep.subr.mxu0 0.0
    %4375 = vmatpush1.msra.mxu0 %v4017
    %4376 = vmatprep.subr.mxu0 0.0
    %4377 = vmatpush2.msra.mxu0 0.0
    %4378 = vmatprep.subr.mxu0 0.0
    %4379 = vmatpush2.msra.mxu0 0.0
    %4380 = vmatprep.subr.mxu0 0.0
    %4381 = vmatpush2.msra.mxu0 0.0
    %4382 = vmatprep.subr.mxu0 0.0
    %4383 = vmatpush2.msra.mxu0 0.0
    %4384 = vmatprep.subr.mxu0 0.0
    %4385 = vmatpush2.msra.mxu0 0.0
    %4386 = vmatprep.subr.mxu0 0.0
    %4387 = vmatpush2.msra.mxu0 0.0
    %4388 = vmatprep.subr.mxu0 0.0
    %4389 = vmatpush2.msra.mxu0 0.0
    %4390 = vmatprep.subr.mxu0 0.0
    %4391 = vmatpush2.msra.mxu0 0.0
    %4392 = vmatprep.subr.mxu0 0.0
    %4393 = vmatpush2.msra.mxu0 0.0
    %4394 = vmatprep.subr.mxu0 0.0
    %4395 = vmatpush2.msra.mxu0 0.0
    %4396 = vmatprep.subr.mxu0 0.0
    %4397 = vmatpush2.msra.mxu0 0.0
    %4398 = vmatprep.subr.mxu0 0.0
    %4399 = vmatpush2.msra.mxu0 0.0
    %4400 = vmatprep.subr.mxu0 0.0
    %4401 = vmatpush2.msra.mxu0 0.0
    %4402 = vmatprep.subr.mxu0 0.0
    %4403 = vmatpush2.msra.mxu0 0.0
    %4404 = vmatprep.subr.mxu0 0.0
    %4405 = vmatpush2.msra.mxu0 0.0
    %4406 = vmatprep.subr.mxu0 0.0
    %4407 = vmatpush2.msra.mxu0 0.0
    %4408 = vmatprep.mubr.f32.mxu0 0.0
    %4409 = vmatmul.mubr.f32.gmra.mxu0 %v4342
    %v4410 = vpop.f32.mrf.mxu0
    %v4411 = vadd.f32 0.0, %v4410
    %v4412 = vpop.f32.mrf.mxu0
    %4413 = vdwg.mxu0
    %v4414 = vmul.f32 %v4338, %v109
    %v4415 = vmul.f32 %v4411, %v109
    %v4416 = vadd.f32 %v4094, %v4414
    %v4417 = vadd.f32 %v4095, %v4415
    %v4418 = vmul.f32 %v3750, %v114
    %v4419 = vmul.f32 %v3755, %v114
    %v4421 = vsel %vm235, %v4418, 0
    %4423 = vmatprep.subr.mxu0 0.0
    %4424 = vmatpush1.xpose.msra.mxu0 0.0
    %4425 = vmatprep.subr.mxu0 0.0
    %4426 = vmatpush1.xpose.msra.mxu0 0.0
    %4427 = vmatprep.subr.mxu0 0.0
    %4428 = vmatpush1.xpose.msra.mxu0 0.0
    %4429 = vmatprep.subr.mxu0 0.0
    %4430 = vmatpush1.xpose.msra.mxu0 0.0
    %4431 = vmatprep.subr.mxu0 0.0
    %4432 = vmatpush1.xpose.msra.mxu0 0.0
    %4433 = vmatprep.subr.mxu0 0.0
    %4434 = vmatpush1.xpose.msra.mxu0 0.0
    %4435 = vmatprep.subr.mxu0 0.0
    %4436 = vmatpush1.xpose.msra.mxu0 0.0
    %4437 = vmatprep.subr.mxu0 0.0
    %4438 = vmatpush1.xpose.msra.mxu0 0.0
    %4439 = vmatprep.subr.mxu0 0.0
    %4440 = vmatpush1.xpose.msra.mxu0 0.0
    %4441 = vmatprep.subr.mxu0 0.0
    %4442 = vmatpush1.xpose.msra.mxu0 0.0
    %4443 = vmatprep.subr.mxu0 0.0
    %4444 = vmatpush1.xpose.msra.mxu0 0.0
    %4445 = vmatprep.subr.mxu0 0.0
    %4446 = vmatpush1.xpose.msra.mxu0 0.0
    %4447 = vmatprep.subr.mxu0 0.0
    %4448 = vmatpush1.xpose.msra.mxu0 0.0
    %4449 = vmatprep.subr.mxu0 0.0
    %4450 = vmatpush1.xpose.msra.mxu0 0.0
    %4451 = vmatprep.subr.mxu0 0.0
    %4452 = vmatpush1.xpose.msra.mxu0 0.0
    %4453 = vmatprep.subr.mxu0 0.0
    %4454 = vmatpush1.xpose.msra.mxu0 %v3766
    %4455 = vmatprep.subr.mxu0 0.0
    %4456 = vmatpush2.xpose.msra.mxu0 0.0
    %4457 = vmatprep.subr.mxu0 0.0
    %4458 = vmatpush2.xpose.msra.mxu0 0.0
    %4459 = vmatprep.subr.mxu0 0.0
    %4460 = vmatpush2.xpose.msra.mxu0 0.0
    %4461 = vmatprep.subr.mxu0 0.0
    %4462 = vmatpush2.xpose.msra.mxu0 0.0
    %4463 = vmatprep.subr.mxu0 0.0
    %4464 = vmatpush2.xpose.msra.mxu0 0.0
    %4465 = vmatprep.subr.mxu0 0.0
    %4466 = vmatpush2.xpose.msra.mxu0 0.0
    %4467 = vmatprep.subr.mxu0 0.0
    %4468 = vmatpush2.xpose.msra.mxu0 0.0
    %4469 = vmatprep.subr.mxu0 0.0
    %4470 = vmatpush2.xpose.msra.mxu0 0.0
    %4471 = vmatprep.subr.mxu0 0.0
    %4472 = vmatpush2.xpose.msra.mxu0 0.0
    %4473 = vmatprep.subr.mxu0 0.0
    %4474 = vmatpush2.xpose.msra.mxu0 0.0
    %4475 = vmatprep.subr.mxu0 0.0
    %4476 = vmatpush2.xpose.msra.mxu0 0.0
    %4477 = vmatprep.subr.mxu0 0.0
    %4478 = vmatpush2.xpose.msra.mxu0 0.0
    %4479 = vmatprep.subr.mxu0 0.0
    %4480 = vmatpush2.xpose.msra.mxu0 0.0
    %4481 = vmatprep.subr.mxu0 0.0
    %4482 = vmatpush2.xpose.msra.mxu0 0.0
    %4483 = vmatprep.subr.mxu0 0.0
    %4484 = vmatpush2.xpose.msra.mxu0 0.0
    %4485 = vmatprep.subr.mxu0 0.0
    %4486 = vmatpush2.xpose.msra.mxu0 0.0
    %4487 = vmatprep.mubr.f32.mxu0 0.0
    %4488 = vmatmul.mubr.f32.gmra.mxu0 %v4421
    %v4489 = vpop.f32.mrf.mxu0
    %v4490 = vadd.f32 0.0, %v4489
    %v4491 = vpop.f32.mrf.mxu0
    %4492 = vdwg.mxu0
    %v4494 = vsel %vm235, %v4419, 0
    %4496 = vmatprep.subr.mxu0 0.0
    %4497 = vmatpush1.xpose.msra.mxu0 0.0
    %4498 = vmatprep.subr.mxu0 0.0
    %4499 = vmatpush1.xpose.msra.mxu0 0.0
    %4500 = vmatprep.subr.mxu0 0.0
    %4501 = vmatpush1.xpose.msra.mxu0 0.0
    %4502 = vmatprep.subr.mxu0 0.0
    %4503 = vmatpush1.xpose.msra.mxu0 0.0
    %4504 = vmatprep.subr.mxu0 0.0
    %4505 = vmatpush1.xpose.msra.mxu0 0.0
    %4506 = vmatprep.subr.mxu0 0.0
    %4507 = vmatpush1.xpose.msra.mxu0 0.0
    %4508 = vmatprep.subr.mxu0 0.0
    %4509 = vmatpush1.xpose.msra.mxu0 0.0
    %4510 = vmatprep.subr.mxu0 0.0
    %4511 = vmatpush1.xpose.msra.mxu0 0.0
    %4512 = vmatprep.subr.mxu0 0.0
    %4513 = vmatpush1.xpose.msra.mxu0 0.0
    %4514 = vmatprep.subr.mxu0 0.0
    %4515 = vmatpush1.xpose.msra.mxu0 0.0
    %4516 = vmatprep.subr.mxu0 0.0
    %4517 = vmatpush1.xpose.msra.mxu0 0.0
    %4518 = vmatprep.subr.mxu0 0.0
    %4519 = vmatpush1.xpose.msra.mxu0 0.0
    %4520 = vmatprep.subr.mxu0 0.0
    %4521 = vmatpush1.xpose.msra.mxu0 0.0
    %4522 = vmatprep.subr.mxu0 0.0
    %4523 = vmatpush1.xpose.msra.mxu0 0.0
    %4524 = vmatprep.subr.mxu0 0.0
    %4525 = vmatpush1.xpose.msra.mxu0 0.0
    %4526 = vmatprep.subr.mxu0 0.0
    %4527 = vmatpush1.xpose.msra.mxu0 %v3844
    %4528 = vmatprep.subr.mxu0 0.0
    %4529 = vmatpush2.xpose.msra.mxu0 0.0
    %4530 = vmatprep.subr.mxu0 0.0
    %4531 = vmatpush2.xpose.msra.mxu0 0.0
    %4532 = vmatprep.subr.mxu0 0.0
    %4533 = vmatpush2.xpose.msra.mxu0 0.0
    %4534 = vmatprep.subr.mxu0 0.0
    %4535 = vmatpush2.xpose.msra.mxu0 0.0
    %4536 = vmatprep.subr.mxu0 0.0
    %4537 = vmatpush2.xpose.msra.mxu0 0.0
    %4538 = vmatprep.subr.mxu0 0.0
    %4539 = vmatpush2.xpose.msra.mxu0 0.0
    %4540 = vmatprep.subr.mxu0 0.0
    %4541 = vmatpush2.xpose.msra.mxu0 0.0
    %4542 = vmatprep.subr.mxu0 0.0
    %4543 = vmatpush2.xpose.msra.mxu0 0.0
    %4544 = vmatprep.subr.mxu0 0.0
    %4545 = vmatpush2.xpose.msra.mxu0 0.0
    %4546 = vmatprep.subr.mxu0 0.0
    %4547 = vmatpush2.xpose.msra.mxu0 0.0
    %4548 = vmatprep.subr.mxu0 0.0
    %4549 = vmatpush2.xpose.msra.mxu0 0.0
    %4550 = vmatprep.subr.mxu0 0.0
    %4551 = vmatpush2.xpose.msra.mxu0 0.0
    %4552 = vmatprep.subr.mxu0 0.0
    %4553 = vmatpush2.xpose.msra.mxu0 0.0
    %4554 = vmatprep.subr.mxu0 0.0
    %4555 = vmatpush2.xpose.msra.mxu0 0.0
    %4556 = vmatprep.subr.mxu0 0.0
    %4557 = vmatpush2.xpose.msra.mxu0 0.0
    %4558 = vmatprep.subr.mxu0 0.0
    %4559 = vmatpush2.xpose.msra.mxu0 0.0
    %4560 = vmatprep.mubr.f32.mxu0 0.0
    %4561 = vmatmul.mubr.f32.gmra.mxu0 %v4494
    %v4562 = vpop.f32.mrf.mxu0
    %v4563 = vadd.f32 0.0, %v4562
    %v4564 = vpop.f32.mrf.mxu0
    %4565 = vdwg.mxu0
    %v4566 = vmul.f32 %v4490, 0.35355338
    %v4567 = vmul.f32 %v4563, 0.35355338
    %v4568 = vsel %vm591, %v4566, -inf
    %4569 = vmax.xlane.f32.xlu0 %v4568
    %v4570 = vpop.xlane.xlu0 %4569
    %v4571 = vsel %vm591, %v4567, -inf
    %4572 = vmax.xlane.f32.xlu0 %v4571
    %v4573 = vpop.xlane.xlu0 %4572
    %v4574 = vsub.f32 %v4566, %v4570
    %v4575 = vsub.f32 %v4567, %v4573
    %v4576 = vmul.f32 %v4574, 1.442695
    %v4577 = vpow.pop %v4576
    %v4578 = vmul.f32 %v4575, 1.442695
    %v4579 = vpow.pop %v4578
    %v4580 = vsel %vm591, %v4577, 0.0
    %4581 = vadd.xlane.f32.xlu0 %v4580
    %v4582 = vpop.xlane.xlu0 %4581
    %v4583 = vsel %vm591, %v4579, 0.0
    %4584 = vadd.xlane.f32.xlu0 %v4583
    %v4585 = vpop.xlane.xlu0 %4584
    %v4586 = vrcp.pop %v4582
    %v4587 = vrcp.pop %v4585
    %v4588 = vmul.f32 %v4577, %v4586
    %v4589 = vmul.f32 %v4579, %v4587
    %v4591 = vsel %vm591, %v4588, 0
    %4593 = vmatprep.subr.mxu0 0.0
    %4594 = vmatpush1.msra.mxu0 0.0
    %4595 = vmatprep.subr.mxu0 0.0
    %4596 = vmatpush1.msra.mxu0 0.0
    %4597 = vmatprep.subr.mxu0 0.0
    %4598 = vmatpush1.msra.mxu0 0.0
    %4599 = vmatprep.subr.mxu0 0.0
    %4600 = vmatpush1.msra.mxu0 0.0
    %4601 = vmatprep.subr.mxu0 0.0
    %4602 = vmatpush1.msra.mxu0 0.0
    %4603 = vmatprep.subr.mxu0 0.0
    %4604 = vmatpush1.msra.mxu0 0.0
    %4605 = vmatprep.subr.mxu0 0.0
    %4606 = vmatpush1.msra.mxu0 0.0
    %4607 = vmatprep.subr.mxu0 0.0
    %4608 = vmatpush1.msra.mxu0 0.0
    %4609 = vmatprep.subr.mxu0 0.0
    %4610 = vmatpush1.msra.mxu0 0.0
    %4611 = vmatprep.subr.mxu0 0.0
    %4612 = vmatpush1.msra.mxu0 0.0
    %4613 = vmatprep.subr.mxu0 0.0
    %4614 = vmatpush1.msra.mxu0 0.0
    %4615 = vmatprep.subr.mxu0 0.0
    %4616 = vmatpush1.msra.mxu0 0.0
    %4617 = vmatprep.subr.mxu0 0.0
    %4618 = vmatpush1.msra.mxu0 0.0
    %4619 = vmatprep.subr.mxu0 0.0
    %4620 = vmatpush1.msra.mxu0 0.0
    %4621 = vmatprep.subr.mxu0 0.0
    %4622 = vmatpush1.msra.mxu0 0.0
    %4623 = vmatprep.subr.mxu0 0.0
    %4624 = vmatpush1.msra.mxu0 %v3941
    %4625 = vmatprep.subr.mxu0 0.0
    %4626 = vmatpush2.msra.mxu0 0.0
    %4627 = vmatprep.subr.mxu0 0.0
    %4628 = vmatpush2.msra.mxu0 0.0
    %4629 = vmatprep.subr.mxu0 0.0
    %4630 = vmatpush2.msra.mxu0 0.0
    %4631 = vmatprep.subr.mxu0 0.0
    %4632 = vmatpush2.msra.mxu0 0.0
    %4633 = vmatprep.subr.mxu0 0.0
    %4634 = vmatpush2.msra.mxu0 0.0
    %4635 = vmatprep.subr.mxu0 0.0
    %4636 = vmatpush2.msra.mxu0 0.0
    %4637 = vmatprep.subr.mxu0 0.0
    %4638 = vmatpush2.msra.mxu0 0.0
    %4639 = vmatprep.subr.mxu0 0.0
    %4640 = vmatpush2.msra.mxu0 0.0
    %4641 = vmatprep.subr.mxu0 0.0
    %4642 = vmatpush2.msra.mxu0 0.0
    %4643 = vmatprep.subr.mxu0 0.0
    %4644 = vmatpush2.msra.mxu0 0.0
    %4645 = vmatprep.subr.mxu0 0.0
    %4646 = vmatpush2.msra.mxu0 0.0
    %4647 = vmatprep.subr.mxu0 0.0
    %4648 = vmatpush2.msra.mxu0 0.0
    %4649 = vmatprep.subr.mxu0 0.0
    %4650 = vmatpush2.msra.mxu0 0.0
    %4651 = vmatprep.subr.mxu0 0.0
    %4652 = vmatpush2.msra.mxu0 0.0
    %4653 = vmatprep.subr.mxu0 0.0
    %4654 = vmatpush2.msra.mxu0 0.0
    %4655 = vmatprep.subr.mxu0 0.0
    %4656 = vmatpush2.msra.mxu0 0.0
    %4657 = vmatprep.mubr.f32.mxu0 0.0
    %4658 = vmatmul.mubr.f32.gmra.mxu0 %v4591
    %v4659 = vpop.f32.mrf.mxu0
    %v4660 = vadd.f32 0.0, %v4659
    %v4661 = vpop.f32.mrf.mxu0
    %4662 = vdwg.mxu0
    %v4664 = vsel %vm591, %v4589, 0
    %4666 = vmatprep.subr.mxu0 0.0
    %4667 = vmatpush1.msra.mxu0 0.0
    %4668 = vmatprep.subr.mxu0 0.0
    %4669 = vmatpush1.msra.mxu0 0.0
    %4670 = vmatprep.subr.mxu0 0.0
    %4671 = vmatpush1.msra.mxu0 0.0
    %4672 = vmatprep.subr.mxu0 0.0
    %4673 = vmatpush1.msra.mxu0 0.0
    %4674 = vmatprep.subr.mxu0 0.0
    %4675 = vmatpush1.msra.mxu0 0.0
    %4676 = vmatprep.subr.mxu0 0.0
    %4677 = vmatpush1.msra.mxu0 0.0
    %4678 = vmatprep.subr.mxu0 0.0
    %4679 = vmatpush1.msra.mxu0 0.0
    %4680 = vmatprep.subr.mxu0 0.0
    %4681 = vmatpush1.msra.mxu0 0.0
    %4682 = vmatprep.subr.mxu0 0.0
    %4683 = vmatpush1.msra.mxu0 0.0
    %4684 = vmatprep.subr.mxu0 0.0
    %4685 = vmatpush1.msra.mxu0 0.0
    %4686 = vmatprep.subr.mxu0 0.0
    %4687 = vmatpush1.msra.mxu0 0.0
    %4688 = vmatprep.subr.mxu0 0.0
    %4689 = vmatpush1.msra.mxu0 0.0
    %4690 = vmatprep.subr.mxu0 0.0
    %4691 = vmatpush1.msra.mxu0 0.0
    %4692 = vmatprep.subr.mxu0 0.0
    %4693 = vmatpush1.msra.mxu0 0.0
    %4694 = vmatprep.subr.mxu0 0.0
    %4695 = vmatpush1.msra.mxu0 0.0
    %4696 = vmatprep.subr.mxu0 0.0
    %4697 = vmatpush1.msra.mxu0 %v4017
    %4698 = vmatprep.subr.mxu0 0.0
    %4699 = vmatpush2.msra.mxu0 0.0
    %4700 = vmatprep.subr.mxu0 0.0
    %4701 = vmatpush2.msra.mxu0 0.0
    %4702 = vmatprep.subr.mxu0 0.0
    %4703 = vmatpush2.msra.mxu0 0.0
    %4704 = vmatprep.subr.mxu0 0.0
    %4705 = vmatpush2.msra.mxu0 0.0
    %4706 = vmatprep.subr.mxu0 0.0
    %4707 = vmatpush2.msra.mxu0 0.0
    %4708 = vmatprep.subr.mxu0 0.0
    %4709 = vmatpush2.msra.mxu0 0.0
    %4710 = vmatprep.subr.mxu0 0.0
    %4711 = vmatpush2.msra.mxu0 0.0
    %4712 = vmatprep.subr.mxu0 0.0
    %4713 = vmatpush2.msra.mxu0 0.0
    %4714 = vmatprep.subr.mxu0 0.0
    %4715 = vmatpush2.msra.mxu0 0.0
    %4716 = vmatprep.subr.mxu0 0.0
    %4717 = vmatpush2.msra.mxu0 0.0
    %4718 = vmatprep.subr.mxu0 0.0
    %4719 = vmatpush2.msra.mxu0 0.0
    %4720 = vmatprep.subr.mxu0 0.0
    %4721 = vmatpush2.msra.mxu0 0.0
    %4722 = vmatprep.subr.mxu0 0.0
    %4723 = vmatpush2.msra.mxu0 0.0
    %4724 = vmatprep.subr.mxu0 0.0
    %4725 = vmatpush2.msra.mxu0 0.0
    %4726 = vmatprep.subr.mxu0 0.0
    %4727 = vmatpush2.msra.mxu0 0.0
    %4728 = vmatprep.subr.mxu0 0.0
    %4729 = vmatpush2.msra.mxu0 0.0
    %4730 = vmatprep.mubr.f32.mxu0 0.0
    %4731 = vmatmul.mubr.f32.gmra.mxu0 %v4664
    %v4732 = vpop.f32.mrf.mxu0
    %v4733 = vadd.f32 0.0, %v4732
    %v4734 = vpop.f32.mrf.mxu0
    %4735 = vdwg.mxu0
    %v4736 = vmul.f32 %v4660, %v114
    %v4737 = vmul.f32 %v4733, %v114
    %v4738 = vadd.f32 %v4416, %v4736
    %v4739 = vadd.f32 %v4417, %v4737
    %v4740 = vmul.f32 %v3750, %v119
    %v4741 = vmul.f32 %v3755, %v119
    %v4743 = vsel %vm235, %v4740, 0
    %4745 = vmatprep.subr.mxu0 0.0
    %4746 = vmatpush1.xpose.msra.mxu0 0.0
    %4747 = vmatprep.subr.mxu0 0.0
    %4748 = vmatpush1.xpose.msra.mxu0 0.0
    %4749 = vmatprep.subr.mxu0 0.0
    %4750 = vmatpush1.xpose.msra.mxu0 0.0
    %4751 = vmatprep.subr.mxu0 0.0
    %4752 = vmatpush1.xpose.msra.mxu0 0.0
    %4753 = vmatprep.subr.mxu0 0.0
    %4754 = vmatpush1.xpose.msra.mxu0 0.0
    %4755 = vmatprep.subr.mxu0 0.0
    %4756 = vmatpush1.xpose.msra.mxu0 0.0
    %4757 = vmatprep.subr.mxu0 0.0
    %4758 = vmatpush1.xpose.msra.mxu0 0.0
    %4759 = vmatprep.subr.mxu0 0.0
    %4760 = vmatpush1.xpose.msra.mxu0 0.0
    %4761 = vmatprep.subr.mxu0 0.0
    %4762 = vmatpush1.xpose.msra.mxu0 0.0
    %4763 = vmatprep.subr.mxu0 0.0
    %4764 = vmatpush1.xpose.msra.mxu0 0.0
    %4765 = vmatprep.subr.mxu0 0.0
    %4766 = vmatpush1.xpose.msra.mxu0 0.0
    %4767 = vmatprep.subr.mxu0 0.0
    %4768 = vmatpush1.xpose.msra.mxu0 0.0
    %4769 = vmatprep.subr.mxu0 0.0
    %4770 = vmatpush1.xpose.msra.mxu0 0.0
    %4771 = vmatprep.subr.mxu0 0.0
    %4772 = vmatpush1.xpose.msra.mxu0 0.0
    %4773 = vmatprep.subr.mxu0 0.0
    %4774 = vmatpush1.xpose.msra.mxu0 0.0
    %4775 = vmatprep.subr.mxu0 0.0
    %4776 = vmatpush1.xpose.msra.mxu0 %v3766
    %4777 = vmatprep.subr.mxu0 0.0
    %4778 = vmatpush2.xpose.msra.mxu0 0.0
    %4779 = vmatprep.subr.mxu0 0.0
    %4780 = vmatpush2.xpose.msra.mxu0 0.0
    %4781 = vmatprep.subr.mxu0 0.0
    %4782 = vmatpush2.xpose.msra.mxu0 0.0
    %4783 = vmatprep.subr.mxu0 0.0
    %4784 = vmatpush2.xpose.msra.mxu0 0.0
    %4785 = vmatprep.subr.mxu0 0.0
    %4786 = vmatpush2.xpose.msra.mxu0 0.0
    %4787 = vmatprep.subr.mxu0 0.0
    %4788 = vmatpush2.xpose.msra.mxu0 0.0
    %4789 = vmatprep.subr.mxu0 0.0
    %4790 = vmatpush2.xpose.msra.mxu0 0.0
    %4791 = vmatprep.subr.mxu0 0.0
    %4792 = vmatpush2.xpose.msra.mxu0 0.0
    %4793 = vmatprep.subr.mxu0 0.0
    %4794 = vmatpush2.xpose.msra.mxu0 0.0
    %4795 = vmatprep.subr.mxu0 0.0
    %4796 = vmatpush2.xpose.msra.mxu0 0.0
    %4797 = vmatprep.subr.mxu0 0.0
    %4798 = vmatpush2.xpose.msra.mxu0 0.0
    %4799 = vmatprep.subr.mxu0 0.0
    %4800 = vmatpush2.xpose.msra.mxu0 0.0
    %4801 = vmatprep.subr.mxu0 0.0
    %4802 = vmatpush2.xpose.msra.mxu0 0.0
    %4803 = vmatprep.subr.mxu0 0.0
    %4804 = vmatpush2.xpose.msra.mxu0 0.0
    %4805 = vmatprep.subr.mxu0 0.0
    %4806 = vmatpush2.xpose.msra.mxu0 0.0
    %4807 = vmatprep.subr.mxu0 0.0
    %4808 = vmatpush2.xpose.msra.mxu0 0.0
    %4809 = vmatprep.mubr.f32.mxu0 0.0
    %4810 = vmatmul.mubr.f32.gmra.mxu0 %v4743
    %v4811 = vpop.f32.mrf.mxu0
    %v4812 = vadd.f32 0.0, %v4811
    %v4813 = vpop.f32.mrf.mxu0
    %4814 = vdwg.mxu0
    %v4816 = vsel %vm235, %v4741, 0
    %4818 = vmatprep.subr.mxu0 0.0
    %4819 = vmatpush1.xpose.msra.mxu0 0.0
    %4820 = vmatprep.subr.mxu0 0.0
    %4821 = vmatpush1.xpose.msra.mxu0 0.0
    %4822 = vmatprep.subr.mxu0 0.0
    %4823 = vmatpush1.xpose.msra.mxu0 0.0
    %4824 = vmatprep.subr.mxu0 0.0
    %4825 = vmatpush1.xpose.msra.mxu0 0.0
    %4826 = vmatprep.subr.mxu0 0.0
    %4827 = vmatpush1.xpose.msra.mxu0 0.0
    %4828 = vmatprep.subr.mxu0 0.0
    %4829 = vmatpush1.xpose.msra.mxu0 0.0
    %4830 = vmatprep.subr.mxu0 0.0
    %4831 = vmatpush1.xpose.msra.mxu0 0.0
    %4832 = vmatprep.subr.mxu0 0.0
    %4833 = vmatpush1.xpose.msra.mxu0 0.0
    %4834 = vmatprep.subr.mxu0 0.0
    %4835 = vmatpush1.xpose.msra.mxu0 0.0
    %4836 = vmatprep.subr.mxu0 0.0
    %4837 = vmatpush1.xpose.msra.mxu0 0.0
    %4838 = vmatprep.subr.mxu0 0.0
    %4839 = vmatpush1.xpose.msra.mxu0 0.0
    %4840 = vmatprep.subr.mxu0 0.0
    %4841 = vmatpush1.xpose.msra.mxu0 0.0
    %4842 = vmatprep.subr.mxu0 0.0
    %4843 = vmatpush1.xpose.msra.mxu0 0.0
    %4844 = vmatprep.subr.mxu0 0.0
    %4845 = vmatpush1.xpose.msra.mxu0 0.0
    %4846 = vmatprep.subr.mxu0 0.0
    %4847 = vmatpush1.xpose.msra.mxu0 0.0
    %4848 = vmatprep.subr.mxu0 0.0
    %4849 = vmatpush1.xpose.msra.mxu0 %v3844
    %4850 = vmatprep.subr.mxu0 0.0
    %4851 = vmatpush2.xpose.msra.mxu0 0.0
    %4852 = vmatprep.subr.mxu0 0.0
    %4853 = vmatpush2.xpose.msra.mxu0 0.0
    %4854 = vmatprep.subr.mxu0 0.0
    %4855 = vmatpush2.xpose.msra.mxu0 0.0
    %4856 = vmatprep.subr.mxu0 0.0
    %4857 = vmatpush2.xpose.msra.mxu0 0.0
    %4858 = vmatprep.subr.mxu0 0.0
    %4859 = vmatpush2.xpose.msra.mxu0 0.0
    %4860 = vmatprep.subr.mxu0 0.0
    %4861 = vmatpush2.xpose.msra.mxu0 0.0
    %4862 = vmatprep.subr.mxu0 0.0
    %4863 = vmatpush2.xpose.msra.mxu0 0.0
    %4864 = vmatprep.subr.mxu0 0.0
    %4865 = vmatpush2.xpose.msra.mxu0 0.0
    %4866 = vmatprep.subr.mxu0 0.0
    %4867 = vmatpush2.xpose.msra.mxu0 0.0
    %4868 = vmatprep.subr.mxu0 0.0
    %4869 = vmatpush2.xpose.msra.mxu0 0.0
    %4870 = vmatprep.subr.mxu0 0.0
    %4871 = vmatpush2.xpose.msra.mxu0 0.0
    %4872 = vmatprep.subr.mxu0 0.0
    %4873 = vmatpush2.xpose.msra.mxu0 0.0
    %4874 = vmatprep.subr.mxu0 0.0
    %4875 = vmatpush2.xpose.msra.mxu0 0.0
    %4876 = vmatprep.subr.mxu0 0.0
    %4877 = vmatpush2.xpose.msra.mxu0 0.0
    %4878 = vmatprep.subr.mxu0 0.0
    %4879 = vmatpush2.xpose.msra.mxu0 0.0
    %4880 = vmatprep.subr.mxu0 0.0
    %4881 = vmatpush2.xpose.msra.mxu0 0.0
    %4882 = vmatprep.mubr.f32.mxu0 0.0
    %4883 = vmatmul.mubr.f32.gmra.mxu0 %v4816
    %v4884 = vpop.f32.mrf.mxu0
    %v4885 = vadd.f32 0.0, %v4884
    %v4886 = vpop.f32.mrf.mxu0
    %4887 = vdwg.mxu0
    %v4888 = vmul.f32 %v4812, 0.35355338
    %v4889 = vmul.f32 %v4885, 0.35355338
    %v4890 = vsel %vm591, %v4888, -inf
    %4891 = vmax.xlane.f32.xlu0 %v4890
    %v4892 = vpop.xlane.xlu0 %4891
    %v4893 = vsel %vm591, %v4889, -inf
    %4894 = vmax.xlane.f32.xlu0 %v4893
    %v4895 = vpop.xlane.xlu0 %4894
    %v4896 = vsub.f32 %v4888, %v4892
    %v4897 = vsub.f32 %v4889, %v4895
    %v4898 = vmul.f32 %v4896, 1.442695
    %v4899 = vpow.pop %v4898
    %v4900 = vmul.f32 %v4897, 1.442695
    %v4901 = vpow.pop %v4900
    %v4902 = vsel %vm591, %v4899, 0.0
    %4903 = vadd.xlane.f32.xlu0 %v4902
    %v4904 = vpop.xlane.xlu0 %4903
    %v4905 = vsel %vm591, %v4901, 0.0
    %4906 = vadd.xlane.f32.xlu0 %v4905
    %v4907 = vpop.xlane.xlu0 %4906
    %v4908 = vrcp.pop %v4904
    %v4909 = vrcp.pop %v4907
    %v4910 = vmul.f32 %v4899, %v4908
    %v4911 = vmul.f32 %v4901, %v4909
    %v4913 = vsel %vm591, %v4910, 0
    %4915 = vmatprep.subr.mxu0 0.0
    %4916 = vmatpush1.msra.mxu0 0.0
    %4917 = vmatprep.subr.mxu0 0.0
    %4918 = vmatpush1.msra.mxu0 0.0
    %4919 = vmatprep.subr.mxu0 0.0
    %4920 = vmatpush1.msra.mxu0 0.0
    %4921 = vmatprep.subr.mxu0 0.0
    %4922 = vmatpush1.msra.mxu0 0.0
    %4923 = vmatprep.subr.mxu0 0.0
    %4924 = vmatpush1.msra.mxu0 0.0
    %4925 = vmatprep.subr.mxu0 0.0
    %4926 = vmatpush1.msra.mxu0 0.0
    %4927 = vmatprep.subr.mxu0 0.0
    %4928 = vmatpush1.msra.mxu0 0.0
    %4929 = vmatprep.subr.mxu0 0.0
    %4930 = vmatpush1.msra.mxu0 0.0
    %4931 = vmatprep.subr.mxu0 0.0
    %4932 = vmatpush1.msra.mxu0 0.0
    %4933 = vmatprep.subr.mxu0 0.0
    %4934 = vmatpush1.msra.mxu0 0.0
    %4935 = vmatprep.subr.mxu0 0.0
    %4936 = vmatpush1.msra.mxu0 0.0
    %4937 = vmatprep.subr.mxu0 0.0
    %4938 = vmatpush1.msra.mxu0 0.0
    %4939 = vmatprep.subr.mxu0 0.0
    %4940 = vmatpush1.msra.mxu0 0.0
    %4941 = vmatprep.subr.mxu0 0.0
    %4942 = vmatpush1.msra.mxu0 0.0
    %4943 = vmatprep.subr.mxu0 0.0
    %4944 = vmatpush1.msra.mxu0 0.0
    %4945 = vmatprep.subr.mxu0 0.0
    %4946 = vmatpush1.msra.mxu0 %v3941
    %4947 = vmatprep.subr.mxu0 0.0
    %4948 = vmatpush2.msra.mxu0 0.0
    %4949 = vmatprep.subr.mxu0 0.0
    %4950 = vmatpush2.msra.mxu0 0.0
    %4951 = vmatprep.subr.mxu0 0.0
    %4952 = vmatpush2.msra.mxu0 0.0
    %4953 = vmatprep.subr.mxu0 0.0
    %4954 = vmatpush2.msra.mxu0 0.0
    %4955 = vmatprep.subr.mxu0 0.0
    %4956 = vmatpush2.msra.mxu0 0.0
    %4957 = vmatprep.subr.mxu0 0.0
    %4958 = vmatpush2.msra.mxu0 0.0
    %4959 = vmatprep.subr.mxu0 0.0
    %4960 = vmatpush2.msra.mxu0 0.0
    %4961 = vmatprep.subr.mxu0 0.0
    %4962 = vmatpush2.msra.mxu0 0.0
    %4963 = vmatprep.subr.mxu0 0.0
    %4964 = vmatpush2.msra.mxu0 0.0
    %4965 = vmatprep.subr.mxu0 0.0
    %4966 = vmatpush2.msra.mxu0 0.0
    %4967 = vmatprep.subr.mxu0 0.0
    %4968 = vmatpush2.msra.mxu0 0.0
    %4969 = vmatprep.subr.mxu0 0.0
    %4970 = vmatpush2.msra.mxu0 0.0
    %4971 = vmatprep.subr.mxu0 0.0
    %4972 = vmatpush2.msra.mxu0 0.0
    %4973 = vmatprep.subr.mxu0 0.0
    %4974 = vmatpush2.msra.mxu0 0.0
    %4975 = vmatprep.subr.mxu0 0.0
    %4976 = vmatpush2.msra.mxu0 0.0
    %4977 = vmatprep.subr.mxu0 0.0
    %4978 = vmatpush2.msra.mxu0 0.0
    %4979 = vmatprep.mubr.f32.mxu0 0.0
    %4980 = vmatmul.mubr.f32.gmra.mxu0 %v4913
    %v4981 = vpop.f32.mrf.mxu0
    %v4982 = vadd.f32 0.0, %v4981
    %v4983 = vpop.f32.mrf.mxu0
    %4984 = vdwg.mxu0
    %v4986 = vsel %vm591, %v4911, 0
    %4988 = vmatprep.subr.mxu0 0.0
    %4989 = vmatpush1.msra.mxu0 0.0
    %4990 = vmatprep.subr.mxu0 0.0
    %4991 = vmatpush1.msra.mxu0 0.0
    %4992 = vmatprep.subr.mxu0 0.0
    %4993 = vmatpush1.msra.mxu0 0.0
    %4994 = vmatprep.subr.mxu0 0.0
    %4995 = vmatpush1.msra.mxu0 0.0
    %4996 = vmatprep.subr.mxu0 0.0
    %4997 = vmatpush1.msra.mxu0 0.0
    %4998 = vmatprep.subr.mxu0 0.0
    %4999 = vmatpush1.msra.mxu0 0.0
    %5000 = vmatprep.subr.mxu0 0.0
    %5001 = vmatpush1.msra.mxu0 0.0
    %5002 = vmatprep.subr.mxu0 0.0
    %5003 = vmatpush1.msra.mxu0 0.0
    %5004 = vmatprep.subr.mxu0 0.0
    %5005 = vmatpush1.msra.mxu0 0.0
    %5006 = vmatprep.subr.mxu0 0.0
    %5007 = vmatpush1.msra.mxu0 0.0
    %5008 = vmatprep.subr.mxu0 0.0
    %5009 = vmatpush1.msra.mxu0 0.0
    %5010 = vmatprep.subr.mxu0 0.0
    %5011 = vmatpush1.msra.mxu0 0.0
    %5012 = vmatprep.subr.mxu0 0.0
    %5013 = vmatpush1.msra.mxu0 0.0
    %5014 = vmatprep.subr.mxu0 0.0
    %5015 = vmatpush1.msra.mxu0 0.0
    %5016 = vmatprep.subr.mxu0 0.0
    %5017 = vmatpush1.msra.mxu0 0.0
    %5018 = vmatprep.subr.mxu0 0.0
    %5019 = vmatpush1.msra.mxu0 %v4017
    %5020 = vmatprep.subr.mxu0 0.0
    %5021 = vmatpush2.msra.mxu0 0.0
    %5022 = vmatprep.subr.mxu0 0.0
    %5023 = vmatpush2.msra.mxu0 0.0
    %5024 = vmatprep.subr.mxu0 0.0
    %5025 = vmatpush2.msra.mxu0 0.0
    %5026 = vmatprep.subr.mxu0 0.0
    %5027 = vmatpush2.msra.mxu0 0.0
    %5028 = vmatprep.subr.mxu0 0.0
    %5029 = vmatpush2.msra.mxu0 0.0
    %5030 = vmatprep.subr.mxu0 0.0
    %5031 = vmatpush2.msra.mxu0 0.0
    %5032 = vmatprep.subr.mxu0 0.0
    %5033 = vmatpush2.msra.mxu0 0.0
    %5034 = vmatprep.subr.mxu0 0.0
    %5035 = vmatpush2.msra.mxu0 0.0
    %5036 = vmatprep.subr.mxu0 0.0
    %5037 = vmatpush2.msra.mxu0 0.0
    %5038 = vmatprep.subr.mxu0 0.0
    %5039 = vmatpush2.msra.mxu0 0.0
    %5040 = vmatprep.subr.mxu0 0.0
    %5041 = vmatpush2.msra.mxu0 0.0
    %5042 = vmatprep.subr.mxu0 0.0
    %5043 = vmatpush2.msra.mxu0 0.0
    %5044 = vmatprep.subr.mxu0 0.0
    %5045 = vmatpush2.msra.mxu0 0.0
    %5046 = vmatprep.subr.mxu0 0.0
    %5047 = vmatpush2.msra.mxu0 0.0
    %5048 = vmatprep.subr.mxu0 0.0
    %5049 = vmatpush2.msra.mxu0 0.0
    %5050 = vmatprep.subr.mxu0 0.0
    %5051 = vmatpush2.msra.mxu0 0.0
    %5052 = vmatprep.mubr.f32.mxu0 0.0
    %5053 = vmatmul.mubr.f32.gmra.mxu0 %v4986
    %v5054 = vpop.f32.mrf.mxu0
    %v5055 = vadd.f32 0.0, %v5054
    %v5056 = vpop.f32.mrf.mxu0
    %5057 = vdwg.mxu0
    %v5058 = vmul.f32 %v4982, %v119
    %v5059 = vmul.f32 %v5055, %v119
    %v5060 = vadd.f32 %v4738, %v5058
    %v5061 = vadd.f32 %v4739, %v5059
    %v5063 = vlaneseq
    %v5064 = vshrl.u32 %v5063, 7
    %v5065 = vsub.s32 0, %v5064
    %v5066 = vrot.slane %v3661, %v5065
    %v5069 = vsel %vm235, %v5060, 0
    %v5072 = vsel %vm235, %v5061, 0
    %5074 = vmatprep.subr.mxu0 0.0
    %5075 = vmatpush1.msra.mxu0 0.0
    %5076 = vmatprep.subr.mxu0 0.0
    %5077 = vmatpush1.msra.mxu0 0.0
    %5078 = vmatprep.subr.mxu0 0.0
    %5079 = vmatpush1.msra.mxu0 0.0
    %5080 = vmatprep.subr.mxu0 0.0
    %5081 = vmatpush1.msra.mxu0 0.0
    %5082 = vmatprep.subr.mxu0 0.0
    %5083 = vmatpush1.msra.mxu0 0.0
    %5084 = vmatprep.subr.mxu0 0.0
    %5085 = vmatpush1.msra.mxu0 0.0
    %5086 = vmatprep.subr.mxu0 0.0
    %5087 = vmatpush1.msra.mxu0 0.0
    %5088 = vmatprep.subr.mxu0 0.0
    %5089 = vmatpush1.msra.mxu0 0.0
    %5090 = vmatprep.subr.mxu0 0.0
    %5091 = vmatpush1.msra.mxu0 0.0
    %5092 = vmatprep.subr.mxu0 0.0
    %5093 = vmatpush1.msra.mxu0 0.0
    %5094 = vmatprep.subr.mxu0 0.0
    %5095 = vmatpush1.msra.mxu0 0.0
    %5096 = vmatprep.subr.mxu0 0.0
    %5097 = vmatpush1.msra.mxu0 0.0
    %5098 = vmatprep.subr.mxu0 0.0
    %5099 = vmatpush1.msra.mxu0 %v3659
    %5100 = vmatprep.subr.mxu0 0.0
    %5101 = vmatpush1.msra.mxu0 %v3658
    %5102 = vmatprep.subr.mxu0 0.0
    %5103 = vmatpush1.msra.mxu0 %v3657
    %5104 = vmatprep.subr.mxu0 0.0
    %5105 = vmatpush1.msra.mxu0 %v3656
    %5106 = vmatprep.subr.mxu0 0.0
    %5107 = vmatpush2.msra.mxu0 0.0
    %5108 = vmatprep.subr.mxu0 0.0
    %5109 = vmatpush2.msra.mxu0 0.0
    %5110 = vmatprep.subr.mxu0 0.0
    %5111 = vmatpush2.msra.mxu0 0.0
    %5112 = vmatprep.subr.mxu0 0.0
    %5113 = vmatpush2.msra.mxu0 0.0
    %5114 = vmatprep.subr.mxu0 0.0
    %5115 = vmatpush2.msra.mxu0 0.0
    %5116 = vmatprep.subr.mxu0 0.0
    %5117 = vmatpush2.msra.mxu0 0.0
    %5118 = vmatprep.subr.mxu0 0.0
    %5119 = vmatpush2.msra.mxu0 0.0
    %5120 = vmatprep.subr.mxu0 0.0
    %5121 = vmatpush2.msra.mxu0 0.0
    %5122 = vmatprep.subr.mxu0 0.0
    %5123 = vmatpush2.msra.mxu0 0.0
    %5124 = vmatprep.subr.mxu0 0.0
    %5125 = vmatpush2.msra.mxu0 0.0
    %5126 = vmatprep.subr.mxu0 0.0
    %5127 = vmatpush2.msra.mxu0 0.0
    %5128 = vmatprep.subr.mxu0 0.0
    %5129 = vmatpush2.msra.mxu0 0.0
    %5130 = vmatprep.subr.mxu0 0.0
    %5131 = vmatpush2.msra.mxu0 0.0
    %5132 = vmatprep.subr.mxu0 0.0
    %5133 = vmatpush2.msra.mxu0 0.0
    %5134 = vmatprep.subr.mxu0 0.0
    %5135 = vmatpush2.msra.mxu0 0.0
    %5136 = vmatprep.subr.mxu0 0.0
    %5137 = vmatpush2.msra.mxu0 0.0
    %5138 = vmatprep.mubr.f32.mxu0 0.0
    %5139 = vmatmul.mubr.f32.gmra.mxu0 %v5069
    %v5140 = vpop.f32.mrf.mxu0
    %v5141 = vadd.f32 %v5066, %v5140
    %v5142 = vpop.f32.mrf.mxu0
    %5143 = vmatprep.mubr.f32.mxu0 0.0
    %5144 = vmatmul.mubr.f32.gmra.mxu0 %v5072
    %v5145 = vpop.f32.mrf.mxu0
    %v5146 = vadd.f32 %v5066, %v5145
    %v5147 = vpop.f32.mrf.mxu0
    %5148 = vdwg.mxu0
    %v5149 = vadd.f32 %v3653, %v5141
    %v5150 = vadd.f32 %v3654, %v5146
    %v5151 = vsel %vm235, %v5149, 0.0
    %5152 = vadd.xlane.f32.xlu0 %v5151
    %v5153 = vpop.xlane.xlu0 %5152
    %v5154 = vsel %vm235, %v5150, 0.0
    %5155 = vadd.xlane.f32.xlu0 %v5154
    %v5156 = vpop.xlane.xlu0 %5155
    %v5157 = vmul.f32 %v5153, %v1831
    %v5158 = vmul.f32 %v5156, %v1831
    %v5159 = vmul.f32 %v5149, %v5149
    %v5160 = vmul.f32 %v5150, %v5150
    %v5161 = vsel %vm235, %v5159, 0.0
    %5162 = vadd.xlane.f32.xlu0 %v5161
    %v5163 = vpop.xlane.xlu0 %5162
    %v5164 = vsel %vm235, %v5160, 0.0
    %5165 = vadd.xlane.f32.xlu0 %v5164
    %v5166 = vpop.xlane.xlu0 %5165
    %v5167 = vmul.f32 %v5163, %v1831
    %v5168 = vmul.f32 %v5166, %v1831
    %v5169 = vmul.f32 %v5157, %v5157
    %v5170 = vmul.f32 %v5158, %v5158
    %v5171 = vsub.f32 %v5167, %v5169
    %v5172 = vsub.f32 %v5168, %v5170
    %v5173 = vsub.f32 %v5149, %v5157
    %v5174 = vsub.f32 %v5150, %v5158
    %v5175 = vadd.f32 %v5171, 1e-05
    %v5176 = vadd.f32 %v5172, 1e-05
    %v5177 = vrsqrt.pop %v5175
    %v5178 = vrsqrt.pop %v5176
    %v5179 = vmul.f32 %v5173, %v5177
    %v5180 = vmul.f32 %v5174, %v5178
    %v5181 = vlaneseq
    %v5182 = vshrl.u32 %v5181, 7
    %v5183 = vsub.s32 0, %v5182
    %v5184 = vrot.slane %v3663, %v5183
    %v5185 = vmul.f32 %v5179, %v5184
    %v5186 = vmul.f32 %v5180, %v5184
    %v5187 = vlaneseq
    %v5188 = vshrl.u32 %v5187, 7
    %v5189 = vsub.s32 1, %v5188
    %v5190 = vrot.slane %v3663, %v5189
    %v5191 = vadd.f32 %v5185, %v5190
    %v5192 = vadd.f32 %v5186, %v5190
    %5197 = vrot.lane.b32.xlu0 %v3656, 96
    %v5198 = vpop.permute.xlu0 %5197
    %5199 = vrot.lane.b32.xlu0 %v3657, 96
    %v5200 = vpop.permute.xlu0 %5199
    %5201 = vrot.lane.b32.xlu0 %v3658, 96
    %v5202 = vpop.permute.xlu0 %5201
    %5203 = vrot.lane.b32.xlu0 %v3659, 96
    %v5204 = vpop.permute.xlu0 %5203
    %5209 = vrot.lane.b32.xlu0 %v5066, 96
    %v5210 = vpop.permute.xlu0 %5209
    %v5213 = vsel %vm235, %v5191, 0
    %v5216 = vsel %vm235, %v5192, 0
    %5218 = vmatprep.subr.mxu0 0.0
    %5219 = vmatpush1.msra.mxu0 0.0
    %5220 = vmatprep.subr.mxu0 0.0
    %5221 = vmatpush1.msra.mxu0 0.0
    %5222 = vmatprep.subr.mxu0 0.0
    %5223 = vmatpush1.msra.mxu0 0.0
    %5224 = vmatprep.subr.mxu0 0.0
    %5225 = vmatpush1.msra.mxu0 0.0
    %5226 = vmatprep.subr.mxu0 0.0
    %5227 = vmatpush1.msra.mxu0 0.0
    %5228 = vmatprep.subr.mxu0 0.0
    %5229 = vmatpush1.msra.mxu0 0.0
    %5230 = vmatprep.subr.mxu0 0.0
    %5231 = vmatpush1.msra.mxu0 0.0
    %5232 = vmatprep.subr.mxu0 0.0
    %5233 = vmatpush1.msra.mxu0 0.0
    %5234 = vmatprep.subr.mxu0 0.0
    %5235 = vmatpush1.msra.mxu0 0.0
    %5236 = vmatprep.subr.mxu0 0.0
    %5237 = vmatpush1.msra.mxu0 0.0
    %5238 = vmatprep.subr.mxu0 0.0
    %5239 = vmatpush1.msra.mxu0 0.0
    %5240 = vmatprep.subr.mxu0 0.0
    %5241 = vmatpush1.msra.mxu0 0.0
    %5242 = vmatprep.subr.mxu0 0.0
    %5243 = vmatpush1.msra.mxu0 %v5204
    %5244 = vmatprep.subr.mxu0 0.0
    %5245 = vmatpush1.msra.mxu0 %v5202
    %5246 = vmatprep.subr.mxu0 0.0
    %5247 = vmatpush1.msra.mxu0 %v5200
    %5248 = vmatprep.subr.mxu0 0.0
    %5249 = vmatpush1.msra.mxu0 %v5198
    %5250 = vmatprep.subr.mxu0 0.0
    %5251 = vmatpush2.msra.mxu0 0.0
    %5252 = vmatprep.subr.mxu0 0.0
    %5253 = vmatpush2.msra.mxu0 0.0
    %5254 = vmatprep.subr.mxu0 0.0
    %5255 = vmatpush2.msra.mxu0 0.0
    %5256 = vmatprep.subr.mxu0 0.0
    %5257 = vmatpush2.msra.mxu0 0.0
    %5258 = vmatprep.subr.mxu0 0.0
    %5259 = vmatpush2.msra.mxu0 0.0
    %5260 = vmatprep.subr.mxu0 0.0
    %5261 = vmatpush2.msra.mxu0 0.0
    %5262 = vmatprep.subr.mxu0 0.0
    %5263 = vmatpush2.msra.mxu0 0.0
    %5264 = vmatprep.subr.mxu0 0.0
    %5265 = vmatpush2.msra.mxu0 0.0
    %5266 = vmatprep.subr.mxu0 0.0
    %5267 = vmatpush2.msra.mxu0 0.0
    %5268 = vmatprep.subr.mxu0 0.0
    %5269 = vmatpush2.msra.mxu0 0.0
    %5270 = vmatprep.subr.mxu0 0.0
    %5271 = vmatpush2.msra.mxu0 0.0
    %5272 = vmatprep.subr.mxu0 0.0
    %5273 = vmatpush2.msra.mxu0 0.0
    %5274 = vmatprep.subr.mxu0 0.0
    %5275 = vmatpush2.msra.mxu0 0.0
    %5276 = vmatprep.subr.mxu0 0.0
    %5277 = vmatpush2.msra.mxu0 0.0
    %5278 = vmatprep.subr.mxu0 0.0
    %5279 = vmatpush2.msra.mxu0 0.0
    %5280 = vmatprep.subr.mxu0 0.0
    %5281 = vmatpush2.msra.mxu0 0.0
    %5282 = vmatprep.mubr.f32.mxu0 0.0
    %5283 = vmatmul.mubr.f32.gmra.mxu0 %v5213
    %v5284 = vpop.f32.mrf.mxu0
    %v5285 = vadd.f32 %v5210, %v5284
    %v5286 = vpop.f32.mrf.mxu0
    %5287 = vmatprep.mubr.f32.mxu0 0.0
    %5288 = vmatmul.mubr.f32.gmra.mxu0 %v5216
    %v5289 = vpop.f32.mrf.mxu0
    %v5290 = vadd.f32 %v5210, %v5289
    %v5291 = vpop.f32.mrf.mxu0
    %5292 = vdwg.mxu0
    %v5293 = vmul.f32 %v5285, %v104
    %v5294 = vmul.f32 %v5290, %v104
    %5295 = vrot.lane.b32.xlu0 %v315, 64
    %v5296 = vpop.permute.xlu0 %5295
    %5297 = vrot.lane.b32.xlu0 %v320, 64
    %v5298 = vpop.permute.xlu0 %5297
    %v5300 = vsel %vm235, %v5293, 0
    %v5302 = vsel %vm235, %v5296, 0
    %v5304 = vsel %vm235, %v5298, 0
    %5306 = vmatprep.subr.mxu0 0.0
    %5307 = vmatpush1.xpose.msra.mxu0 0.0
    %5308 = vmatprep.subr.mxu0 0.0
    %5309 = vmatpush1.xpose.msra.mxu0 0.0
    %5310 = vmatprep.subr.mxu0 0.0
    %5311 = vmatpush1.xpose.msra.mxu0 0.0
    %5312 = vmatprep.subr.mxu0 0.0
    %5313 = vmatpush1.xpose.msra.mxu0 0.0
    %5314 = vmatprep.subr.mxu0 0.0
    %5315 = vmatpush1.xpose.msra.mxu0 0.0
    %5316 = vmatprep.subr.mxu0 0.0
    %5317 = vmatpush1.xpose.msra.mxu0 0.0
    %5318 = vmatprep.subr.mxu0 0.0
    %5319 = vmatpush1.xpose.msra.mxu0 0.0
    %5320 = vmatprep.subr.mxu0 0.0
    %5321 = vmatpush1.xpose.msra.mxu0 0.0
    %5322 = vmatprep.subr.mxu0 0.0
    %5323 = vmatpush1.xpose.msra.mxu0 0.0
    %5324 = vmatprep.subr.mxu0 0.0
    %5325 = vmatpush1.xpose.msra.mxu0 0.0
    %5326 = vmatprep.subr.mxu0 0.0
    %5327 = vmatpush1.xpose.msra.mxu0 0.0
    %5328 = vmatprep.subr.mxu0 0.0
    %5329 = vmatpush1.xpose.msra.mxu0 0.0
    %5330 = vmatprep.subr.mxu0 0.0
    %5331 = vmatpush1.xpose.msra.mxu0 0.0
    %5332 = vmatprep.subr.mxu0 0.0
    %5333 = vmatpush1.xpose.msra.mxu0 0.0
    %5334 = vmatprep.subr.mxu0 0.0
    %5335 = vmatpush1.xpose.msra.mxu0 %v5304
    %5336 = vmatprep.subr.mxu0 0.0
    %5337 = vmatpush1.xpose.msra.mxu0 %v5302
    %5338 = vmatprep.subr.mxu0 0.0
    %5339 = vmatpush2.xpose.msra.mxu0 0.0
    %5340 = vmatprep.subr.mxu0 0.0
    %5341 = vmatpush2.xpose.msra.mxu0 0.0
    %5342 = vmatprep.subr.mxu0 0.0
    %5343 = vmatpush2.xpose.msra.mxu0 0.0
    %5344 = vmatprep.subr.mxu0 0.0
    %5345 = vmatpush2.xpose.msra.mxu0 0.0
    %5346 = vmatprep.subr.mxu0 0.0
    %5347 = vmatpush2.xpose.msra.mxu0 0.0
    %5348 = vmatprep.subr.mxu0 0.0
    %5349 = vmatpush2.xpose.msra.mxu0 0.0
    %5350 = vmatprep.subr.mxu0 0.0
    %5351 = vmatpush2.xpose.msra.mxu0 0.0
    %5352 = vmatprep.subr.mxu0 0.0
    %5353 = vmatpush2.xpose.msra.mxu0 0.0
    %5354 = vmatprep.subr.mxu0 0.0
    %5355 = vmatpush2.xpose.msra.mxu0 0.0
    %5356 = vmatprep.subr.mxu0 0.0
    %5357 = vmatpush2.xpose.msra.mxu0 0.0
    %5358 = vmatprep.subr.mxu0 0.0
    %5359 = vmatpush2.xpose.msra.mxu0 0.0
    %5360 = vmatprep.subr.mxu0 0.0
    %5361 = vmatpush2.xpose.msra.mxu0 0.0
    %5362 = vmatprep.subr.mxu0 0.0
    %5363 = vmatpush2.xpose.msra.mxu0 0.0
    %5364 = vmatprep.subr.mxu0 0.0
    %5365 = vmatpush2.xpose.msra.mxu0 0.0
    %5366 = vmatprep.subr.mxu0 0.0
    %5367 = vmatpush2.xpose.msra.mxu0 0.0
    %5368 = vmatprep.subr.mxu0 0.0
    %5369 = vmatpush2.xpose.msra.mxu0 0.0
    %5370 = vmatprep.mubr.f32.mxu0 0.0
    %5371 = vmatmul.mubr.f32.gmra.mxu0 %v5300
    %v5372 = vpop.f32.mrf.mxu0
    %v5373 = vadd.f32 0.0, %v5372
    %v5374 = vpop.f32.mrf.mxu0
    %5375 = vdwg.mxu0
    %5376 = vrot.lane.b32.xlu0 %v325, 64
    %v5377 = vpop.permute.xlu0 %5376
    %5378 = vrot.lane.b32.xlu0 %v330, 64
    %v5379 = vpop.permute.xlu0 %5378
    %v5381 = vsel %vm235, %v5294, 0
    %v5383 = vsel %vm235, %v5377, 0
    %v5385 = vsel %vm235, %v5379, 0
    %5387 = vmatprep.subr.mxu0 0.0
    %5388 = vmatpush1.xpose.msra.mxu0 0.0
    %5389 = vmatprep.subr.mxu0 0.0
    %5390 = vmatpush1.xpose.msra.mxu0 0.0
    %5391 = vmatprep.subr.mxu0 0.0
    %5392 = vmatpush1.xpose.msra.mxu0 0.0
    %5393 = vmatprep.subr.mxu0 0.0
    %5394 = vmatpush1.xpose.msra.mxu0 0.0
    %5395 = vmatprep.subr.mxu0 0.0
    %5396 = vmatpush1.xpose.msra.mxu0 0.0
    %5397 = vmatprep.subr.mxu0 0.0
    %5398 = vmatpush1.xpose.msra.mxu0 0.0
    %5399 = vmatprep.subr.mxu0 0.0
    %5400 = vmatpush1.xpose.msra.mxu0 0.0
    %5401 = vmatprep.subr.mxu0 0.0
    %5402 = vmatpush1.xpose.msra.mxu0 0.0
    %5403 = vmatprep.subr.mxu0 0.0
    %5404 = vmatpush1.xpose.msra.mxu0 0.0
    %5405 = vmatprep.subr.mxu0 0.0
    %5406 = vmatpush1.xpose.msra.mxu0 0.0
    %5407 = vmatprep.subr.mxu0 0.0
    %5408 = vmatpush1.xpose.msra.mxu0 0.0
    %5409 = vmatprep.subr.mxu0 0.0
    %5410 = vmatpush1.xpose.msra.mxu0 0.0
    %5411 = vmatprep.subr.mxu0 0.0
    %5412 = vmatpush1.xpose.msra.mxu0 0.0
    %5413 = vmatprep.subr.mxu0 0.0
    %5414 = vmatpush1.xpose.msra.mxu0 0.0
    %5415 = vmatprep.subr.mxu0 0.0
    %5416 = vmatpush1.xpose.msra.mxu0 %v5385
    %5417 = vmatprep.subr.mxu0 0.0
    %5418 = vmatpush1.xpose.msra.mxu0 %v5383
    %5419 = vmatprep.subr.mxu0 0.0
    %5420 = vmatpush2.xpose.msra.mxu0 0.0
    %5421 = vmatprep.subr.mxu0 0.0
    %5422 = vmatpush2.xpose.msra.mxu0 0.0
    %5423 = vmatprep.subr.mxu0 0.0
    %5424 = vmatpush2.xpose.msra.mxu0 0.0
    %5425 = vmatprep.subr.mxu0 0.0
    %5426 = vmatpush2.xpose.msra.mxu0 0.0
    %5427 = vmatprep.subr.mxu0 0.0
    %5428 = vmatpush2.xpose.msra.mxu0 0.0
    %5429 = vmatprep.subr.mxu0 0.0
    %5430 = vmatpush2.xpose.msra.mxu0 0.0
    %5431 = vmatprep.subr.mxu0 0.0
    %5432 = vmatpush2.xpose.msra.mxu0 0.0
    %5433 = vmatprep.subr.mxu0 0.0
    %5434 = vmatpush2.xpose.msra.mxu0 0.0
    %5435 = vmatprep.subr.mxu0 0.0
    %5436 = vmatpush2.xpose.msra.mxu0 0.0
    %5437 = vmatprep.subr.mxu0 0.0
    %5438 = vmatpush2.xpose.msra.mxu0 0.0
    %5439 = vmatprep.subr.mxu0 0.0
    %5440 = vmatpush2.xpose.msra.mxu0 0.0
    %5441 = vmatprep.subr.mxu0 0.0
    %5442 = vmatpush2.xpose.msra.mxu0 0.0
    %5443 = vmatprep.subr.mxu0 0.0
    %5444 = vmatpush2.xpose.msra.mxu0 0.0
    %5445 = vmatprep.subr.mxu0 0.0
    %5446 = vmatpush2.xpose.msra.mxu0 0.0
    %5447 = vmatprep.subr.mxu0 0.0
    %5448 = vmatpush2.xpose.msra.mxu0 0.0
    %5449 = vmatprep.subr.mxu0 0.0
    %5450 = vmatpush2.xpose.msra.mxu0 0.0
    %5451 = vmatprep.mubr.f32.mxu0 0.0
    %5452 = vmatmul.mubr.f32.gmra.mxu0 %v5381
    %v5453 = vpop.f32.mrf.mxu0
    %v5454 = vadd.f32 0.0, %v5453
    %v5455 = vpop.f32.mrf.mxu0
    %5456 = vdwg.mxu0
    %v5457 = vmul.f32 %v5373, 0.35355338
    %v5458 = vmul.f32 %v5454, 0.35355338
    %v5459 = vsel %vm138, %v5457, -inf
    %5460 = vmax.xlane.f32.xlu0 %v5459
    %v5461 = vpop.xlane.xlu0 %5460
    %v5462 = vsel %vm138, %v5458, -inf
    %5463 = vmax.xlane.f32.xlu0 %v5462
    %v5464 = vpop.xlane.xlu0 %5463
    %v5465 = vsub.f32 %v5457, %v5461
    %v5466 = vsub.f32 %v5458, %v5464
    %v5467 = vmul.f32 %v5465, 1.442695
    %v5468 = vpow.pop %v5467
    %v5469 = vmul.f32 %v5466, 1.442695
    %v5470 = vpow.pop %v5469
    %v5471 = vsel %vm138, %v5468, 0.0
    %5472 = vadd.xlane.f32.xlu0 %v5471
    %v5473 = vpop.xlane.xlu0 %5472
    %v5474 = vsel %vm138, %v5470, 0.0
    %5475 = vadd.xlane.f32.xlu0 %v5474
    %v5476 = vpop.xlane.xlu0 %5475
    %v5477 = vrcp.pop %v5473
    %v5478 = vrcp.pop %v5476
    %v5479 = vmul.f32 %v5468, %v5477
    %v5480 = vmul.f32 %v5470, %v5478
    %5481 = vrot.lane.b32.xlu0 %v315, 32
    %v5482 = vpop.permute.xlu0 %5481
    %5483 = vrot.lane.b32.xlu0 %v320, 32
    %v5484 = vpop.permute.xlu0 %5483
    %v5488 = vsel %vm138, %v5479, 0
    %5490 = vmatprep.subr.mxu0 0.0
    %5491 = vmatpush1.msra.mxu0 0.0
    %5492 = vmatprep.subr.mxu0 0.0
    %5493 = vmatpush1.msra.mxu0 0.0
    %5494 = vmatprep.subr.mxu0 0.0
    %5495 = vmatpush1.msra.mxu0 0.0
    %5496 = vmatprep.subr.mxu0 0.0
    %5497 = vmatpush1.msra.mxu0 0.0
    %5498 = vmatprep.subr.mxu0 0.0
    %5499 = vmatpush1.msra.mxu0 0.0
    %5500 = vmatprep.subr.mxu0 0.0
    %5501 = vmatpush1.msra.mxu0 0.0
    %5502 = vmatprep.subr.mxu0 0.0
    %5503 = vmatpush1.msra.mxu0 0.0
    %5504 = vmatprep.subr.mxu0 0.0
    %5505 = vmatpush1.msra.mxu0 0.0
    %5506 = vmatprep.subr.mxu0 0.0
    %5507 = vmatpush1.msra.mxu0 0.0
    %5508 = vmatprep.subr.mxu0 0.0
    %5509 = vmatpush1.msra.mxu0 0.0
    %5510 = vmatprep.subr.mxu0 0.0
    %5511 = vmatpush1.msra.mxu0 0.0
    %5512 = vmatprep.subr.mxu0 0.0
    %5513 = vmatpush1.msra.mxu0 0.0
    %5514 = vmatprep.subr.mxu0 0.0
    %5515 = vmatpush1.msra.mxu0 0.0
    %5516 = vmatprep.subr.mxu0 0.0
    %5517 = vmatpush1.msra.mxu0 0.0
    %5518 = vmatprep.subr.mxu0 0.0
    %5519 = vmatpush1.msra.mxu0 %v5484
    %5520 = vmatprep.subr.mxu0 0.0
    %5521 = vmatpush1.msra.mxu0 %v5482
    %5522 = vmatprep.subr.mxu0 0.0
    %5523 = vmatpush2.msra.mxu0 0.0
    %5524 = vmatprep.subr.mxu0 0.0
    %5525 = vmatpush2.msra.mxu0 0.0
    %5526 = vmatprep.subr.mxu0 0.0
    %5527 = vmatpush2.msra.mxu0 0.0
    %5528 = vmatprep.subr.mxu0 0.0
    %5529 = vmatpush2.msra.mxu0 0.0
    %5530 = vmatprep.subr.mxu0 0.0
    %5531 = vmatpush2.msra.mxu0 0.0
    %5532 = vmatprep.subr.mxu0 0.0
    %5533 = vmatpush2.msra.mxu0 0.0
    %5534 = vmatprep.subr.mxu0 0.0
    %5535 = vmatpush2.msra.mxu0 0.0
    %5536 = vmatprep.subr.mxu0 0.0
    %5537 = vmatpush2.msra.mxu0 0.0
    %5538 = vmatprep.subr.mxu0 0.0
    %5539 = vmatpush2.msra.mxu0 0.0
    %5540 = vmatprep.subr.mxu0 0.0
    %5541 = vmatpush2.msra.mxu0 0.0
    %5542 = vmatprep.subr.mxu0 0.0
    %5543 = vmatpush2.msra.mxu0 0.0
    %5544 = vmatprep.subr.mxu0 0.0
    %5545 = vmatpush2.msra.mxu0 0.0
    %5546 = vmatprep.subr.mxu0 0.0
    %5547 = vmatpush2.msra.mxu0 0.0
    %5548 = vmatprep.subr.mxu0 0.0
    %5549 = vmatpush2.msra.mxu0 0.0
    %5550 = vmatprep.subr.mxu0 0.0
    %5551 = vmatpush2.msra.mxu0 0.0
    %5552 = vmatprep.subr.mxu0 0.0
    %5553 = vmatpush2.msra.mxu0 0.0
    %5554 = vmatprep.mubr.f32.mxu0 0.0
    %5555 = vmatmul.mubr.f32.gmra.mxu0 %v5488
    %v5556 = vpop.f32.mrf.mxu0
    %v5557 = vadd.f32 0.0, %v5556
    %v5558 = vpop.f32.mrf.mxu0
    %5559 = vdwg.mxu0
    %5560 = vrot.lane.b32.xlu0 %v325, 32
    %v5561 = vpop.permute.xlu0 %5560
    %5562 = vrot.lane.b32.xlu0 %v330, 32
    %v5563 = vpop.permute.xlu0 %5562
    %v5567 = vsel %vm138, %v5480, 0
    %5569 = vmatprep.subr.mxu0 0.0
    %5570 = vmatpush1.msra.mxu0 0.0
    %5571 = vmatprep.subr.mxu0 0.0
    %5572 = vmatpush1.msra.mxu0 0.0
    %5573 = vmatprep.subr.mxu0 0.0
    %5574 = vmatpush1.msra.mxu0 0.0
    %5575 = vmatprep.subr.mxu0 0.0
    %5576 = vmatpush1.msra.mxu0 0.0
    %5577 = vmatprep.subr.mxu0 0.0
    %5578 = vmatpush1.msra.mxu0 0.0
    %5579 = vmatprep.subr.mxu0 0.0
    %5580 = vmatpush1.msra.mxu0 0.0
    %5581 = vmatprep.subr.mxu0 0.0
    %5582 = vmatpush1.msra.mxu0 0.0
    %5583 = vmatprep.subr.mxu0 0.0
    %5584 = vmatpush1.msra.mxu0 0.0
    %5585 = vmatprep.subr.mxu0 0.0
    %5586 = vmatpush1.msra.mxu0 0.0
    %5587 = vmatprep.subr.mxu0 0.0
    %5588 = vmatpush1.msra.mxu0 0.0
    %5589 = vmatprep.subr.mxu0 0.0
    %5590 = vmatpush1.msra.mxu0 0.0
    %5591 = vmatprep.subr.mxu0 0.0
    %5592 = vmatpush1.msra.mxu0 0.0
    %5593 = vmatprep.subr.mxu0 0.0
    %5594 = vmatpush1.msra.mxu0 0.0
    %5595 = vmatprep.subr.mxu0 0.0
    %5596 = vmatpush1.msra.mxu0 0.0
    %5597 = vmatprep.subr.mxu0 0.0
    %5598 = vmatpush1.msra.mxu0 %v5563
    %5599 = vmatprep.subr.mxu0 0.0
    %5600 = vmatpush1.msra.mxu0 %v5561
    %5601 = vmatprep.subr.mxu0 0.0
    %5602 = vmatpush2.msra.mxu0 0.0
    %5603 = vmatprep.subr.mxu0 0.0
    %5604 = vmatpush2.msra.mxu0 0.0
    %5605 = vmatprep.subr.mxu0 0.0
    %5606 = vmatpush2.msra.mxu0 0.0
    %5607 = vmatprep.subr.mxu0 0.0
    %5608 = vmatpush2.msra.mxu0 0.0
    %5609 = vmatprep.subr.mxu0 0.0
    %5610 = vmatpush2.msra.mxu0 0.0
    %5611 = vmatprep.subr.mxu0 0.0
    %5612 = vmatpush2.msra.mxu0 0.0
    %5613 = vmatprep.subr.mxu0 0.0
    %5614 = vmatpush2.msra.mxu0 0.0
    %5615 = vmatprep.subr.mxu0 0.0
    %5616 = vmatpush2.msra.mxu0 0.0
    %5617 = vmatprep.subr.mxu0 0.0
    %5618 = vmatpush2.msra.mxu0 0.0
    %5619 = vmatprep.subr.mxu0 0.0
    %5620 = vmatpush2.msra.mxu0 0.0
    %5621 = vmatprep.subr.mxu0 0.0
    %5622 = vmatpush2.msra.mxu0 0.0
    %5623 = vmatprep.subr.mxu0 0.0
    %5624 = vmatpush2.msra.mxu0 0.0
    %5625 = vmatprep.subr.mxu0 0.0
    %5626 = vmatpush2.msra.mxu0 0.0
    %5627 = vmatprep.subr.mxu0 0.0
    %5628 = vmatpush2.msra.mxu0 0.0
    %5629 = vmatprep.subr.mxu0 0.0
    %5630 = vmatpush2.msra.mxu0 0.0
    %5631 = vmatprep.subr.mxu0 0.0
    %5632 = vmatpush2.msra.mxu0 0.0
    %5633 = vmatprep.mubr.f32.mxu0 0.0
    %5634 = vmatmul.mubr.f32.gmra.mxu0 %v5567
    %v5635 = vpop.f32.mrf.mxu0
    %v5636 = vadd.f32 0.0, %v5635
    %v5637 = vpop.f32.mrf.mxu0
    %5638 = vdwg.mxu0
    %v5639 = vmul.f32 %v5557, %v104
    %v5640 = vmul.f32 %v5636, %v104
    %v5641 = vadd.f32 %v5639, 0.0
    %v5642 = vadd.f32 %v5640, 0.0
    %v5643 = vmul.f32 %v5285, %v109
    %v5644 = vmul.f32 %v5290, %v109
    %v5646 = vsel %vm235, %v5643, 0
    %5648 = vmatprep.subr.mxu0 0.0
    %5649 = vmatpush1.xpose.msra.mxu0 0.0
    %5650 = vmatprep.subr.mxu0 0.0
    %5651 = vmatpush1.xpose.msra.mxu0 0.0
    %5652 = vmatprep.subr.mxu0 0.0
    %5653 = vmatpush1.xpose.msra.mxu0 0.0
    %5654 = vmatprep.subr.mxu0 0.0
    %5655 = vmatpush1.xpose.msra.mxu0 0.0
    %5656 = vmatprep.subr.mxu0 0.0
    %5657 = vmatpush1.xpose.msra.mxu0 0.0
    %5658 = vmatprep.subr.mxu0 0.0
    %5659 = vmatpush1.xpose.msra.mxu0 0.0
    %5660 = vmatprep.subr.mxu0 0.0
    %5661 = vmatpush1.xpose.msra.mxu0 0.0
    %5662 = vmatprep.subr.mxu0 0.0
    %5663 = vmatpush1.xpose.msra.mxu0 0.0
    %5664 = vmatprep.subr.mxu0 0.0
    %5665 = vmatpush1.xpose.msra.mxu0 0.0
    %5666 = vmatprep.subr.mxu0 0.0
    %5667 = vmatpush1.xpose.msra.mxu0 0.0
    %5668 = vmatprep.subr.mxu0 0.0
    %5669 = vmatpush1.xpose.msra.mxu0 0.0
    %5670 = vmatprep.subr.mxu0 0.0
    %5671 = vmatpush1.xpose.msra.mxu0 0.0
    %5672 = vmatprep.subr.mxu0 0.0
    %5673 = vmatpush1.xpose.msra.mxu0 0.0
    %5674 = vmatprep.subr.mxu0 0.0
    %5675 = vmatpush1.xpose.msra.mxu0 0.0
    %5676 = vmatprep.subr.mxu0 0.0
    %5677 = vmatpush1.xpose.msra.mxu0 %v5304
    %5678 = vmatprep.subr.mxu0 0.0
    %5679 = vmatpush1.xpose.msra.mxu0 %v5302
    %5680 = vmatprep.subr.mxu0 0.0
    %5681 = vmatpush2.xpose.msra.mxu0 0.0
    %5682 = vmatprep.subr.mxu0 0.0
    %5683 = vmatpush2.xpose.msra.mxu0 0.0
    %5684 = vmatprep.subr.mxu0 0.0
    %5685 = vmatpush2.xpose.msra.mxu0 0.0
    %5686 = vmatprep.subr.mxu0 0.0
    %5687 = vmatpush2.xpose.msra.mxu0 0.0
    %5688 = vmatprep.subr.mxu0 0.0
    %5689 = vmatpush2.xpose.msra.mxu0 0.0
    %5690 = vmatprep.subr.mxu0 0.0
    %5691 = vmatpush2.xpose.msra.mxu0 0.0
    %5692 = vmatprep.subr.mxu0 0.0
    %5693 = vmatpush2.xpose.msra.mxu0 0.0
    %5694 = vmatprep.subr.mxu0 0.0
    %5695 = vmatpush2.xpose.msra.mxu0 0.0
    %5696 = vmatprep.subr.mxu0 0.0
    %5697 = vmatpush2.xpose.msra.mxu0 0.0
    %5698 = vmatprep.subr.mxu0 0.0
    %5699 = vmatpush2.xpose.msra.mxu0 0.0
    %5700 = vmatprep.subr.mxu0 0.0
    %5701 = vmatpush2.xpose.msra.mxu0 0.0
    %5702 = vmatprep.subr.mxu0 0.0
    %5703 = vmatpush2.xpose.msra.mxu0 0.0
    %5704 = vmatprep.subr.mxu0 0.0
    %5705 = vmatpush2.xpose.msra.mxu0 0.0
    %5706 = vmatprep.subr.mxu0 0.0
    %5707 = vmatpush2.xpose.msra.mxu0 0.0
    %5708 = vmatprep.subr.mxu0 0.0
    %5709 = vmatpush2.xpose.msra.mxu0 0.0
    %5710 = vmatprep.subr.mxu0 0.0
    %5711 = vmatpush2.xpose.msra.mxu0 0.0
    %5712 = vmatprep.mubr.f32.mxu0 0.0
    %5713 = vmatmul.mubr.f32.gmra.mxu0 %v5646
    %v5714 = vpop.f32.mrf.mxu0
    %v5715 = vadd.f32 0.0, %v5714
    %v5716 = vpop.f32.mrf.mxu0
    %5717 = vdwg.mxu0
    %v5719 = vsel %vm235, %v5644, 0
    %5721 = vmatprep.subr.mxu0 0.0
    %5722 = vmatpush1.xpose.msra.mxu0 0.0
    %5723 = vmatprep.subr.mxu0 0.0
    %5724 = vmatpush1.xpose.msra.mxu0 0.0
    %5725 = vmatprep.subr.mxu0 0.0
    %5726 = vmatpush1.xpose.msra.mxu0 0.0
    %5727 = vmatprep.subr.mxu0 0.0
    %5728 = vmatpush1.xpose.msra.mxu0 0.0
    %5729 = vmatprep.subr.mxu0 0.0
    %5730 = vmatpush1.xpose.msra.mxu0 0.0
    %5731 = vmatprep.subr.mxu0 0.0
    %5732 = vmatpush1.xpose.msra.mxu0 0.0
    %5733 = vmatprep.subr.mxu0 0.0
    %5734 = vmatpush1.xpose.msra.mxu0 0.0
    %5735 = vmatprep.subr.mxu0 0.0
    %5736 = vmatpush1.xpose.msra.mxu0 0.0
    %5737 = vmatprep.subr.mxu0 0.0
    %5738 = vmatpush1.xpose.msra.mxu0 0.0
    %5739 = vmatprep.subr.mxu0 0.0
    %5740 = vmatpush1.xpose.msra.mxu0 0.0
    %5741 = vmatprep.subr.mxu0 0.0
    %5742 = vmatpush1.xpose.msra.mxu0 0.0
    %5743 = vmatprep.subr.mxu0 0.0
    %5744 = vmatpush1.xpose.msra.mxu0 0.0
    %5745 = vmatprep.subr.mxu0 0.0
    %5746 = vmatpush1.xpose.msra.mxu0 0.0
    %5747 = vmatprep.subr.mxu0 0.0
    %5748 = vmatpush1.xpose.msra.mxu0 0.0
    %5749 = vmatprep.subr.mxu0 0.0
    %5750 = vmatpush1.xpose.msra.mxu0 %v5385
    %5751 = vmatprep.subr.mxu0 0.0
    %5752 = vmatpush1.xpose.msra.mxu0 %v5383
    %5753 = vmatprep.subr.mxu0 0.0
    %5754 = vmatpush2.xpose.msra.mxu0 0.0
    %5755 = vmatprep.subr.mxu0 0.0
    %5756 = vmatpush2.xpose.msra.mxu0 0.0
    %5757 = vmatprep.subr.mxu0 0.0
    %5758 = vmatpush2.xpose.msra.mxu0 0.0
    %5759 = vmatprep.subr.mxu0 0.0
    %5760 = vmatpush2.xpose.msra.mxu0 0.0
    %5761 = vmatprep.subr.mxu0 0.0
    %5762 = vmatpush2.xpose.msra.mxu0 0.0
    %5763 = vmatprep.subr.mxu0 0.0
    %5764 = vmatpush2.xpose.msra.mxu0 0.0
    %5765 = vmatprep.subr.mxu0 0.0
    %5766 = vmatpush2.xpose.msra.mxu0 0.0
    %5767 = vmatprep.subr.mxu0 0.0
    %5768 = vmatpush2.xpose.msra.mxu0 0.0
    %5769 = vmatprep.subr.mxu0 0.0
    %5770 = vmatpush2.xpose.msra.mxu0 0.0
    %5771 = vmatprep.subr.mxu0 0.0
    %5772 = vmatpush2.xpose.msra.mxu0 0.0
    %5773 = vmatprep.subr.mxu0 0.0
    %5774 = vmatpush2.xpose.msra.mxu0 0.0
    %5775 = vmatprep.subr.mxu0 0.0
    %5776 = vmatpush2.xpose.msra.mxu0 0.0
    %5777 = vmatprep.subr.mxu0 0.0
    %5778 = vmatpush2.xpose.msra.mxu0 0.0
    %5779 = vmatprep.subr.mxu0 0.0
    %5780 = vmatpush2.xpose.msra.mxu0 0.0
    %5781 = vmatprep.subr.mxu0 0.0
    %5782 = vmatpush2.xpose.msra.mxu0 0.0
    %5783 = vmatprep.subr.mxu0 0.0
    %5784 = vmatpush2.xpose.msra.mxu0 0.0
    %5785 = vmatprep.mubr.f32.mxu0 0.0
    %5786 = vmatmul.mubr.f32.gmra.mxu0 %v5719
    %v5787 = vpop.f32.mrf.mxu0
    %v5788 = vadd.f32 0.0, %v5787
    %v5789 = vpop.f32.mrf.mxu0
    %5790 = vdwg.mxu0
    %v5791 = vmul.f32 %v5715, 0.35355338
    %v5792 = vmul.f32 %v5788, 0.35355338
    %v5793 = vsel %vm138, %v5791, -inf
    %5794 = vmax.xlane.f32.xlu0 %v5793
    %v5795 = vpop.xlane.xlu0 %5794
    %v5796 = vsel %vm138, %v5792, -inf
    %5797 = vmax.xlane.f32.xlu0 %v5796
    %v5798 = vpop.xlane.xlu0 %5797
    %v5799 = vsub.f32 %v5791, %v5795
    %v5800 = vsub.f32 %v5792, %v5798
    %v5801 = vmul.f32 %v5799, 1.442695
    %v5802 = vpow.pop %v5801
    %v5803 = vmul.f32 %v5800, 1.442695
    %v5804 = vpow.pop %v5803
    %v5805 = vsel %vm138, %v5802, 0.0
    %5806 = vadd.xlane.f32.xlu0 %v5805
    %v5807 = vpop.xlane.xlu0 %5806
    %v5808 = vsel %vm138, %v5804, 0.0
    %5809 = vadd.xlane.f32.xlu0 %v5808
    %v5810 = vpop.xlane.xlu0 %5809
    %v5811 = vrcp.pop %v5807
    %v5812 = vrcp.pop %v5810
    %v5813 = vmul.f32 %v5802, %v5811
    %v5814 = vmul.f32 %v5804, %v5812
    %v5816 = vsel %vm138, %v5813, 0
    %5818 = vmatprep.subr.mxu0 0.0
    %5819 = vmatpush1.msra.mxu0 0.0
    %5820 = vmatprep.subr.mxu0 0.0
    %5821 = vmatpush1.msra.mxu0 0.0
    %5822 = vmatprep.subr.mxu0 0.0
    %5823 = vmatpush1.msra.mxu0 0.0
    %5824 = vmatprep.subr.mxu0 0.0
    %5825 = vmatpush1.msra.mxu0 0.0
    %5826 = vmatprep.subr.mxu0 0.0
    %5827 = vmatpush1.msra.mxu0 0.0
    %5828 = vmatprep.subr.mxu0 0.0
    %5829 = vmatpush1.msra.mxu0 0.0
    %5830 = vmatprep.subr.mxu0 0.0
    %5831 = vmatpush1.msra.mxu0 0.0
    %5832 = vmatprep.subr.mxu0 0.0
    %5833 = vmatpush1.msra.mxu0 0.0
    %5834 = vmatprep.subr.mxu0 0.0
    %5835 = vmatpush1.msra.mxu0 0.0
    %5836 = vmatprep.subr.mxu0 0.0
    %5837 = vmatpush1.msra.mxu0 0.0
    %5838 = vmatprep.subr.mxu0 0.0
    %5839 = vmatpush1.msra.mxu0 0.0
    %5840 = vmatprep.subr.mxu0 0.0
    %5841 = vmatpush1.msra.mxu0 0.0
    %5842 = vmatprep.subr.mxu0 0.0
    %5843 = vmatpush1.msra.mxu0 0.0
    %5844 = vmatprep.subr.mxu0 0.0
    %5845 = vmatpush1.msra.mxu0 0.0
    %5846 = vmatprep.subr.mxu0 0.0
    %5847 = vmatpush1.msra.mxu0 %v5484
    %5848 = vmatprep.subr.mxu0 0.0
    %5849 = vmatpush1.msra.mxu0 %v5482
    %5850 = vmatprep.subr.mxu0 0.0
    %5851 = vmatpush2.msra.mxu0 0.0
    %5852 = vmatprep.subr.mxu0 0.0
    %5853 = vmatpush2.msra.mxu0 0.0
    %5854 = vmatprep.subr.mxu0 0.0
    %5855 = vmatpush2.msra.mxu0 0.0
    %5856 = vmatprep.subr.mxu0 0.0
    %5857 = vmatpush2.msra.mxu0 0.0
    %5858 = vmatprep.subr.mxu0 0.0
    %5859 = vmatpush2.msra.mxu0 0.0
    %5860 = vmatprep.subr.mxu0 0.0
    %5861 = vmatpush2.msra.mxu0 0.0
    %5862 = vmatprep.subr.mxu0 0.0
    %5863 = vmatpush2.msra.mxu0 0.0
    %5864 = vmatprep.subr.mxu0 0.0
    %5865 = vmatpush2.msra.mxu0 0.0
    %5866 = vmatprep.subr.mxu0 0.0
    %5867 = vmatpush2.msra.mxu0 0.0
    %5868 = vmatprep.subr.mxu0 0.0
    %5869 = vmatpush2.msra.mxu0 0.0
    %5870 = vmatprep.subr.mxu0 0.0
    %5871 = vmatpush2.msra.mxu0 0.0
    %5872 = vmatprep.subr.mxu0 0.0
    %5873 = vmatpush2.msra.mxu0 0.0
    %5874 = vmatprep.subr.mxu0 0.0
    %5875 = vmatpush2.msra.mxu0 0.0
    %5876 = vmatprep.subr.mxu0 0.0
    %5877 = vmatpush2.msra.mxu0 0.0
    %5878 = vmatprep.subr.mxu0 0.0
    %5879 = vmatpush2.msra.mxu0 0.0
    %5880 = vmatprep.subr.mxu0 0.0
    %5881 = vmatpush2.msra.mxu0 0.0
    %5882 = vmatprep.mubr.f32.mxu0 0.0
    %5883 = vmatmul.mubr.f32.gmra.mxu0 %v5816
    %v5884 = vpop.f32.mrf.mxu0
    %v5885 = vadd.f32 0.0, %v5884
    %v5886 = vpop.f32.mrf.mxu0
    %5887 = vdwg.mxu0
    %v5889 = vsel %vm138, %v5814, 0
    %5891 = vmatprep.subr.mxu0 0.0
    %5892 = vmatpush1.msra.mxu0 0.0
    %5893 = vmatprep.subr.mxu0 0.0
    %5894 = vmatpush1.msra.mxu0 0.0
    %5895 = vmatprep.subr.mxu0 0.0
    %5896 = vmatpush1.msra.mxu0 0.0
    %5897 = vmatprep.subr.mxu0 0.0
    %5898 = vmatpush1.msra.mxu0 0.0
    %5899 = vmatprep.subr.mxu0 0.0
    %5900 = vmatpush1.msra.mxu0 0.0
    %5901 = vmatprep.subr.mxu0 0.0
    %5902 = vmatpush1.msra.mxu0 0.0
    %5903 = vmatprep.subr.mxu0 0.0
    %5904 = vmatpush1.msra.mxu0 0.0
    %5905 = vmatprep.subr.mxu0 0.0
    %5906 = vmatpush1.msra.mxu0 0.0
    %5907 = vmatprep.subr.mxu0 0.0
    %5908 = vmatpush1.msra.mxu0 0.0
    %5909 = vmatprep.subr.mxu0 0.0
    %5910 = vmatpush1.msra.mxu0 0.0
    %5911 = vmatprep.subr.mxu0 0.0
    %5912 = vmatpush1.msra.mxu0 0.0
    %5913 = vmatprep.subr.mxu0 0.0
    %5914 = vmatpush1.msra.mxu0 0.0
    %5915 = vmatprep.subr.mxu0 0.0
    %5916 = vmatpush1.msra.mxu0 0.0
    %5917 = vmatprep.subr.mxu0 0.0
    %5918 = vmatpush1.msra.mxu0 0.0
    %5919 = vmatprep.subr.mxu0 0.0
    %5920 = vmatpush1.msra.mxu0 %v5563
    %5921 = vmatprep.subr.mxu0 0.0
    %5922 = vmatpush1.msra.mxu0 %v5561
    %5923 = vmatprep.subr.mxu0 0.0
    %5924 = vmatpush2.msra.mxu0 0.0
    %5925 = vmatprep.subr.mxu0 0.0
    %5926 = vmatpush2.msra.mxu0 0.0
    %5927 = vmatprep.subr.mxu0 0.0
    %5928 = vmatpush2.msra.mxu0 0.0
    %5929 = vmatprep.subr.mxu0 0.0
    %5930 = vmatpush2.msra.mxu0 0.0
    %5931 = vmatprep.subr.mxu0 0.0
    %5932 = vmatpush2.msra.mxu0 0.0
    %5933 = vmatprep.subr.mxu0 0.0
    %5934 = vmatpush2.msra.mxu0 0.0
    %5935 = vmatprep.subr.mxu0 0.0
    %5936 = vmatpush2.msra.mxu0 0.0
    %5937 = vmatprep.subr.mxu0 0.0
    %5938 = vmatpush2.msra.mxu0 0.0
    %5939 = vmatprep.subr.mxu0 0.0
    %5940 = vmatpush2.msra.mxu0 0.0
    %5941 = vmatprep.subr.mxu0 0.0
    %5942 = vmatpush2.msra.mxu0 0.0
    %5943 = vmatprep.subr.mxu0 0.0
    %5944 = vmatpush2.msra.mxu0 0.0
    %5945 = vmatprep.subr.mxu0 0.0
    %5946 = vmatpush2.msra.mxu0 0.0
    %5947 = vmatprep.subr.mxu0 0.0
    %5948 = vmatpush2.msra.mxu0 0.0
    %5949 = vmatprep.subr.mxu0 0.0
    %5950 = vmatpush2.msra.mxu0 0.0
    %5951 = vmatprep.subr.mxu0 0.0
    %5952 = vmatpush2.msra.mxu0 0.0
    %5953 = vmatprep.subr.mxu0 0.0
    %5954 = vmatpush2.msra.mxu0 0.0
    %5955 = vmatprep.mubr.f32.mxu0 0.0
    %5956 = vmatmul.mubr.f32.gmra.mxu0 %v5889
    %v5957 = vpop.f32.mrf.mxu0
    %v5958 = vadd.f32 0.0, %v5957
    %v5959 = vpop.f32.mrf.mxu0
    %5960 = vdwg.mxu0
    %v5961 = vmul.f32 %v5885, %v109
    %v5962 = vmul.f32 %v5958, %v109
    %v5963 = vadd.f32 %v5641, %v5961
    %v5964 = vadd.f32 %v5642, %v5962
    %v5965 = vmul.f32 %v5285, %v114
    %v5966 = vmul.f32 %v5290, %v114
    %v5968 = vsel %vm235, %v5965, 0
    %5970 = vmatprep.subr.mxu0 0.0
    %5971 = vmatpush1.xpose.msra.mxu0 0.0
    %5972 = vmatprep.subr.mxu0 0.0
    %5973 = vmatpush1.xpose.msra.mxu0 0.0
    %5974 = vmatprep.subr.mxu0 0.0
    %5975 = vmatpush1.xpose.msra.mxu0 0.0
    %5976 = vmatprep.subr.mxu0 0.0
    %5977 = vmatpush1.xpose.msra.mxu0 0.0
    %5978 = vmatprep.subr.mxu0 0.0
    %5979 = vmatpush1.xpose.msra.mxu0 0.0
    %5980 = vmatprep.subr.mxu0 0.0
    %5981 = vmatpush1.xpose.msra.mxu0 0.0
    %5982 = vmatprep.subr.mxu0 0.0
    %5983 = vmatpush1.xpose.msra.mxu0 0.0
    %5984 = vmatprep.subr.mxu0 0.0
    %5985 = vmatpush1.xpose.msra.mxu0 0.0
    %5986 = vmatprep.subr.mxu0 0.0
    %5987 = vmatpush1.xpose.msra.mxu0 0.0
    %5988 = vmatprep.subr.mxu0 0.0
    %5989 = vmatpush1.xpose.msra.mxu0 0.0
    %5990 = vmatprep.subr.mxu0 0.0
    %5991 = vmatpush1.xpose.msra.mxu0 0.0
    %5992 = vmatprep.subr.mxu0 0.0
    %5993 = vmatpush1.xpose.msra.mxu0 0.0
    %5994 = vmatprep.subr.mxu0 0.0
    %5995 = vmatpush1.xpose.msra.mxu0 0.0
    %5996 = vmatprep.subr.mxu0 0.0
    %5997 = vmatpush1.xpose.msra.mxu0 0.0
    %5998 = vmatprep.subr.mxu0 0.0
    %5999 = vmatpush1.xpose.msra.mxu0 %v5304
    %6000 = vmatprep.subr.mxu0 0.0
    %6001 = vmatpush1.xpose.msra.mxu0 %v5302
    %6002 = vmatprep.subr.mxu0 0.0
    %6003 = vmatpush2.xpose.msra.mxu0 0.0
    %6004 = vmatprep.subr.mxu0 0.0
    %6005 = vmatpush2.xpose.msra.mxu0 0.0
    %6006 = vmatprep.subr.mxu0 0.0
    %6007 = vmatpush2.xpose.msra.mxu0 0.0
    %6008 = vmatprep.subr.mxu0 0.0
    %6009 = vmatpush2.xpose.msra.mxu0 0.0
    %6010 = vmatprep.subr.mxu0 0.0
    %6011 = vmatpush2.xpose.msra.mxu0 0.0
    %6012 = vmatprep.subr.mxu0 0.0
    %6013 = vmatpush2.xpose.msra.mxu0 0.0
    %6014 = vmatprep.subr.mxu0 0.0
    %6015 = vmatpush2.xpose.msra.mxu0 0.0
    %6016 = vmatprep.subr.mxu0 0.0
    %6017 = vmatpush2.xpose.msra.mxu0 0.0
    %6018 = vmatprep.subr.mxu0 0.0
    %6019 = vmatpush2.xpose.msra.mxu0 0.0
    %6020 = vmatprep.subr.mxu0 0.0
    %6021 = vmatpush2.xpose.msra.mxu0 0.0
    %6022 = vmatprep.subr.mxu0 0.0
    %6023 = vmatpush2.xpose.msra.mxu0 0.0
    %6024 = vmatprep.subr.mxu0 0.0
    %6025 = vmatpush2.xpose.msra.mxu0 0.0
    %6026 = vmatprep.subr.mxu0 0.0
    %6027 = vmatpush2.xpose.msra.mxu0 0.0
    %6028 = vmatprep.subr.mxu0 0.0
    %6029 = vmatpush2.xpose.msra.mxu0 0.0
    %6030 = vmatprep.subr.mxu0 0.0
    %6031 = vmatpush2.xpose.msra.mxu0 0.0
    %6032 = vmatprep.subr.mxu0 0.0
    %6033 = vmatpush2.xpose.msra.mxu0 0.0
    %6034 = vmatprep.mubr.f32.mxu0 0.0
    %6035 = vmatmul.mubr.f32.gmra.mxu0 %v5968
    %v6036 = vpop.f32.mrf.mxu0
    %v6037 = vadd.f32 0.0, %v6036
    %v6038 = vpop.f32.mrf.mxu0
    %6039 = vdwg.mxu0
    %v6041 = vsel %vm235, %v5966, 0
    %6043 = vmatprep.subr.mxu0 0.0
    %6044 = vmatpush1.xpose.msra.mxu0 0.0
    %6045 = vmatprep.subr.mxu0 0.0
    %6046 = vmatpush1.xpose.msra.mxu0 0.0
    %6047 = vmatprep.subr.mxu0 0.0
    %6048 = vmatpush1.xpose.msra.mxu0 0.0
    %6049 = vmatprep.subr.mxu0 0.0
    %6050 = vmatpush1.xpose.msra.mxu0 0.0
    %6051 = vmatprep.subr.mxu0 0.0
    %6052 = vmatpush1.xpose.msra.mxu0 0.0
    %6053 = vmatprep.subr.mxu0 0.0
    %6054 = vmatpush1.xpose.msra.mxu0 0.0
    %6055 = vmatprep.subr.mxu0 0.0
    %6056 = vmatpush1.xpose.msra.mxu0 0.0
    %6057 = vmatprep.subr.mxu0 0.0
    %6058 = vmatpush1.xpose.msra.mxu0 0.0
    %6059 = vmatprep.subr.mxu0 0.0
    %6060 = vmatpush1.xpose.msra.mxu0 0.0
    %6061 = vmatprep.subr.mxu0 0.0
    %6062 = vmatpush1.xpose.msra.mxu0 0.0
    %6063 = vmatprep.subr.mxu0 0.0
    %6064 = vmatpush1.xpose.msra.mxu0 0.0
    %6065 = vmatprep.subr.mxu0 0.0
    %6066 = vmatpush1.xpose.msra.mxu0 0.0
    %6067 = vmatprep.subr.mxu0 0.0
    %6068 = vmatpush1.xpose.msra.mxu0 0.0
    %6069 = vmatprep.subr.mxu0 0.0
    %6070 = vmatpush1.xpose.msra.mxu0 0.0
    %6071 = vmatprep.subr.mxu0 0.0
    %6072 = vmatpush1.xpose.msra.mxu0 %v5385
    %6073 = vmatprep.subr.mxu0 0.0
    %6074 = vmatpush1.xpose.msra.mxu0 %v5383
    %6075 = vmatprep.subr.mxu0 0.0
    %6076 = vmatpush2.xpose.msra.mxu0 0.0
    %6077 = vmatprep.subr.mxu0 0.0
    %6078 = vmatpush2.xpose.msra.mxu0 0.0
    %6079 = vmatprep.subr.mxu0 0.0
    %6080 = vmatpush2.xpose.msra.mxu0 0.0
    %6081 = vmatprep.subr.mxu0 0.0
    %6082 = vmatpush2.xpose.msra.mxu0 0.0
    %6083 = vmatprep.subr.mxu0 0.0
    %6084 = vmatpush2.xpose.msra.mxu0 0.0
    %6085 = vmatprep.subr.mxu0 0.0
    %6086 = vmatpush2.xpose.msra.mxu0 0.0
    %6087 = vmatprep.subr.mxu0 0.0
    %6088 = vmatpush2.xpose.msra.mxu0 0.0
    %6089 = vmatprep.subr.mxu0 0.0
    %6090 = vmatpush2.xpose.msra.mxu0 0.0
    %6091 = vmatprep.subr.mxu0 0.0
    %6092 = vmatpush2.xpose.msra.mxu0 0.0
    %6093 = vmatprep.subr.mxu0 0.0
    %6094 = vmatpush2.xpose.msra.mxu0 0.0
    %6095 = vmatprep.subr.mxu0 0.0
    %6096 = vmatpush2.xpose.msra.mxu0 0.0
    %6097 = vmatprep.subr.mxu0 0.0
    %6098 = vmatpush2.xpose.msra.mxu0 0.0
    %6099 = vmatprep.subr.mxu0 0.0
    %6100 = vmatpush2.xpose.msra.mxu0 0.0
    %6101 = vmatprep.subr.mxu0 0.0
    %6102 = vmatpush2.xpose.msra.mxu0 0.0
    %6103 = vmatprep.subr.mxu0 0.0
    %6104 = vmatpush2.xpose.msra.mxu0 0.0
    %6105 = vmatprep.subr.mxu0 0.0
    %6106 = vmatpush2.xpose.msra.mxu0 0.0
    %6107 = vmatprep.mubr.f32.mxu0 0.0
    %6108 = vmatmul.mubr.f32.gmra.mxu0 %v6041
    %v6109 = vpop.f32.mrf.mxu0
    %v6110 = vadd.f32 0.0, %v6109
    %v6111 = vpop.f32.mrf.mxu0
    %6112 = vdwg.mxu0
    %v6113 = vmul.f32 %v6037, 0.35355338
    %v6114 = vmul.f32 %v6110, 0.35355338
    %v6115 = vsel %vm138, %v6113, -inf
    %6116 = vmax.xlane.f32.xlu0 %v6115
    %v6117 = vpop.xlane.xlu0 %6116
    %v6118 = vsel %vm138, %v6114, -inf
    %6119 = vmax.xlane.f32.xlu0 %v6118
    %v6120 = vpop.xlane.xlu0 %6119
    %v6121 = vsub.f32 %v6113, %v6117
    %v6122 = vsub.f32 %v6114, %v6120
    %v6123 = vmul.f32 %v6121, 1.442695
    %v6124 = vpow.pop %v6123
    %v6125 = vmul.f32 %v6122, 1.442695
    %v6126 = vpow.pop %v6125
    %v6127 = vsel %vm138, %v6124, 0.0
    %6128 = vadd.xlane.f32.xlu0 %v6127
    %v6129 = vpop.xlane.xlu0 %6128
    %v6130 = vsel %vm138, %v6126, 0.0
    %6131 = vadd.xlane.f32.xlu0 %v6130
    %v6132 = vpop.xlane.xlu0 %6131
    %v6133 = vrcp.pop %v6129
    %v6134 = vrcp.pop %v6132
    %v6135 = vmul.f32 %v6124, %v6133
    %v6136 = vmul.f32 %v6126, %v6134
    %v6138 = vsel %vm138, %v6135, 0
    %6140 = vmatprep.subr.mxu0 0.0
    %6141 = vmatpush1.msra.mxu0 0.0
    %6142 = vmatprep.subr.mxu0 0.0
    %6143 = vmatpush1.msra.mxu0 0.0
    %6144 = vmatprep.subr.mxu0 0.0
    %6145 = vmatpush1.msra.mxu0 0.0
    %6146 = vmatprep.subr.mxu0 0.0
    %6147 = vmatpush1.msra.mxu0 0.0
    %6148 = vmatprep.subr.mxu0 0.0
    %6149 = vmatpush1.msra.mxu0 0.0
    %6150 = vmatprep.subr.mxu0 0.0
    %6151 = vmatpush1.msra.mxu0 0.0
    %6152 = vmatprep.subr.mxu0 0.0
    %6153 = vmatpush1.msra.mxu0 0.0
    %6154 = vmatprep.subr.mxu0 0.0
    %6155 = vmatpush1.msra.mxu0 0.0
    %6156 = vmatprep.subr.mxu0 0.0
    %6157 = vmatpush1.msra.mxu0 0.0
    %6158 = vmatprep.subr.mxu0 0.0
    %6159 = vmatpush1.msra.mxu0 0.0
    %6160 = vmatprep.subr.mxu0 0.0
    %6161 = vmatpush1.msra.mxu0 0.0
    %6162 = vmatprep.subr.mxu0 0.0
    %6163 = vmatpush1.msra.mxu0 0.0
    %6164 = vmatprep.subr.mxu0 0.0
    %6165 = vmatpush1.msra.mxu0 0.0
    %6166 = vmatprep.subr.mxu0 0.0
    %6167 = vmatpush1.msra.mxu0 0.0
    %6168 = vmatprep.subr.mxu0 0.0
    %6169 = vmatpush1.msra.mxu0 %v5484
    %6170 = vmatprep.subr.mxu0 0.0
    %6171 = vmatpush1.msra.mxu0 %v5482
    %6172 = vmatprep.subr.mxu0 0.0
    %6173 = vmatpush2.msra.mxu0 0.0
    %6174 = vmatprep.subr.mxu0 0.0
    %6175 = vmatpush2.msra.mxu0 0.0
    %6176 = vmatprep.subr.mxu0 0.0
    %6177 = vmatpush2.msra.mxu0 0.0
    %6178 = vmatprep.subr.mxu0 0.0
    %6179 = vmatpush2.msra.mxu0 0.0
    %6180 = vmatprep.subr.mxu0 0.0
    %6181 = vmatpush2.msra.mxu0 0.0
    %6182 = vmatprep.subr.mxu0 0.0
    %6183 = vmatpush2.msra.mxu0 0.0
    %6184 = vmatprep.subr.mxu0 0.0
    %6185 = vmatpush2.msra.mxu0 0.0
    %6186 = vmatprep.subr.mxu0 0.0
    %6187 = vmatpush2.msra.mxu0 0.0
    %6188 = vmatprep.subr.mxu0 0.0
    %6189 = vmatpush2.msra.mxu0 0.0
    %6190 = vmatprep.subr.mxu0 0.0
    %6191 = vmatpush2.msra.mxu0 0.0
    %6192 = vmatprep.subr.mxu0 0.0
    %6193 = vmatpush2.msra.mxu0 0.0
    %6194 = vmatprep.subr.mxu0 0.0
    %6195 = vmatpush2.msra.mxu0 0.0
    %6196 = vmatprep.subr.mxu0 0.0
    %6197 = vmatpush2.msra.mxu0 0.0
    %6198 = vmatprep.subr.mxu0 0.0
    %6199 = vmatpush2.msra.mxu0 0.0
    %6200 = vmatprep.subr.mxu0 0.0
    %6201 = vmatpush2.msra.mxu0 0.0
    %6202 = vmatprep.subr.mxu0 0.0
    %6203 = vmatpush2.msra.mxu0 0.0
    %6204 = vmatprep.mubr.f32.mxu0 0.0
    %6205 = vmatmul.mubr.f32.gmra.mxu0 %v6138
    %v6206 = vpop.f32.mrf.mxu0
    %v6207 = vadd.f32 0.0, %v6206
    %v6208 = vpop.f32.mrf.mxu0
    %6209 = vdwg.mxu0
    %v6211 = vsel %vm138, %v6136, 0
    %6213 = vmatprep.subr.mxu0 0.0
    %6214 = vmatpush1.msra.mxu0 0.0
    %6215 = vmatprep.subr.mxu0 0.0
    %6216 = vmatpush1.msra.mxu0 0.0
    %6217 = vmatprep.subr.mxu0 0.0
    %6218 = vmatpush1.msra.mxu0 0.0
    %6219 = vmatprep.subr.mxu0 0.0
    %6220 = vmatpush1.msra.mxu0 0.0
    %6221 = vmatprep.subr.mxu0 0.0
    %6222 = vmatpush1.msra.mxu0 0.0
    %6223 = vmatprep.subr.mxu0 0.0
    %6224 = vmatpush1.msra.mxu0 0.0
    %6225 = vmatprep.subr.mxu0 0.0
    %6226 = vmatpush1.msra.mxu0 0.0
    %6227 = vmatprep.subr.mxu0 0.0
    %6228 = vmatpush1.msra.mxu0 0.0
    %6229 = vmatprep.subr.mxu0 0.0
    %6230 = vmatpush1.msra.mxu0 0.0
    %6231 = vmatprep.subr.mxu0 0.0
    %6232 = vmatpush1.msra.mxu0 0.0
    %6233 = vmatprep.subr.mxu0 0.0
    %6234 = vmatpush1.msra.mxu0 0.0
    %6235 = vmatprep.subr.mxu0 0.0
    %6236 = vmatpush1.msra.mxu0 0.0
    %6237 = vmatprep.subr.mxu0 0.0
    %6238 = vmatpush1.msra.mxu0 0.0
    %6239 = vmatprep.subr.mxu0 0.0
    %6240 = vmatpush1.msra.mxu0 0.0
    %6241 = vmatprep.subr.mxu0 0.0
    %6242 = vmatpush1.msra.mxu0 %v5563
    %6243 = vmatprep.subr.mxu0 0.0
    %6244 = vmatpush1.msra.mxu0 %v5561
    %6245 = vmatprep.subr.mxu0 0.0
    %6246 = vmatpush2.msra.mxu0 0.0
    %6247 = vmatprep.subr.mxu0 0.0
    %6248 = vmatpush2.msra.mxu0 0.0
    %6249 = vmatprep.subr.mxu0 0.0
    %6250 = vmatpush2.msra.mxu0 0.0
    %6251 = vmatprep.subr.mxu0 0.0
    %6252 = vmatpush2.msra.mxu0 0.0
    %6253 = vmatprep.subr.mxu0 0.0
    %6254 = vmatpush2.msra.mxu0 0.0
    %6255 = vmatprep.subr.mxu0 0.0
    %6256 = vmatpush2.msra.mxu0 0.0
    %6257 = vmatprep.subr.mxu0 0.0
    %6258 = vmatpush2.msra.mxu0 0.0
    %6259 = vmatprep.subr.mxu0 0.0
    %6260 = vmatpush2.msra.mxu0 0.0
    %6261 = vmatprep.subr.mxu0 0.0
    %6262 = vmatpush2.msra.mxu0 0.0
    %6263 = vmatprep.subr.mxu0 0.0
    %6264 = vmatpush2.msra.mxu0 0.0
    %6265 = vmatprep.subr.mxu0 0.0
    %6266 = vmatpush2.msra.mxu0 0.0
    %6267 = vmatprep.subr.mxu0 0.0
    %6268 = vmatpush2.msra.mxu0 0.0
    %6269 = vmatprep.subr.mxu0 0.0
    %6270 = vmatpush2.msra.mxu0 0.0
    %6271 = vmatprep.subr.mxu0 0.0
    %6272 = vmatpush2.msra.mxu0 0.0
    %6273 = vmatprep.subr.mxu0 0.0
    %6274 = vmatpush2.msra.mxu0 0.0
    %6275 = vmatprep.subr.mxu0 0.0
    %6276 = vmatpush2.msra.mxu0 0.0
    %6277 = vmatprep.mubr.f32.mxu0 0.0
    %6278 = vmatmul.mubr.f32.gmra.mxu0 %v6211
    %v6279 = vpop.f32.mrf.mxu0
    %v6280 = vadd.f32 0.0, %v6279
    %v6281 = vpop.f32.mrf.mxu0
    %6282 = vdwg.mxu0
    %v6283 = vmul.f32 %v6207, %v114
    %v6284 = vmul.f32 %v6280, %v114
    %v6285 = vadd.f32 %v5963, %v6283
    %v6286 = vadd.f32 %v5964, %v6284
    %v6287 = vmul.f32 %v5285, %v119
    %v6288 = vmul.f32 %v5290, %v119
    %v6290 = vsel %vm235, %v6287, 0
    %6292 = vmatprep.subr.mxu0 0.0
    %6293 = vmatpush1.xpose.msra.mxu0 0.0
    %6294 = vmatprep.subr.mxu0 0.0
    %6295 = vmatpush1.xpose.msra.mxu0 0.0
    %6296 = vmatprep.subr.mxu0 0.0
    %6297 = vmatpush1.xpose.msra.mxu0 0.0
    %6298 = vmatprep.subr.mxu0 0.0
    %6299 = vmatpush1.xpose.msra.mxu0 0.0
    %6300 = vmatprep.subr.mxu0 0.0
    %6301 = vmatpush1.xpose.msra.mxu0 0.0
    %6302 = vmatprep.subr.mxu0 0.0
    %6303 = vmatpush1.xpose.msra.mxu0 0.0
    %6304 = vmatprep.subr.mxu0 0.0
    %6305 = vmatpush1.xpose.msra.mxu0 0.0
    %6306 = vmatprep.subr.mxu0 0.0
    %6307 = vmatpush1.xpose.msra.mxu0 0.0
    %6308 = vmatprep.subr.mxu0 0.0
    %6309 = vmatpush1.xpose.msra.mxu0 0.0
    %6310 = vmatprep.subr.mxu0 0.0
    %6311 = vmatpush1.xpose.msra.mxu0 0.0
    %6312 = vmatprep.subr.mxu0 0.0
    %6313 = vmatpush1.xpose.msra.mxu0 0.0
    %6314 = vmatprep.subr.mxu0 0.0
    %6315 = vmatpush1.xpose.msra.mxu0 0.0
    %6316 = vmatprep.subr.mxu0 0.0
    %6317 = vmatpush1.xpose.msra.mxu0 0.0
    %6318 = vmatprep.subr.mxu0 0.0
    %6319 = vmatpush1.xpose.msra.mxu0 0.0
    %6320 = vmatprep.subr.mxu0 0.0
    %6321 = vmatpush1.xpose.msra.mxu0 %v5304
    %6322 = vmatprep.subr.mxu0 0.0
    %6323 = vmatpush1.xpose.msra.mxu0 %v5302
    %6324 = vmatprep.subr.mxu0 0.0
    %6325 = vmatpush2.xpose.msra.mxu0 0.0
    %6326 = vmatprep.subr.mxu0 0.0
    %6327 = vmatpush2.xpose.msra.mxu0 0.0
    %6328 = vmatprep.subr.mxu0 0.0
    %6329 = vmatpush2.xpose.msra.mxu0 0.0
    %6330 = vmatprep.subr.mxu0 0.0
    %6331 = vmatpush2.xpose.msra.mxu0 0.0
    %6332 = vmatprep.subr.mxu0 0.0
    %6333 = vmatpush2.xpose.msra.mxu0 0.0
    %6334 = vmatprep.subr.mxu0 0.0
    %6335 = vmatpush2.xpose.msra.mxu0 0.0
    %6336 = vmatprep.subr.mxu0 0.0
    %6337 = vmatpush2.xpose.msra.mxu0 0.0
    %6338 = vmatprep.subr.mxu0 0.0
    %6339 = vmatpush2.xpose.msra.mxu0 0.0
    %6340 = vmatprep.subr.mxu0 0.0
    %6341 = vmatpush2.xpose.msra.mxu0 0.0
    %6342 = vmatprep.subr.mxu0 0.0
    %6343 = vmatpush2.xpose.msra.mxu0 0.0
    %6344 = vmatprep.subr.mxu0 0.0
    %6345 = vmatpush2.xpose.msra.mxu0 0.0
    %6346 = vmatprep.subr.mxu0 0.0
    %6347 = vmatpush2.xpose.msra.mxu0 0.0
    %6348 = vmatprep.subr.mxu0 0.0
    %6349 = vmatpush2.xpose.msra.mxu0 0.0
    %6350 = vmatprep.subr.mxu0 0.0
    %6351 = vmatpush2.xpose.msra.mxu0 0.0
    %6352 = vmatprep.subr.mxu0 0.0
    %6353 = vmatpush2.xpose.msra.mxu0 0.0
    %6354 = vmatprep.subr.mxu0 0.0
    %6355 = vmatpush2.xpose.msra.mxu0 0.0
    %6356 = vmatprep.mubr.f32.mxu0 0.0
    %6357 = vmatmul.mubr.f32.gmra.mxu0 %v6290
    %v6358 = vpop.f32.mrf.mxu0
    %v6359 = vadd.f32 0.0, %v6358
    %v6360 = vpop.f32.mrf.mxu0
    %6361 = vdwg.mxu0
    %v6363 = vsel %vm235, %v6288, 0
    %6365 = vmatprep.subr.mxu0 0.0
    %6366 = vmatpush1.xpose.msra.mxu0 0.0
    %6367 = vmatprep.subr.mxu0 0.0
    %6368 = vmatpush1.xpose.msra.mxu0 0.0
    %6369 = vmatprep.subr.mxu0 0.0
    %6370 = vmatpush1.xpose.msra.mxu0 0.0
    %6371 = vmatprep.subr.mxu0 0.0
    %6372 = vmatpush1.xpose.msra.mxu0 0.0
    %6373 = vmatprep.subr.mxu0 0.0
    %6374 = vmatpush1.xpose.msra.mxu0 0.0
    %6375 = vmatprep.subr.mxu0 0.0
    %6376 = vmatpush1.xpose.msra.mxu0 0.0
    %6377 = vmatprep.subr.mxu0 0.0
    %6378 = vmatpush1.xpose.msra.mxu0 0.0
    %6379 = vmatprep.subr.mxu0 0.0
    %6380 = vmatpush1.xpose.msra.mxu0 0.0
    %6381 = vmatprep.subr.mxu0 0.0
    %6382 = vmatpush1.xpose.msra.mxu0 0.0
    %6383 = vmatprep.subr.mxu0 0.0
    %6384 = vmatpush1.xpose.msra.mxu0 0.0
    %6385 = vmatprep.subr.mxu0 0.0
    %6386 = vmatpush1.xpose.msra.mxu0 0.0
    %6387 = vmatprep.subr.mxu0 0.0
    %6388 = vmatpush1.xpose.msra.mxu0 0.0
    %6389 = vmatprep.subr.mxu0 0.0
    %6390 = vmatpush1.xpose.msra.mxu0 0.0
    %6391 = vmatprep.subr.mxu0 0.0
    %6392 = vmatpush1.xpose.msra.mxu0 0.0
    %6393 = vmatprep.subr.mxu0 0.0
    %6394 = vmatpush1.xpose.msra.mxu0 %v5385
    %6395 = vmatprep.subr.mxu0 0.0
    %6396 = vmatpush1.xpose.msra.mxu0 %v5383
    %6397 = vmatprep.subr.mxu0 0.0
    %6398 = vmatpush2.xpose.msra.mxu0 0.0
    %6399 = vmatprep.subr.mxu0 0.0
    %6400 = vmatpush2.xpose.msra.mxu0 0.0
    %6401 = vmatprep.subr.mxu0 0.0
    %6402 = vmatpush2.xpose.msra.mxu0 0.0
    %6403 = vmatprep.subr.mxu0 0.0
    %6404 = vmatpush2.xpose.msra.mxu0 0.0
    %6405 = vmatprep.subr.mxu0 0.0
    %6406 = vmatpush2.xpose.msra.mxu0 0.0
    %6407 = vmatprep.subr.mxu0 0.0
    %6408 = vmatpush2.xpose.msra.mxu0 0.0
    %6409 = vmatprep.subr.mxu0 0.0
    %6410 = vmatpush2.xpose.msra.mxu0 0.0
    %6411 = vmatprep.subr.mxu0 0.0
    %6412 = vmatpush2.xpose.msra.mxu0 0.0
    %6413 = vmatprep.subr.mxu0 0.0
    %6414 = vmatpush2.xpose.msra.mxu0 0.0
    %6415 = vmatprep.subr.mxu0 0.0
    %6416 = vmatpush2.xpose.msra.mxu0 0.0
    %6417 = vmatprep.subr.mxu0 0.0
    %6418 = vmatpush2.xpose.msra.mxu0 0.0
    %6419 = vmatprep.subr.mxu0 0.0
    %6420 = vmatpush2.xpose.msra.mxu0 0.0
    %6421 = vmatprep.subr.mxu0 0.0
    %6422 = vmatpush2.xpose.msra.mxu0 0.0
    %6423 = vmatprep.subr.mxu0 0.0
    %6424 = vmatpush2.xpose.msra.mxu0 0.0
    %6425 = vmatprep.subr.mxu0 0.0
    %6426 = vmatpush2.xpose.msra.mxu0 0.0
    %6427 = vmatprep.subr.mxu0 0.0
    %6428 = vmatpush2.xpose.msra.mxu0 0.0
    %6429 = vmatprep.mubr.f32.mxu0 0.0
    %6430 = vmatmul.mubr.f32.gmra.mxu0 %v6363
    %v6431 = vpop.f32.mrf.mxu0
    %v6432 = vadd.f32 0.0, %v6431
    %v6433 = vpop.f32.mrf.mxu0
    %6434 = vdwg.mxu0
    %v6435 = vmul.f32 %v6359, 0.35355338
    %v6436 = vmul.f32 %v6432, 0.35355338
    %v6437 = vsel %vm138, %v6435, -inf
    %6438 = vmax.xlane.f32.xlu0 %v6437
    %v6439 = vpop.xlane.xlu0 %6438
    %v6440 = vsel %vm138, %v6436, -inf
    %6441 = vmax.xlane.f32.xlu0 %v6440
    %v6442 = vpop.xlane.xlu0 %6441
    %v6443 = vsub.f32 %v6435, %v6439
    %v6444 = vsub.f32 %v6436, %v6442
    %v6445 = vmul.f32 %v6443, 1.442695
    %v6446 = vpow.pop %v6445
    %v6447 = vmul.f32 %v6444, 1.442695
    %v6448 = vpow.pop %v6447
    %v6449 = vsel %vm138, %v6446, 0.0
    %6450 = vadd.xlane.f32.xlu0 %v6449
    %v6451 = vpop.xlane.xlu0 %6450
    %v6452 = vsel %vm138, %v6448, 0.0
    %6453 = vadd.xlane.f32.xlu0 %v6452
    %v6454 = vpop.xlane.xlu0 %6453
    %v6455 = vrcp.pop %v6451
    %v6456 = vrcp.pop %v6454
    %v6457 = vmul.f32 %v6446, %v6455
    %v6458 = vmul.f32 %v6448, %v6456
    %v6460 = vsel %vm138, %v6457, 0
    %6462 = vmatprep.subr.mxu0 0.0
    %6463 = vmatpush1.msra.mxu0 0.0
    %6464 = vmatprep.subr.mxu0 0.0
    %6465 = vmatpush1.msra.mxu0 0.0
    %6466 = vmatprep.subr.mxu0 0.0
    %6467 = vmatpush1.msra.mxu0 0.0
    %6468 = vmatprep.subr.mxu0 0.0
    %6469 = vmatpush1.msra.mxu0 0.0
    %6470 = vmatprep.subr.mxu0 0.0
    %6471 = vmatpush1.msra.mxu0 0.0
    %6472 = vmatprep.subr.mxu0 0.0
    %6473 = vmatpush1.msra.mxu0 0.0
    %6474 = vmatprep.subr.mxu0 0.0
    %6475 = vmatpush1.msra.mxu0 0.0
    %6476 = vmatprep.subr.mxu0 0.0
    %6477 = vmatpush1.msra.mxu0 0.0
    %6478 = vmatprep.subr.mxu0 0.0
    %6479 = vmatpush1.msra.mxu0 0.0
    %6480 = vmatprep.subr.mxu0 0.0
    %6481 = vmatpush1.msra.mxu0 0.0
    %6482 = vmatprep.subr.mxu0 0.0
    %6483 = vmatpush1.msra.mxu0 0.0
    %6484 = vmatprep.subr.mxu0 0.0
    %6485 = vmatpush1.msra.mxu0 0.0
    %6486 = vmatprep.subr.mxu0 0.0
    %6487 = vmatpush1.msra.mxu0 0.0
    %6488 = vmatprep.subr.mxu0 0.0
    %6489 = vmatpush1.msra.mxu0 0.0
    %6490 = vmatprep.subr.mxu0 0.0
    %6491 = vmatpush1.msra.mxu0 %v5484
    %6492 = vmatprep.subr.mxu0 0.0
    %6493 = vmatpush1.msra.mxu0 %v5482
    %6494 = vmatprep.subr.mxu0 0.0
    %6495 = vmatpush2.msra.mxu0 0.0
    %6496 = vmatprep.subr.mxu0 0.0
    %6497 = vmatpush2.msra.mxu0 0.0
    %6498 = vmatprep.subr.mxu0 0.0
    %6499 = vmatpush2.msra.mxu0 0.0
    %6500 = vmatprep.subr.mxu0 0.0
    %6501 = vmatpush2.msra.mxu0 0.0
    %6502 = vmatprep.subr.mxu0 0.0
    %6503 = vmatpush2.msra.mxu0 0.0
    %6504 = vmatprep.subr.mxu0 0.0
    %6505 = vmatpush2.msra.mxu0 0.0
    %6506 = vmatprep.subr.mxu0 0.0
    %6507 = vmatpush2.msra.mxu0 0.0
    %6508 = vmatprep.subr.mxu0 0.0
    %6509 = vmatpush2.msra.mxu0 0.0
    %6510 = vmatprep.subr.mxu0 0.0
    %6511 = vmatpush2.msra.mxu0 0.0
    %6512 = vmatprep.subr.mxu0 0.0
    %6513 = vmatpush2.msra.mxu0 0.0
    %6514 = vmatprep.subr.mxu0 0.0
    %6515 = vmatpush2.msra.mxu0 0.0
    %6516 = vmatprep.subr.mxu0 0.0
    %6517 = vmatpush2.msra.mxu0 0.0
    %6518 = vmatprep.subr.mxu0 0.0
    %6519 = vmatpush2.msra.mxu0 0.0
    %6520 = vmatprep.subr.mxu0 0.0
    %6521 = vmatpush2.msra.mxu0 0.0
    %6522 = vmatprep.subr.mxu0 0.0
    %6523 = vmatpush2.msra.mxu0 0.0
    %6524 = vmatprep.subr.mxu0 0.0
    %6525 = vmatpush2.msra.mxu0 0.0
    %6526 = vmatprep.mubr.f32.mxu0 0.0
    %6527 = vmatmul.mubr.f32.gmra.mxu0 %v6460
    %v6528 = vpop.f32.mrf.mxu0
    %v6529 = vadd.f32 0.0, %v6528
    %v6530 = vpop.f32.mrf.mxu0
    %6531 = vdwg.mxu0
    %v6533 = vsel %vm138, %v6458, 0
    %6535 = vmatprep.subr.mxu0 0.0
    %6536 = vmatpush1.msra.mxu0 0.0
    %6537 = vmatprep.subr.mxu0 0.0
    %6538 = vmatpush1.msra.mxu0 0.0
    %6539 = vmatprep.subr.mxu0 0.0
    %6540 = vmatpush1.msra.mxu0 0.0
    %6541 = vmatprep.subr.mxu0 0.0
    %6542 = vmatpush1.msra.mxu0 0.0
    %6543 = vmatprep.subr.mxu0 0.0
    %6544 = vmatpush1.msra.mxu0 0.0
    %6545 = vmatprep.subr.mxu0 0.0
    %6546 = vmatpush1.msra.mxu0 0.0
    %6547 = vmatprep.subr.mxu0 0.0
    %6548 = vmatpush1.msra.mxu0 0.0
    %6549 = vmatprep.subr.mxu0 0.0
    %6550 = vmatpush1.msra.mxu0 0.0
    %6551 = vmatprep.subr.mxu0 0.0
    %6552 = vmatpush1.msra.mxu0 0.0
    %6553 = vmatprep.subr.mxu0 0.0
    %6554 = vmatpush1.msra.mxu0 0.0
    %6555 = vmatprep.subr.mxu0 0.0
    %6556 = vmatpush1.msra.mxu0 0.0
    %6557 = vmatprep.subr.mxu0 0.0
    %6558 = vmatpush1.msra.mxu0 0.0
    %6559 = vmatprep.subr.mxu0 0.0
    %6560 = vmatpush1.msra.mxu0 0.0
    %6561 = vmatprep.subr.mxu0 0.0
    %6562 = vmatpush1.msra.mxu0 0.0
    %6563 = vmatprep.subr.mxu0 0.0
    %6564 = vmatpush1.msra.mxu0 %v5563
    %6565 = vmatprep.subr.mxu0 0.0
    %6566 = vmatpush1.msra.mxu0 %v5561
    %6567 = vmatprep.subr.mxu0 0.0
    %6568 = vmatpush2.msra.mxu0 0.0
    %6569 = vmatprep.subr.mxu0 0.0
    %6570 = vmatpush2.msra.mxu0 0.0
    %6571 = vmatprep.subr.mxu0 0.0
    %6572 = vmatpush2.msra.mxu0 0.0
    %6573 = vmatprep.subr.mxu0 0.0
    %6574 = vmatpush2.msra.mxu0 0.0
    %6575 = vmatprep.subr.mxu0 0.0
    %6576 = vmatpush2.msra.mxu0 0.0
    %6577 = vmatprep.subr.mxu0 0.0
    %6578 = vmatpush2.msra.mxu0 0.0
    %6579 = vmatprep.subr.mxu0 0.0
    %6580 = vmatpush2.msra.mxu0 0.0
    %6581 = vmatprep.subr.mxu0 0.0
    %6582 = vmatpush2.msra.mxu0 0.0
    %6583 = vmatprep.subr.mxu0 0.0
    %6584 = vmatpush2.msra.mxu0 0.0
    %6585 = vmatprep.subr.mxu0 0.0
    %6586 = vmatpush2.msra.mxu0 0.0
    %6587 = vmatprep.subr.mxu0 0.0
    %6588 = vmatpush2.msra.mxu0 0.0
    %6589 = vmatprep.subr.mxu0 0.0
    %6590 = vmatpush2.msra.mxu0 0.0
    %6591 = vmatprep.subr.mxu0 0.0
    %6592 = vmatpush2.msra.mxu0 0.0
    %6593 = vmatprep.subr.mxu0 0.0
    %6594 = vmatpush2.msra.mxu0 0.0
    %6595 = vmatprep.subr.mxu0 0.0
    %6596 = vmatpush2.msra.mxu0 0.0
    %6597 = vmatprep.subr.mxu0 0.0
    %6598 = vmatpush2.msra.mxu0 0.0
    %6599 = vmatprep.mubr.f32.mxu0 0.0
    %6600 = vmatmul.mubr.f32.gmra.mxu0 %v6533
    %v6601 = vpop.f32.mrf.mxu0
    %v6602 = vadd.f32 0.0, %v6601
    %v6603 = vpop.f32.mrf.mxu0
    %6604 = vdwg.mxu0
    %v6605 = vmul.f32 %v6529, %v119
    %v6606 = vmul.f32 %v6602, %v119
    %v6607 = vadd.f32 %v6285, %v6605
    %v6608 = vadd.f32 %v6286, %v6606
    %6609 = vrot.lane.b32.xlu0 %v3656, 64
    %v6610 = vpop.permute.xlu0 %6609
    %6611 = vrot.lane.b32.xlu0 %v3657, 64
    %v6612 = vpop.permute.xlu0 %6611
    %6613 = vrot.lane.b32.xlu0 %v3658, 64
    %v6614 = vpop.permute.xlu0 %6613
    %6615 = vrot.lane.b32.xlu0 %v3659, 64
    %v6616 = vpop.permute.xlu0 %6615
    %6621 = vrot.lane.b32.xlu0 %v5066, 64
    %v6622 = vpop.permute.xlu0 %6621
    %v6625 = vsel %vm235, %v6607, 0
    %v6628 = vsel %vm235, %v6608, 0
    %6630 = vmatprep.subr.mxu0 0.0
    %6631 = vmatpush1.msra.mxu0 0.0
    %6632 = vmatprep.subr.mxu0 0.0
    %6633 = vmatpush1.msra.mxu0 0.0
    %6634 = vmatprep.subr.mxu0 0.0
    %6635 = vmatpush1.msra.mxu0 0.0
    %6636 = vmatprep.subr.mxu0 0.0
    %6637 = vmatpush1.msra.mxu0 0.0
    %6638 = vmatprep.subr.mxu0 0.0
    %6639 = vmatpush1.msra.mxu0 0.0
    %6640 = vmatprep.subr.mxu0 0.0
    %6641 = vmatpush1.msra.mxu0 0.0
    %6642 = vmatprep.subr.mxu0 0.0
    %6643 = vmatpush1.msra.mxu0 0.0
    %6644 = vmatprep.subr.mxu0 0.0
    %6645 = vmatpush1.msra.mxu0 0.0
    %6646 = vmatprep.subr.mxu0 0.0
    %6647 = vmatpush1.msra.mxu0 0.0
    %6648 = vmatprep.subr.mxu0 0.0
    %6649 = vmatpush1.msra.mxu0 0.0
    %6650 = vmatprep.subr.mxu0 0.0
    %6651 = vmatpush1.msra.mxu0 0.0
    %6652 = vmatprep.subr.mxu0 0.0
    %6653 = vmatpush1.msra.mxu0 0.0
    %6654 = vmatprep.subr.mxu0 0.0
    %6655 = vmatpush1.msra.mxu0 %v6616
    %6656 = vmatprep.subr.mxu0 0.0
    %6657 = vmatpush1.msra.mxu0 %v6614
    %6658 = vmatprep.subr.mxu0 0.0
    %6659 = vmatpush1.msra.mxu0 %v6612
    %6660 = vmatprep.subr.mxu0 0.0
    %6661 = vmatpush1.msra.mxu0 %v6610
    %6662 = vmatprep.subr.mxu0 0.0
    %6663 = vmatpush2.msra.mxu0 0.0
    %6664 = vmatprep.subr.mxu0 0.0
    %6665 = vmatpush2.msra.mxu0 0.0
    %6666 = vmatprep.subr.mxu0 0.0
    %6667 = vmatpush2.msra.mxu0 0.0
    %6668 = vmatprep.subr.mxu0 0.0
    %6669 = vmatpush2.msra.mxu0 0.0
    %6670 = vmatprep.subr.mxu0 0.0
    %6671 = vmatpush2.msra.mxu0 0.0
    %6672 = vmatprep.subr.mxu0 0.0
    %6673 = vmatpush2.msra.mxu0 0.0
    %6674 = vmatprep.subr.mxu0 0.0
    %6675 = vmatpush2.msra.mxu0 0.0
    %6676 = vmatprep.subr.mxu0 0.0
    %6677 = vmatpush2.msra.mxu0 0.0
    %6678 = vmatprep.subr.mxu0 0.0
    %6679 = vmatpush2.msra.mxu0 0.0
    %6680 = vmatprep.subr.mxu0 0.0
    %6681 = vmatpush2.msra.mxu0 0.0
    %6682 = vmatprep.subr.mxu0 0.0
    %6683 = vmatpush2.msra.mxu0 0.0
    %6684 = vmatprep.subr.mxu0 0.0
    %6685 = vmatpush2.msra.mxu0 0.0
    %6686 = vmatprep.subr.mxu0 0.0
    %6687 = vmatpush2.msra.mxu0 0.0
    %6688 = vmatprep.subr.mxu0 0.0
    %6689 = vmatpush2.msra.mxu0 0.0
    %6690 = vmatprep.subr.mxu0 0.0
    %6691 = vmatpush2.msra.mxu0 0.0
    %6692 = vmatprep.subr.mxu0 0.0
    %6693 = vmatpush2.msra.mxu0 0.0
    %6694 = vmatprep.mubr.f32.mxu0 0.0
    %6695 = vmatmul.mubr.f32.gmra.mxu0 %v6625
    %v6696 = vpop.f32.mrf.mxu0
    %v6697 = vadd.f32 %v6622, %v6696
    %v6698 = vpop.f32.mrf.mxu0
    %6699 = vmatprep.mubr.f32.mxu0 0.0
    %6700 = vmatmul.mubr.f32.gmra.mxu0 %v6628
    %v6701 = vpop.f32.mrf.mxu0
    %v6702 = vadd.f32 %v6622, %v6701
    %v6703 = vpop.f32.mrf.mxu0
    %6704 = vdwg.mxu0
    %v6705 = vadd.f32 %v5191, %v6697
    %v6706 = vadd.f32 %v5192, %v6702
    %v6707 = vsel %vm235, %v6705, 0.0
    %6708 = vadd.xlane.f32.xlu0 %v6707
    %v6709 = vpop.xlane.xlu0 %6708
    %v6710 = vsel %vm235, %v6706, 0.0
    %6711 = vadd.xlane.f32.xlu0 %v6710
    %v6712 = vpop.xlane.xlu0 %6711
    %v6713 = vmul.f32 %v6709, %v1831
    %v6714 = vmul.f32 %v6712, %v1831
    %v6715 = vmul.f32 %v6705, %v6705
    %v6716 = vmul.f32 %v6706, %v6706
    %v6717 = vsel %vm235, %v6715, 0.0
    %6718 = vadd.xlane.f32.xlu0 %v6717
    %v6719 = vpop.xlane.xlu0 %6718
    %v6720 = vsel %vm235, %v6716, 0.0
    %6721 = vadd.xlane.f32.xlu0 %v6720
    %v6722 = vpop.xlane.xlu0 %6721
    %v6723 = vmul.f32 %v6719, %v1831
    %v6724 = vmul.f32 %v6722, %v1831
    %v6725 = vmul.f32 %v6713, %v6713
    %v6726 = vmul.f32 %v6714, %v6714
    %v6727 = vsub.f32 %v6723, %v6725
    %v6728 = vsub.f32 %v6724, %v6726
    %v6729 = vsub.f32 %v6705, %v6713
    %v6730 = vsub.f32 %v6706, %v6714
    %v6731 = vadd.f32 %v6727, 1e-05
    %v6732 = vadd.f32 %v6728, 1e-05
    %v6733 = vrsqrt.pop %v6731
    %v6734 = vrsqrt.pop %v6732
    %v6735 = vmul.f32 %v6729, %v6733
    %v6736 = vmul.f32 %v6730, %v6734
    %v6737 = vlaneseq
    %v6738 = vshrl.u32 %v6737, 7
    %v6739 = vsub.s32 2, %v6738
    %v6740 = vrot.slane %v3663, %v6739
    %v6741 = vmul.f32 %v6735, %v6740
    %v6742 = vmul.f32 %v6736, %v6740
    %v6743 = vlaneseq
    %v6744 = vshrl.u32 %v6743, 7
    %v6745 = vsub.s32 3, %v6744
    %v6746 = vrot.slane %v3663, %v6745
    %v6747 = vadd.f32 %v6741, %v6746
    %v6748 = vadd.f32 %v6742, %v6746
    %s6749 = scalar_lea.vmem %s10, 32
    %v6750 = vld [vmem:[%s6749] sm:$0xff]
    %v6751 = vld [vmem:[%s6749 + $0x8] sm:$0xff]
    %v6752 = vld [vmem:[%s6749 + $0x10] sm:$0xff]
    %v6753 = vld [vmem:[%s6749 + $0x18] sm:$0xff]
    %s6754 = scalar_lea.vmem %s11, 1
    %v6755 = vld [vmem:[%s6754] sm:$0x1]
    %v6757 = vlaneseq
    %v6758 = vshrl.u32 %v6757, 7
    %v6759 = vsub.s32 0, %v6758
    %v6760 = vrot.slane %v6755, %v6759
    %v6763 = vsel %vm235, %v6747, 0
    %v6766 = vsel %vm235, %v6748, 0
    %6768 = vmatprep.subr.mxu0 0.0
    %6769 = vmatpush1.msra.mxu0 0.0
    %6770 = vmatprep.subr.mxu0 0.0
    %6771 = vmatpush1.msra.mxu0 0.0
    %6772 = vmatprep.subr.mxu0 0.0
    %6773 = vmatpush1.msra.mxu0 0.0
    %6774 = vmatprep.subr.mxu0 0.0
    %6775 = vmatpush1.msra.mxu0 0.0
    %6776 = vmatprep.subr.mxu0 0.0
    %6777 = vmatpush1.msra.mxu0 0.0
    %6778 = vmatprep.subr.mxu0 0.0
    %6779 = vmatpush1.msra.mxu0 0.0
    %6780 = vmatprep.subr.mxu0 0.0
    %6781 = vmatpush1.msra.mxu0 0.0
    %6782 = vmatprep.subr.mxu0 0.0
    %6783 = vmatpush1.msra.mxu0 0.0
    %6784 = vmatprep.subr.mxu0 0.0
    %6785 = vmatpush1.msra.mxu0 0.0
    %6786 = vmatprep.subr.mxu0 0.0
    %6787 = vmatpush1.msra.mxu0 0.0
    %6788 = vmatprep.subr.mxu0 0.0
    %6789 = vmatpush1.msra.mxu0 0.0
    %6790 = vmatprep.subr.mxu0 0.0
    %6791 = vmatpush1.msra.mxu0 0.0
    %6792 = vmatprep.subr.mxu0 0.0
    %6793 = vmatpush1.msra.mxu0 %v6753
    %6794 = vmatprep.subr.mxu0 0.0
    %6795 = vmatpush1.msra.mxu0 %v6752
    %6796 = vmatprep.subr.mxu0 0.0
    %6797 = vmatpush1.msra.mxu0 %v6751
    %6798 = vmatprep.subr.mxu0 0.0
    %6799 = vmatpush1.msra.mxu0 %v6750
    %6800 = vmatprep.subr.mxu0 0.0
    %6801 = vmatpush2.msra.mxu0 0.0
    %6802 = vmatprep.subr.mxu0 0.0
    %6803 = vmatpush2.msra.mxu0 0.0
    %6804 = vmatprep.subr.mxu0 0.0
    %6805 = vmatpush2.msra.mxu0 0.0
    %6806 = vmatprep.subr.mxu0 0.0
    %6807 = vmatpush2.msra.mxu0 0.0
    %6808 = vmatprep.subr.mxu0 0.0
    %6809 = vmatpush2.msra.mxu0 0.0
    %6810 = vmatprep.subr.mxu0 0.0
    %6811 = vmatpush2.msra.mxu0 0.0
    %6812 = vmatprep.subr.mxu0 0.0
    %6813 = vmatpush2.msra.mxu0 0.0
    %6814 = vmatprep.subr.mxu0 0.0
    %6815 = vmatpush2.msra.mxu0 0.0
    %6816 = vmatprep.subr.mxu0 0.0
    %6817 = vmatpush2.msra.mxu0 0.0
    %6818 = vmatprep.subr.mxu0 0.0
    %6819 = vmatpush2.msra.mxu0 0.0
    %6820 = vmatprep.subr.mxu0 0.0
    %6821 = vmatpush2.msra.mxu0 0.0
    %6822 = vmatprep.subr.mxu0 0.0
    %6823 = vmatpush2.msra.mxu0 0.0
    %6824 = vmatprep.subr.mxu0 0.0
    %6825 = vmatpush2.msra.mxu0 0.0
    %6826 = vmatprep.subr.mxu0 0.0
    %6827 = vmatpush2.msra.mxu0 0.0
    %6828 = vmatprep.subr.mxu0 0.0
    %6829 = vmatpush2.msra.mxu0 0.0
    %6830 = vmatprep.subr.mxu0 0.0
    %6831 = vmatpush2.msra.mxu0 0.0
    %6832 = vmatprep.mubr.f32.mxu0 0.0
    %6833 = vmatmul.mubr.f32.gmra.mxu0 %v6763
    %v6834 = vpop.f32.mrf.mxu0
    %v6835 = vadd.f32 %v6760, %v6834
    %v6836 = vpop.f32.mrf.mxu0
    %6837 = vmatprep.mubr.f32.mxu0 0.0
    %6838 = vmatmul.mubr.f32.gmra.mxu0 %v6766
    %v6839 = vpop.f32.mrf.mxu0
    %v6840 = vadd.f32 %v6760, %v6839
    %v6841 = vpop.f32.mrf.mxu0
    %6842 = vdwg.mxu0
    %v6843 = vmax.f32 %v6835, 0.0
    %v6844 = vmax.f32 %v6840, 0.0
    %s6845 = scalar_lea.vmem %s12, 64
    %v6846 = vld [vmem:[%s6845] sm:$0xff]
    %v6847 = vld [vmem:[%s6845 + $0x8] sm:$0xff]
    %v6848 = vld [vmem:[%s6845 + $0x10] sm:$0xff]
    %v6849 = vld [vmem:[%s6845 + $0x18] sm:$0xff]
    %v6850 = vld [vmem:[%s6845 + $0x20] sm:$0xff]
    %v6851 = vld [vmem:[%s6845 + $0x28] sm:$0xff]
    %v6852 = vld [vmem:[%s6845 + $0x30] sm:$0xff]
    %v6853 = vld [vmem:[%s6845 + $0x38] sm:$0xff]
    %s6854 = scalar_lea.vmem %s13, 1
    %v6855 = vld [vmem:[%s6854] sm:$0x1]
    %v6857 = vlaneseq
    %v6858 = vshrl.u32 %v6857, 7
    %v6859 = vsub.s32 0, %v6858
    %v6860 = vrot.slane %v6855, %v6859
    %v6863 = vsel %vm3529, %v6843, 0
    %v6866 = vsel %vm3529, %v6844, 0
    %6868 = vmatprep.subr.mxu0 0.0
    %6869 = vmatpush1.msra.mxu0 0.0
    %6870 = vmatprep.subr.mxu0 0.0
    %6871 = vmatpush1.msra.mxu0 0.0
    %6872 = vmatprep.subr.mxu0 0.0
    %6873 = vmatpush1.msra.mxu0 0.0
    %6874 = vmatprep.subr.mxu0 0.0
    %6875 = vmatpush1.msra.mxu0 0.0
    %6876 = vmatprep.subr.mxu0 0.0
    %6877 = vmatpush1.msra.mxu0 0.0
    %6878 = vmatprep.subr.mxu0 0.0
    %6879 = vmatpush1.msra.mxu0 0.0
    %6880 = vmatprep.subr.mxu0 0.0
    %6881 = vmatpush1.msra.mxu0 0.0
    %6882 = vmatprep.subr.mxu0 0.0
    %6883 = vmatpush1.msra.mxu0 0.0
    %6884 = vmatprep.subr.mxu0 0.0
    %6885 = vmatpush1.msra.mxu0 %v6853
    %6886 = vmatprep.subr.mxu0 0.0
    %6887 = vmatpush1.msra.mxu0 %v6852
    %6888 = vmatprep.subr.mxu0 0.0
    %6889 = vmatpush1.msra.mxu0 %v6851
    %6890 = vmatprep.subr.mxu0 0.0
    %6891 = vmatpush1.msra.mxu0 %v6850
    %6892 = vmatprep.subr.mxu0 0.0
    %6893 = vmatpush1.msra.mxu0 %v6849
    %6894 = vmatprep.subr.mxu0 0.0
    %6895 = vmatpush1.msra.mxu0 %v6848
    %6896 = vmatprep.subr.mxu0 0.0
    %6897 = vmatpush1.msra.mxu0 %v6847
    %6898 = vmatprep.subr.mxu0 0.0
    %6899 = vmatpush1.msra.mxu0 %v6846
    %6900 = vmatprep.subr.mxu0 0.0
    %6901 = vmatpush2.msra.mxu0 0.0
    %6902 = vmatprep.subr.mxu0 0.0
    %6903 = vmatpush2.msra.mxu0 0.0
    %6904 = vmatprep.subr.mxu0 0.0
    %6905 = vmatpush2.msra.mxu0 0.0
    %6906 = vmatprep.subr.mxu0 0.0
    %6907 = vmatpush2.msra.mxu0 0.0
    %6908 = vmatprep.subr.mxu0 0.0
    %6909 = vmatpush2.msra.mxu0 0.0
    %6910 = vmatprep.subr.mxu0 0.0
    %6911 = vmatpush2.msra.mxu0 0.0
    %6912 = vmatprep.subr.mxu0 0.0
    %6913 = vmatpush2.msra.mxu0 0.0
    %6914 = vmatprep.subr.mxu0 0.0
    %6915 = vmatpush2.msra.mxu0 0.0
    %6916 = vmatprep.subr.mxu0 0.0
    %6917 = vmatpush2.msra.mxu0 0.0
    %6918 = vmatprep.subr.mxu0 0.0
    %6919 = vmatpush2.msra.mxu0 0.0
    %6920 = vmatprep.subr.mxu0 0.0
    %6921 = vmatpush2.msra.mxu0 0.0
    %6922 = vmatprep.subr.mxu0 0.0
    %6923 = vmatpush2.msra.mxu0 0.0
    %6924 = vmatprep.subr.mxu0 0.0
    %6925 = vmatpush2.msra.mxu0 0.0
    %6926 = vmatprep.subr.mxu0 0.0
    %6927 = vmatpush2.msra.mxu0 0.0
    %6928 = vmatprep.subr.mxu0 0.0
    %6929 = vmatpush2.msra.mxu0 0.0
    %6930 = vmatprep.subr.mxu0 0.0
    %6931 = vmatpush2.msra.mxu0 0.0
    %6932 = vmatprep.mubr.f32.mxu0 0.0
    %6933 = vmatmul.mubr.f32.gmra.mxu0 %v6863
    %v6934 = vpop.f32.mrf.mxu0
    %v6935 = vadd.f32 %v6860, %v6934
    %v6936 = vpop.f32.mrf.mxu0
    %6937 = vmatprep.mubr.f32.mxu0 0.0
    %6938 = vmatmul.mubr.f32.gmra.mxu0 %v6866
    %v6939 = vpop.f32.mrf.mxu0
    %v6940 = vadd.f32 %v6860, %v6939
    %v6941 = vpop.f32.mrf.mxu0
    %6942 = vdwg.mxu0
    %v6943 = vadd.f32 %v6747, %v6935
    %v6944 = vadd.f32 %v6748, %v6940
    %v6945 = vsel %vm235, %v6943, 0.0
    %6946 = vadd.xlane.f32.xlu0 %v6945
    %v6947 = vpop.xlane.xlu0 %6946
    %v6948 = vsel %vm235, %v6944, 0.0
    %6949 = vadd.xlane.f32.xlu0 %v6948
    %v6950 = vpop.xlane.xlu0 %6949
    %v6951 = vmul.f32 %v6947, %v1831
    %v6952 = vmul.f32 %v6950, %v1831
    %v6953 = vmul.f32 %v6943, %v6943
    %v6954 = vmul.f32 %v6944, %v6944
    %v6955 = vsel %vm235, %v6953, 0.0
    %6956 = vadd.xlane.f32.xlu0 %v6955
    %v6957 = vpop.xlane.xlu0 %6956
    %v6958 = vsel %vm235, %v6954, 0.0
    %6959 = vadd.xlane.f32.xlu0 %v6958
    %v6960 = vpop.xlane.xlu0 %6959
    %v6961 = vmul.f32 %v6957, %v1831
    %v6962 = vmul.f32 %v6960, %v1831
    %v6963 = vmul.f32 %v6951, %v6951
    %v6964 = vmul.f32 %v6952, %v6952
    %v6965 = vsub.f32 %v6961, %v6963
    %v6966 = vsub.f32 %v6962, %v6964
    %v6967 = vsub.f32 %v6943, %v6951
    %v6968 = vsub.f32 %v6944, %v6952
    %v6969 = vadd.f32 %v6965, 1e-05
    %v6970 = vadd.f32 %v6966, 1e-05
    %v6971 = vrsqrt.pop %v6969
    %v6972 = vrsqrt.pop %v6970
    %v6973 = vmul.f32 %v6967, %v6971
    %v6974 = vmul.f32 %v6968, %v6972
    %v6975 = vlaneseq
    %v6976 = vshrl.u32 %v6975, 7
    %v6977 = vsub.s32 4, %v6976
    %v6978 = vrot.slane %v3663, %v6977
    %v6979 = vmul.f32 %v6973, %v6978
    %v6980 = vmul.f32 %v6974, %v6978
    %v6981 = vlaneseq
    %v6982 = vshrl.u32 %v6981, 7
    %v6983 = vsub.s32 5, %v6982
    %v6984 = vrot.slane %v3663, %v6983
    %v6985 = vadd.f32 %v6979, %v6984
    %v6986 = vadd.f32 %v6980, %v6984
    %v6987 = vld [vmem:[#allocation7] sm:$0xff]
    %v6988 = vld [vmem:[#allocation7 + $0x8] sm:$0xff]
    %v6989 = vld [vmem:[#allocation7 + $0x10] sm:$0xff]
    %v6990 = vld [vmem:[#allocation7 + $0x18] sm:$0xff]
    %v6991 = vld [vmem:[%s16] sm:$0x1]
    %v6993 = vlaneseq
    %v6994 = vshrl.u32 %v6993, 7
    %v6995 = vsub.s32 0, %v6994
    %v6996 = vrot.slane %v6991, %v6995
    %v6999 = vsel %vm235, %v6985, 0
    %v7002 = vsel %vm235, %v6986, 0
    %7004 = vmatprep.subr.mxu0 0.0
    %7005 = vmatpush1.msra.mxu0 0.0
    %7006 = vmatprep.subr.mxu0 0.0
    %7007 = vmatpush1.msra.mxu0 0.0
    %7008 = vmatprep.subr.mxu0 0.0
    %7009 = vmatpush1.msra.mxu0 0.0
    %7010 = vmatprep.subr.mxu0 0.0
    %7011 = vmatpush1.msra.mxu0 0.0
    %7012 = vmatprep.subr.mxu0 0.0
    %7013 = vmatpush1.msra.mxu0 0.0
    %7014 = vmatprep.subr.mxu0 0.0
    %7015 = vmatpush1.msra.mxu0 0.0
    %7016 = vmatprep.subr.mxu0 0.0
    %7017 = vmatpush1.msra.mxu0 0.0
    %7018 = vmatprep.subr.mxu0 0.0
    %7019 = vmatpush1.msra.mxu0 0.0
    %7020 = vmatprep.subr.mxu0 0.0
    %7021 = vmatpush1.msra.mxu0 0.0
    %7022 = vmatprep.subr.mxu0 0.0
    %7023 = vmatpush1.msra.mxu0 0.0
    %7024 = vmatprep.subr.mxu0 0.0
    %7025 = vmatpush1.msra.mxu0 0.0
    %7026 = vmatprep.subr.mxu0 0.0
    %7027 = vmatpush1.msra.mxu0 0.0
    %7028 = vmatprep.subr.mxu0 0.0
    %7029 = vmatpush1.msra.mxu0 %v6990
    %7030 = vmatprep.subr.mxu0 0.0
    %7031 = vmatpush1.msra.mxu0 %v6989
    %7032 = vmatprep.subr.mxu0 0.0
    %7033 = vmatpush1.msra.mxu0 %v6988
    %7034 = vmatprep.subr.mxu0 0.0
    %7035 = vmatpush1.msra.mxu0 %v6987
    %7036 = vmatprep.subr.mxu0 0.0
    %7037 = vmatpush2.msra.mxu0 0.0
    %7038 = vmatprep.subr.mxu0 0.0
    %7039 = vmatpush2.msra.mxu0 0.0
    %7040 = vmatprep.subr.mxu0 0.0
    %7041 = vmatpush2.msra.mxu0 0.0
    %7042 = vmatprep.subr.mxu0 0.0
    %7043 = vmatpush2.msra.mxu0 0.0
    %7044 = vmatprep.subr.mxu0 0.0
    %7045 = vmatpush2.msra.mxu0 0.0
    %7046 = vmatprep.subr.mxu0 0.0
    %7047 = vmatpush2.msra.mxu0 0.0
    %7048 = vmatprep.subr.mxu0 0.0
    %7049 = vmatpush2.msra.mxu0 0.0
    %7050 = vmatprep.subr.mxu0 0.0
    %7051 = vmatpush2.msra.mxu0 0.0
    %7052 = vmatprep.subr.mxu0 0.0
    %7053 = vmatpush2.msra.mxu0 0.0
    %7054 = vmatprep.subr.mxu0 0.0
    %7055 = vmatpush2.msra.mxu0 0.0
    %7056 = vmatprep.subr.mxu0 0.0
    %7057 = vmatpush2.msra.mxu0 0.0
    %7058 = vmatprep.subr.mxu0 0.0
    %7059 = vmatpush2.msra.mxu0 0.0
    %7060 = vmatprep.subr.mxu0 0.0
    %7061 = vmatpush2.msra.mxu0 0.0
    %7062 = vmatprep.subr.mxu0 0.0
    %7063 = vmatpush2.msra.mxu0 0.0
    %7064 = vmatprep.subr.mxu0 0.0
    %7065 = vmatpush2.msra.mxu0 0.0
    %7066 = vmatprep.subr.mxu0 0.0
    %7067 = vmatpush2.msra.mxu0 0.0
    %7068 = vmatprep.mubr.f32.mxu0 0.0
    %7069 = vmatmul.mubr.f32.gmra.mxu0 %v6999
    %v7070 = vpop.f32.mrf.mxu0
    %v7071 = vadd.f32 %v6996, %v7070
    %v7072 = vpop.f32.mrf.mxu0
    %7073 = vmatprep.mubr.f32.mxu0 0.0
    %7074 = vmatmul.mubr.f32.gmra.mxu0 %v7002
    %v7075 = vpop.f32.mrf.mxu0
    %v7076 = vadd.f32 %v6996, %v7075
    %v7077 = vpop.f32.mrf.mxu0
    %7078 = vdwg.mxu0
    %7079 = vst [vmem:[#allocation8] sm:$0xff] %v7071
    %7080 = vst [vmem:[#allocation8 + $0x8] sm:$0xff] %v7076
    // Predicated region
    $region82: #{transformer_decoder_forward.1} parent=1 // pred_check
      _
    $region83: #{transformer_decoder_forward.1} parent=1 // pred_check_branch
      %7082 = sbr.rel (0) target = $region85
    $region84: #{transformer_decoder_forward.1} parent=1 // pred_region
      %s7084 = ssub.s32 256, 256
      %7085 = vsyncadd [#allocation4], %s7084
      %s7086 = sshll.u32 [#allocation8], 4
      %s7087 = int_to_ptr.vmem [resolvable:$true] %s7086
      %7092 = dma.vmem_to_hbm [thread:$0]  %s7087, 256, %s17, [#allocation4], 128, 128, 8
    $region85: #{transformer_decoder_forward.1} parent=1 // pred_fallthru
      _
    // Predicated region
    $region86: #{transformer_decoder_forward.1} parent=1 // pred_check
      _
    $region87: #{transformer_decoder_forward.1} parent=1 // pred_check_branch
      %7094 = sbr.rel (0) target = $region89
    $region88: #{transformer_decoder_forward.1} parent=1 // pred_region
      %7095 = dma.done [#allocation4], 256
    $region89: #{transformer_decoder_forward.1} parent=1 // pred_fallthru
      _
    %7096 = vsyncpa [#allocation3], 1
    %7097 = vsyncpa [#allocation6], 1
    %7098 = vsyncpa [#allocation4], 1

</llo_original>
